<compile_context>
chip_gen: v7x
topology: tpu7x:2x2x1
jax: 0.10.0
libtpu: 0.0.40
codegen_flags: <defaults>
</compile_context>

<pallas_src>
import functools

import jax
import jax.numpy as jnp
from jax.experimental import pallas as pl
from jax.experimental.pallas import tpu as pltpu

NZ = 128
H1, H2, H3 = 256, 512, 1024
OUT = 784            # 28 * 28
OUT_PAD = 896        # 7 * 128 (lane-dense final layer -> unmasked stores)

_GRID_STEP_OVERHEAD_ROWS = 128   # ~0.35us/step vs ~3.5ns/row of MXU work


def _round_up(x, m):
    return ((x + m - 1) // m) * m


# -----------------------------------------------------------------------------
# Kernel: fully fused 4-layer MLP.  Four MXU matmuls (bf16 operands, f32
# accumulation) + VPU LeakyReLU / EUP tanh; intermediates never leave VMEM.
# -----------------------------------------------------------------------------
def generator_kernel(x_ref,
                     w1_ref, b1_ref,
                     w2_ref, b2_ref,
                     w3_ref, b3_ref,
                     w4_ref, b4_ref,
                     out_ref, *, act_dtype):

    def leaky(h):
        h = h.astype(act_dtype)                 # bf16 VPU path on v6e/v7x
        h = jnp.where(h > 0, h, 0.2 * h)
        return h.astype(jnp.bfloat16)           # MXU operand for the next dot

    h = jnp.dot(x_ref[...], w1_ref[...],
                preferred_element_type=jnp.float32) + b1_ref[...]
    h = leaky(h)                                                  # (TB, 256)
    h = jnp.dot(h, w2_ref[...],
                preferred_element_type=jnp.float32) + b2_ref[...]
    h = leaky(h)                                                  # (TB, 512)
    h = jnp.dot(h, w3_ref[...],
                preferred_element_type=jnp.float32) + b3_ref[...]
    h = leaky(h)                                                  # (TB, 1024)
    h = jnp.dot(h, w4_ref[...],
                preferred_element_type=jnp.float32) + b4_ref[...]
    out_ref[...] = jnp.tanh(h)                                    # (TB, 896) f32


# -----------------------------------------------------------------------------
# Chip-aware helpers
# -----------------------------------------------------------------------------
def _vmem_cap_bytes():
    """Physical VMEM of the local chip; conservative fallback = 64 MiB (v7x)."""
    try:
        return int(pltpu.get_tpu_info().vmem_capacity_bytes)
    except Exception:
        return 64 << 20


def _has_bf16_vpu():
    """v6e/v7x VALUs process bf16 natively; keep activation math f32 on v5e-."""
    try:
        kind = jax.devices()[0].device_kind.lower()
    except Exception:
        return True
    return not any(old in kind for old in ("v2", "v3", "v4", "v5"))


def _choose_tile(batch, max_tile):
    """Batch tile: multiple of 16 (bf16 sublane pack), minimizes padded rows +
    per-grid-step overhead; forces >= 2 grid steps for big batches so the
    "parallel" axis can shard across both v7x TensorCores (harmless no-op on
    single-TC v5e/v6e)."""
    b16 = _round_up(max(batch, 1), 16)
    max_tile = max(16, _round_up(max_tile, 16))
    min_steps = 2 if b16 >= 512 else 1
    best = None                               # (cost, tile, padded_batch)
    for t in range(min(max_tile, b16), 15, -16):
        n = -(-b16 // t)                      # cdiv
        if n < min_steps:
            continue
        cost = n * (t + _GRID_STEP_OVERHEAD_ROWS)
        if best is None or cost < best[0]:
            best = (cost, t, n * t)
    _, tile, b_pad = best
    return tile, b_pad


def _vmem_limit_bytes(tile_b):
    # Worst case (double-buffered weights, fallback path) + generous margin,
    # capped with headroom below the chip's physical VMEM.
    w = 2 * 2 * (NZ * H1 + H1 * H2 + H2 * H3 + H3 * OUT_PAD)   # bf16 weights
    b = 2 * 4 * (H1 + H2 + H3 + OUT_PAD)                       # f32 biases
    io = 2 * (tile_b * NZ * 2 + tile_b * OUT_PAD * 4)          # x / out tiles
    act = 3 * 4 * tile_b * (H1 + H2 + H3 + OUT_PAD)            # f32 intermediates
    want = w + b + io + act + (8 << 20)
    cap = _vmem_cap_bytes() - (8 << 20)
    return max(min(want, cap), 16 << 20)


# -----------------------------------------------------------------------------
# Wrapper
# -----------------------------------------------------------------------------
def prepare_params(params):
    """One-time preprocessing (hoisted out of the per-call hot path): pad the
    last layer 784 -> 896 output columns (lane-dense) and cast weights to bf16
    MXU operands; biases stay f32."""
    (w1, b1), (w2, b2), (w3, b3), (w4, b4) = params
    w4p = jnp.zeros((H3, OUT_PAD), w4.dtype).at[:, :OUT].set(w4)
    b4p = jnp.zeros((1, OUT_PAD), b4.dtype).at[:, :OUT].set(b4)
    return (w1.astype(jnp.bfloat16), b1.astype(jnp.float32),
            w2.astype(jnp.bfloat16), b2.astype(jnp.float32),
            w3.astype(jnp.bfloat16), b3.astype(jnp.float32),
            w4p.astype(jnp.bfloat16), b4p.astype(jnp.float32))


def generator_forward(x, prepared, *, tile_b=1024, act_dtype=None):
    """x: (B, NZ) float32, prepared = prepare_params(params) -> (B,1,28,28) f32."""
    w1, b1, w2, b2, w3, b3, w4, b4 = prepared
    B = x.shape[0]
    if act_dtype is None:
        act_dtype = jnp.bfloat16 if _has_bf16_vpu() else jnp.float32

    tile, b_pad = _choose_tile(B, tile_b)
    x_bf = x.astype(jnp.bfloat16)
    if b_pad != B:
        x_bf = jnp.zeros((b_pad, NZ), jnp.bfloat16).at[:B].set(x_bf)
    grid = (b_pad // tile,)

    flops = 2 * b_pad * (NZ * H1 + H1 * H2 + H2 * H3 + H3 * OUT_PAD)
    bytes_accessed = (b_pad * NZ * 2
                      + 2 * (NZ * H1 + H1 * H2 + H2 * H3 + H3 * OUT_PAD)
                      + 4 * (H1 + H2 + H3 + OUT_PAD)
                      + b_pad * OUT_PAD * 4)

    def run(single_buffer_weights):
        # Constant-index weight/bias blocks are never re-DMA'd across grid
        # steps; single-buffer them to reclaim VMEM when supported.
        const_kw = (dict(pipeline_mode=pl.Buffered(1))
                    if single_buffer_weights else {})
        const = lambda shape: pl.BlockSpec(shape, lambda i: (0, 0), **const_kw)
        call = pl.pallas_call(
            functools.partial(generator_kernel, act_dtype=act_dtype),
            out_shape=jax.ShapeDtypeStruct((b_pad, OUT_PAD), jnp.float32),
            grid_spec=pltpu.PrefetchScalarGridSpec(
                num_scalar_prefetch=0,
                grid=grid,
                in_specs=[
                    pl.BlockSpec((tile, NZ), lambda i: (i, 0)),     # x tile
                    const((NZ, H1)), const((1, H1)),
                    const((H1, H2)), const((1, H2)),
                    const((H2, H3)), const((1, H3)),
                    const((H3, OUT_PAD)), const((1, OUT_PAD)),
                ],
                out_specs=pl.BlockSpec((tile, OUT_PAD), lambda i: (i, 0)),
            ),
            compiler_params=pltpu.CompilerParams(
                dimension_semantics=("parallel",),
                vmem_limit_bytes=_vmem_limit_bytes(tile)),
            cost_estimate=pl.CostEstimate(
                flops=flops,
                transcendentals=b_pad * OUT_PAD,
                bytes_accessed=bytes_accessed),
        )
        return call(x_bf, w1, b1, w2, b2, w3, b3, w4, b4)

    try:
        y = run(True)
    except Exception:
        # pipeline_mode=pl.Buffered(1) not supported by this jax version;
        # fall back to default double-buffered constant blocks.
        y = run(False)

    return y[:B, :OUT].reshape(-1, 1, 28, 28)


# -----------------------------------------------------------------------------
# Params / reference
# -----------------------------------------------------------------------------
def init_params(key):
    """Deterministic synthetic params, same shapes as the PyTorch module
    (weights stored transposed: (in, out)), kept in f32."""
    dims = [(NZ, H1), (H1, H2), (H2, H3), (H3, OUT)]
    params = []
    for (din, dout) in dims:
        key, kw, kb = jax.random.split(key, 3)
        bound = 1.0 / jnp.sqrt(din)
        w = jax.random.uniform(kw, (din, dout), jnp.float32, -bound, bound)
        b = jax.random.uniform(kb, (1, dout), jnp.float32, -bound, bound)
        params.append((w, b))
    return params


def reference_forward(x, params):
    h = x
    for i, (w, b) in enumerate(params):
        h = h @ w + b
        if i < 3:
            h = jnp.where(h > 0, h, 0.2 * h)
        else:
            h = jnp.tanh(h)
    return h.reshape(-1, 1, 28, 28)


if __name__ == "__main__":
    key = jax.random.PRNGKey(0)
    kx1, kx2, kp = jax.random.split(key, 3)
    params = init_params(kp)
    prepared = prepare_params(params)        # one-time, out of the hot path

    # Small batch (single grid step).
    B = 8
    x = jax.random.normal(kx1, (B, NZ), jnp.float32)
    out = jax.block_until_ready(generator_forward(x, prepared))
    ref = reference_forward(x, params)
    assert out.shape == (B, 1, 28, 28), out.shape
    # bf16 MXU operands / activations with f32 accumulation -> relaxed tol.
    assert jnp.allclose(out, ref, atol=2e-2, rtol=2e-2), (
        "mismatch vs reference: max abs err %e"
        % float(jnp.max(jnp.abs(out - ref))))

    # Multi-step batch grid (deliberately tiny tile) to exercise the pipeline
    # and the batch-padding / slicing path.
    B2 = 40
    x2 = jax.random.normal(kx2, (B2, NZ), jnp.float32)
    out2 = jax.block_until_ready(generator_forward(x2, prepared, tile_b=16))
    ref2 = reference_forward(x2, params)
    assert out2.shape == (B2, 1, 28, 28), out2.shape
    assert jnp.allclose(out2, ref2, atol=2e-2, rtol=2e-2), (
        "mismatch vs reference (multi-step grid): max abs err %e"
        % float(jnp.max(jnp.abs(out2 - ref2))))

    print("KERNEL_OK")
</pallas_src>

<mosaic_0001>
module attributes {stable_mosaic.version = 11 : i64} {
  func.func @generator_kernel(%arg0: i32, %arg1: memref<16x128xbf16, #tpu.memory_space<vmem>>, %arg2: memref<128x256xbf16, #tpu.memory_space<vmem>>, %arg3: memref<1x256xf32, #tpu.memory_space<vmem>>, %arg4: memref<256x512xbf16, #tpu.memory_space<vmem>>, %arg5: memref<1x512xf32, #tpu.memory_space<vmem>>, %arg6: memref<512x1024xbf16, #tpu.memory_space<vmem>>, %arg7: memref<1x1024xf32, #tpu.memory_space<vmem>>, %arg8: memref<1024x896xbf16, #tpu.memory_space<vmem>>, %arg9: memref<1x896xf32, #tpu.memory_space<vmem>>, %arg10: memref<16x896xf32, #tpu.memory_space<vmem>>) attributes {dimension_semantics = [#tpu.dimension_semantics<parallel>], iteration_bounds = array<i64: 1>, scalar_prefetch = 0 : i64, scratch_operands = 0 : i64, tpu.core_type = #tpu.core_type<tc>, window_params = [{transform_indices = @transform_0, window_bounds = array<i64: 16, 128>}, {pipeline_mode = #tpu.pipeline_mode<synchronous>, transform_indices = @transform_1, window_bounds = array<i64: 128, 256>}, {pipeline_mode = #tpu.pipeline_mode<synchronous>, transform_indices = @transform_2, window_bounds = array<i64: 1, 256>}, {pipeline_mode = #tpu.pipeline_mode<synchronous>, transform_indices = @transform_3, window_bounds = array<i64: 256, 512>}, {pipeline_mode = #tpu.pipeline_mode<synchronous>, transform_indices = @transform_4, window_bounds = array<i64: 1, 512>}, {pipeline_mode = #tpu.pipeline_mode<synchronous>, transform_indices = @transform_5, window_bounds = array<i64: 512, 1024>}, {pipeline_mode = #tpu.pipeline_mode<synchronous>, transform_indices = @transform_6, window_bounds = array<i64: 1, 1024>}, {pipeline_mode = #tpu.pipeline_mode<synchronous>, transform_indices = @transform_7, window_bounds = array<i64: 1024, 896>}, {pipeline_mode = #tpu.pipeline_mode<synchronous>, transform_indices = @transform_8, window_bounds = array<i64: 1, 896>}, {transform_indices = @transform_9, window_bounds = array<i64: 16, 896>}]} {
    %c0 = arith.constant 0 : index
    %c0_0 = arith.constant 0 : index
    %0 = vector.load %arg1[%c0, %c0_0] : memref<16x128xbf16, #tpu.memory_space<vmem>>, vector<16x128xbf16>
    %c0_1 = arith.constant 0 : index
    %c0_2 = arith.constant 0 : index
    %1 = vector.load %arg2[%c0_1, %c0_2] : memref<128x256xbf16, #tpu.memory_space<vmem>>, vector<128x256xbf16>
    %cst = arith.constant dense<0.000000e+00> : vector<16x256xf32>
    %2 = tpu.matmul %0, %1, %cst {dimension_numbers = #tpu.dot_dimension_numbers<[1], [0], [0], [1], [0, 0, 1, 1], [], []>} : vector<16x128xbf16>, vector<128x256xbf16>, vector<16x256xf32> -> vector<16x256xf32>
    %c0_3 = arith.constant 0 : index
    %c0_4 = arith.constant 0 : index
    %3 = vector.load %arg3[%c0_3, %c0_4] : memref<1x256xf32, #tpu.memory_space<vmem>>, vector<1x256xf32>
    %4 = vector.broadcast %3 : vector<1x256xf32> to vector<16x256xf32>
    %5 = arith.addf %2, %4 : vector<16x256xf32>
    %6 = arith.truncf %5 : vector<16x256xf32> to vector<16x256xbf16>
    %cst_5 = arith.constant 0.000000e+00 : bf16
    %7 = vector.broadcast %cst_5 : bf16 to vector<16x256xbf16>
    %8 = arith.cmpf ogt, %6, %7 : vector<16x256xbf16>
    %cst_6 = arith.constant 2.001950e-01 : bf16
    %9 = vector.broadcast %cst_6 : bf16 to vector<16x256xbf16>
    %10 = arith.mulf %9, %6 : vector<16x256xbf16>
    %11 = arith.select %8, %6, %10 : vector<16x256xi1>, vector<16x256xbf16>
    %c0_7 = arith.constant 0 : index
    %c0_8 = arith.constant 0 : index
    %12 = vector.load %arg4[%c0_7, %c0_8] : memref<256x512xbf16, #tpu.memory_space<vmem>>, vector<256x512xbf16>
    %cst_9 = arith.constant dense<0.000000e+00> : vector<16x512xf32>
    %13 = tpu.matmul %11, %12, %cst_9 {dimension_numbers = #tpu.dot_dimension_numbers<[1], [0], [0], [1], [0, 0, 1, 1], [], []>} : vector<16x256xbf16>, vector<256x512xbf16>, vector<16x512xf32> -> vector<16x512xf32>
    %c0_10 = arith.constant 0 : index
    %c0_11 = arith.constant 0 : index
    %14 = vector.load %arg5[%c0_10, %c0_11] : memref<1x512xf32, #tpu.memory_space<vmem>>, vector<1x512xf32>
    %15 = vector.broadcast %14 : vector<1x512xf32> to vector<16x512xf32>
    %16 = arith.addf %13, %15 : vector<16x512xf32>
    %17 = arith.truncf %16 : vector<16x512xf32> to vector<16x512xbf16>
    %cst_12 = arith.constant 0.000000e+00 : bf16
    %18 = vector.broadcast %cst_12 : bf16 to vector<16x512xbf16>
    %19 = arith.cmpf ogt, %17, %18 : vector<16x512xbf16>
    %cst_13 = arith.constant 2.001950e-01 : bf16
    %20 = vector.broadcast %cst_13 : bf16 to vector<16x512xbf16>
    %21 = arith.mulf %20, %17 : vector<16x512xbf16>
    %22 = arith.select %19, %17, %21 : vector<16x512xi1>, vector<16x512xbf16>
    %c0_14 = arith.constant 0 : index
    %c0_15 = arith.constant 0 : index
    %23 = vector.load %arg6[%c0_14, %c0_15] : memref<512x1024xbf16, #tpu.memory_space<vmem>>, vector<512x1024xbf16>
    %cst_16 = arith.constant dense<0.000000e+00> : vector<16x1024xf32>
    %24 = tpu.matmul %22, %23, %cst_16 {dimension_numbers = #tpu.dot_dimension_numbers<[1], [0], [0], [1], [0, 0, 1, 1], [], []>} : vector<16x512xbf16>, vector<512x1024xbf16>, vector<16x1024xf32> -> vector<16x1024xf32>
    %c0_17 = arith.constant 0 : index
    %c0_18 = arith.constant 0 : index
    %25 = vector.load %arg7[%c0_17, %c0_18] : memref<1x1024xf32, #tpu.memory_space<vmem>>, vector<1x1024xf32>
    %26 = vector.broadcast %25 : vector<1x1024xf32> to vector<16x1024xf32>
    %27 = arith.addf %24, %26 : vector<16x1024xf32>
    %28 = arith.truncf %27 : vector<16x1024xf32> to vector<16x1024xbf16>
    %cst_19 = arith.constant 0.000000e+00 : bf16
    %29 = vector.broadcast %cst_19 : bf16 to vector<16x1024xbf16>
    %30 = arith.cmpf ogt, %28, %29 : vector<16x1024xbf16>
    %cst_20 = arith.constant 2.001950e-01 : bf16
    %31 = vector.broadcast %cst_20 : bf16 to vector<16x1024xbf16>
    %32 = arith.mulf %31, %28 : vector<16x1024xbf16>
    %33 = arith.select %30, %28, %32 : vector<16x1024xi1>, vector<16x1024xbf16>
    %c0_21 = arith.constant 0 : index
    %c0_22 = arith.constant 0 : index
    %34 = vector.load %arg8[%c0_21, %c0_22] : memref<1024x896xbf16, #tpu.memory_space<vmem>>, vector<1024x896xbf16>
    %cst_23 = arith.constant dense<0.000000e+00> : vector<16x896xf32>
    %35 = tpu.matmul %33, %34, %cst_23 {dimension_numbers = #tpu.dot_dimension_numbers<[1], [0], [0], [1], [0, 0, 1, 1], [], []>} : vector<16x1024xbf16>, vector<1024x896xbf16>, vector<16x896xf32> -> vector<16x896xf32>
    %c0_24 = arith.constant 0 : index
    %c0_25 = arith.constant 0 : index
    %36 = vector.load %arg9[%c0_24, %c0_25] : memref<1x896xf32, #tpu.memory_space<vmem>>, vector<1x896xf32>
    %37 = vector.broadcast %36 : vector<1x896xf32> to vector<16x896xf32>
    %38 = arith.addf %35, %37 : vector<16x896xf32>
    %39 = math.tanh %38 : vector<16x896xf32>
    %c0_26 = arith.constant 0 : index
    %c0_27 = arith.constant 0 : index
    %40 = vector.load %arg10[%c0_26, %c0_27] : memref<16x896xf32, #tpu.memory_space<vmem>>, vector<16x896xf32>
    tpu.vector_store %arg10[%c0_26, %c0_27], %39 {strides = array<i32>} : memref<16x896xf32, #tpu.memory_space<vmem>>, vector<16x896xf32>,
    return
  }
  func.func @transform_0(%arg0: i32) -> (i32, i32) {
    %c0_i32 = arith.constant 0 : i32
    %c0_i32_0 = arith.constant 0 : i32
    return %arg0, %c0_i32 : i32, i32
  }
  func.func @transform_1(%arg0: i32) -> (i32, i32) {
    %c0_i32 = arith.constant 0 : i32
    %c0_i32_0 = arith.constant 0 : i32
    %c0_i32_1 = arith.constant 0 : i32
    return %c0_i32, %c0_i32_0 : i32, i32
  }
  func.func @transform_2(%arg0: i32) -> (i32, i32) {
    %c0_i32 = arith.constant 0 : i32
    %c0_i32_0 = arith.constant 0 : i32
    %c0_i32_1 = arith.constant 0 : i32
    return %c0_i32, %c0_i32_0 : i32, i32
  }
  func.func @transform_3(%arg0: i32) -> (i32, i32) {
    %c0_i32 = arith.constant 0 : i32
    %c0_i32_0 = arith.constant 0 : i32
    %c0_i32_1 = arith.constant 0 : i32
    return %c0_i32, %c0_i32_0 : i32, i32
  }
  func.func @transform_4(%arg0: i32) -> (i32, i32) {
    %c0_i32 = arith.constant 0 : i32
    %c0_i32_0 = arith.constant 0 : i32
    %c0_i32_1 = arith.constant 0 : i32
    return %c0_i32, %c0_i32_0 : i32, i32
  }
  func.func @transform_5(%arg0: i32) -> (i32, i32) {
    %c0_i32 = arith.constant 0 : i32
    %c0_i32_0 = arith.constant 0 : i32
    %c0_i32_1 = arith.constant 0 : i32
    return %c0_i32, %c0_i32_0 : i32, i32
  }
  func.func @transform_6(%arg0: i32) -> (i32, i32) {
    %c0_i32 = arith.constant 0 : i32
    %c0_i32_0 = arith.constant 0 : i32
    %c0_i32_1 = arith.constant 0 : i32
    return %c0_i32, %c0_i32_0 : i32, i32
  }
  func.func @transform_7(%arg0: i32) -> (i32, i32) {
    %c0_i32 = arith.constant 0 : i32
    %c0_i32_0 = arith.constant 0 : i32
    %c0_i32_1 = arith.constant 0 : i32
    return %c0_i32, %c0_i32_0 : i32, i32
  }
  func.func @transform_8(%arg0: i32) -> (i32, i32) {
    %c0_i32 = arith.constant 0 : i32
    %c0_i32_0 = arith.constant 0 : i32
    %c0_i32_1 = arith.constant 0 : i32
    return %c0_i32, %c0_i32_0 : i32, i32
  }
  func.func @transform_9(%arg0: i32) -> (i32, i32) {
    %c0_i32 = arith.constant 0 : i32
    %c0_i32_0 = arith.constant 0 : i32
    return %arg0, %c0_i32 : i32, i32
  }
}

module attributes {stable_mosaic.version = 11 : i64} {
  func.func @generator_kernel(%arg0: i32, %arg1: memref<16x128xbf16, #tpu.memory_space<vmem>>, %arg2: memref<128x256xbf16, #tpu.memory_space<vmem>>, %arg3: memref<1x256xf32, #tpu.memory_space<vmem>>, %arg4: memref<256x512xbf16, #tpu.memory_space<vmem>>, %arg5: memref<1x512xf32, #tpu.memory_space<vmem>>, %arg6: memref<512x1024xbf16, #tpu.memory_space<vmem>>, %arg7: memref<1x1024xf32, #tpu.memory_space<vmem>>, %arg8: memref<1024x896xbf16, #tpu.memory_space<vmem>>, %arg9: memref<1x896xf32, #tpu.memory_space<vmem>>, %arg10: memref<16x896xf32, #tpu.memory_space<vmem>>) attributes {dimension_semantics = [#tpu.dimension_semantics<parallel>], iteration_bounds = array<i64: 1>, scalar_prefetch = 0 : i64, scratch_operands = 0 : i64, tpu.core_type = #tpu.core_type<tc>, window_params = [{transform_indices = @transform_0, window_bounds = array<i64: 16, 128>}, {pipeline_mode = #tpu.pipeline_mode<synchronous>, transform_indices = @transform_1, window_bounds = array<i64: 128, 256>}, {pipeline_mode = #tpu.pipeline_mode<synchronous>, transform_indices = @transform_2, window_bounds = array<i64: 1, 256>}, {pipeline_mode = #tpu.pipeline_mode<synchronous>, transform_indices = @transform_3, window_bounds = array<i64: 256, 512>}, {pipeline_mode = #tpu.pipeline_mode<synchronous>, transform_indices = @transform_4, window_bounds = array<i64: 1, 512>}, {pipeline_mode = #tpu.pipeline_mode<synchronous>, transform_indices = @transform_5, window_bounds = array<i64: 512, 1024>}, {pipeline_mode = #tpu.pipeline_mode<synchronous>, transform_indices = @transform_6, window_bounds = array<i64: 1, 1024>}, {pipeline_mode = #tpu.pipeline_mode<synchronous>, transform_indices = @transform_7, window_bounds = array<i64: 1024, 896>}, {pipeline_mode = #tpu.pipeline_mode<synchronous>, transform_indices = @transform_8, window_bounds = array<i64: 1, 896>}, {transform_indices = @transform_9, window_bounds = array<i64: 16, 896>}]} {
    %c0 = arith.constant 0 : index
    %c0_0 = arith.constant 0 : index
    %0 = vector.load %arg1[%c0, %c0_0] : memref<16x128xbf16, #tpu.memory_space<vmem>>, vector<16x128xbf16>
    %c0_1 = arith.constant 0 : index
    %c0_2 = arith.constant 0 : index
    %1 = vector.load %arg2[%c0_1, %c0_2] : memref<128x256xbf16, #tpu.memory_space<vmem>>, vector<128x256xbf16>
    %cst = arith.constant dense<0.000000e+00> : vector<16x256xf32>
    %2 = tpu.matmul %0, %1, %cst {dimension_numbers = #tpu.dot_dimension_numbers<[1], [0], [0], [1], [0, 0, 1, 1], [], []>} : vector<16x128xbf16>, vector<128x256xbf16>, vector<16x256xf32> -> vector<16x256xf32>
    %c0_3 = arith.constant 0 : index
    %c0_4 = arith.constant 0 : index
    %3 = vector.load %arg3[%c0_3, %c0_4] : memref<1x256xf32, #tpu.memory_space<vmem>>, vector<1x256xf32>
    %4 = vector.broadcast %3 : vector<1x256xf32> to vector<16x256xf32>
    %5 = arith.addf %2, %4 : vector<16x256xf32>
    %6 = arith.truncf %5 : vector<16x256xf32> to vector<16x256xbf16>
    %cst_5 = arith.constant 0.000000e+00 : bf16
    %7 = vector.broadcast %cst_5 : bf16 to vector<16x256xbf16>
    %8 = arith.cmpf ogt, %6, %7 : vector<16x256xbf16>
    %cst_6 = arith.constant 2.001950e-01 : bf16
    %9 = vector.broadcast %cst_6 : bf16 to vector<16x256xbf16>
    %10 = arith.mulf %9, %6 : vector<16x256xbf16>
    %11 = arith.select %8, %6, %10 : vector<16x256xi1>, vector<16x256xbf16>
    %c0_7 = arith.constant 0 : index
    %c0_8 = arith.constant 0 : index
    %12 = vector.load %arg4[%c0_7, %c0_8] : memref<256x512xbf16, #tpu.memory_space<vmem>>, vector<256x512xbf16>
    %cst_9 = arith.constant dense<0.000000e+00> : vector<16x512xf32>
    %13 = tpu.matmul %11, %12, %cst_9 {dimension_numbers = #tpu.dot_dimension_numbers<[1], [0], [0], [1], [0, 0, 1, 1], [], []>} : vector<16x256xbf16>, vector<256x512xbf16>, vector<16x512xf32> -> vector<16x512xf32>
    %c0_10 = arith.constant 0 : index
    %c0_11 = arith.constant 0 : index
    %14 = vector.load %arg5[%c0_10, %c0_11] : memref<1x512xf32, #tpu.memory_space<vmem>>, vector<1x512xf32>
    %15 = vector.broadcast %14 : vector<1x512xf32> to vector<16x512xf32>
    %16 = arith.addf %13, %15 : vector<16x512xf32>
    %17 = arith.truncf %16 : vector<16x512xf32> to vector<16x512xbf16>
    %cst_12 = arith.constant 0.000000e+00 : bf16
    %18 = vector.broadcast %cst_12 : bf16 to vector<16x512xbf16>
    %19 = arith.cmpf ogt, %17, %18 : vector<16x512xbf16>
    %cst_13 = arith.constant 2.001950e-01 : bf16
    %20 = vector.broadcast %cst_13 : bf16 to vector<16x512xbf16>
    %21 = arith.mulf %20, %17 : vector<16x512xbf16>
    %22 = arith.select %19, %17, %21 : vector<16x512xi1>, vector<16x512xbf16>
    %c0_14 = arith.constant 0 : index
    %c0_15 = arith.constant 0 : index
    %23 = vector.load %arg6[%c0_14, %c0_15] : memref<512x1024xbf16, #tpu.memory_space<vmem>>, vector<512x1024xbf16>
    %cst_16 = arith.constant dense<0.000000e+00> : vector<16x1024xf32>
    %24 = tpu.matmul %22, %23, %cst_16 {dimension_numbers = #tpu.dot_dimension_numbers<[1], [0], [0], [1], [0, 0, 1, 1], [], []>} : vector<16x512xbf16>, vector<512x1024xbf16>, vector<16x1024xf32> -> vector<16x1024xf32>
    %c0_17 = arith.constant 0 : index
    %c0_18 = arith.constant 0 : index
    %25 = vector.load %arg7[%c0_17, %c0_18] : memref<1x1024xf32, #tpu.memory_space<vmem>>, vector<1x1024xf32>
    %26 = vector.broadcast %25 : vector<1x1024xf32> to vector<16x1024xf32>
    %27 = arith.addf %24, %26 : vector<16x1024xf32>
    %28 = arith.truncf %27 : vector<16x1024xf32> to vector<16x1024xbf16>
    %cst_19 = arith.constant 0.000000e+00 : bf16
    %29 = vector.broadcast %cst_19 : bf16 to vector<16x1024xbf16>
    %30 = arith.cmpf ogt, %28, %29 : vector<16x1024xbf16>
    %cst_20 = arith.constant 2.001950e-01 : bf16
    %31 = vector.broadcast %cst_20 : bf16 to vector<16x1024xbf16>
    %32 = arith.mulf %31, %28 : vector<16x1024xbf16>
    %33 = arith.select %30, %28, %32 : vector<16x1024xi1>, vector<16x1024xbf16>
    %c0_21 = arith.constant 0 : index
    %c0_22 = arith.constant 0 : index
    %34 = vector.load %arg8[%c0_21, %c0_22] : memref<1024x896xbf16, #tpu.memory_space<vmem>>, vector<1024x896xbf16>
    %cst_23 = arith.constant dense<0.000000e+00> : vector<16x896xf32>
    %35 = tpu.matmul %33, %34, %cst_23 {dimension_numbers = #tpu.dot_dimension_numbers<[1], [0], [0], [1], [0, 0, 1, 1], [], []>} : vector<16x1024xbf16>, vector<1024x896xbf16>, vector<16x896xf32> -> vector<16x896xf32>
    %c0_24 = arith.constant 0 : index
    %c0_25 = arith.constant 0 : index
    %36 = vector.load %arg9[%c0_24, %c0_25] : memref<1x896xf32, #tpu.memory_space<vmem>>, vector<1x896xf32>
    %37 = vector.broadcast %36 : vector<1x896xf32> to vector<16x896xf32>
    %38 = arith.addf %35, %37 : vector<16x896xf32>
    %39 = math.tanh %38 : vector<16x896xf32>
    %c0_26 = arith.constant 0 : index
    %c0_27 = arith.constant 0 : index
    %40 = vector.load %arg10[%c0_26, %c0_27] : memref<16x896xf32, #tpu.memory_space<vmem>>, vector<16x896xf32>
    tpu.vector_store %arg10[%c0_26, %c0_27], %39 {strides = array<i32>} : memref<16x896xf32, #tpu.memory_space<vmem>>, vector<16x896xf32>,
    return
  }
  func.func @transform_0(%arg0: i32) -> (i32, i32) {
    %c0_i32 = arith.constant 0 : i32
    %c0_i32_0 = arith.constant 0 : i32
    return %arg0, %c0_i32 : i32, i32
  }
  func.func @transform_1(%arg0: i32) -> (i32, i32) {
    %c0_i32 = arith.constant 0 : i32
    %c0_i32_0 = arith.constant 0 : i32
    %c0_i32_1 = arith.constant 0 : i32
    return %c0_i32, %c0_i32_0 : i32, i32
  }
  func.func @transform_2(%arg0: i32) -> (i32, i32) {
    %c0_i32 = arith.constant 0 : i32
    %c0_i32_0 = arith.constant 0 : i32
    %c0_i32_1 = arith.constant 0 : i32
    return %c0_i32, %c0_i32_0 : i32, i32
  }
  func.func @transform_3(%arg0: i32) -> (i32, i32) {
    %c0_i32 = arith.constant 0 : i32
    %c0_i32_0 = arith.constant 0 : i32
    %c0_i32_1 = arith.constant 0 : i32
    return %c0_i32, %c0_i32_0 : i32, i32
  }
  func.func @transform_4(%arg0: i32) -> (i32, i32) {
    %c0_i32 = arith.constant 0 : i32
    %c0_i32_0 = arith.constant 0 : i32
    %c0_i32_1 = arith.constant 0 : i32
    return %c0_i32, %c0_i32_0 : i32, i32
  }
  func.func @transform_5(%arg0: i32) -> (i32, i32) {
    %c0_i32 = arith.constant 0 : i32
    %c0_i32_0 = arith.constant 0 : i32
    %c0_i32_1 = arith.constant 0 : i32
    return %c0_i32, %c0_i32_0 : i32, i32
  }
  func.func @transform_6(%arg0: i32) -> (i32, i32) {
    %c0_i32 = arith.constant 0 : i32
    %c0_i32_0 = arith.constant 0 : i32
    %c0_i32_1 = arith.constant 0 : i32
    return %c0_i32, %c0_i32_0 : i32, i32
  }
  func.func @transform_7(%arg0: i32) -> (i32, i32) {
    %c0_i32 = arith.constant 0 : i32
    %c0_i32_0 = arith.constant 0 : i32
    %c0_i32_1 = arith.constant 0 : i32
    return %c0_i32, %c0_i32_0 : i32, i32
  }
  func.func @transform_8(%arg0: i32) -> (i32, i32) {
    %c0_i32 = arith.constant 0 : i32
    %c0_i32_0 = arith.constant 0 : i32
    %c0_i32_1 = arith.constant 0 : i32
    return %c0_i32, %c0_i32_0 : i32, i32
  }
  func.func @transform_9(%arg0: i32) -> (i32, i32) {
    %c0_i32 = arith.constant 0 : i32
    %c0_i32_0 = arith.constant 0 : i32
    return %arg0, %c0_i32 : i32, i32
  }
}

</mosaic_0001>

<llo_original>
// kernel: tpu_custom_call.1
$region0: #{tpu_custom_call.1}
  #allocation0 [shape = 'u32[]', space=smem, size = 0x4, offset = 0x4, fixed_abs, tag = 'smem constant byte address 0x4 - core index']
  #allocation1 [shape = 'u32[144,128]{1,0:T(1,128)}', space=vmem, size = 0x12000, scoped, tag = 'internal scratch']
  %s0 = inlined_call_operand.hbm [shape: bf16[16,128], index: 0, kind: input, shape index: {}]
  %s1 = inlined_call_operand.hbm [shape: bf16[128,256], index: 1, kind: input, shape index: {}]
  %s2 = inlined_call_operand.hbm [shape: f32[1,256], index: 2, kind: input, shape index: {}]
  %s3 = inlined_call_operand.hbm [shape: bf16[256,512], index: 3, kind: input, shape index: {}]
  %s4 = inlined_call_operand.hbm [shape: f32[1,512], index: 4, kind: input, shape index: {}]
  %s5 = inlined_call_operand.hbm [shape: bf16[512,1024], index: 5, kind: input, shape index: {}]
  %s6 = inlined_call_operand.hbm [shape: f32[1,1024], index: 6, kind: input, shape index: {}]
  %s7 = inlined_call_operand.hbm [shape: bf16[1024,896], index: 7, kind: input, shape index: {}]
  %s8 = inlined_call_operand.hbm [shape: f32[1,896], index: 8, kind: input, shape index: {}]
  %s9 = inlined_call_operand.hbm [shape: f32[16,896], index: 9, kind: output, shape index: {}]
  %s10 = sld [smem:[#allocation0]]
  $region82: #{tpu_custom_call.1} parent=0
    _
  %s12 = ssub.s32 1, %s10
  %s13 = scalar_select 0, %s12, %s10
  $region1: #{tpu_custom_call.1} parent=0
    #allocation2 [shape = 'u8[4096]{0}', space=vmem, size = 0x1000, scoped, tag = 'input window, operand 0, single buffered']
    #allocation3 [shape = 's32[1]{0}', space=sflag, size = 0x4, scoped, tag = 'scoped memory for tpu_custom_call.1']
    #allocation4 [shape = 's32[1]{0}', space=sflag, size = 0x4, scoped, tag = 'scoped memory for tpu_custom_call.1']
    #allocation5 [shape = 'u8[65536]{0}', space=vmem, size = 0x10000, scoped, tag = 'input window, operand 1, single buffered']
    #allocation6 [shape = 's32[1]{0}', space=sflag, size = 0x4, scoped, tag = 'scoped memory for tpu_custom_call.1']
    #allocation7 [shape = 'u8[1024]{0}', space=vmem, size = 0x400, scoped, tag = 'input window, operand 2, single buffered']
    #allocation8 [shape = 'u8[262144]{0}', space=vmem, size = 0x40000, scoped, tag = 'input window, operand 3, single buffered']
    #allocation9 [shape = 's32[1]{0}', space=sflag, size = 0x4, scoped, tag = 'scoped memory for tpu_custom_call.1']
    #allocation10 [shape = 'u8[2048]{0}', space=vmem, size = 0x800, scoped, tag = 'input window, operand 4, single buffered']
    #allocation11 [shape = 'u8[1048576]{0}', space=vmem, size = 0x100000, scoped, tag = 'input window, operand 5, single buffered']
    #allocation12 [shape = 's32[1]{0}', space=sflag, size = 0x4, scoped, tag = 'scoped memory for tpu_custom_call.1']
    #allocation13 [shape = 'u8[4096]{0}', space=vmem, size = 0x1000, scoped, tag = 'input window, operand 6, single buffered']
    #allocation14 [shape = 'u8[1835008]{0}', space=vmem, size = 0x1c0000, scoped, tag = 'input window, operand 7, single buffered']
    #allocation15 [shape = 's32[1]{0}', space=sflag, size = 0x4, scoped, tag = 'scoped memory for tpu_custom_call.1']
    #allocation16 [shape = 'u8[3584]{0}', space=vmem, size = 0x1000, scoped, tag = 'input window, operand 8, single buffered']
    #allocation17 [shape = 'u8[57344]{0}', space=vmem, size = 0xe000, scoped, tag = 'output window, operand 0, single buffered']
    %14 = vsyncpa [#allocation3], 0
    %15 = vsyncpa [#allocation6], 0
    %16 = vsyncpa [#allocation9], 0
    %17 = vsyncpa [#allocation12], 0
    %18 = vsyncpa [#allocation15], 0
    %19 = vsyncpa [#allocation4], 0
    // Predicated region
    $region2: #{tpu_custom_call.1} parent=1 // pred_check
      _
    $region3: #{tpu_custom_call.1} parent=1 // pred_check_branch
      %21 = sbr.rel (0) target = $region5
    $region4: #{tpu_custom_call.1} parent=1 // pred_region
      %s23 = ssub.s32 128, 128
      %24 = vsyncadd [#allocation3], %s23
      %s25 = sshll.u32 [#allocation2], 4
      %s26 = int_to_ptr.vmem [resolvable:$true] %s25
      %31 = dma.hbm_to_vmem [thread:$0]  %s0, 128, %s26, [#allocation3], 64, 64, 4
    $region5: #{tpu_custom_call.1} parent=1 // pred_fallthru
      _
    // Predicated region
    $region6: #{tpu_custom_call.1} parent=1 // pred_check
      _
    $region7: #{tpu_custom_call.1} parent=1 // pred_check_branch
      %33 = sbr.rel (0) target = $region9
    $region8: #{tpu_custom_call.1} parent=1 // pred_region
      %s35 = ssub.s32 2048, 2048
      %36 = vsyncadd [#allocation6], %s35
      %s37 = sshll.u32 [#allocation5], 4
      %s38 = int_to_ptr.vmem [resolvable:$true] %s37
      %43 = dma.hbm_to_vmem [thread:$0]  %s1, 2048, %s38, [#allocation6], 128, 128, 8
    $region9: #{tpu_custom_call.1} parent=1 // pred_fallthru
      _
    // Predicated region
    $region10: #{tpu_custom_call.1} parent=1 // pred_check
      _
    $region11: #{tpu_custom_call.1} parent=1 // pred_check_branch
      %45 = sbr.rel (0) target = $region13
    $region12: #{tpu_custom_call.1} parent=1 // pred_region
      %s47 = ssub.s32 32, 32
      %48 = vsyncadd [#allocation6], %s47
      %s50 = sshll.u32 [#allocation7], 4
      %s51 = int_to_ptr.vmem [resolvable:$true] %s50
      %53 = dma.hbm_to_vmem [thread:$0]  %s2, 32, %s51, [#allocation6]
    $region13: #{tpu_custom_call.1} parent=1 // pred_fallthru
      _
    // Predicated region
    $region14: #{tpu_custom_call.1} parent=1 // pred_check
      _
    $region15: #{tpu_custom_call.1} parent=1 // pred_check_branch
      %55 = sbr.rel (0) target = $region17
    $region16: #{tpu_custom_call.1} parent=1 // pred_region
      %s57 = ssub.s32 8192, 8192
      %58 = vsyncadd [#allocation9], %s57
      %s59 = sshll.u32 [#allocation8], 4
      %s60 = int_to_ptr.vmem [resolvable:$true] %s59
      %65 = dma.hbm_to_vmem [thread:$0]  %s3, 8192, %s60, [#allocation9], 256, 256, 16
    $region17: #{tpu_custom_call.1} parent=1 // pred_fallthru
      _
    // Predicated region
    $region18: #{tpu_custom_call.1} parent=1 // pred_check
      _
    $region19: #{tpu_custom_call.1} parent=1 // pred_check_branch
      %67 = sbr.rel (0) target = $region21
    $region20: #{tpu_custom_call.1} parent=1 // pred_region
      %s69 = ssub.s32 64, 64
      %70 = vsyncadd [#allocation9], %s69
      %s72 = sshll.u32 [#allocation10], 4
      %s73 = int_to_ptr.vmem [resolvable:$true] %s72
      %75 = dma.hbm_to_vmem [thread:$0]  %s4, 64, %s73, [#allocation9]
    $region21: #{tpu_custom_call.1} parent=1 // pred_fallthru
      _
    // Predicated region
    $region22: #{tpu_custom_call.1} parent=1 // pred_check
      _
    $region23: #{tpu_custom_call.1} parent=1 // pred_check_branch
      %77 = sbr.rel (0) target = $region25
    $region24: #{tpu_custom_call.1} parent=1 // pred_region
      %s79 = ssub.s32 32768, 32768
      %80 = vsyncadd [#allocation12], %s79
      %s81 = sshll.u32 [#allocation11], 4
      %s82 = int_to_ptr.vmem [resolvable:$true] %s81
      %87 = dma.hbm_to_vmem [thread:$0]  %s5, 32768, %s82, [#allocation12], 512, 512, 32
    $region25: #{tpu_custom_call.1} parent=1 // pred_fallthru
      _
    // Predicated region
    $region26: #{tpu_custom_call.1} parent=1 // pred_check
      _
    $region27: #{tpu_custom_call.1} parent=1 // pred_check_branch
      %89 = sbr.rel (0) target = $region29
    $region28: #{tpu_custom_call.1} parent=1 // pred_region
      %s91 = ssub.s32 128, 128
      %92 = vsyncadd [#allocation12], %s91
      %s94 = sshll.u32 [#allocation13], 4
      %s95 = int_to_ptr.vmem [resolvable:$true] %s94
      %97 = dma.hbm_to_vmem [thread:$0]  %s6, 128, %s95, [#allocation12]
    $region29: #{tpu_custom_call.1} parent=1 // pred_fallthru
      _
    // Predicated region
    $region30: #{tpu_custom_call.1} parent=1 // pred_check
      _
    $region31: #{tpu_custom_call.1} parent=1 // pred_check_branch
      %99 = sbr.rel (0) target = $region33
    $region32: #{tpu_custom_call.1} parent=1 // pred_region
      %s101 = ssub.s32 57344, 57344
      %102 = vsyncadd [#allocation15], %s101
      %s103 = sshll.u32 [#allocation14], 4
      %s104 = int_to_ptr.vmem [resolvable:$true] %s103
      %109 = dma.hbm_to_vmem [thread:$0]  %s7, 57344, %s104, [#allocation15], 448, 448, 28
    $region33: #{tpu_custom_call.1} parent=1 // pred_fallthru
      _
    // Predicated region
    $region34: #{tpu_custom_call.1} parent=1 // pred_check
      _
    $region35: #{tpu_custom_call.1} parent=1 // pred_check_branch
      %111 = sbr.rel (0) target = $region37
    $region36: #{tpu_custom_call.1} parent=1 // pred_region
      %s113 = ssub.s32 112, 112
      %114 = vsyncadd [#allocation15], %s113
      %s116 = sshll.u32 [#allocation16], 4
      %s117 = int_to_ptr.vmem [resolvable:$true] %s116
      %119 = dma.hbm_to_vmem [thread:$0]  %s8, 112, %s117, [#allocation15]
    $region37: #{tpu_custom_call.1} parent=1 // pred_fallthru
      _
    // Predicated region
    $region38: #{tpu_custom_call.1} parent=1 // pred_check
      _
    $region39: #{tpu_custom_call.1} parent=1 // pred_check_branch
      %121 = sbr.rel (0) target = $region41
    $region40: #{tpu_custom_call.1} parent=1 // pred_region
      %122 = dma.done [#allocation3], 128
    $region41: #{tpu_custom_call.1} parent=1 // pred_fallthru
      _
    // Predicated region
    $region42: #{tpu_custom_call.1} parent=1 // pred_check
      _
    $region43: #{tpu_custom_call.1} parent=1 // pred_check_branch
      %124 = sbr.rel (0) target = $region45
    $region44: #{tpu_custom_call.1} parent=1 // pred_region
      %125 = dma.done [#allocation6], 2048
    $region45: #{tpu_custom_call.1} parent=1 // pred_fallthru
      _
    // Predicated region
    $region46: #{tpu_custom_call.1} parent=1 // pred_check
      _
    $region47: #{tpu_custom_call.1} parent=1 // pred_check_branch
      %127 = sbr.rel (0) target = $region49
    $region48: #{tpu_custom_call.1} parent=1 // pred_region
      %128 = dma.done [#allocation6], 32
    $region49: #{tpu_custom_call.1} parent=1 // pred_fallthru
      _
    // Predicated region
    $region50: #{tpu_custom_call.1} parent=1 // pred_check
      _
    $region51: #{tpu_custom_call.1} parent=1 // pred_check_branch
      %130 = sbr.rel (0) target = $region53
    $region52: #{tpu_custom_call.1} parent=1 // pred_region
      %131 = dma.done [#allocation9], 8192
    $region53: #{tpu_custom_call.1} parent=1 // pred_fallthru
      _
    // Predicated region
    $region54: #{tpu_custom_call.1} parent=1 // pred_check
      _
    $region55: #{tpu_custom_call.1} parent=1 // pred_check_branch
      %133 = sbr.rel (0) target = $region57
    $region56: #{tpu_custom_call.1} parent=1 // pred_region
      %134 = dma.done [#allocation9], 64
    $region57: #{tpu_custom_call.1} parent=1 // pred_fallthru
      _
    // Predicated region
    $region58: #{tpu_custom_call.1} parent=1 // pred_check
      _
    $region59: #{tpu_custom_call.1} parent=1 // pred_check_branch
      %136 = sbr.rel (0) target = $region61
    $region60: #{tpu_custom_call.1} parent=1 // pred_region
      %137 = dma.done [#allocation12], 32768
    $region61: #{tpu_custom_call.1} parent=1 // pred_fallthru
      _
    // Predicated region
    $region62: #{tpu_custom_call.1} parent=1 // pred_check
      _
    $region63: #{tpu_custom_call.1} parent=1 // pred_check_branch
      %139 = sbr.rel (0) target = $region65
    $region64: #{tpu_custom_call.1} parent=1 // pred_region
      %140 = dma.done [#allocation12], 128
    $region65: #{tpu_custom_call.1} parent=1 // pred_fallthru
      _
    // Predicated region
    $region66: #{tpu_custom_call.1} parent=1 // pred_check
      _
    $region67: #{tpu_custom_call.1} parent=1 // pred_check_branch
      %142 = sbr.rel (0) target = $region69
    $region68: #{tpu_custom_call.1} parent=1 // pred_region
      %143 = dma.done [#allocation15], 57344
    $region69: #{tpu_custom_call.1} parent=1 // pred_fallthru
      _
    // Predicated region
    $region70: #{tpu_custom_call.1} parent=1 // pred_check
      _
    $region71: #{tpu_custom_call.1} parent=1 // pred_check_branch
      %145 = sbr.rel (0) target = $region73
    $region72: #{tpu_custom_call.1} parent=1 // pred_region
      %146 = dma.done [#allocation15], 112
    $region73: #{tpu_custom_call.1} parent=1 // pred_fallthru
      _
    %v149 = vld [vmem:[#allocation2] sm:$0xf]
    %v150 = vld [vmem:[#allocation2 + $0x4] sm:$0xf]
    %v151 = vld [vmem:[#allocation5] sm:$0xff]
    %v152 = vld [vmem:[#allocation5 + $0x8] sm:$0xff]
    %v153 = vld [vmem:[#allocation5 + $0x10] sm:$0xff]
    %v154 = vld [vmem:[#allocation5 + $0x18] sm:$0xff]
    %v155 = vld [vmem:[#allocation5 + $0x20] sm:$0xff]
    %v156 = vld [vmem:[#allocation5 + $0x28] sm:$0xff]
    %v157 = vld [vmem:[#allocation5 + $0x30] sm:$0xff]
    %v158 = vld [vmem:[#allocation5 + $0x38] sm:$0xff]
    %v159 = vld [vmem:[#allocation5 + $0x40] sm:$0xff]
    %v160 = vld [vmem:[#allocation5 + $0x48] sm:$0xff]
    %v161 = vld [vmem:[#allocation5 + $0x50] sm:$0xff]
    %v162 = vld [vmem:[#allocation5 + $0x58] sm:$0xff]
    %v163 = vld [vmem:[#allocation5 + $0x60] sm:$0xff]
    %v164 = vld [vmem:[#allocation5 + $0x68] sm:$0xff]
    %v165 = vld [vmem:[#allocation5 + $0x70] sm:$0xff]
    %v166 = vld [vmem:[#allocation5 + $0x78] sm:$0xff]
    %v167 = vld [vmem:[#allocation7] sm:$0x3]
    %v169 = vlaneseq
    %v170 = vshrl.u32 %v169, 7
    %v171 = vsub.s32 0, %v170
    %v172 = vrot.slane %v167, %v171
    %v173 = vlaneseq
    %v174 = vshrl.u32 %v173, 7
    %v175 = vsub.s32 1, %v174
    %v176 = vrot.slane %v167, %v175
    %v181 = vunpack.c.l.b16 %v149
    %v182 = vunpack.c.l.b16 %v150
    %v183 = vpack.c.b16 %v182, %v181
    %v201 = vunpack.c.l.b16 %v151
    %v202 = vunpack.c.h.b16 %v151
    %v203 = vunpack.c.l.b16 %v152
    %v204 = vunpack.c.h.b16 %v152
    %v205 = vunpack.c.l.b16 %v153
    %v206 = vunpack.c.h.b16 %v153
    %v207 = vunpack.c.l.b16 %v154
    %v208 = vunpack.c.h.b16 %v154
    %v209 = vunpack.c.l.b16 %v155
    %v210 = vunpack.c.h.b16 %v155
    %v211 = vunpack.c.l.b16 %v156
    %v212 = vunpack.c.h.b16 %v156
    %v213 = vunpack.c.l.b16 %v157
    %v214 = vunpack.c.h.b16 %v157
    %v215 = vunpack.c.l.b16 %v158
    %v216 = vunpack.c.h.b16 %v158
    %v217 = vunpack.c.l.b16 %v159
    %v218 = vunpack.c.h.b16 %v159
    %v219 = vunpack.c.l.b16 %v160
    %v220 = vunpack.c.h.b16 %v160
    %v221 = vunpack.c.l.b16 %v161
    %v222 = vunpack.c.h.b16 %v161
    %v223 = vunpack.c.l.b16 %v162
    %v224 = vunpack.c.h.b16 %v162
    %v225 = vunpack.c.l.b16 %v163
    %v226 = vunpack.c.h.b16 %v163
    %v227 = vunpack.c.l.b16 %v164
    %v228 = vunpack.c.h.b16 %v164
    %v229 = vunpack.c.l.b16 %v165
    %v230 = vunpack.c.h.b16 %v165
    %v231 = vunpack.c.l.b16 %v166
    %v232 = vunpack.c.h.b16 %v166
    %v233 = vpack.c.b16 %v203, %v201
    %v234 = vpack.c.b16 %v204, %v202
    %v235 = vpack.c.b16 %v207, %v205
    %v236 = vpack.c.b16 %v208, %v206
    %v237 = vpack.c.b16 %v211, %v209
    %v238 = vpack.c.b16 %v212, %v210
    %v239 = vpack.c.b16 %v215, %v213
    %v240 = vpack.c.b16 %v216, %v214
    %v241 = vpack.c.b16 %v219, %v217
    %v242 = vpack.c.b16 %v220, %v218
    %v243 = vpack.c.b16 %v223, %v221
    %v244 = vpack.c.b16 %v224, %v222
    %v245 = vpack.c.b16 %v227, %v225
    %v246 = vpack.c.b16 %v228, %v226
    %v247 = vpack.c.b16 %v231, %v229
    %v248 = vpack.c.b16 %v232, %v230
    %265 = vmatprep.subr.bf16.mxu0 %v234
    %266 = vmatpush1.bf16.msra.mxu0 %v233
    %267 = vmatprep.subr.bf16.mxu0 %v236
    %268 = vmatpush1.bf16.msra.mxu0 %v235
    %269 = vmatprep.subr.bf16.mxu0 %v238
    %270 = vmatpush1.bf16.msra.mxu0 %v237
    %271 = vmatprep.subr.bf16.mxu0 %v240
    %272 = vmatpush1.bf16.msra.mxu0 %v239
    %273 = vmatprep.subr.bf16.mxu0 %v242
    %274 = vmatpush1.bf16.msra.mxu0 %v241
    %275 = vmatprep.subr.bf16.mxu0 %v244
    %276 = vmatpush1.bf16.msra.mxu0 %v243
    %277 = vmatprep.subr.bf16.mxu0 %v246
    %278 = vmatpush1.bf16.msra.mxu0 %v245
    %279 = vmatprep.subr.bf16.mxu0 %v248
    %280 = vmatpush1.bf16.msra.mxu0 %v247
    %281 = vmatprep.subr.bf16.mxu0 0
    %282 = vmatpush1.bf16.msra.mxu0 0
    %283 = vmatprep.subr.bf16.mxu0 0
    %284 = vmatpush1.bf16.msra.mxu0 0
    %285 = vmatprep.subr.bf16.mxu0 0
    %286 = vmatpush1.bf16.msra.mxu0 0
    %287 = vmatprep.subr.bf16.mxu0 0
    %288 = vmatpush1.bf16.msra.mxu0 0
    %289 = vmatprep.subr.bf16.mxu0 0
    %290 = vmatpush1.bf16.msra.mxu0 0
    %291 = vmatprep.subr.bf16.mxu0 0
    %292 = vmatpush1.bf16.msra.mxu0 0
    %293 = vmatprep.subr.bf16.mxu0 0
    %294 = vmatpush1.bf16.msra.mxu0 0
    %295 = vmatprep.subr.bf16.mxu0 0
    %296 = vmatpush1.bf16.msra.mxu0 0
    %297 = vmatprep.mubr.bf16.mxu0 0
    %298 = vmatmul.mubr.bf16.gmra.mrb[0].mxu0 %v183
    %v299 = vpop.f32.mrb[0].mxu0
    %v300 = vadd.f32 %v172, %v299
    %v301 = vpop.f32.mrb[0].mxu0
    %v302 = vadd.f32 %v176, %v301
    %v303 = vpop.f32.mrb[0].mxu0
    %v304 = vadd.f32 %v172, %v303
    %v305 = vpop.f32.mrb[0].mxu0
    %v306 = vadd.f32 %v176, %v305
    %307 = vdwg.mxu0
    %v308 = vpack.c.bf16 %v304, %v300
    %v309 = vpack.c.bf16 %v306, %v302
    %vm310 = vcmp.gt.bf16.partialorder %v308, 0
    %vm311 = vcmp.gt.bf16.partialorder %v309, 0
    %v312 = vmul.bf16 %v308, 1045249613
    %v313 = vmul.bf16 %v309, 1045249613
    %v314 = vsel %vm310, %v308, %v312
    %v315 = vsel %vm311, %v309, %v313
    %v316 = vld [vmem:[#allocation8] sm:$0xff]
    %v317 = vld [vmem:[#allocation8 + $0x8] sm:$0xff]
    %v318 = vld [vmem:[#allocation8 + $0x10] sm:$0xff]
    %v319 = vld [vmem:[#allocation8 + $0x18] sm:$0xff]
    %v320 = vld [vmem:[#allocation8 + $0x20] sm:$0xff]
    %v321 = vld [vmem:[#allocation8 + $0x28] sm:$0xff]
    %v322 = vld [vmem:[#allocation8 + $0x30] sm:$0xff]
    %v323 = vld [vmem:[#allocation8 + $0x38] sm:$0xff]
    %v324 = vld [vmem:[#allocation8 + $0x40] sm:$0xff]
    %v325 = vld [vmem:[#allocation8 + $0x48] sm:$0xff]
    %v326 = vld [vmem:[#allocation8 + $0x50] sm:$0xff]
    %v327 = vld [vmem:[#allocation8 + $0x58] sm:$0xff]
    %v328 = vld [vmem:[#allocation8 + $0x60] sm:$0xff]
    %v329 = vld [vmem:[#allocation8 + $0x68] sm:$0xff]
    %v330 = vld [vmem:[#allocation8 + $0x70] sm:$0xff]
    %v331 = vld [vmem:[#allocation8 + $0x78] sm:$0xff]
    %v332 = vld [vmem:[#allocation8 + $0x80] sm:$0xff]
    %v333 = vld [vmem:[#allocation8 + $0x88] sm:$0xff]
    %v334 = vld [vmem:[#allocation8 + $0x90] sm:$0xff]
    %v335 = vld [vmem:[#allocation8 + $0x98] sm:$0xff]
    %v336 = vld [vmem:[#allocation8 + $0xa0] sm:$0xff]
    %v337 = vld [vmem:[#allocation8 + $0xa8] sm:$0xff]
    %v338 = vld [vmem:[#allocation8 + $0xb0] sm:$0xff]
    %v339 = vld [vmem:[#allocation8 + $0xb8] sm:$0xff]
    %v340 = vld [vmem:[#allocation8 + $0xc0] sm:$0xff]
    %v341 = vld [vmem:[#allocation8 + $0xc8] sm:$0xff]
    %v342 = vld [vmem:[#allocation8 + $0xd0] sm:$0xff]
    %v343 = vld [vmem:[#allocation8 + $0xd8] sm:$0xff]
    %v344 = vld [vmem:[#allocation8 + $0xe0] sm:$0xff]
    %v345 = vld [vmem:[#allocation8 + $0xe8] sm:$0xff]
    %v346 = vld [vmem:[#allocation8 + $0xf0] sm:$0xff]
    %v347 = vld [vmem:[#allocation8 + $0xf8] sm:$0xff]
    %v348 = vld [vmem:[#allocation8 + $0x100] sm:$0xff]
    %v349 = vld [vmem:[#allocation8 + $0x108] sm:$0xff]
    %v350 = vld [vmem:[#allocation8 + $0x110] sm:$0xff]
    %v351 = vld [vmem:[#allocation8 + $0x118] sm:$0xff]
    %v352 = vld [vmem:[#allocation8 + $0x120] sm:$0xff]
    %v353 = vld [vmem:[#allocation8 + $0x128] sm:$0xff]
    %v354 = vld [vmem:[#allocation8 + $0x130] sm:$0xff]
    %v355 = vld [vmem:[#allocation8 + $0x138] sm:$0xff]
    %v356 = vld [vmem:[#allocation8 + $0x140] sm:$0xff]
    %v357 = vld [vmem:[#allocation8 + $0x148] sm:$0xff]
    %v358 = vld [vmem:[#allocation8 + $0x150] sm:$0xff]
    %v359 = vld [vmem:[#allocation8 + $0x158] sm:$0xff]
    %v360 = vld [vmem:[#allocation8 + $0x160] sm:$0xff]
    %v361 = vld [vmem:[#allocation8 + $0x168] sm:$0xff]
    %v362 = vld [vmem:[#allocation8 + $0x170] sm:$0xff]
    %v363 = vld [vmem:[#allocation8 + $0x178] sm:$0xff]
    %v364 = vld [vmem:[#allocation8 + $0x180] sm:$0xff]
    %v365 = vld [vmem:[#allocation8 + $0x188] sm:$0xff]
    %v366 = vld [vmem:[#allocation8 + $0x190] sm:$0xff]
    %v367 = vld [vmem:[#allocation8 + $0x198] sm:$0xff]
    %v368 = vld [vmem:[#allocation8 + $0x1a0] sm:$0xff]
    %v369 = vld [vmem:[#allocation8 + $0x1a8] sm:$0xff]
    %v370 = vld [vmem:[#allocation8 + $0x1b0] sm:$0xff]
    %v371 = vld [vmem:[#allocation8 + $0x1b8] sm:$0xff]
    %v372 = vld [vmem:[#allocation8 + $0x1c0] sm:$0xff]
    %v373 = vld [vmem:[#allocation8 + $0x1c8] sm:$0xff]
    %v374 = vld [vmem:[#allocation8 + $0x1d0] sm:$0xff]
    %v375 = vld [vmem:[#allocation8 + $0x1d8] sm:$0xff]
    %v376 = vld [vmem:[#allocation8 + $0x1e0] sm:$0xff]
    %v377 = vld [vmem:[#allocation8 + $0x1e8] sm:$0xff]
    %v378 = vld [vmem:[#allocation8 + $0x1f0] sm:$0xff]
    %v379 = vld [vmem:[#allocation8 + $0x1f8] sm:$0xff]
    %v380 = vld [vmem:[#allocation10] sm:$0xf]
    %v382 = vlaneseq
    %v383 = vshrl.u32 %v382, 7
    %v384 = vsub.s32 0, %v383
    %v385 = vrot.slane %v380, %v384
    %v386 = vlaneseq
    %v387 = vshrl.u32 %v386, 7
    %v388 = vsub.s32 1, %v387
    %v389 = vrot.slane %v380, %v388
    %v390 = vlaneseq
    %v391 = vshrl.u32 %v390, 7
    %v392 = vsub.s32 2, %v391
    %v393 = vrot.slane %v380, %v392
    %v394 = vlaneseq
    %v395 = vshrl.u32 %v394, 7
    %v396 = vsub.s32 3, %v395
    %v397 = vrot.slane %v380, %v396
    %v466 = vunpack.c.l.b16 %v316
    %v467 = vunpack.c.h.b16 %v316
    %v468 = vunpack.c.l.b16 %v317
    %v469 = vunpack.c.h.b16 %v317
    %v470 = vunpack.c.l.b16 %v318
    %v471 = vunpack.c.h.b16 %v318
    %v472 = vunpack.c.l.b16 %v319
    %v473 = vunpack.c.h.b16 %v319
    %v474 = vunpack.c.l.b16 %v320
    %v475 = vunpack.c.h.b16 %v320
    %v476 = vunpack.c.l.b16 %v321
    %v477 = vunpack.c.h.b16 %v321
    %v478 = vunpack.c.l.b16 %v322
    %v479 = vunpack.c.h.b16 %v322
    %v480 = vunpack.c.l.b16 %v323
    %v481 = vunpack.c.h.b16 %v323
    %v482 = vunpack.c.l.b16 %v324
    %v483 = vunpack.c.h.b16 %v324
    %v484 = vunpack.c.l.b16 %v325
    %v485 = vunpack.c.h.b16 %v325
    %v486 = vunpack.c.l.b16 %v326
    %v487 = vunpack.c.h.b16 %v326
    %v488 = vunpack.c.l.b16 %v327
    %v489 = vunpack.c.h.b16 %v327
    %v490 = vunpack.c.l.b16 %v328
    %v491 = vunpack.c.h.b16 %v328
    %v492 = vunpack.c.l.b16 %v329
    %v493 = vunpack.c.h.b16 %v329
    %v494 = vunpack.c.l.b16 %v330
    %v495 = vunpack.c.h.b16 %v330
    %v496 = vunpack.c.l.b16 %v331
    %v497 = vunpack.c.h.b16 %v331
    %v498 = vunpack.c.l.b16 %v332
    %v499 = vunpack.c.h.b16 %v332
    %v500 = vunpack.c.l.b16 %v333
    %v501 = vunpack.c.h.b16 %v333
    %v502 = vunpack.c.l.b16 %v334
    %v503 = vunpack.c.h.b16 %v334
    %v504 = vunpack.c.l.b16 %v335
    %v505 = vunpack.c.h.b16 %v335
    %v506 = vunpack.c.l.b16 %v336
    %v507 = vunpack.c.h.b16 %v336
    %v508 = vunpack.c.l.b16 %v337
    %v509 = vunpack.c.h.b16 %v337
    %v510 = vunpack.c.l.b16 %v338
    %v511 = vunpack.c.h.b16 %v338
    %v512 = vunpack.c.l.b16 %v339
    %v513 = vunpack.c.h.b16 %v339
    %v514 = vunpack.c.l.b16 %v340
    %v515 = vunpack.c.h.b16 %v340
    %v516 = vunpack.c.l.b16 %v341
    %v517 = vunpack.c.h.b16 %v341
    %v518 = vunpack.c.l.b16 %v342
    %v519 = vunpack.c.h.b16 %v342
    %v520 = vunpack.c.l.b16 %v343
    %v521 = vunpack.c.h.b16 %v343
    %v522 = vunpack.c.l.b16 %v344
    %v523 = vunpack.c.h.b16 %v344
    %v524 = vunpack.c.l.b16 %v345
    %v525 = vunpack.c.h.b16 %v345
    %v526 = vunpack.c.l.b16 %v346
    %v527 = vunpack.c.h.b16 %v346
    %v528 = vunpack.c.l.b16 %v347
    %v529 = vunpack.c.h.b16 %v347
    %v530 = vunpack.c.l.b16 %v348
    %v531 = vunpack.c.h.b16 %v348
    %v532 = vunpack.c.l.b16 %v349
    %v533 = vunpack.c.h.b16 %v349
    %v534 = vunpack.c.l.b16 %v350
    %v535 = vunpack.c.h.b16 %v350
    %v536 = vunpack.c.l.b16 %v351
    %v537 = vunpack.c.h.b16 %v351
    %v538 = vunpack.c.l.b16 %v352
    %v539 = vunpack.c.h.b16 %v352
    %v540 = vunpack.c.l.b16 %v353
    %v541 = vunpack.c.h.b16 %v353
    %v542 = vunpack.c.l.b16 %v354
    %v543 = vunpack.c.h.b16 %v354
    %v544 = vunpack.c.l.b16 %v355
    %v545 = vunpack.c.h.b16 %v355
    %v546 = vunpack.c.l.b16 %v356
    %v547 = vunpack.c.h.b16 %v356
    %v548 = vunpack.c.l.b16 %v357
    %v549 = vunpack.c.h.b16 %v357
    %v550 = vunpack.c.l.b16 %v358
    %v551 = vunpack.c.h.b16 %v358
    %v552 = vunpack.c.l.b16 %v359
    %v553 = vunpack.c.h.b16 %v359
    %v554 = vunpack.c.l.b16 %v360
    %v555 = vunpack.c.h.b16 %v360
    %v556 = vunpack.c.l.b16 %v361
    %v557 = vunpack.c.h.b16 %v361
    %v558 = vunpack.c.l.b16 %v362
    %v559 = vunpack.c.h.b16 %v362
    %v560 = vunpack.c.l.b16 %v363
    %v561 = vunpack.c.h.b16 %v363
    %v562 = vunpack.c.l.b16 %v364
    %v563 = vunpack.c.h.b16 %v364
    %v564 = vunpack.c.l.b16 %v365
    %v565 = vunpack.c.h.b16 %v365
    %v566 = vunpack.c.l.b16 %v366
    %v567 = vunpack.c.h.b16 %v366
    %v568 = vunpack.c.l.b16 %v367
    %v569 = vunpack.c.h.b16 %v367
    %v570 = vunpack.c.l.b16 %v368
    %v571 = vunpack.c.h.b16 %v368
    %v572 = vunpack.c.l.b16 %v369
    %v573 = vunpack.c.h.b16 %v369
    %v574 = vunpack.c.l.b16 %v370
    %v575 = vunpack.c.h.b16 %v370
    %v576 = vunpack.c.l.b16 %v371
    %v577 = vunpack.c.h.b16 %v371
    %v578 = vunpack.c.l.b16 %v372
    %v579 = vunpack.c.h.b16 %v372
    %v580 = vunpack.c.l.b16 %v373
    %v581 = vunpack.c.h.b16 %v373
    %v582 = vunpack.c.l.b16 %v374
    %v583 = vunpack.c.h.b16 %v374
    %v584 = vunpack.c.l.b16 %v375
    %v585 = vunpack.c.h.b16 %v375
    %v586 = vunpack.c.l.b16 %v376
    %v587 = vunpack.c.h.b16 %v376
    %v588 = vunpack.c.l.b16 %v377
    %v589 = vunpack.c.h.b16 %v377
    %v590 = vunpack.c.l.b16 %v378
    %v591 = vunpack.c.h.b16 %v378
    %v592 = vunpack.c.l.b16 %v379
    %v593 = vunpack.c.h.b16 %v379
    %v594 = vpack.c.b16 %v470, %v466
    %v595 = vpack.c.b16 %v471, %v467
    %v596 = vpack.c.b16 %v472, %v468
    %v597 = vpack.c.b16 %v473, %v469
    %v598 = vpack.c.b16 %v478, %v474
    %v599 = vpack.c.b16 %v479, %v475
    %v600 = vpack.c.b16 %v480, %v476
    %v601 = vpack.c.b16 %v481, %v477
    %v602 = vpack.c.b16 %v486, %v482
    %v603 = vpack.c.b16 %v487, %v483
    %v604 = vpack.c.b16 %v488, %v484
    %v605 = vpack.c.b16 %v489, %v485
    %v606 = vpack.c.b16 %v494, %v490
    %v607 = vpack.c.b16 %v495, %v491
    %v608 = vpack.c.b16 %v496, %v492
    %v609 = vpack.c.b16 %v497, %v493
    %v610 = vpack.c.b16 %v502, %v498
    %v611 = vpack.c.b16 %v503, %v499
    %v612 = vpack.c.b16 %v504, %v500
    %v613 = vpack.c.b16 %v505, %v501
    %v614 = vpack.c.b16 %v510, %v506
    %v615 = vpack.c.b16 %v511, %v507
    %v616 = vpack.c.b16 %v512, %v508
    %v617 = vpack.c.b16 %v513, %v509
    %v618 = vpack.c.b16 %v518, %v514
    %v619 = vpack.c.b16 %v519, %v515
    %v620 = vpack.c.b16 %v520, %v516
    %v621 = vpack.c.b16 %v521, %v517
    %v622 = vpack.c.b16 %v526, %v522
    %v623 = vpack.c.b16 %v527, %v523
    %v624 = vpack.c.b16 %v528, %v524
    %v625 = vpack.c.b16 %v529, %v525
    %v626 = vpack.c.b16 %v534, %v530
    %v627 = vpack.c.b16 %v535, %v531
    %v628 = vpack.c.b16 %v536, %v532
    %v629 = vpack.c.b16 %v537, %v533
    %v630 = vpack.c.b16 %v542, %v538
    %v631 = vpack.c.b16 %v543, %v539
    %v632 = vpack.c.b16 %v544, %v540
    %v633 = vpack.c.b16 %v545, %v541
    %v634 = vpack.c.b16 %v550, %v546
    %v635 = vpack.c.b16 %v551, %v547
    %v636 = vpack.c.b16 %v552, %v548
    %v637 = vpack.c.b16 %v553, %v549
    %v638 = vpack.c.b16 %v558, %v554
    %v639 = vpack.c.b16 %v559, %v555
    %v640 = vpack.c.b16 %v560, %v556
    %v641 = vpack.c.b16 %v561, %v557
    %v642 = vpack.c.b16 %v566, %v562
    %v643 = vpack.c.b16 %v567, %v563
    %v644 = vpack.c.b16 %v568, %v564
    %v645 = vpack.c.b16 %v569, %v565
    %v646 = vpack.c.b16 %v574, %v570
    %v647 = vpack.c.b16 %v575, %v571
    %v648 = vpack.c.b16 %v576, %v572
    %v649 = vpack.c.b16 %v577, %v573
    %v650 = vpack.c.b16 %v582, %v578
    %v651 = vpack.c.b16 %v583, %v579
    %v652 = vpack.c.b16 %v584, %v580
    %v653 = vpack.c.b16 %v585, %v581
    %v654 = vpack.c.b16 %v590, %v586
    %v655 = vpack.c.b16 %v591, %v587
    %v656 = vpack.c.b16 %v592, %v588
    %v657 = vpack.c.b16 %v593, %v589
    %722 = vmatprep.subr.bf16.mxu0 %v595
    %723 = vmatpush1.bf16.msra.mxu0 %v594
    %724 = vmatprep.subr.bf16.mxu0 %v599
    %725 = vmatpush1.bf16.msra.mxu0 %v598
    %726 = vmatprep.subr.bf16.mxu0 %v603
    %727 = vmatpush1.bf16.msra.mxu0 %v602
    %728 = vmatprep.subr.bf16.mxu0 %v607
    %729 = vmatpush1.bf16.msra.mxu0 %v606
    %730 = vmatprep.subr.bf16.mxu0 %v611
    %731 = vmatpush1.bf16.msra.mxu0 %v610
    %732 = vmatprep.subr.bf16.mxu0 %v615
    %733 = vmatpush1.bf16.msra.mxu0 %v614
    %734 = vmatprep.subr.bf16.mxu0 %v619
    %735 = vmatpush1.bf16.msra.mxu0 %v618
    %736 = vmatprep.subr.bf16.mxu0 %v623
    %737 = vmatpush1.bf16.msra.mxu0 %v622
    %738 = vmatprep.subr.bf16.mxu0 %v627
    %739 = vmatpush1.bf16.msra.mxu0 %v626
    %740 = vmatprep.subr.bf16.mxu0 %v631
    %741 = vmatpush1.bf16.msra.mxu0 %v630
    %742 = vmatprep.subr.bf16.mxu0 %v635
    %743 = vmatpush1.bf16.msra.mxu0 %v634
    %744 = vmatprep.subr.bf16.mxu0 %v639
    %745 = vmatpush1.bf16.msra.mxu0 %v638
    %746 = vmatprep.subr.bf16.mxu0 %v643
    %747 = vmatpush1.bf16.msra.mxu0 %v642
    %748 = vmatprep.subr.bf16.mxu0 %v647
    %749 = vmatpush1.bf16.msra.mxu0 %v646
    %750 = vmatprep.subr.bf16.mxu0 %v651
    %751 = vmatpush1.bf16.msra.mxu0 %v650
    %752 = vmatprep.subr.bf16.mxu0 %v655
    %753 = vmatpush1.bf16.msra.mxu0 %v654
    %754 = vmatprep.mubr.bf16.mxu0 %v315
    %755 = vmatmul.mubr.bf16.gmra.mrb[0].mxu0 %v314
    %v756 = vpop.f32.mrb[0].mxu0
    %v757 = vadd.f32 %v385, %v756
    %v758 = vpop.f32.mrb[0].mxu0
    %v759 = vadd.f32 %v389, %v758
    %v760 = vpop.f32.mrb[0].mxu0
    %v761 = vadd.f32 %v385, %v760
    %v762 = vpop.f32.mrb[0].mxu0
    %v763 = vadd.f32 %v389, %v762
    %764 = vdwg.mxu0
    %765 = vmatprep.subr.bf16.mxu0 %v597
    %766 = vmatpush1.bf16.msra.mxu0 %v596
    %767 = vmatprep.subr.bf16.mxu0 %v601
    %768 = vmatpush1.bf16.msra.mxu0 %v600
    %769 = vmatprep.subr.bf16.mxu0 %v605
    %770 = vmatpush1.bf16.msra.mxu0 %v604
    %771 = vmatprep.subr.bf16.mxu0 %v609
    %772 = vmatpush1.bf16.msra.mxu0 %v608
    %773 = vmatprep.subr.bf16.mxu0 %v613
    %774 = vmatpush1.bf16.msra.mxu0 %v612
    %775 = vmatprep.subr.bf16.mxu0 %v617
    %776 = vmatpush1.bf16.msra.mxu0 %v616
    %777 = vmatprep.subr.bf16.mxu0 %v621
    %778 = vmatpush1.bf16.msra.mxu0 %v620
    %779 = vmatprep.subr.bf16.mxu0 %v625
    %780 = vmatpush1.bf16.msra.mxu0 %v624
    %781 = vmatprep.subr.bf16.mxu0 %v629
    %782 = vmatpush1.bf16.msra.mxu0 %v628
    %783 = vmatprep.subr.bf16.mxu0 %v633
    %784 = vmatpush1.bf16.msra.mxu0 %v632
    %785 = vmatprep.subr.bf16.mxu0 %v637
    %786 = vmatpush1.bf16.msra.mxu0 %v636
    %787 = vmatprep.subr.bf16.mxu0 %v641
    %788 = vmatpush1.bf16.msra.mxu0 %v640
    %789 = vmatprep.subr.bf16.mxu0 %v645
    %790 = vmatpush1.bf16.msra.mxu0 %v644
    %791 = vmatprep.subr.bf16.mxu0 %v649
    %792 = vmatpush1.bf16.msra.mxu0 %v648
    %793 = vmatprep.subr.bf16.mxu0 %v653
    %794 = vmatpush1.bf16.msra.mxu0 %v652
    %795 = vmatprep.subr.bf16.mxu0 %v657
    %796 = vmatpush1.bf16.msra.mxu0 %v656
    %797 = vmatprep.mubr.bf16.mxu0 %v315
    %798 = vmatmul.mubr.bf16.gmra.mrb[0].mxu0 %v314
    %v799 = vpop.f32.mrb[0].mxu0
    %v800 = vadd.f32 %v393, %v799
    %v801 = vpop.f32.mrb[0].mxu0
    %v802 = vadd.f32 %v397, %v801
    %v803 = vpop.f32.mrb[0].mxu0
    %v804 = vadd.f32 %v393, %v803
    %v805 = vpop.f32.mrb[0].mxu0
    %v806 = vadd.f32 %v397, %v805
    %807 = vdwg.mxu0
    %v808 = vpack.c.bf16 %v761, %v757
    %v809 = vpack.c.bf16 %v763, %v759
    %v810 = vpack.c.bf16 %v804, %v800
    %v811 = vpack.c.bf16 %v806, %v802
    %vm812 = vcmp.gt.bf16.partialorder %v808, 0
    %vm813 = vcmp.gt.bf16.partialorder %v809, 0
    %vm814 = vcmp.gt.bf16.partialorder %v810, 0
    %vm815 = vcmp.gt.bf16.partialorder %v811, 0
    %v816 = vmul.bf16 %v808, 1045249613
    %v817 = vmul.bf16 %v809, 1045249613
    %v818 = vmul.bf16 %v810, 1045249613
    %v819 = vmul.bf16 %v811, 1045249613
    %v820 = vsel %vm812, %v808, %v816
    %v821 = vsel %vm813, %v809, %v817
    %v822 = vsel %vm814, %v810, %v818
    %v823 = vsel %vm815, %v811, %v819
    %v824 = vld [vmem:[#allocation11] sm:$0xff]
    %v825 = vld [vmem:[#allocation11 + $0x8] sm:$0xff]
    %v826 = vld [vmem:[#allocation11 + $0x10] sm:$0xff]
    %v827 = vld [vmem:[#allocation11 + $0x18] sm:$0xff]
    %v828 = vld [vmem:[#allocation11 + $0x20] sm:$0xff]
    %v829 = vld [vmem:[#allocation11 + $0x28] sm:$0xff]
    %v830 = vld [vmem:[#allocation11 + $0x30] sm:$0xff]
    %v831 = vld [vmem:[#allocation11 + $0x38] sm:$0xff]
    %v832 = vld [vmem:[#allocation11 + $0x40] sm:$0xff]
    %v833 = vld [vmem:[#allocation11 + $0x48] sm:$0xff]
    %v834 = vld [vmem:[#allocation11 + $0x50] sm:$0xff]
    %v835 = vld [vmem:[#allocation11 + $0x58] sm:$0xff]
    %v836 = vld [vmem:[#allocation11 + $0x60] sm:$0xff]
    %v837 = vld [vmem:[#allocation11 + $0x68] sm:$0xff]
    %v838 = vld [vmem:[#allocation11 + $0x70] sm:$0xff]
    %v839 = vld [vmem:[#allocation11 + $0x78] sm:$0xff]
    %v840 = vld [vmem:[#allocation11 + $0x80] sm:$0xff]
    %v841 = vld [vmem:[#allocation11 + $0x88] sm:$0xff]
    %v842 = vld [vmem:[#allocation11 + $0x90] sm:$0xff]
    %v843 = vld [vmem:[#allocation11 + $0x98] sm:$0xff]
    %v844 = vld [vmem:[#allocation11 + $0xa0] sm:$0xff]
    %v845 = vld [vmem:[#allocation11 + $0xa8] sm:$0xff]
    %v846 = vld [vmem:[#allocation11 + $0xb0] sm:$0xff]
    %v847 = vld [vmem:[#allocation11 + $0xb8] sm:$0xff]
    %v848 = vld [vmem:[#allocation11 + $0xc0] sm:$0xff]
    %v849 = vld [vmem:[#allocation11 + $0xc8] sm:$0xff]
    %v850 = vld [vmem:[#allocation11 + $0xd0] sm:$0xff]
    %v851 = vld [vmem:[#allocation11 + $0xd8] sm:$0xff]
    %v852 = vld [vmem:[#allocation11 + $0xe0] sm:$0xff]
    %v853 = vld [vmem:[#allocation11 + $0xe8] sm:$0xff]
    %v854 = vld [vmem:[#allocation11 + $0xf0] sm:$0xff]
    %v855 = vld [vmem:[#allocation11 + $0xf8] sm:$0xff]
    %v856 = vld [vmem:[#allocation11 + $0x100] sm:$0xff]
    %v857 = vld [vmem:[#allocation11 + $0x108] sm:$0xff]
    %v858 = vld [vmem:[#allocation11 + $0x110] sm:$0xff]
    %v859 = vld [vmem:[#allocation11 + $0x118] sm:$0xff]
    %v860 = vld [vmem:[#allocation11 + $0x120] sm:$0xff]
    %v861 = vld [vmem:[#allocation11 + $0x128] sm:$0xff]
    %v862 = vld [vmem:[#allocation11 + $0x130] sm:$0xff]
    %v863 = vld [vmem:[#allocation11 + $0x138] sm:$0xff]
    %v864 = vld [vmem:[#allocation11 + $0x140] sm:$0xff]
    %v865 = vld [vmem:[#allocation11 + $0x148] sm:$0xff]
    %v866 = vld [vmem:[#allocation11 + $0x150] sm:$0xff]
    %v867 = vld [vmem:[#allocation11 + $0x158] sm:$0xff]
    %v868 = vld [vmem:[#allocation11 + $0x160] sm:$0xff]
    %v869 = vld [vmem:[#allocation11 + $0x168] sm:$0xff]
    %v870 = vld [vmem:[#allocation11 + $0x170] sm:$0xff]
    %v871 = vld [vmem:[#allocation11 + $0x178] sm:$0xff]
    %v872 = vld [vmem:[#allocation11 + $0x180] sm:$0xff]
    %v873 = vld [vmem:[#allocation11 + $0x188] sm:$0xff]
    %v874 = vld [vmem:[#allocation11 + $0x190] sm:$0xff]
    %v875 = vld [vmem:[#allocation11 + $0x198] sm:$0xff]
    %v876 = vld [vmem:[#allocation11 + $0x1a0] sm:$0xff]
    %v877 = vld [vmem:[#allocation11 + $0x1a8] sm:$0xff]
    %v878 = vld [vmem:[#allocation11 + $0x1b0] sm:$0xff]
    %v879 = vld [vmem:[#allocation11 + $0x1b8] sm:$0xff]
    %v880 = vld [vmem:[#allocation11 + $0x1c0] sm:$0xff]
    %v881 = vld [vmem:[#allocation11 + $0x1c8] sm:$0xff]
    %v882 = vld [vmem:[#allocation11 + $0x1d0] sm:$0xff]
    %v883 = vld [vmem:[#allocation11 + $0x1d8] sm:$0xff]
    %v884 = vld [vmem:[#allocation11 + $0x1e0] sm:$0xff]
    %v885 = vld [vmem:[#allocation11 + $0x1e8] sm:$0xff]
    %v886 = vld [vmem:[#allocation11 + $0x1f0] sm:$0xff]
    %v887 = vld [vmem:[#allocation11 + $0x1f8] sm:$0xff]
    %v888 = vld [vmem:[#allocation11 + $0x200] sm:$0xff]
    %v889 = vld [vmem:[#allocation11 + $0x208] sm:$0xff]
    %v890 = vld [vmem:[#allocation11 + $0x210] sm:$0xff]
    %v891 = vld [vmem:[#allocation11 + $0x218] sm:$0xff]
    %v892 = vld [vmem:[#allocation11 + $0x220] sm:$0xff]
    %v893 = vld [vmem:[#allocation11 + $0x228] sm:$0xff]
    %v894 = vld [vmem:[#allocation11 + $0x230] sm:$0xff]
    %v895 = vld [vmem:[#allocation11 + $0x238] sm:$0xff]
    %v896 = vld [vmem:[#allocation11 + $0x240] sm:$0xff]
    %v897 = vld [vmem:[#allocation11 + $0x248] sm:$0xff]
    %v898 = vld [vmem:[#allocation11 + $0x250] sm:$0xff]
    %v899 = vld [vmem:[#allocation11 + $0x258] sm:$0xff]
    %v900 = vld [vmem:[#allocation11 + $0x260] sm:$0xff]
    %v901 = vld [vmem:[#allocation11 + $0x268] sm:$0xff]
    %v902 = vld [vmem:[#allocation11 + $0x270] sm:$0xff]
    %v903 = vld [vmem:[#allocation11 + $0x278] sm:$0xff]
    %v904 = vld [vmem:[#allocation11 + $0x280] sm:$0xff]
    %v905 = vld [vmem:[#allocation11 + $0x288] sm:$0xff]
    %v906 = vld [vmem:[#allocation11 + $0x290] sm:$0xff]
    %v907 = vld [vmem:[#allocation11 + $0x298] sm:$0xff]
    %v908 = vld [vmem:[#allocation11 + $0x2a0] sm:$0xff]
    %v909 = vld [vmem:[#allocation11 + $0x2a8] sm:$0xff]
    %v910 = vld [vmem:[#allocation11 + $0x2b0] sm:$0xff]
    %v911 = vld [vmem:[#allocation11 + $0x2b8] sm:$0xff]
    %v912 = vld [vmem:[#allocation11 + $0x2c0] sm:$0xff]
    %v913 = vld [vmem:[#allocation11 + $0x2c8] sm:$0xff]
    %v914 = vld [vmem:[#allocation11 + $0x2d0] sm:$0xff]
    %v915 = vld [vmem:[#allocation11 + $0x2d8] sm:$0xff]
    %v916 = vld [vmem:[#allocation11 + $0x2e0] sm:$0xff]
    %v917 = vld [vmem:[#allocation11 + $0x2e8] sm:$0xff]
    %v918 = vld [vmem:[#allocation11 + $0x2f0] sm:$0xff]
    %v919 = vld [vmem:[#allocation11 + $0x2f8] sm:$0xff]
    %v920 = vld [vmem:[#allocation11 + $0x300] sm:$0xff]
    %v921 = vld [vmem:[#allocation11 + $0x308] sm:$0xff]
    %v922 = vld [vmem:[#allocation11 + $0x310] sm:$0xff]
    %v923 = vld [vmem:[#allocation11 + $0x318] sm:$0xff]
    %v924 = vld [vmem:[#allocation11 + $0x320] sm:$0xff]
    %v925 = vld [vmem:[#allocation11 + $0x328] sm:$0xff]
    %v926 = vld [vmem:[#allocation11 + $0x330] sm:$0xff]
    %v927 = vld [vmem:[#allocation11 + $0x338] sm:$0xff]
    %v928 = vld [vmem:[#allocation11 + $0x340] sm:$0xff]
    %v929 = vld [vmem:[#allocation11 + $0x348] sm:$0xff]
    %v930 = vld [vmem:[#allocation11 + $0x350] sm:$0xff]
    %v931 = vld [vmem:[#allocation11 + $0x358] sm:$0xff]
    %v932 = vld [vmem:[#allocation11 + $0x360] sm:$0xff]
    %v933 = vld [vmem:[#allocation11 + $0x368] sm:$0xff]
    %v934 = vld [vmem:[#allocation11 + $0x370] sm:$0xff]
    %v935 = vld [vmem:[#allocation11 + $0x378] sm:$0xff]
    %v936 = vld [vmem:[#allocation11 + $0x380] sm:$0xff]
    %v937 = vld [vmem:[#allocation11 + $0x388] sm:$0xff]
    %v938 = vld [vmem:[#allocation11 + $0x390] sm:$0xff]
    %v939 = vld [vmem:[#allocation11 + $0x398] sm:$0xff]
    %v940 = vld [vmem:[#allocation11 + $0x3a0] sm:$0xff]
    %v941 = vld [vmem:[#allocation11 + $0x3a8] sm:$0xff]
    %v942 = vld [vmem:[#allocation11 + $0x3b0] sm:$0xff]
    %v943 = vld [vmem:[#allocation11 + $0x3b8] sm:$0xff]
    %v944 = vld [vmem:[#allocation11 + $0x3c0] sm:$0xff]
    %v945 = vld [vmem:[#allocation11 + $0x3c8] sm:$0xff]
    %v946 = vld [vmem:[#allocation11 + $0x3d0] sm:$0xff]
    %v947 = vld [vmem:[#allocation11 + $0x3d8] sm:$0xff]
    %v948 = vld [vmem:[#allocation11 + $0x3e0] sm:$0xff]
    %v949 = vld [vmem:[#allocation11 + $0x3e8] sm:$0xff]
    %v950 = vld [vmem:[#allocation11 + $0x3f0] sm:$0xff]
    %v951 = vld [vmem:[#allocation11 + $0x3f8] sm:$0xff]
    %v952 = vld [vmem:[#allocation11 + $0x400] sm:$0xff]
    %v953 = vld [vmem:[#allocation11 + $0x408] sm:$0xff]
    %v954 = vld [vmem:[#allocation11 + $0x410] sm:$0xff]
    %v955 = vld [vmem:[#allocation11 + $0x418] sm:$0xff]
    %v956 = vld [vmem:[#allocation11 + $0x420] sm:$0xff]
    %v957 = vld [vmem:[#allocation11 + $0x428] sm:$0xff]
    %v958 = vld [vmem:[#allocation11 + $0x430] sm:$0xff]
    %v959 = vld [vmem:[#allocation11 + $0x438] sm:$0xff]
    %v960 = vld [vmem:[#allocation11 + $0x440] sm:$0xff]
    %v961 = vld [vmem:[#allocation11 + $0x448] sm:$0xff]
    %v962 = vld [vmem:[#allocation11 + $0x450] sm:$0xff]
    %v963 = vld [vmem:[#allocation11 + $0x458] sm:$0xff]
    %v964 = vld [vmem:[#allocation11 + $0x460] sm:$0xff]
    %v965 = vld [vmem:[#allocation11 + $0x468] sm:$0xff]
    %v966 = vld [vmem:[#allocation11 + $0x470] sm:$0xff]
    %v967 = vld [vmem:[#allocation11 + $0x478] sm:$0xff]
    %v968 = vld [vmem:[#allocation11 + $0x480] sm:$0xff]
    %v969 = vld [vmem:[#allocation11 + $0x488] sm:$0xff]
    %v970 = vld [vmem:[#allocation11 + $0x490] sm:$0xff]
    %v971 = vld [vmem:[#allocation11 + $0x498] sm:$0xff]
    %v972 = vld [vmem:[#allocation11 + $0x4a0] sm:$0xff]
    %v973 = vld [vmem:[#allocation11 + $0x4a8] sm:$0xff]
    %v974 = vld [vmem:[#allocation11 + $0x4b0] sm:$0xff]
    %v975 = vld [vmem:[#allocation11 + $0x4b8] sm:$0xff]
    %v976 = vld [vmem:[#allocation11 + $0x4c0] sm:$0xff]
    %v977 = vld [vmem:[#allocation11 + $0x4c8] sm:$0xff]
    %v978 = vld [vmem:[#allocation11 + $0x4d0] sm:$0xff]
    %v979 = vld [vmem:[#allocation11 + $0x4d8] sm:$0xff]
    %v980 = vld [vmem:[#allocation11 + $0x4e0] sm:$0xff]
    %v981 = vld [vmem:[#allocation11 + $0x4e8] sm:$0xff]
    %v982 = vld [vmem:[#allocation11 + $0x4f0] sm:$0xff]
    %v983 = vld [vmem:[#allocation11 + $0x4f8] sm:$0xff]
    %v984 = vld [vmem:[#allocation11 + $0x500] sm:$0xff]
    %v985 = vld [vmem:[#allocation11 + $0x508] sm:$0xff]
    %v986 = vld [vmem:[#allocation11 + $0x510] sm:$0xff]
    %v987 = vld [vmem:[#allocation11 + $0x518] sm:$0xff]
    %v988 = vld [vmem:[#allocation11 + $0x520] sm:$0xff]
    %v989 = vld [vmem:[#allocation11 + $0x528] sm:$0xff]
    %v990 = vld [vmem:[#allocation11 + $0x530] sm:$0xff]
    %v991 = vld [vmem:[#allocation11 + $0x538] sm:$0xff]
    %v992 = vld [vmem:[#allocation11 + $0x540] sm:$0xff]
    %v993 = vld [vmem:[#allocation11 + $0x548] sm:$0xff]
    %v994 = vld [vmem:[#allocation11 + $0x550] sm:$0xff]
    %v995 = vld [vmem:[#allocation11 + $0x558] sm:$0xff]
    %v996 = vld [vmem:[#allocation11 + $0x560] sm:$0xff]
    %v997 = vld [vmem:[#allocation11 + $0x568] sm:$0xff]
    %v998 = vld [vmem:[#allocation11 + $0x570] sm:$0xff]
    %v999 = vld [vmem:[#allocation11 + $0x578] sm:$0xff]
    %v1000 = vld [vmem:[#allocation11 + $0x580] sm:$0xff]
    %v1001 = vld [vmem:[#allocation11 + $0x588] sm:$0xff]
    %v1002 = vld [vmem:[#allocation11 + $0x590] sm:$0xff]
    %v1003 = vld [vmem:[#allocation11 + $0x598] sm:$0xff]
    %v1004 = vld [vmem:[#allocation11 + $0x5a0] sm:$0xff]
    %v1005 = vld [vmem:[#allocation11 + $0x5a8] sm:$0xff]
    %v1006 = vld [vmem:[#allocation11 + $0x5b0] sm:$0xff]
    %v1007 = vld [vmem:[#allocation11 + $0x5b8] sm:$0xff]
    %v1008 = vld [vmem:[#allocation11 + $0x5c0] sm:$0xff]
    %v1009 = vld [vmem:[#allocation11 + $0x5c8] sm:$0xff]
    %v1010 = vld [vmem:[#allocation11 + $0x5d0] sm:$0xff]
    %v1011 = vld [vmem:[#allocation11 + $0x5d8] sm:$0xff]
    %v1012 = vld [vmem:[#allocation11 + $0x5e0] sm:$0xff]
    %v1013 = vld [vmem:[#allocation11 + $0x5e8] sm:$0xff]
    %v1014 = vld [vmem:[#allocation11 + $0x5f0] sm:$0xff]
    %v1015 = vld [vmem:[#allocation11 + $0x5f8] sm:$0xff]
    %v1016 = vld [vmem:[#allocation11 + $0x600] sm:$0xff]
    %v1017 = vld [vmem:[#allocation11 + $0x608] sm:$0xff]
    %v1018 = vld [vmem:[#allocation11 + $0x610] sm:$0xff]
    %v1019 = vld [vmem:[#allocation11 + $0x618] sm:$0xff]
    %v1020 = vld [vmem:[#allocation11 + $0x620] sm:$0xff]
    %v1021 = vld [vmem:[#allocation11 + $0x628] sm:$0xff]
    %v1022 = vld [vmem:[#allocation11 + $0x630] sm:$0xff]
    %v1023 = vld [vmem:[#allocation11 + $0x638] sm:$0xff]
    %v1024 = vld [vmem:[#allocation11 + $0x640] sm:$0xff]
    %v1025 = vld [vmem:[#allocation11 + $0x648] sm:$0xff]
    %v1026 = vld [vmem:[#allocation11 + $0x650] sm:$0xff]
    %v1027 = vld [vmem:[#allocation11 + $0x658] sm:$0xff]
    %v1028 = vld [vmem:[#allocation11 + $0x660] sm:$0xff]
    %v1029 = vld [vmem:[#allocation11 + $0x668] sm:$0xff]
    %v1030 = vld [vmem:[#allocation11 + $0x670] sm:$0xff]
    %v1031 = vld [vmem:[#allocation11 + $0x678] sm:$0xff]
    %v1032 = vld [vmem:[#allocation11 + $0x680] sm:$0xff]
    %v1033 = vld [vmem:[#allocation11 + $0x688] sm:$0xff]
    %v1034 = vld [vmem:[#allocation11 + $0x690] sm:$0xff]
    %v1035 = vld [vmem:[#allocation11 + $0x698] sm:$0xff]
    %v1036 = vld [vmem:[#allocation11 + $0x6a0] sm:$0xff]
    %v1037 = vld [vmem:[#allocation11 + $0x6a8] sm:$0xff]
    %v1038 = vld [vmem:[#allocation11 + $0x6b0] sm:$0xff]
    %v1039 = vld [vmem:[#allocation11 + $0x6b8] sm:$0xff]
    %v1040 = vld [vmem:[#allocation11 + $0x6c0] sm:$0xff]
    %v1041 = vld [vmem:[#allocation11 + $0x6c8] sm:$0xff]
    %v1042 = vld [vmem:[#allocation11 + $0x6d0] sm:$0xff]
    %v1043 = vld [vmem:[#allocation11 + $0x6d8] sm:$0xff]
    %v1044 = vld [vmem:[#allocation11 + $0x6e0] sm:$0xff]
    %v1045 = vld [vmem:[#allocation11 + $0x6e8] sm:$0xff]
    %v1046 = vld [vmem:[#allocation11 + $0x6f0] sm:$0xff]
    %v1047 = vld [vmem:[#allocation11 + $0x6f8] sm:$0xff]
    %v1048 = vld [vmem:[#allocation11 + $0x700] sm:$0xff]
    %v1049 = vld [vmem:[#allocation11 + $0x708] sm:$0xff]
    %v1050 = vld [vmem:[#allocation11 + $0x710] sm:$0xff]
    %v1051 = vld [vmem:[#allocation11 + $0x718] sm:$0xff]
    %v1052 = vld [vmem:[#allocation11 + $0x720] sm:$0xff]
    %v1053 = vld [vmem:[#allocation11 + $0x728] sm:$0xff]
    %v1054 = vld [vmem:[#allocation11 + $0x730] sm:$0xff]
    %v1055 = vld [vmem:[#allocation11 + $0x738] sm:$0xff]
    %v1056 = vld [vmem:[#allocation11 + $0x740] sm:$0xff]
    %v1057 = vld [vmem:[#allocation11 + $0x748] sm:$0xff]
    %v1058 = vld [vmem:[#allocation11 + $0x750] sm:$0xff]
    %v1059 = vld [vmem:[#allocation11 + $0x758] sm:$0xff]
    %v1060 = vld [vmem:[#allocation11 + $0x760] sm:$0xff]
    %v1061 = vld [vmem:[#allocation11 + $0x768] sm:$0xff]
    %v1062 = vld [vmem:[#allocation11 + $0x770] sm:$0xff]
    %v1063 = vld [vmem:[#allocation11 + $0x778] sm:$0xff]
    %v1064 = vld [vmem:[#allocation11 + $0x780] sm:$0xff]
    %v1065 = vld [vmem:[#allocation11 + $0x788] sm:$0xff]
    %v1066 = vld [vmem:[#allocation11 + $0x790] sm:$0xff]
    %v1067 = vld [vmem:[#allocation11 + $0x798] sm:$0xff]
    %v1068 = vld [vmem:[#allocation11 + $0x7a0] sm:$0xff]
    %v1069 = vld [vmem:[#allocation11 + $0x7a8] sm:$0xff]
    %v1070 = vld [vmem:[#allocation11 + $0x7b0] sm:$0xff]
    %v1071 = vld [vmem:[#allocation11 + $0x7b8] sm:$0xff]
    %v1072 = vld [vmem:[#allocation11 + $0x7c0] sm:$0xff]
    %v1073 = vld [vmem:[#allocation11 + $0x7c8] sm:$0xff]
    %v1074 = vld [vmem:[#allocation11 + $0x7d0] sm:$0xff]
    %v1075 = vld [vmem:[#allocation11 + $0x7d8] sm:$0xff]
    %v1076 = vld [vmem:[#allocation11 + $0x7e0] sm:$0xff]
    %v1077 = vld [vmem:[#allocation11 + $0x7e8] sm:$0xff]
    %v1078 = vld [vmem:[#allocation11 + $0x7f0] sm:$0xff]
    %v1079 = vld [vmem:[#allocation11 + $0x7f8] sm:$0xff]
    %v1080 = vld [vmem:[#allocation13] sm:$0xff]
    %v1082 = vlaneseq
    %v1083 = vshrl.u32 %v1082, 7
    %v1084 = vsub.s32 0, %v1083
    %v1085 = vrot.slane %v1080, %v1084
    %v1086 = vlaneseq
    %v1087 = vshrl.u32 %v1086, 7
    %v1088 = vsub.s32 1, %v1087
    %v1089 = vrot.slane %v1080, %v1088
    %v1090 = vlaneseq
    %v1091 = vshrl.u32 %v1090, 7
    %v1092 = vsub.s32 2, %v1091
    %v1093 = vrot.slane %v1080, %v1092
    %v1094 = vlaneseq
    %v1095 = vshrl.u32 %v1094, 7
    %v1096 = vsub.s32 3, %v1095
    %v1097 = vrot.slane %v1080, %v1096
    %v1098 = vlaneseq
    %v1099 = vshrl.u32 %v1098, 7
    %v1100 = vsub.s32 4, %v1099
    %v1101 = vrot.slane %v1080, %v1100
    %v1102 = vlaneseq
    %v1103 = vshrl.u32 %v1102, 7
    %v1104 = vsub.s32 5, %v1103
    %v1105 = vrot.slane %v1080, %v1104
    %v1106 = vlaneseq
    %v1107 = vshrl.u32 %v1106, 7
    %v1108 = vsub.s32 6, %v1107
    %v1109 = vrot.slane %v1080, %v1108
    %v1110 = vlaneseq
    %v1111 = vshrl.u32 %v1110, 7
    %v1112 = vsub.s32 7, %v1111
    %v1113 = vrot.slane %v1080, %v1112
    %v1378 = vunpack.c.l.b16 %v824
    %v1379 = vunpack.c.h.b16 %v824
    %v1380 = vunpack.c.l.b16 %v825
    %v1381 = vunpack.c.h.b16 %v825
    %v1382 = vunpack.c.l.b16 %v826
    %v1383 = vunpack.c.h.b16 %v826
    %v1384 = vunpack.c.l.b16 %v827
    %v1385 = vunpack.c.h.b16 %v827
    %v1386 = vunpack.c.l.b16 %v828
    %v1387 = vunpack.c.h.b16 %v828
    %v1388 = vunpack.c.l.b16 %v829
    %v1389 = vunpack.c.h.b16 %v829
    %v1390 = vunpack.c.l.b16 %v830
    %v1391 = vunpack.c.h.b16 %v830
    %v1392 = vunpack.c.l.b16 %v831
    %v1393 = vunpack.c.h.b16 %v831
    %v1394 = vunpack.c.l.b16 %v832
    %v1395 = vunpack.c.h.b16 %v832
    %v1396 = vunpack.c.l.b16 %v833
    %v1397 = vunpack.c.h.b16 %v833
    %v1398 = vunpack.c.l.b16 %v834
    %v1399 = vunpack.c.h.b16 %v834
    %v1400 = vunpack.c.l.b16 %v835
    %v1401 = vunpack.c.h.b16 %v835
    %v1402 = vunpack.c.l.b16 %v836
    %v1403 = vunpack.c.h.b16 %v836
    %v1404 = vunpack.c.l.b16 %v837
    %v1405 = vunpack.c.h.b16 %v837
    %v1406 = vunpack.c.l.b16 %v838
    %v1407 = vunpack.c.h.b16 %v838
    %v1408 = vunpack.c.l.b16 %v839
    %v1409 = vunpack.c.h.b16 %v839
    %v1410 = vunpack.c.l.b16 %v840
    %v1411 = vunpack.c.h.b16 %v840
    %v1412 = vunpack.c.l.b16 %v841
    %v1413 = vunpack.c.h.b16 %v841
    %v1414 = vunpack.c.l.b16 %v842
    %v1415 = vunpack.c.h.b16 %v842
    %v1416 = vunpack.c.l.b16 %v843
    %v1417 = vunpack.c.h.b16 %v843
    %v1418 = vunpack.c.l.b16 %v844
    %v1419 = vunpack.c.h.b16 %v844
    %v1420 = vunpack.c.l.b16 %v845
    %v1421 = vunpack.c.h.b16 %v845
    %v1422 = vunpack.c.l.b16 %v846
    %v1423 = vunpack.c.h.b16 %v846
    %v1424 = vunpack.c.l.b16 %v847
    %v1425 = vunpack.c.h.b16 %v847
    %v1426 = vunpack.c.l.b16 %v848
    %v1427 = vunpack.c.h.b16 %v848
    %v1428 = vunpack.c.l.b16 %v849
    %v1429 = vunpack.c.h.b16 %v849
    %v1430 = vunpack.c.l.b16 %v850
    %v1431 = vunpack.c.h.b16 %v850
    %v1432 = vunpack.c.l.b16 %v851
    %v1433 = vunpack.c.h.b16 %v851
    %v1434 = vunpack.c.l.b16 %v852
    %v1435 = vunpack.c.h.b16 %v852
    %v1436 = vunpack.c.l.b16 %v853
    %v1437 = vunpack.c.h.b16 %v853
    %v1438 = vunpack.c.l.b16 %v854
    %v1439 = vunpack.c.h.b16 %v854
    %v1440 = vunpack.c.l.b16 %v855
    %v1441 = vunpack.c.h.b16 %v855
    %v1442 = vunpack.c.l.b16 %v856
    %v1443 = vunpack.c.h.b16 %v856
    %v1444 = vunpack.c.l.b16 %v857
    %v1445 = vunpack.c.h.b16 %v857
    %v1446 = vunpack.c.l.b16 %v858
    %v1447 = vunpack.c.h.b16 %v858
    %v1448 = vunpack.c.l.b16 %v859
    %v1449 = vunpack.c.h.b16 %v859
    %v1450 = vunpack.c.l.b16 %v860
    %v1451 = vunpack.c.h.b16 %v860
    %v1452 = vunpack.c.l.b16 %v861
    %v1453 = vunpack.c.h.b16 %v861
    %v1454 = vunpack.c.l.b16 %v862
    %v1455 = vunpack.c.h.b16 %v862
    %v1456 = vunpack.c.l.b16 %v863
    %v1457 = vunpack.c.h.b16 %v863
    %v1458 = vunpack.c.l.b16 %v864
    %v1459 = vunpack.c.h.b16 %v864
    %v1460 = vunpack.c.l.b16 %v865
    %v1461 = vunpack.c.h.b16 %v865
    %v1462 = vunpack.c.l.b16 %v866
    %v1463 = vunpack.c.h.b16 %v866
    %v1464 = vunpack.c.l.b16 %v867
    %v1465 = vunpack.c.h.b16 %v867
    %v1466 = vunpack.c.l.b16 %v868
    %v1467 = vunpack.c.h.b16 %v868
    %v1468 = vunpack.c.l.b16 %v869
    %v1469 = vunpack.c.h.b16 %v869
    %v1470 = vunpack.c.l.b16 %v870
    %v1471 = vunpack.c.h.b16 %v870
    %v1472 = vunpack.c.l.b16 %v871
    %v1473 = vunpack.c.h.b16 %v871
    %v1474 = vunpack.c.l.b16 %v872
    %v1475 = vunpack.c.h.b16 %v872
    %v1476 = vunpack.c.l.b16 %v873
    %v1477 = vunpack.c.h.b16 %v873
    %v1478 = vunpack.c.l.b16 %v874
    %v1479 = vunpack.c.h.b16 %v874
    %v1480 = vunpack.c.l.b16 %v875
    %v1481 = vunpack.c.h.b16 %v875
    %v1482 = vunpack.c.l.b16 %v876
    %v1483 = vunpack.c.h.b16 %v876
    %v1484 = vunpack.c.l.b16 %v877
    %v1485 = vunpack.c.h.b16 %v877
    %v1486 = vunpack.c.l.b16 %v878
    %v1487 = vunpack.c.h.b16 %v878
    %v1488 = vunpack.c.l.b16 %v879
    %v1489 = vunpack.c.h.b16 %v879
    %v1490 = vunpack.c.l.b16 %v880
    %v1491 = vunpack.c.h.b16 %v880
    %v1492 = vunpack.c.l.b16 %v881
    %v1493 = vunpack.c.h.b16 %v881
    %v1494 = vunpack.c.l.b16 %v882
    %v1495 = vunpack.c.h.b16 %v882
    %v1496 = vunpack.c.l.b16 %v883
    %v1497 = vunpack.c.h.b16 %v883
    %v1498 = vunpack.c.l.b16 %v884
    %v1499 = vunpack.c.h.b16 %v884
    %v1500 = vunpack.c.l.b16 %v885
    %v1501 = vunpack.c.h.b16 %v885
    %v1502 = vunpack.c.l.b16 %v886
    %v1503 = vunpack.c.h.b16 %v886
    %v1504 = vunpack.c.l.b16 %v887
    %v1505 = vunpack.c.h.b16 %v887
    %v1506 = vunpack.c.l.b16 %v888
    %v1507 = vunpack.c.h.b16 %v888
    %v1508 = vunpack.c.l.b16 %v889
    %v1509 = vunpack.c.h.b16 %v889
    %v1510 = vunpack.c.l.b16 %v890
    %v1511 = vunpack.c.h.b16 %v890
    %v1512 = vunpack.c.l.b16 %v891
    %v1513 = vunpack.c.h.b16 %v891
    %v1514 = vunpack.c.l.b16 %v892
    %v1515 = vunpack.c.h.b16 %v892
    %v1516 = vunpack.c.l.b16 %v893
    %v1517 = vunpack.c.h.b16 %v893
    %v1518 = vunpack.c.l.b16 %v894
    %v1519 = vunpack.c.h.b16 %v894
    %v1520 = vunpack.c.l.b16 %v895
    %v1521 = vunpack.c.h.b16 %v895
    %v1522 = vunpack.c.l.b16 %v896
    %v1523 = vunpack.c.h.b16 %v896
    %v1524 = vunpack.c.l.b16 %v897
    %v1525 = vunpack.c.h.b16 %v897
    %v1526 = vunpack.c.l.b16 %v898
    %v1527 = vunpack.c.h.b16 %v898
    %v1528 = vunpack.c.l.b16 %v899
    %v1529 = vunpack.c.h.b16 %v899
    %v1530 = vunpack.c.l.b16 %v900
    %v1531 = vunpack.c.h.b16 %v900
    %v1532 = vunpack.c.l.b16 %v901
    %v1533 = vunpack.c.h.b16 %v901
    %v1534 = vunpack.c.l.b16 %v902
    %v1535 = vunpack.c.h.b16 %v902
    %v1536 = vunpack.c.l.b16 %v903
    %v1537 = vunpack.c.h.b16 %v903
    %v1538 = vunpack.c.l.b16 %v904
    %v1539 = vunpack.c.h.b16 %v904
    %v1540 = vunpack.c.l.b16 %v905
    %v1541 = vunpack.c.h.b16 %v905
    %v1542 = vunpack.c.l.b16 %v906
    %v1543 = vunpack.c.h.b16 %v906
    %v1544 = vunpack.c.l.b16 %v907
    %v1545 = vunpack.c.h.b16 %v907
    %v1546 = vunpack.c.l.b16 %v908
    %v1547 = vunpack.c.h.b16 %v908
    %v1548 = vunpack.c.l.b16 %v909
    %v1549 = vunpack.c.h.b16 %v909
    %v1550 = vunpack.c.l.b16 %v910
    %v1551 = vunpack.c.h.b16 %v910
    %v1552 = vunpack.c.l.b16 %v911
    %v1553 = vunpack.c.h.b16 %v911
    %v1554 = vunpack.c.l.b16 %v912
    %v1555 = vunpack.c.h.b16 %v912
    %v1556 = vunpack.c.l.b16 %v913
    %v1557 = vunpack.c.h.b16 %v913
    %v1558 = vunpack.c.l.b16 %v914
    %v1559 = vunpack.c.h.b16 %v914
    %v1560 = vunpack.c.l.b16 %v915
    %v1561 = vunpack.c.h.b16 %v915
    %v1562 = vunpack.c.l.b16 %v916
    %v1563 = vunpack.c.h.b16 %v916
    %v1564 = vunpack.c.l.b16 %v917
    %v1565 = vunpack.c.h.b16 %v917
    %v1566 = vunpack.c.l.b16 %v918
    %v1567 = vunpack.c.h.b16 %v918
    %v1568 = vunpack.c.l.b16 %v919
    %v1569 = vunpack.c.h.b16 %v919
    %v1570 = vunpack.c.l.b16 %v920
    %v1571 = vunpack.c.h.b16 %v920
    %v1572 = vunpack.c.l.b16 %v921
    %v1573 = vunpack.c.h.b16 %v921
    %v1574 = vunpack.c.l.b16 %v922
    %v1575 = vunpack.c.h.b16 %v922
    %v1576 = vunpack.c.l.b16 %v923
    %v1577 = vunpack.c.h.b16 %v923
    %v1578 = vunpack.c.l.b16 %v924
    %v1579 = vunpack.c.h.b16 %v924
    %v1580 = vunpack.c.l.b16 %v925
    %v1581 = vunpack.c.h.b16 %v925
    %v1582 = vunpack.c.l.b16 %v926
    %v1583 = vunpack.c.h.b16 %v926
    %v1584 = vunpack.c.l.b16 %v927
    %v1585 = vunpack.c.h.b16 %v927
    %v1586 = vunpack.c.l.b16 %v928
    %v1587 = vunpack.c.h.b16 %v928
    %v1588 = vunpack.c.l.b16 %v929
    %v1589 = vunpack.c.h.b16 %v929
    %v1590 = vunpack.c.l.b16 %v930
    %v1591 = vunpack.c.h.b16 %v930
    %v1592 = vunpack.c.l.b16 %v931
    %v1593 = vunpack.c.h.b16 %v931
    %v1594 = vunpack.c.l.b16 %v932
    %v1595 = vunpack.c.h.b16 %v932
    %v1596 = vunpack.c.l.b16 %v933
    %v1597 = vunpack.c.h.b16 %v933
    %v1598 = vunpack.c.l.b16 %v934
    %v1599 = vunpack.c.h.b16 %v934
    %v1600 = vunpack.c.l.b16 %v935
    %v1601 = vunpack.c.h.b16 %v935
    %v1602 = vunpack.c.l.b16 %v936
    %v1603 = vunpack.c.h.b16 %v936
    %v1604 = vunpack.c.l.b16 %v937
    %v1605 = vunpack.c.h.b16 %v937
    %v1606 = vunpack.c.l.b16 %v938
    %v1607 = vunpack.c.h.b16 %v938
    %v1608 = vunpack.c.l.b16 %v939
    %v1609 = vunpack.c.h.b16 %v939
    %v1610 = vunpack.c.l.b16 %v940
    %v1611 = vunpack.c.h.b16 %v940
    %v1612 = vunpack.c.l.b16 %v941
    %v1613 = vunpack.c.h.b16 %v941
    %v1614 = vunpack.c.l.b16 %v942
    %v1615 = vunpack.c.h.b16 %v942
    %v1616 = vunpack.c.l.b16 %v943
    %v1617 = vunpack.c.h.b16 %v943
    %v1618 = vunpack.c.l.b16 %v944
    %v1619 = vunpack.c.h.b16 %v944
    %v1620 = vunpack.c.l.b16 %v945
    %v1621 = vunpack.c.h.b16 %v945
    %v1622 = vunpack.c.l.b16 %v946
    %v1623 = vunpack.c.h.b16 %v946
    %v1624 = vunpack.c.l.b16 %v947
    %v1625 = vunpack.c.h.b16 %v947
    %v1626 = vunpack.c.l.b16 %v948
    %v1627 = vunpack.c.h.b16 %v948
    %v1628 = vunpack.c.l.b16 %v949
    %v1629 = vunpack.c.h.b16 %v949
    %v1630 = vunpack.c.l.b16 %v950
    %v1631 = vunpack.c.h.b16 %v950
    %v1632 = vunpack.c.l.b16 %v951
    %v1633 = vunpack.c.h.b16 %v951
    %v1634 = vunpack.c.l.b16 %v952
    %v1635 = vunpack.c.h.b16 %v952
    %v1636 = vunpack.c.l.b16 %v953
    %v1637 = vunpack.c.h.b16 %v953
    %v1638 = vunpack.c.l.b16 %v954
    %v1639 = vunpack.c.h.b16 %v954
    %v1640 = vunpack.c.l.b16 %v955
    %v1641 = vunpack.c.h.b16 %v955
    %v1642 = vunpack.c.l.b16 %v956
    %v1643 = vunpack.c.h.b16 %v956
    %v1644 = vunpack.c.l.b16 %v957
    %v1645 = vunpack.c.h.b16 %v957
    %v1646 = vunpack.c.l.b16 %v958
    %v1647 = vunpack.c.h.b16 %v958
    %v1648 = vunpack.c.l.b16 %v959
    %v1649 = vunpack.c.h.b16 %v959
    %v1650 = vunpack.c.l.b16 %v960
    %v1651 = vunpack.c.h.b16 %v960
    %v1652 = vunpack.c.l.b16 %v961
    %v1653 = vunpack.c.h.b16 %v961
    %v1654 = vunpack.c.l.b16 %v962
    %v1655 = vunpack.c.h.b16 %v962
    %v1656 = vunpack.c.l.b16 %v963
    %v1657 = vunpack.c.h.b16 %v963
    %v1658 = vunpack.c.l.b16 %v964
    %v1659 = vunpack.c.h.b16 %v964
    %v1660 = vunpack.c.l.b16 %v965
    %v1661 = vunpack.c.h.b16 %v965
    %v1662 = vunpack.c.l.b16 %v966
    %v1663 = vunpack.c.h.b16 %v966
    %v1664 = vunpack.c.l.b16 %v967
    %v1665 = vunpack.c.h.b16 %v967
    %v1666 = vunpack.c.l.b16 %v968
    %v1667 = vunpack.c.h.b16 %v968
    %v1668 = vunpack.c.l.b16 %v969
    %v1669 = vunpack.c.h.b16 %v969
    %v1670 = vunpack.c.l.b16 %v970
    %v1671 = vunpack.c.h.b16 %v970
    %v1672 = vunpack.c.l.b16 %v971
    %v1673 = vunpack.c.h.b16 %v971
    %v1674 = vunpack.c.l.b16 %v972
    %v1675 = vunpack.c.h.b16 %v972
    %v1676 = vunpack.c.l.b16 %v973
    %v1677 = vunpack.c.h.b16 %v973
    %v1678 = vunpack.c.l.b16 %v974
    %v1679 = vunpack.c.h.b16 %v974
    %v1680 = vunpack.c.l.b16 %v975
    %v1681 = vunpack.c.h.b16 %v975
    %v1682 = vunpack.c.l.b16 %v976
    %v1683 = vunpack.c.h.b16 %v976
    %v1684 = vunpack.c.l.b16 %v977
    %v1685 = vunpack.c.h.b16 %v977
    %v1686 = vunpack.c.l.b16 %v978
    %v1687 = vunpack.c.h.b16 %v978
    %v1688 = vunpack.c.l.b16 %v979
    %v1689 = vunpack.c.h.b16 %v979
    %v1690 = vunpack.c.l.b16 %v980
    %v1691 = vunpack.c.h.b16 %v980
    %v1692 = vunpack.c.l.b16 %v981
    %v1693 = vunpack.c.h.b16 %v981
    %v1694 = vunpack.c.l.b16 %v982
    %v1695 = vunpack.c.h.b16 %v982
    %v1696 = vunpack.c.l.b16 %v983
    %v1697 = vunpack.c.h.b16 %v983
    %v1698 = vunpack.c.l.b16 %v984
    %v1699 = vunpack.c.h.b16 %v984
    %v1700 = vunpack.c.l.b16 %v985
    %v1701 = vunpack.c.h.b16 %v985
    %v1702 = vunpack.c.l.b16 %v986
    %v1703 = vunpack.c.h.b16 %v986
    %v1704 = vunpack.c.l.b16 %v987
    %v1705 = vunpack.c.h.b16 %v987
    %v1706 = vunpack.c.l.b16 %v988
    %v1707 = vunpack.c.h.b16 %v988
    %v1708 = vunpack.c.l.b16 %v989
    %v1709 = vunpack.c.h.b16 %v989
    %v1710 = vunpack.c.l.b16 %v990
    %v1711 = vunpack.c.h.b16 %v990
    %v1712 = vunpack.c.l.b16 %v991
    %v1713 = vunpack.c.h.b16 %v991
    %v1714 = vunpack.c.l.b16 %v992
    %v1715 = vunpack.c.h.b16 %v992
    %v1716 = vunpack.c.l.b16 %v993
    %v1717 = vunpack.c.h.b16 %v993
    %v1718 = vunpack.c.l.b16 %v994
    %v1719 = vunpack.c.h.b16 %v994
    %v1720 = vunpack.c.l.b16 %v995
    %v1721 = vunpack.c.h.b16 %v995
    %v1722 = vunpack.c.l.b16 %v996
    %v1723 = vunpack.c.h.b16 %v996
    %v1724 = vunpack.c.l.b16 %v997
    %v1725 = vunpack.c.h.b16 %v997
    %v1726 = vunpack.c.l.b16 %v998
    %v1727 = vunpack.c.h.b16 %v998
    %v1728 = vunpack.c.l.b16 %v999
    %v1729 = vunpack.c.h.b16 %v999
    %v1730 = vunpack.c.l.b16 %v1000
    %v1731 = vunpack.c.h.b16 %v1000
    %v1732 = vunpack.c.l.b16 %v1001
    %v1733 = vunpack.c.h.b16 %v1001
    %v1734 = vunpack.c.l.b16 %v1002
    %v1735 = vunpack.c.h.b16 %v1002
    %v1736 = vunpack.c.l.b16 %v1003
    %v1737 = vunpack.c.h.b16 %v1003
    %v1738 = vunpack.c.l.b16 %v1004
    %v1739 = vunpack.c.h.b16 %v1004
    %v1740 = vunpack.c.l.b16 %v1005
    %v1741 = vunpack.c.h.b16 %v1005
    %v1742 = vunpack.c.l.b16 %v1006
    %v1743 = vunpack.c.h.b16 %v1006
    %v1744 = vunpack.c.l.b16 %v1007
    %v1745 = vunpack.c.h.b16 %v1007
    %v1746 = vunpack.c.l.b16 %v1008
    %v1747 = vunpack.c.h.b16 %v1008
    %v1748 = vunpack.c.l.b16 %v1009
    %v1749 = vunpack.c.h.b16 %v1009
    %v1750 = vunpack.c.l.b16 %v1010
    %v1751 = vunpack.c.h.b16 %v1010
    %v1752 = vunpack.c.l.b16 %v1011
    %v1753 = vunpack.c.h.b16 %v1011
    %v1754 = vunpack.c.l.b16 %v1012
    %v1755 = vunpack.c.h.b16 %v1012
    %v1756 = vunpack.c.l.b16 %v1013
    %v1757 = vunpack.c.h.b16 %v1013
    %v1758 = vunpack.c.l.b16 %v1014
    %v1759 = vunpack.c.h.b16 %v1014
    %v1760 = vunpack.c.l.b16 %v1015
    %v1761 = vunpack.c.h.b16 %v1015
    %v1762 = vunpack.c.l.b16 %v1016
    %v1763 = vunpack.c.h.b16 %v1016
    %v1764 = vunpack.c.l.b16 %v1017
    %v1765 = vunpack.c.h.b16 %v1017
    %v1766 = vunpack.c.l.b16 %v1018
    %v1767 = vunpack.c.h.b16 %v1018
    %v1768 = vunpack.c.l.b16 %v1019
    %v1769 = vunpack.c.h.b16 %v1019
    %v1770 = vunpack.c.l.b16 %v1020
    %v1771 = vunpack.c.h.b16 %v1020
    %v1772 = vunpack.c.l.b16 %v1021
    %v1773 = vunpack.c.h.b16 %v1021
    %v1774 = vunpack.c.l.b16 %v1022
    %v1775 = vunpack.c.h.b16 %v1022
    %v1776 = vunpack.c.l.b16 %v1023
    %v1777 = vunpack.c.h.b16 %v1023
    %v1778 = vunpack.c.l.b16 %v1024
    %v1779 = vunpack.c.h.b16 %v1024
    %v1780 = vunpack.c.l.b16 %v1025
    %v1781 = vunpack.c.h.b16 %v1025
    %v1782 = vunpack.c.l.b16 %v1026
    %v1783 = vunpack.c.h.b16 %v1026
    %v1784 = vunpack.c.l.b16 %v1027
    %v1785 = vunpack.c.h.b16 %v1027
    %v1786 = vunpack.c.l.b16 %v1028
    %v1787 = vunpack.c.h.b16 %v1028
    %v1788 = vunpack.c.l.b16 %v1029
    %v1789 = vunpack.c.h.b16 %v1029
    %v1790 = vunpack.c.l.b16 %v1030
    %v1791 = vunpack.c.h.b16 %v1030
    %v1792 = vunpack.c.l.b16 %v1031
    %v1793 = vunpack.c.h.b16 %v1031
    %v1794 = vunpack.c.l.b16 %v1032
    %v1795 = vunpack.c.h.b16 %v1032
    %v1796 = vunpack.c.l.b16 %v1033
    %v1797 = vunpack.c.h.b16 %v1033
    %v1798 = vunpack.c.l.b16 %v1034
    %v1799 = vunpack.c.h.b16 %v1034
    %v1800 = vunpack.c.l.b16 %v1035
    %v1801 = vunpack.c.h.b16 %v1035
    %v1802 = vunpack.c.l.b16 %v1036
    %v1803 = vunpack.c.h.b16 %v1036
    %v1804 = vunpack.c.l.b16 %v1037
    %v1805 = vunpack.c.h.b16 %v1037
    %v1806 = vunpack.c.l.b16 %v1038
    %v1807 = vunpack.c.h.b16 %v1038
    %v1808 = vunpack.c.l.b16 %v1039
    %v1809 = vunpack.c.h.b16 %v1039
    %v1810 = vunpack.c.l.b16 %v1040
    %v1811 = vunpack.c.h.b16 %v1040
    %v1812 = vunpack.c.l.b16 %v1041
    %v1813 = vunpack.c.h.b16 %v1041
    %v1814 = vunpack.c.l.b16 %v1042
    %v1815 = vunpack.c.h.b16 %v1042
    %v1816 = vunpack.c.l.b16 %v1043
    %v1817 = vunpack.c.h.b16 %v1043
    %v1818 = vunpack.c.l.b16 %v1044
    %v1819 = vunpack.c.h.b16 %v1044
    %v1820 = vunpack.c.l.b16 %v1045
    %v1821 = vunpack.c.h.b16 %v1045
    %v1822 = vunpack.c.l.b16 %v1046
    %v1823 = vunpack.c.h.b16 %v1046
    %v1824 = vunpack.c.l.b16 %v1047
    %v1825 = vunpack.c.h.b16 %v1047
    %v1826 = vunpack.c.l.b16 %v1048
    %v1827 = vunpack.c.h.b16 %v1048
    %v1828 = vunpack.c.l.b16 %v1049
    %v1829 = vunpack.c.h.b16 %v1049
    %v1830 = vunpack.c.l.b16 %v1050
    %v1831 = vunpack.c.h.b16 %v1050
    %v1832 = vunpack.c.l.b16 %v1051
    %v1833 = vunpack.c.h.b16 %v1051
    %v1834 = vunpack.c.l.b16 %v1052
    %v1835 = vunpack.c.h.b16 %v1052
    %v1836 = vunpack.c.l.b16 %v1053
    %v1837 = vunpack.c.h.b16 %v1053
    %v1838 = vunpack.c.l.b16 %v1054
    %v1839 = vunpack.c.h.b16 %v1054
    %v1840 = vunpack.c.l.b16 %v1055
    %v1841 = vunpack.c.h.b16 %v1055
    %v1842 = vunpack.c.l.b16 %v1056
    %v1843 = vunpack.c.h.b16 %v1056
    %v1844 = vunpack.c.l.b16 %v1057
    %v1845 = vunpack.c.h.b16 %v1057
    %v1846 = vunpack.c.l.b16 %v1058
    %v1847 = vunpack.c.h.b16 %v1058
    %v1848 = vunpack.c.l.b16 %v1059
    %v1849 = vunpack.c.h.b16 %v1059
    %v1850 = vunpack.c.l.b16 %v1060
    %v1851 = vunpack.c.h.b16 %v1060
    %v1852 = vunpack.c.l.b16 %v1061
    %v1853 = vunpack.c.h.b16 %v1061
    %v1854 = vunpack.c.l.b16 %v1062
    %v1855 = vunpack.c.h.b16 %v1062
    %v1856 = vunpack.c.l.b16 %v1063
    %v1857 = vunpack.c.h.b16 %v1063
    %v1858 = vunpack.c.l.b16 %v1064
    %v1859 = vunpack.c.h.b16 %v1064
    %v1860 = vunpack.c.l.b16 %v1065
    %v1861 = vunpack.c.h.b16 %v1065
    %v1862 = vunpack.c.l.b16 %v1066
    %v1863 = vunpack.c.h.b16 %v1066
    %v1864 = vunpack.c.l.b16 %v1067
    %v1865 = vunpack.c.h.b16 %v1067
    %v1866 = vunpack.c.l.b16 %v1068
    %v1867 = vunpack.c.h.b16 %v1068
    %v1868 = vunpack.c.l.b16 %v1069
    %v1869 = vunpack.c.h.b16 %v1069
    %v1870 = vunpack.c.l.b16 %v1070
    %v1871 = vunpack.c.h.b16 %v1070
    %v1872 = vunpack.c.l.b16 %v1071
    %v1873 = vunpack.c.h.b16 %v1071
    %v1874 = vunpack.c.l.b16 %v1072
    %v1875 = vunpack.c.h.b16 %v1072
    %v1876 = vunpack.c.l.b16 %v1073
    %v1877 = vunpack.c.h.b16 %v1073
    %v1878 = vunpack.c.l.b16 %v1074
    %v1879 = vunpack.c.h.b16 %v1074
    %v1880 = vunpack.c.l.b16 %v1075
    %v1881 = vunpack.c.h.b16 %v1075
    %v1882 = vunpack.c.l.b16 %v1076
    %v1883 = vunpack.c.h.b16 %v1076
    %v1884 = vunpack.c.l.b16 %v1077
    %v1885 = vunpack.c.h.b16 %v1077
    %v1886 = vunpack.c.l.b16 %v1078
    %v1887 = vunpack.c.h.b16 %v1078
    %v1888 = vunpack.c.l.b16 %v1079
    %v1889 = vunpack.c.h.b16 %v1079
    %v1890 = vpack.c.b16 %v1386, %v1378
    %v1891 = vpack.c.b16 %v1387, %v1379
    %v1892 = vpack.c.b16 %v1388, %v1380
    %v1893 = vpack.c.b16 %v1389, %v1381
    %v1894 = vpack.c.b16 %v1390, %v1382
    %v1895 = vpack.c.b16 %v1391, %v1383
    %v1896 = vpack.c.b16 %v1392, %v1384
    %v1897 = vpack.c.b16 %v1393, %v1385
    %v1898 = vpack.c.b16 %v1402, %v1394
    %v1899 = vpack.c.b16 %v1403, %v1395
    %v1900 = vpack.c.b16 %v1404, %v1396
    %v1901 = vpack.c.b16 %v1405, %v1397
    %v1902 = vpack.c.b16 %v1406, %v1398
    %v1903 = vpack.c.b16 %v1407, %v1399
    %v1904 = vpack.c.b16 %v1408, %v1400
    %v1905 = vpack.c.b16 %v1409, %v1401
    %v1906 = vpack.c.b16 %v1418, %v1410
    %v1907 = vpack.c.b16 %v1419, %v1411
    %v1908 = vpack.c.b16 %v1420, %v1412
    %v1909 = vpack.c.b16 %v1421, %v1413
    %v1910 = vpack.c.b16 %v1422, %v1414
    %v1911 = vpack.c.b16 %v1423, %v1415
    %v1912 = vpack.c.b16 %v1424, %v1416
    %v1913 = vpack.c.b16 %v1425, %v1417
    %v1914 = vpack.c.b16 %v1434, %v1426
    %v1915 = vpack.c.b16 %v1435, %v1427
    %v1916 = vpack.c.b16 %v1436, %v1428
    %v1917 = vpack.c.b16 %v1437, %v1429
    %v1918 = vpack.c.b16 %v1438, %v1430
    %v1919 = vpack.c.b16 %v1439, %v1431
    %v1920 = vpack.c.b16 %v1440, %v1432
    %v1921 = vpack.c.b16 %v1441, %v1433
    %v1922 = vpack.c.b16 %v1450, %v1442
    %v1923 = vpack.c.b16 %v1451, %v1443
    %v1924 = vpack.c.b16 %v1452, %v1444
    %v1925 = vpack.c.b16 %v1453, %v1445
    %v1926 = vpack.c.b16 %v1454, %v1446
    %v1927 = vpack.c.b16 %v1455, %v1447
    %v1928 = vpack.c.b16 %v1456, %v1448
    %v1929 = vpack.c.b16 %v1457, %v1449
    %v1930 = vpack.c.b16 %v1466, %v1458
    %v1931 = vpack.c.b16 %v1467, %v1459
    %v1932 = vpack.c.b16 %v1468, %v1460
    %v1933 = vpack.c.b16 %v1469, %v1461
    %v1934 = vpack.c.b16 %v1470, %v1462
    %v1935 = vpack.c.b16 %v1471, %v1463
    %v1936 = vpack.c.b16 %v1472, %v1464
    %v1937 = vpack.c.b16 %v1473, %v1465
    %v1938 = vpack.c.b16 %v1482, %v1474
    %v1939 = vpack.c.b16 %v1483, %v1475
    %v1940 = vpack.c.b16 %v1484, %v1476
    %v1941 = vpack.c.b16 %v1485, %v1477
    %v1942 = vpack.c.b16 %v1486, %v1478
    %v1943 = vpack.c.b16 %v1487, %v1479
    %v1944 = vpack.c.b16 %v1488, %v1480
    %v1945 = vpack.c.b16 %v1489, %v1481
    %v1946 = vpack.c.b16 %v1498, %v1490
    %v1947 = vpack.c.b16 %v1499, %v1491
    %v1948 = vpack.c.b16 %v1500, %v1492
    %v1949 = vpack.c.b16 %v1501, %v1493
    %v1950 = vpack.c.b16 %v1502, %v1494
    %v1951 = vpack.c.b16 %v1503, %v1495
    %v1952 = vpack.c.b16 %v1504, %v1496
    %v1953 = vpack.c.b16 %v1505, %v1497
    %v1954 = vpack.c.b16 %v1514, %v1506
    %v1955 = vpack.c.b16 %v1515, %v1507
    %v1956 = vpack.c.b16 %v1516, %v1508
    %v1957 = vpack.c.b16 %v1517, %v1509
    %v1958 = vpack.c.b16 %v1518, %v1510
    %v1959 = vpack.c.b16 %v1519, %v1511
    %v1960 = vpack.c.b16 %v1520, %v1512
    %v1961 = vpack.c.b16 %v1521, %v1513
    %v1962 = vpack.c.b16 %v1530, %v1522
    %v1963 = vpack.c.b16 %v1531, %v1523
    %v1964 = vpack.c.b16 %v1532, %v1524
    %v1965 = vpack.c.b16 %v1533, %v1525
    %v1966 = vpack.c.b16 %v1534, %v1526
    %v1967 = vpack.c.b16 %v1535, %v1527
    %v1968 = vpack.c.b16 %v1536, %v1528
    %v1969 = vpack.c.b16 %v1537, %v1529
    %v1970 = vpack.c.b16 %v1546, %v1538
    %v1971 = vpack.c.b16 %v1547, %v1539
    %v1972 = vpack.c.b16 %v1548, %v1540
    %v1973 = vpack.c.b16 %v1549, %v1541
    %v1974 = vpack.c.b16 %v1550, %v1542
    %v1975 = vpack.c.b16 %v1551, %v1543
    %v1976 = vpack.c.b16 %v1552, %v1544
    %v1977 = vpack.c.b16 %v1553, %v1545
    %v1978 = vpack.c.b16 %v1562, %v1554
    %v1979 = vpack.c.b16 %v1563, %v1555
    %v1980 = vpack.c.b16 %v1564, %v1556
    %v1981 = vpack.c.b16 %v1565, %v1557
    %v1982 = vpack.c.b16 %v1566, %v1558
    %v1983 = vpack.c.b16 %v1567, %v1559
    %v1984 = vpack.c.b16 %v1568, %v1560
    %v1985 = vpack.c.b16 %v1569, %v1561
    %v1986 = vpack.c.b16 %v1578, %v1570
    %v1987 = vpack.c.b16 %v1579, %v1571
    %v1988 = vpack.c.b16 %v1580, %v1572
    %v1989 = vpack.c.b16 %v1581, %v1573
    %v1990 = vpack.c.b16 %v1582, %v1574
    %v1991 = vpack.c.b16 %v1583, %v1575
    %v1992 = vpack.c.b16 %v1584, %v1576
    %v1993 = vpack.c.b16 %v1585, %v1577
    %v1994 = vpack.c.b16 %v1594, %v1586
    %v1995 = vpack.c.b16 %v1595, %v1587
    %v1996 = vpack.c.b16 %v1596, %v1588
    %v1997 = vpack.c.b16 %v1597, %v1589
    %v1998 = vpack.c.b16 %v1598, %v1590
    %v1999 = vpack.c.b16 %v1599, %v1591
    %v2000 = vpack.c.b16 %v1600, %v1592
    %v2001 = vpack.c.b16 %v1601, %v1593
    %v2002 = vpack.c.b16 %v1610, %v1602
    %v2003 = vpack.c.b16 %v1611, %v1603
    %v2004 = vpack.c.b16 %v1612, %v1604
    %v2005 = vpack.c.b16 %v1613, %v1605
    %v2006 = vpack.c.b16 %v1614, %v1606
    %v2007 = vpack.c.b16 %v1615, %v1607
    %v2008 = vpack.c.b16 %v1616, %v1608
    %v2009 = vpack.c.b16 %v1617, %v1609
    %v2010 = vpack.c.b16 %v1626, %v1618
    %v2011 = vpack.c.b16 %v1627, %v1619
    %v2012 = vpack.c.b16 %v1628, %v1620
    %v2013 = vpack.c.b16 %v1629, %v1621
    %v2014 = vpack.c.b16 %v1630, %v1622
    %v2015 = vpack.c.b16 %v1631, %v1623
    %v2016 = vpack.c.b16 %v1632, %v1624
    %v2017 = vpack.c.b16 %v1633, %v1625
    %v2018 = vpack.c.b16 %v1642, %v1634
    %v2019 = vpack.c.b16 %v1643, %v1635
    %v2020 = vpack.c.b16 %v1644, %v1636
    %v2021 = vpack.c.b16 %v1645, %v1637
    %v2022 = vpack.c.b16 %v1646, %v1638
    %v2023 = vpack.c.b16 %v1647, %v1639
    %v2024 = vpack.c.b16 %v1648, %v1640
    %v2025 = vpack.c.b16 %v1649, %v1641
    %v2026 = vpack.c.b16 %v1658, %v1650
    %v2027 = vpack.c.b16 %v1659, %v1651
    %v2028 = vpack.c.b16 %v1660, %v1652
    %v2029 = vpack.c.b16 %v1661, %v1653
    %v2030 = vpack.c.b16 %v1662, %v1654
    %v2031 = vpack.c.b16 %v1663, %v1655
    %v2032 = vpack.c.b16 %v1664, %v1656
    %v2033 = vpack.c.b16 %v1665, %v1657
    %v2034 = vpack.c.b16 %v1674, %v1666
    %v2035 = vpack.c.b16 %v1675, %v1667
    %v2036 = vpack.c.b16 %v1676, %v1668
    %v2037 = vpack.c.b16 %v1677, %v1669
    %v2038 = vpack.c.b16 %v1678, %v1670
    %v2039 = vpack.c.b16 %v1679, %v1671
    %v2040 = vpack.c.b16 %v1680, %v1672
    %v2041 = vpack.c.b16 %v1681, %v1673
    %v2042 = vpack.c.b16 %v1690, %v1682
    %v2043 = vpack.c.b16 %v1691, %v1683
    %v2044 = vpack.c.b16 %v1692, %v1684
    %v2045 = vpack.c.b16 %v1693, %v1685
    %v2046 = vpack.c.b16 %v1694, %v1686
    %v2047 = vpack.c.b16 %v1695, %v1687
    %v2048 = vpack.c.b16 %v1696, %v1688
    %v2049 = vpack.c.b16 %v1697, %v1689
    %v2050 = vpack.c.b16 %v1706, %v1698
    %v2051 = vpack.c.b16 %v1707, %v1699
    %v2052 = vpack.c.b16 %v1708, %v1700
    %v2053 = vpack.c.b16 %v1709, %v1701
    %v2054 = vpack.c.b16 %v1710, %v1702
    %v2055 = vpack.c.b16 %v1711, %v1703
    %v2056 = vpack.c.b16 %v1712, %v1704
    %v2057 = vpack.c.b16 %v1713, %v1705
    %v2058 = vpack.c.b16 %v1722, %v1714
    %v2059 = vpack.c.b16 %v1723, %v1715
    %v2060 = vpack.c.b16 %v1724, %v1716
    %v2061 = vpack.c.b16 %v1725, %v1717
    %v2062 = vpack.c.b16 %v1726, %v1718
    %v2063 = vpack.c.b16 %v1727, %v1719
    %v2064 = vpack.c.b16 %v1728, %v1720
    %v2065 = vpack.c.b16 %v1729, %v1721
    %v2066 = vpack.c.b16 %v1738, %v1730
    %v2067 = vpack.c.b16 %v1739, %v1731
    %v2068 = vpack.c.b16 %v1740, %v1732
    %v2069 = vpack.c.b16 %v1741, %v1733
    %v2070 = vpack.c.b16 %v1742, %v1734
    %v2071 = vpack.c.b16 %v1743, %v1735
    %v2072 = vpack.c.b16 %v1744, %v1736
    %v2073 = vpack.c.b16 %v1745, %v1737
    %v2074 = vpack.c.b16 %v1754, %v1746
    %v2075 = vpack.c.b16 %v1755, %v1747
    %v2076 = vpack.c.b16 %v1756, %v1748
    %v2077 = vpack.c.b16 %v1757, %v1749
    %v2078 = vpack.c.b16 %v1758, %v1750
    %v2079 = vpack.c.b16 %v1759, %v1751
    %v2080 = vpack.c.b16 %v1760, %v1752
    %v2081 = vpack.c.b16 %v1761, %v1753
    %v2082 = vpack.c.b16 %v1770, %v1762
    %v2083 = vpack.c.b16 %v1771, %v1763
    %v2084 = vpack.c.b16 %v1772, %v1764
    %v2085 = vpack.c.b16 %v1773, %v1765
    %v2086 = vpack.c.b16 %v1774, %v1766
    %v2087 = vpack.c.b16 %v1775, %v1767
    %v2088 = vpack.c.b16 %v1776, %v1768
    %v2089 = vpack.c.b16 %v1777, %v1769
    %v2090 = vpack.c.b16 %v1786, %v1778
    %v2091 = vpack.c.b16 %v1787, %v1779
    %v2092 = vpack.c.b16 %v1788, %v1780
    %v2093 = vpack.c.b16 %v1789, %v1781
    %v2094 = vpack.c.b16 %v1790, %v1782
    %v2095 = vpack.c.b16 %v1791, %v1783
    %v2096 = vpack.c.b16 %v1792, %v1784
    %v2097 = vpack.c.b16 %v1793, %v1785
    %v2098 = vpack.c.b16 %v1802, %v1794
    %v2099 = vpack.c.b16 %v1803, %v1795
    %v2100 = vpack.c.b16 %v1804, %v1796
    %v2101 = vpack.c.b16 %v1805, %v1797
    %v2102 = vpack.c.b16 %v1806, %v1798
    %v2103 = vpack.c.b16 %v1807, %v1799
    %v2104 = vpack.c.b16 %v1808, %v1800
    %v2105 = vpack.c.b16 %v1809, %v1801
    %v2106 = vpack.c.b16 %v1818, %v1810
    %v2107 = vpack.c.b16 %v1819, %v1811
    %v2108 = vpack.c.b16 %v1820, %v1812
    %v2109 = vpack.c.b16 %v1821, %v1813
    %v2110 = vpack.c.b16 %v1822, %v1814
    %v2111 = vpack.c.b16 %v1823, %v1815
    %v2112 = vpack.c.b16 %v1824, %v1816
    %v2113 = vpack.c.b16 %v1825, %v1817
    %v2114 = vpack.c.b16 %v1834, %v1826
    %v2115 = vpack.c.b16 %v1835, %v1827
    %v2116 = vpack.c.b16 %v1836, %v1828
    %v2117 = vpack.c.b16 %v1837, %v1829
    %v2118 = vpack.c.b16 %v1838, %v1830
    %v2119 = vpack.c.b16 %v1839, %v1831
    %v2120 = vpack.c.b16 %v1840, %v1832
    %v2121 = vpack.c.b16 %v1841, %v1833
    %v2122 = vpack.c.b16 %v1850, %v1842
    %v2123 = vpack.c.b16 %v1851, %v1843
    %v2124 = vpack.c.b16 %v1852, %v1844
    %v2125 = vpack.c.b16 %v1853, %v1845
    %v2126 = vpack.c.b16 %v1854, %v1846
    %v2127 = vpack.c.b16 %v1855, %v1847
    %v2128 = vpack.c.b16 %v1856, %v1848
    %v2129 = vpack.c.b16 %v1857, %v1849
    %v2130 = vpack.c.b16 %v1866, %v1858
    %v2131 = vpack.c.b16 %v1867, %v1859
    %v2132 = vpack.c.b16 %v1868, %v1860
    %v2133 = vpack.c.b16 %v1869, %v1861
    %v2134 = vpack.c.b16 %v1870, %v1862
    %v2135 = vpack.c.b16 %v1871, %v1863
    %v2136 = vpack.c.b16 %v1872, %v1864
    %v2137 = vpack.c.b16 %v1873, %v1865
    %v2138 = vpack.c.b16 %v1882, %v1874
    %v2139 = vpack.c.b16 %v1883, %v1875
    %v2140 = vpack.c.b16 %v1884, %v1876
    %v2141 = vpack.c.b16 %v1885, %v1877
    %v2142 = vpack.c.b16 %v1886, %v1878
    %v2143 = vpack.c.b16 %v1887, %v1879
    %v2144 = vpack.c.b16 %v1888, %v1880
    %v2145 = vpack.c.b16 %v1889, %v1881
    %2402 = vmatprep.subr.bf16.mxu0 %v1891
    %2403 = vmatpush1.bf16.msra.mxu0 %v1890
    %2404 = vmatprep.subr.bf16.mxu0 %v1899
    %2405 = vmatpush1.bf16.msra.mxu0 %v1898
    %2406 = vmatprep.subr.bf16.mxu0 %v1907
    %2407 = vmatpush1.bf16.msra.mxu0 %v1906
    %2408 = vmatprep.subr.bf16.mxu0 %v1915
    %2409 = vmatpush1.bf16.msra.mxu0 %v1914
    %2410 = vmatprep.subr.bf16.mxu0 %v1923
    %2411 = vmatpush1.bf16.msra.mxu0 %v1922
    %2412 = vmatprep.subr.bf16.mxu0 %v1931
    %2413 = vmatpush1.bf16.msra.mxu0 %v1930
    %2414 = vmatprep.subr.bf16.mxu0 %v1939
    %2415 = vmatpush1.bf16.msra.mxu0 %v1938
    %2416 = vmatprep.subr.bf16.mxu0 %v1947
    %2417 = vmatpush1.bf16.msra.mxu0 %v1946
    %2418 = vmatprep.subr.bf16.mxu0 %v1955
    %2419 = vmatpush1.bf16.msra.mxu0 %v1954
    %2420 = vmatprep.subr.bf16.mxu0 %v1963
    %2421 = vmatpush1.bf16.msra.mxu0 %v1962
    %2422 = vmatprep.subr.bf16.mxu0 %v1971
    %2423 = vmatpush1.bf16.msra.mxu0 %v1970
    %2424 = vmatprep.subr.bf16.mxu0 %v1979
    %2425 = vmatpush1.bf16.msra.mxu0 %v1978
    %2426 = vmatprep.subr.bf16.mxu0 %v1987
    %2427 = vmatpush1.bf16.msra.mxu0 %v1986
    %2428 = vmatprep.subr.bf16.mxu0 %v1995
    %2429 = vmatpush1.bf16.msra.mxu0 %v1994
    %2430 = vmatprep.subr.bf16.mxu0 %v2003
    %2431 = vmatpush1.bf16.msra.mxu0 %v2002
    %2432 = vmatprep.subr.bf16.mxu0 %v2011
    %2433 = vmatpush1.bf16.msra.mxu0 %v2010
    %2434 = vmatprep.mubr.bf16.mxu0 %v821
    %2435 = vmatmul.mubr.bf16.gmra.mrb[0].mxu0 %v820
    %v2436 = vpop.f32.mrb[0].mxu0
    %v2437 = vadd.f32 %v1085, %v2436
    %v2438 = vpop.f32.mrb[0].mxu0
    %v2439 = vadd.f32 %v1089, %v2438
    %v2440 = vpop.f32.mrb[0].mxu0
    %v2441 = vadd.f32 %v1085, %v2440
    %v2442 = vpop.f32.mrb[0].mxu0
    %v2443 = vadd.f32 %v1089, %v2442
    %2444 = vdwg.mxu0
    %2445 = vmatprep.subr.bf16.mxu0 %v2019
    %2446 = vmatpush1.bf16.msra.mxu0 %v2018
    %2447 = vmatprep.subr.bf16.mxu0 %v2027
    %2448 = vmatpush1.bf16.msra.mxu0 %v2026
    %2449 = vmatprep.subr.bf16.mxu0 %v2035
    %2450 = vmatpush1.bf16.msra.mxu0 %v2034
    %2451 = vmatprep.subr.bf16.mxu0 %v2043
    %2452 = vmatpush1.bf16.msra.mxu0 %v2042
    %2453 = vmatprep.subr.bf16.mxu0 %v2051
    %2454 = vmatpush1.bf16.msra.mxu0 %v2050
    %2455 = vmatprep.subr.bf16.mxu0 %v2059
    %2456 = vmatpush1.bf16.msra.mxu0 %v2058
    %2457 = vmatprep.subr.bf16.mxu0 %v2067
    %2458 = vmatpush1.bf16.msra.mxu0 %v2066
    %2459 = vmatprep.subr.bf16.mxu0 %v2075
    %2460 = vmatpush1.bf16.msra.mxu0 %v2074
    %2461 = vmatprep.subr.bf16.mxu0 %v2083
    %2462 = vmatpush1.bf16.msra.mxu0 %v2082
    %2463 = vmatprep.subr.bf16.mxu0 %v2091
    %2464 = vmatpush1.bf16.msra.mxu0 %v2090
    %2465 = vmatprep.subr.bf16.mxu0 %v2099
    %2466 = vmatpush1.bf16.msra.mxu0 %v2098
    %2467 = vmatprep.subr.bf16.mxu0 %v2107
    %2468 = vmatpush1.bf16.msra.mxu0 %v2106
    %2469 = vmatprep.subr.bf16.mxu0 %v2115
    %2470 = vmatpush1.bf16.msra.mxu0 %v2114
    %2471 = vmatprep.subr.bf16.mxu0 %v2123
    %2472 = vmatpush1.bf16.msra.mxu0 %v2122
    %2473 = vmatprep.subr.bf16.mxu0 %v2131
    %2474 = vmatpush1.bf16.msra.mxu0 %v2130
    %2475 = vmatprep.subr.bf16.mxu0 %v2139
    %2476 = vmatpush1.bf16.msra.mxu0 %v2138
    %2477 = vmatprep.mubr.bf16.mxu0 %v823
    %2478 = vmatmul.mubr.bf16.gmra.mrb[0].mxu0 %v822
    %v2479 = vpop.f32.mrb[0].mxu0
    %v2480 = vadd.f32 %v2437, %v2479
    %v2481 = vpop.f32.mrb[0].mxu0
    %v2482 = vadd.f32 %v2439, %v2481
    %v2483 = vpop.f32.mrb[0].mxu0
    %v2484 = vadd.f32 %v2441, %v2483
    %v2485 = vpop.f32.mrb[0].mxu0
    %v2486 = vadd.f32 %v2443, %v2485
    %2487 = vdwg.mxu0
    %2488 = vmatprep.subr.bf16.mxu0 %v1893
    %2489 = vmatpush1.bf16.msra.mxu0 %v1892
    %2490 = vmatprep.subr.bf16.mxu0 %v1901
    %2491 = vmatpush1.bf16.msra.mxu0 %v1900
    %2492 = vmatprep.subr.bf16.mxu0 %v1909
    %2493 = vmatpush1.bf16.msra.mxu0 %v1908
    %2494 = vmatprep.subr.bf16.mxu0 %v1917
    %2495 = vmatpush1.bf16.msra.mxu0 %v1916
    %2496 = vmatprep.subr.bf16.mxu0 %v1925
    %2497 = vmatpush1.bf16.msra.mxu0 %v1924
    %2498 = vmatprep.subr.bf16.mxu0 %v1933
    %2499 = vmatpush1.bf16.msra.mxu0 %v1932
    %2500 = vmatprep.subr.bf16.mxu0 %v1941
    %2501 = vmatpush1.bf16.msra.mxu0 %v1940
    %2502 = vmatprep.subr.bf16.mxu0 %v1949
    %2503 = vmatpush1.bf16.msra.mxu0 %v1948
    %2504 = vmatprep.subr.bf16.mxu0 %v1957
    %2505 = vmatpush1.bf16.msra.mxu0 %v1956
    %2506 = vmatprep.subr.bf16.mxu0 %v1965
    %2507 = vmatpush1.bf16.msra.mxu0 %v1964
    %2508 = vmatprep.subr.bf16.mxu0 %v1973
    %2509 = vmatpush1.bf16.msra.mxu0 %v1972
    %2510 = vmatprep.subr.bf16.mxu0 %v1981
    %2511 = vmatpush1.bf16.msra.mxu0 %v1980
    %2512 = vmatprep.subr.bf16.mxu0 %v1989
    %2513 = vmatpush1.bf16.msra.mxu0 %v1988
    %2514 = vmatprep.subr.bf16.mxu0 %v1997
    %2515 = vmatpush1.bf16.msra.mxu0 %v1996
    %2516 = vmatprep.subr.bf16.mxu0 %v2005
    %2517 = vmatpush1.bf16.msra.mxu0 %v2004
    %2518 = vmatprep.subr.bf16.mxu0 %v2013
    %2519 = vmatpush1.bf16.msra.mxu0 %v2012
    %2520 = vmatprep.mubr.bf16.mxu0 %v821
    %2521 = vmatmul.mubr.bf16.gmra.mrb[0].mxu0 %v820
    %v2522 = vpop.f32.mrb[0].mxu0
    %v2523 = vadd.f32 %v1093, %v2522
    %v2524 = vpop.f32.mrb[0].mxu0
    %v2525 = vadd.f32 %v1097, %v2524
    %v2526 = vpop.f32.mrb[0].mxu0
    %v2527 = vadd.f32 %v1093, %v2526
    %v2528 = vpop.f32.mrb[0].mxu0
    %v2529 = vadd.f32 %v1097, %v2528
    %2530 = vdwg.mxu0
    %2531 = vmatprep.subr.bf16.mxu0 %v2021
    %2532 = vmatpush1.bf16.msra.mxu0 %v2020
    %2533 = vmatprep.subr.bf16.mxu0 %v2029
    %2534 = vmatpush1.bf16.msra.mxu0 %v2028
    %2535 = vmatprep.subr.bf16.mxu0 %v2037
    %2536 = vmatpush1.bf16.msra.mxu0 %v2036
    %2537 = vmatprep.subr.bf16.mxu0 %v2045
    %2538 = vmatpush1.bf16.msra.mxu0 %v2044
    %2539 = vmatprep.subr.bf16.mxu0 %v2053
    %2540 = vmatpush1.bf16.msra.mxu0 %v2052
    %2541 = vmatprep.subr.bf16.mxu0 %v2061
    %2542 = vmatpush1.bf16.msra.mxu0 %v2060
    %2543 = vmatprep.subr.bf16.mxu0 %v2069
    %2544 = vmatpush1.bf16.msra.mxu0 %v2068
    %2545 = vmatprep.subr.bf16.mxu0 %v2077
    %2546 = vmatpush1.bf16.msra.mxu0 %v2076
    %2547 = vmatprep.subr.bf16.mxu0 %v2085
    %2548 = vmatpush1.bf16.msra.mxu0 %v2084
    %2549 = vmatprep.subr.bf16.mxu0 %v2093
    %2550 = vmatpush1.bf16.msra.mxu0 %v2092
    %2551 = vmatprep.subr.bf16.mxu0 %v2101
    %2552 = vmatpush1.bf16.msra.mxu0 %v2100
    %2553 = vmatprep.subr.bf16.mxu0 %v2109
    %2554 = vmatpush1.bf16.msra.mxu0 %v2108
    %2555 = vmatprep.subr.bf16.mxu0 %v2117
    %2556 = vmatpush1.bf16.msra.mxu0 %v2116
    %2557 = vmatprep.subr.bf16.mxu0 %v2125
    %2558 = vmatpush1.bf16.msra.mxu0 %v2124
    %2559 = vmatprep.subr.bf16.mxu0 %v2133
    %2560 = vmatpush1.bf16.msra.mxu0 %v2132
    %2561 = vmatprep.subr.bf16.mxu0 %v2141
    %2562 = vmatpush1.bf16.msra.mxu0 %v2140
    %2563 = vmatprep.mubr.bf16.mxu0 %v823
    %2564 = vmatmul.mubr.bf16.gmra.mrb[0].mxu0 %v822
    %v2565 = vpop.f32.mrb[0].mxu0
    %v2566 = vadd.f32 %v2523, %v2565
    %v2567 = vpop.f32.mrb[0].mxu0
    %v2568 = vadd.f32 %v2525, %v2567
    %v2569 = vpop.f32.mrb[0].mxu0
    %v2570 = vadd.f32 %v2527, %v2569
    %v2571 = vpop.f32.mrb[0].mxu0
    %v2572 = vadd.f32 %v2529, %v2571
    %2573 = vdwg.mxu0
    %2574 = vmatprep.subr.bf16.mxu0 %v1895
    %2575 = vmatpush1.bf16.msra.mxu0 %v1894
    %2576 = vmatprep.subr.bf16.mxu0 %v1903
    %2577 = vmatpush1.bf16.msra.mxu0 %v1902
    %2578 = vmatprep.subr.bf16.mxu0 %v1911
    %2579 = vmatpush1.bf16.msra.mxu0 %v1910
    %2580 = vmatprep.subr.bf16.mxu0 %v1919
    %2581 = vmatpush1.bf16.msra.mxu0 %v1918
    %2582 = vmatprep.subr.bf16.mxu0 %v1927
    %2583 = vmatpush1.bf16.msra.mxu0 %v1926
    %2584 = vmatprep.subr.bf16.mxu0 %v1935
    %2585 = vmatpush1.bf16.msra.mxu0 %v1934
    %2586 = vmatprep.subr.bf16.mxu0 %v1943
    %2587 = vmatpush1.bf16.msra.mxu0 %v1942
    %2588 = vmatprep.subr.bf16.mxu0 %v1951
    %2589 = vmatpush1.bf16.msra.mxu0 %v1950
    %2590 = vmatprep.subr.bf16.mxu0 %v1959
    %2591 = vmatpush1.bf16.msra.mxu0 %v1958
    %2592 = vmatprep.subr.bf16.mxu0 %v1967
    %2593 = vmatpush1.bf16.msra.mxu0 %v1966
    %2594 = vmatprep.subr.bf16.mxu0 %v1975
    %2595 = vmatpush1.bf16.msra.mxu0 %v1974
    %2596 = vmatprep.subr.bf16.mxu0 %v1983
    %2597 = vmatpush1.bf16.msra.mxu0 %v1982
    %2598 = vmatprep.subr.bf16.mxu0 %v1991
    %2599 = vmatpush1.bf16.msra.mxu0 %v1990
    %2600 = vmatprep.subr.bf16.mxu0 %v1999
    %2601 = vmatpush1.bf16.msra.mxu0 %v1998
    %2602 = vmatprep.subr.bf16.mxu0 %v2007
    %2603 = vmatpush1.bf16.msra.mxu0 %v2006
    %2604 = vmatprep.subr.bf16.mxu0 %v2015
    %2605 = vmatpush1.bf16.msra.mxu0 %v2014
    %2606 = vmatprep.mubr.bf16.mxu0 %v821
    %2607 = vmatmul.mubr.bf16.gmra.mrb[0].mxu0 %v820
    %v2608 = vpop.f32.mrb[0].mxu0
    %v2609 = vadd.f32 %v1101, %v2608
    %v2610 = vpop.f32.mrb[0].mxu0
    %v2611 = vadd.f32 %v1105, %v2610
    %v2612 = vpop.f32.mrb[0].mxu0
    %v2613 = vadd.f32 %v1101, %v2612
    %v2614 = vpop.f32.mrb[0].mxu0
    %v2615 = vadd.f32 %v1105, %v2614
    %2616 = vdwg.mxu0
    %2617 = vmatprep.subr.bf16.mxu0 %v2023
    %2618 = vmatpush1.bf16.msra.mxu0 %v2022
    %2619 = vmatprep.subr.bf16.mxu0 %v2031
    %2620 = vmatpush1.bf16.msra.mxu0 %v2030
    %2621 = vmatprep.subr.bf16.mxu0 %v2039
    %2622 = vmatpush1.bf16.msra.mxu0 %v2038
    %2623 = vmatprep.subr.bf16.mxu0 %v2047
    %2624 = vmatpush1.bf16.msra.mxu0 %v2046
    %2625 = vmatprep.subr.bf16.mxu0 %v2055
    %2626 = vmatpush1.bf16.msra.mxu0 %v2054
    %2627 = vmatprep.subr.bf16.mxu0 %v2063
    %2628 = vmatpush1.bf16.msra.mxu0 %v2062
    %2629 = vmatprep.subr.bf16.mxu0 %v2071
    %2630 = vmatpush1.bf16.msra.mxu0 %v2070
    %2631 = vmatprep.subr.bf16.mxu0 %v2079
    %2632 = vmatpush1.bf16.msra.mxu0 %v2078
    %2633 = vmatprep.subr.bf16.mxu0 %v2087
    %2634 = vmatpush1.bf16.msra.mxu0 %v2086
    %2635 = vmatprep.subr.bf16.mxu0 %v2095
    %2636 = vmatpush1.bf16.msra.mxu0 %v2094
    %2637 = vmatprep.subr.bf16.mxu0 %v2103
    %2638 = vmatpush1.bf16.msra.mxu0 %v2102
    %2639 = vmatprep.subr.bf16.mxu0 %v2111
    %2640 = vmatpush1.bf16.msra.mxu0 %v2110
    %2641 = vmatprep.subr.bf16.mxu0 %v2119
    %2642 = vmatpush1.bf16.msra.mxu0 %v2118
    %2643 = vmatprep.subr.bf16.mxu0 %v2127
    %2644 = vmatpush1.bf16.msra.mxu0 %v2126
    %2645 = vmatprep.subr.bf16.mxu0 %v2135
    %2646 = vmatpush1.bf16.msra.mxu0 %v2134
    %2647 = vmatprep.subr.bf16.mxu0 %v2143
    %2648 = vmatpush1.bf16.msra.mxu0 %v2142
    %2649 = vmatprep.mubr.bf16.mxu0 %v823
    %2650 = vmatmul.mubr.bf16.gmra.mrb[0].mxu0 %v822
    %v2651 = vpop.f32.mrb[0].mxu0
    %v2652 = vadd.f32 %v2609, %v2651
    %v2653 = vpop.f32.mrb[0].mxu0
    %v2654 = vadd.f32 %v2611, %v2653
    %v2655 = vpop.f32.mrb[0].mxu0
    %v2656 = vadd.f32 %v2613, %v2655
    %v2657 = vpop.f32.mrb[0].mxu0
    %v2658 = vadd.f32 %v2615, %v2657
    %2659 = vdwg.mxu0
    %2660 = vmatprep.subr.bf16.mxu0 %v1897
    %2661 = vmatpush1.bf16.msra.mxu0 %v1896
    %2662 = vmatprep.subr.bf16.mxu0 %v1905
    %2663 = vmatpush1.bf16.msra.mxu0 %v1904
    %2664 = vmatprep.subr.bf16.mxu0 %v1913
    %2665 = vmatpush1.bf16.msra.mxu0 %v1912
    %2666 = vmatprep.subr.bf16.mxu0 %v1921
    %2667 = vmatpush1.bf16.msra.mxu0 %v1920
    %2668 = vmatprep.subr.bf16.mxu0 %v1929
    %2669 = vmatpush1.bf16.msra.mxu0 %v1928
    %2670 = vmatprep.subr.bf16.mxu0 %v1937
    %2671 = vmatpush1.bf16.msra.mxu0 %v1936
    %2672 = vmatprep.subr.bf16.mxu0 %v1945
    %2673 = vmatpush1.bf16.msra.mxu0 %v1944
    %2674 = vmatprep.subr.bf16.mxu0 %v1953
    %2675 = vmatpush1.bf16.msra.mxu0 %v1952
    %2676 = vmatprep.subr.bf16.mxu0 %v1961
    %2677 = vmatpush1.bf16.msra.mxu0 %v1960
    %2678 = vmatprep.subr.bf16.mxu0 %v1969
    %2679 = vmatpush1.bf16.msra.mxu0 %v1968
    %2680 = vmatprep.subr.bf16.mxu0 %v1977
    %2681 = vmatpush1.bf16.msra.mxu0 %v1976
    %2682 = vmatprep.subr.bf16.mxu0 %v1985
    %2683 = vmatpush1.bf16.msra.mxu0 %v1984
    %2684 = vmatprep.subr.bf16.mxu0 %v1993
    %2685 = vmatpush1.bf16.msra.mxu0 %v1992
    %2686 = vmatprep.subr.bf16.mxu0 %v2001
    %2687 = vmatpush1.bf16.msra.mxu0 %v2000
    %2688 = vmatprep.subr.bf16.mxu0 %v2009
    %2689 = vmatpush1.bf16.msra.mxu0 %v2008
    %2690 = vmatprep.subr.bf16.mxu0 %v2017
    %2691 = vmatpush1.bf16.msra.mxu0 %v2016
    %2692 = vmatprep.mubr.bf16.mxu0 %v821
    %2693 = vmatmul.mubr.bf16.gmra.mrb[0].mxu0 %v820
    %v2694 = vpop.f32.mrb[0].mxu0
    %v2695 = vadd.f32 %v1109, %v2694
    %v2696 = vpop.f32.mrb[0].mxu0
    %v2697 = vadd.f32 %v1113, %v2696
    %v2698 = vpop.f32.mrb[0].mxu0
    %v2699 = vadd.f32 %v1109, %v2698
    %v2700 = vpop.f32.mrb[0].mxu0
    %v2701 = vadd.f32 %v1113, %v2700
    %2702 = vdwg.mxu0
    %2703 = vmatprep.subr.bf16.mxu0 %v2025
    %2704 = vmatpush1.bf16.msra.mxu0 %v2024
    %2705 = vmatprep.subr.bf16.mxu0 %v2033
    %2706 = vmatpush1.bf16.msra.mxu0 %v2032
    %2707 = vmatprep.subr.bf16.mxu0 %v2041
    %2708 = vmatpush1.bf16.msra.mxu0 %v2040
    %2709 = vmatprep.subr.bf16.mxu0 %v2049
    %2710 = vmatpush1.bf16.msra.mxu0 %v2048
    %2711 = vmatprep.subr.bf16.mxu0 %v2057
    %2712 = vmatpush1.bf16.msra.mxu0 %v2056
    %2713 = vmatprep.subr.bf16.mxu0 %v2065
    %2714 = vmatpush1.bf16.msra.mxu0 %v2064
    %2715 = vmatprep.subr.bf16.mxu0 %v2073
    %2716 = vmatpush1.bf16.msra.mxu0 %v2072
    %2717 = vmatprep.subr.bf16.mxu0 %v2081
    %2718 = vmatpush1.bf16.msra.mxu0 %v2080
    %2719 = vmatprep.subr.bf16.mxu0 %v2089
    %2720 = vmatpush1.bf16.msra.mxu0 %v2088
    %2721 = vmatprep.subr.bf16.mxu0 %v2097
    %2722 = vmatpush1.bf16.msra.mxu0 %v2096
    %2723 = vmatprep.subr.bf16.mxu0 %v2105
    %2724 = vmatpush1.bf16.msra.mxu0 %v2104
    %2725 = vmatprep.subr.bf16.mxu0 %v2113
    %2726 = vmatpush1.bf16.msra.mxu0 %v2112
    %2727 = vmatprep.subr.bf16.mxu0 %v2121
    %2728 = vmatpush1.bf16.msra.mxu0 %v2120
    %2729 = vmatprep.subr.bf16.mxu0 %v2129
    %2730 = vmatpush1.bf16.msra.mxu0 %v2128
    %2731 = vmatprep.subr.bf16.mxu0 %v2137
    %2732 = vmatpush1.bf16.msra.mxu0 %v2136
    %2733 = vmatprep.subr.bf16.mxu0 %v2145
    %2734 = vmatpush1.bf16.msra.mxu0 %v2144
    %2735 = vmatprep.mubr.bf16.mxu0 %v823
    %2736 = vmatmul.mubr.bf16.gmra.mrb[0].mxu0 %v822
    %v2737 = vpop.f32.mrb[0].mxu0
    %v2738 = vadd.f32 %v2695, %v2737
    %v2739 = vpop.f32.mrb[0].mxu0
    %v2740 = vadd.f32 %v2697, %v2739
    %v2741 = vpop.f32.mrb[0].mxu0
    %v2742 = vadd.f32 %v2699, %v2741
    %v2743 = vpop.f32.mrb[0].mxu0
    %v2744 = vadd.f32 %v2701, %v2743
    %2745 = vdwg.mxu0
    %v2746 = vpack.c.bf16 %v2484, %v2480
    %v2747 = vpack.c.bf16 %v2486, %v2482
    %v2748 = vpack.c.bf16 %v2570, %v2566
    %v2749 = vpack.c.bf16 %v2572, %v2568
    %v2750 = vpack.c.bf16 %v2656, %v2652
    %v2751 = vpack.c.bf16 %v2658, %v2654
    %v2752 = vpack.c.bf16 %v2742, %v2738
    %v2753 = vpack.c.bf16 %v2744, %v2740
    %vm2754 = vcmp.gt.bf16.partialorder %v2746, 0
    %vm2755 = vcmp.gt.bf16.partialorder %v2747, 0
    %vm2756 = vcmp.gt.bf16.partialorder %v2748, 0
    %vm2757 = vcmp.gt.bf16.partialorder %v2749, 0
    %vm2758 = vcmp.gt.bf16.partialorder %v2750, 0
    %vm2759 = vcmp.gt.bf16.partialorder %v2751, 0
    %vm2760 = vcmp.gt.bf16.partialorder %v2752, 0
    %vm2761 = vcmp.gt.bf16.partialorder %v2753, 0
    %v2762 = vmul.bf16 %v2746, 1045249613
    %v2763 = vmul.bf16 %v2747, 1045249613
    %v2764 = vmul.bf16 %v2748, 1045249613
    %v2765 = vmul.bf16 %v2749, 1045249613
    %v2766 = vmul.bf16 %v2750, 1045249613
    %v2767 = vmul.bf16 %v2751, 1045249613
    %v2768 = vmul.bf16 %v2752, 1045249613
    %v2769 = vmul.bf16 %v2753, 1045249613
    %v2770 = vsel %vm2754, %v2746, %v2762
    %v2771 = vsel %vm2755, %v2747, %v2763
    %v2772 = vsel %vm2756, %v2748, %v2764
    %v2773 = vsel %vm2757, %v2749, %v2765
    %v2774 = vsel %vm2758, %v2750, %v2766
    %v2775 = vsel %vm2759, %v2751, %v2767
    %v2776 = vsel %vm2760, %v2752, %v2768
    %v2777 = vsel %vm2761, %v2753, %v2769
    %v2778 = vld [vmem:[#allocation14] sm:$0xff]
    %v2779 = vld [vmem:[#allocation14 + $0x8] sm:$0xff]
    %v2780 = vld [vmem:[#allocation14 + $0x10] sm:$0xff]
    %v2781 = vld [vmem:[#allocation14 + $0x18] sm:$0xf]
    %v2782 = vld [vmem:[#allocation14 + $0x1c] sm:$0xff]
    %v2783 = vld [vmem:[#allocation14 + $0x24] sm:$0xff]
    %v2784 = vld [vmem:[#allocation14 + $0x2c] sm:$0xff]
    %v2785 = vld [vmem:[#allocation14 + $0x34] sm:$0xf]
    %v2786 = vld [vmem:[#allocation14 + $0x38] sm:$0xff]
    %v2787 = vld [vmem:[#allocation14 + $0x40] sm:$0xff]
    %v2788 = vld [vmem:[#allocation14 + $0x48] sm:$0xff]
    %v2789 = vld [vmem:[#allocation14 + $0x50] sm:$0xf]
    %v2790 = vld [vmem:[#allocation14 + $0x54] sm:$0xff]
    %v2791 = vld [vmem:[#allocation14 + $0x5c] sm:$0xff]
    %v2792 = vld [vmem:[#allocation14 + $0x64] sm:$0xff]
    %v2793 = vld [vmem:[#allocation14 + $0x6c] sm:$0xf]
    %v2794 = vld [vmem:[#allocation14 + $0x70] sm:$0xff]
    %v2795 = vld [vmem:[#allocation14 + $0x78] sm:$0xff]
    %v2796 = vld [vmem:[#allocation14 + $0x80] sm:$0xff]
    %v2797 = vld [vmem:[#allocation14 + $0x88] sm:$0xf]
    %v2798 = vld [vmem:[#allocation14 + $0x8c] sm:$0xff]
    %v2799 = vld [vmem:[#allocation14 + $0x94] sm:$0xff]
    %v2800 = vld [vmem:[#allocation14 + $0x9c] sm:$0xff]
    %v2801 = vld [vmem:[#allocation14 + $0xa4] sm:$0xf]
    %v2802 = vld [vmem:[#allocation14 + $0xa8] sm:$0xff]
    %v2803 = vld [vmem:[#allocation14 + $0xb0] sm:$0xff]
    %v2804 = vld [vmem:[#allocation14 + $0xb8] sm:$0xff]
    %v2805 = vld [vmem:[#allocation14 + $0xc0] sm:$0xf]
    %v2806 = vld [vmem:[#allocation14 + $0xc4] sm:$0xff]
    %v2807 = vld [vmem:[#allocation14 + $0xcc] sm:$0xff]
    %v2808 = vld [vmem:[#allocation14 + $0xd4] sm:$0xff]
    %v2809 = vld [vmem:[#allocation14 + $0xdc] sm:$0xf]
    %v2810 = vld [vmem:[#allocation14 + $0xe0] sm:$0xff]
    %v2811 = vld [vmem:[#allocation14 + $0xe8] sm:$0xff]
    %v2812 = vld [vmem:[#allocation14 + $0xf0] sm:$0xff]
    %v2813 = vld [vmem:[#allocation14 + $0xf8] sm:$0xf]
    %v2814 = vld [vmem:[#allocation14 + $0xfc] sm:$0xff]
    %v2815 = vld [vmem:[#allocation14 + $0x104] sm:$0xff]
    %v2816 = vld [vmem:[#allocation14 + $0x10c] sm:$0xff]
    %v2817 = vld [vmem:[#allocation14 + $0x114] sm:$0xf]
    %v2818 = vld [vmem:[#allocation14 + $0x118] sm:$0xff]
    %v2819 = vld [vmem:[#allocation14 + $0x120] sm:$0xff]
    %v2820 = vld [vmem:[#allocation14 + $0x128] sm:$0xff]
    %v2821 = vld [vmem:[#allocation14 + $0x130] sm:$0xf]
    %v2822 = vld [vmem:[#allocation14 + $0x134] sm:$0xff]
    %v2823 = vld [vmem:[#allocation14 + $0x13c] sm:$0xff]
    %v2824 = vld [vmem:[#allocation14 + $0x144] sm:$0xff]
    %v2825 = vld [vmem:[#allocation14 + $0x14c] sm:$0xf]
    %v2826 = vld [vmem:[#allocation14 + $0x150] sm:$0xff]
    %v2827 = vld [vmem:[#allocation14 + $0x158] sm:$0xff]
    %v2828 = vld [vmem:[#allocation14 + $0x160] sm:$0xff]
    %v2829 = vld [vmem:[#allocation14 + $0x168] sm:$0xf]
    %v2830 = vld [vmem:[#allocation14 + $0x16c] sm:$0xff]
    %v2831 = vld [vmem:[#allocation14 + $0x174] sm:$0xff]
    %v2832 = vld [vmem:[#allocation14 + $0x17c] sm:$0xff]
    %v2833 = vld [vmem:[#allocation14 + $0x184] sm:$0xf]
    %v2834 = vld [vmem:[#allocation14 + $0x188] sm:$0xff]
    %v2835 = vld [vmem:[#allocation14 + $0x190] sm:$0xff]
    %v2836 = vld [vmem:[#allocation14 + $0x198] sm:$0xff]
    %v2837 = vld [vmem:[#allocation14 + $0x1a0] sm:$0xf]
    %v2838 = vld [vmem:[#allocation14 + $0x1a4] sm:$0xff]
    %v2839 = vld [vmem:[#allocation14 + $0x1ac] sm:$0xff]
    %v2840 = vld [vmem:[#allocation14 + $0x1b4] sm:$0xff]
    %v2841 = vld [vmem:[#allocation14 + $0x1bc] sm:$0xf]
    %v2842 = vld [vmem:[#allocation14 + $0x1c0] sm:$0xff]
    %v2843 = vld [vmem:[#allocation14 + $0x1c8] sm:$0xff]
    %v2844 = vld [vmem:[#allocation14 + $0x1d0] sm:$0xff]
    %v2845 = vld [vmem:[#allocation14 + $0x1d8] sm:$0xf]
    %v2846 = vld [vmem:[#allocation14 + $0x1dc] sm:$0xff]
    %v2847 = vld [vmem:[#allocation14 + $0x1e4] sm:$0xff]
    %v2848 = vld [vmem:[#allocation14 + $0x1ec] sm:$0xff]
    %v2849 = vld [vmem:[#allocation14 + $0x1f4] sm:$0xf]
    %v2850 = vld [vmem:[#allocation14 + $0x1f8] sm:$0xff]
    %v2851 = vld [vmem:[#allocation14 + $0x200] sm:$0xff]
    %v2852 = vld [vmem:[#allocation14 + $0x208] sm:$0xff]
    %v2853 = vld [vmem:[#allocation14 + $0x210] sm:$0xf]
    %v2854 = vld [vmem:[#allocation14 + $0x214] sm:$0xff]
    %v2855 = vld [vmem:[#allocation14 + $0x21c] sm:$0xff]
    %v2856 = vld [vmem:[#allocation14 + $0x224] sm:$0xff]
    %v2857 = vld [vmem:[#allocation14 + $0x22c] sm:$0xf]
    %v2858 = vld [vmem:[#allocation14 + $0x230] sm:$0xff]
    %v2859 = vld [vmem:[#allocation14 + $0x238] sm:$0xff]
    %v2860 = vld [vmem:[#allocation14 + $0x240] sm:$0xff]
    %v2861 = vld [vmem:[#allocation14 + $0x248] sm:$0xf]
    %v2862 = vld [vmem:[#allocation14 + $0x24c] sm:$0xff]
    %v2863 = vld [vmem:[#allocation14 + $0x254] sm:$0xff]
    %v2864 = vld [vmem:[#allocation14 + $0x25c] sm:$0xff]
    %v2865 = vld [vmem:[#allocation14 + $0x264] sm:$0xf]
    %v2866 = vld [vmem:[#allocation14 + $0x268] sm:$0xff]
    %v2867 = vld [vmem:[#allocation14 + $0x270] sm:$0xff]
    %v2868 = vld [vmem:[#allocation14 + $0x278] sm:$0xff]
    %v2869 = vld [vmem:[#allocation14 + $0x280] sm:$0xf]
    %v2870 = vld [vmem:[#allocation14 + $0x284] sm:$0xff]
    %v2871 = vld [vmem:[#allocation14 + $0x28c] sm:$0xff]
    %v2872 = vld [vmem:[#allocation14 + $0x294] sm:$0xff]
    %v2873 = vld [vmem:[#allocation14 + $0x29c] sm:$0xf]
    %v2874 = vld [vmem:[#allocation14 + $0x2a0] sm:$0xff]
    %v2875 = vld [vmem:[#allocation14 + $0x2a8] sm:$0xff]
    %v2876 = vld [vmem:[#allocation14 + $0x2b0] sm:$0xff]
    %v2877 = vld [vmem:[#allocation14 + $0x2b8] sm:$0xf]
    %v2878 = vld [vmem:[#allocation14 + $0x2bc] sm:$0xff]
    %v2879 = vld [vmem:[#allocation14 + $0x2c4] sm:$0xff]
    %v2880 = vld [vmem:[#allocation14 + $0x2cc] sm:$0xff]
    %v2881 = vld [vmem:[#allocation14 + $0x2d4] sm:$0xf]
    %v2882 = vld [vmem:[#allocation14 + $0x2d8] sm:$0xff]
    %v2883 = vld [vmem:[#allocation14 + $0x2e0] sm:$0xff]
    %v2884 = vld [vmem:[#allocation14 + $0x2e8] sm:$0xff]
    %v2885 = vld [vmem:[#allocation14 + $0x2f0] sm:$0xf]
    %v2886 = vld [vmem:[#allocation14 + $0x2f4] sm:$0xff]
    %v2887 = vld [vmem:[#allocation14 + $0x2fc] sm:$0xff]
    %v2888 = vld [vmem:[#allocation14 + $0x304] sm:$0xff]
    %v2889 = vld [vmem:[#allocation14 + $0x30c] sm:$0xf]
    %v2890 = vld [vmem:[#allocation14 + $0x310] sm:$0xff]
    %v2891 = vld [vmem:[#allocation14 + $0x318] sm:$0xff]
    %v2892 = vld [vmem:[#allocation14 + $0x320] sm:$0xff]
    %v2893 = vld [vmem:[#allocation14 + $0x328] sm:$0xf]
    %v2894 = vld [vmem:[#allocation14 + $0x32c] sm:$0xff]
    %v2895 = vld [vmem:[#allocation14 + $0x334] sm:$0xff]
    %v2896 = vld [vmem:[#allocation14 + $0x33c] sm:$0xff]
    %v2897 = vld [vmem:[#allocation14 + $0x344] sm:$0xf]
    %v2898 = vld [vmem:[#allocation14 + $0x348] sm:$0xff]
    %v2899 = vld [vmem:[#allocation14 + $0x350] sm:$0xff]
    %v2900 = vld [vmem:[#allocation14 + $0x358] sm:$0xff]
    %v2901 = vld [vmem:[#allocation14 + $0x360] sm:$0xf]
    %v2902 = vld [vmem:[#allocation14 + $0x364] sm:$0xff]
    %v2903 = vld [vmem:[#allocation14 + $0x36c] sm:$0xff]
    %v2904 = vld [vmem:[#allocation14 + $0x374] sm:$0xff]
    %v2905 = vld [vmem:[#allocation14 + $0x37c] sm:$0xf]
    %v2906 = vld [vmem:[#allocation14 + $0x380] sm:$0xff]
    %v2907 = vld [vmem:[#allocation14 + $0x388] sm:$0xff]
    %v2908 = vld [vmem:[#allocation14 + $0x390] sm:$0xff]
    %v2909 = vld [vmem:[#allocation14 + $0x398] sm:$0xf]
    %v2910 = vld [vmem:[#allocation14 + $0x39c] sm:$0xff]
    %v2911 = vld [vmem:[#allocation14 + $0x3a4] sm:$0xff]
    %v2912 = vld [vmem:[#allocation14 + $0x3ac] sm:$0xff]
    %v2913 = vld [vmem:[#allocation14 + $0x3b4] sm:$0xf]
    %v2914 = vld [vmem:[#allocation14 + $0x3b8] sm:$0xff]
    %v2915 = vld [vmem:[#allocation14 + $0x3c0] sm:$0xff]
    %v2916 = vld [vmem:[#allocation14 + $0x3c8] sm:$0xff]
    %v2917 = vld [vmem:[#allocation14 + $0x3d0] sm:$0xf]
    %v2918 = vld [vmem:[#allocation14 + $0x3d4] sm:$0xff]
    %v2919 = vld [vmem:[#allocation14 + $0x3dc] sm:$0xff]
    %v2920 = vld [vmem:[#allocation14 + $0x3e4] sm:$0xff]
    %v2921 = vld [vmem:[#allocation14 + $0x3ec] sm:$0xf]
    %v2922 = vld [vmem:[#allocation14 + $0x3f0] sm:$0xff]
    %v2923 = vld [vmem:[#allocation14 + $0x3f8] sm:$0xff]
    %v2924 = vld [vmem:[#allocation14 + $0x400] sm:$0xff]
    %v2925 = vld [vmem:[#allocation14 + $0x408] sm:$0xf]
    %v2926 = vld [vmem:[#allocation14 + $0x40c] sm:$0xff]
    %v2927 = vld [vmem:[#allocation14 + $0x414] sm:$0xff]
    %v2928 = vld [vmem:[#allocation14 + $0x41c] sm:$0xff]
    %v2929 = vld [vmem:[#allocation14 + $0x424] sm:$0xf]
    %v2930 = vld [vmem:[#allocation14 + $0x428] sm:$0xff]
    %v2931 = vld [vmem:[#allocation14 + $0x430] sm:$0xff]
    %v2932 = vld [vmem:[#allocation14 + $0x438] sm:$0xff]
    %v2933 = vld [vmem:[#allocation14 + $0x440] sm:$0xf]
    %v2934 = vld [vmem:[#allocation14 + $0x444] sm:$0xff]
    %v2935 = vld [vmem:[#allocation14 + $0x44c] sm:$0xff]
    %v2936 = vld [vmem:[#allocation14 + $0x454] sm:$0xff]
    %v2937 = vld [vmem:[#allocation14 + $0x45c] sm:$0xf]
    %v2938 = vld [vmem:[#allocation14 + $0x460] sm:$0xff]
    %v2939 = vld [vmem:[#allocation14 + $0x468] sm:$0xff]
    %v2940 = vld [vmem:[#allocation14 + $0x470] sm:$0xff]
    %v2941 = vld [vmem:[#allocation14 + $0x478] sm:$0xf]
    %v2942 = vld [vmem:[#allocation14 + $0x47c] sm:$0xff]
    %v2943 = vld [vmem:[#allocation14 + $0x484] sm:$0xff]
    %v2944 = vld [vmem:[#allocation14 + $0x48c] sm:$0xff]
    %v2945 = vld [vmem:[#allocation14 + $0x494] sm:$0xf]
    %v2946 = vld [vmem:[#allocation14 + $0x498] sm:$0xff]
    %v2947 = vld [vmem:[#allocation14 + $0x4a0] sm:$0xff]
    %v2948 = vld [vmem:[#allocation14 + $0x4a8] sm:$0xff]
    %v2949 = vld [vmem:[#allocation14 + $0x4b0] sm:$0xf]
    %v2950 = vld [vmem:[#allocation14 + $0x4b4] sm:$0xff]
    %v2951 = vld [vmem:[#allocation14 + $0x4bc] sm:$0xff]
    %v2952 = vld [vmem:[#allocation14 + $0x4c4] sm:$0xff]
    %v2953 = vld [vmem:[#allocation14 + $0x4cc] sm:$0xf]
    %v2954 = vld [vmem:[#allocation14 + $0x4d0] sm:$0xff]
    %v2955 = vld [vmem:[#allocation14 + $0x4d8] sm:$0xff]
    %v2956 = vld [vmem:[#allocation14 + $0x4e0] sm:$0xff]
    %v2957 = vld [vmem:[#allocation14 + $0x4e8] sm:$0xf]
    %v2958 = vld [vmem:[#allocation14 + $0x4ec] sm:$0xff]
    %v2959 = vld [vmem:[#allocation14 + $0x4f4] sm:$0xff]
    %v2960 = vld [vmem:[#allocation14 + $0x4fc] sm:$0xff]
    %v2961 = vld [vmem:[#allocation14 + $0x504] sm:$0xf]
    %v2962 = vld [vmem:[#allocation14 + $0x508] sm:$0xff]
    %v2963 = vld [vmem:[#allocation14 + $0x510] sm:$0xff]
    %v2964 = vld [vmem:[#allocation14 + $0x518] sm:$0xff]
    %v2965 = vld [vmem:[#allocation14 + $0x520] sm:$0xf]
    %v2966 = vld [vmem:[#allocation14 + $0x524] sm:$0xff]
    %v2967 = vld [vmem:[#allocation14 + $0x52c] sm:$0xff]
    %v2968 = vld [vmem:[#allocation14 + $0x534] sm:$0xff]
    %v2969 = vld [vmem:[#allocation14 + $0x53c] sm:$0xf]
    %v2970 = vld [vmem:[#allocation14 + $0x540] sm:$0xff]
    %v2971 = vld [vmem:[#allocation14 + $0x548] sm:$0xff]
    %v2972 = vld [vmem:[#allocation14 + $0x550] sm:$0xff]
    %v2973 = vld [vmem:[#allocation14 + $0x558] sm:$0xf]
    %v2974 = vld [vmem:[#allocation14 + $0x55c] sm:$0xff]
    %v2975 = vld [vmem:[#allocation14 + $0x564] sm:$0xff]
    %v2976 = vld [vmem:[#allocation14 + $0x56c] sm:$0xff]
    %v2977 = vld [vmem:[#allocation14 + $0x574] sm:$0xf]
    %v2978 = vld [vmem:[#allocation14 + $0x578] sm:$0xff]
    %v2979 = vld [vmem:[#allocation14 + $0x580] sm:$0xff]
    %v2980 = vld [vmem:[#allocation14 + $0x588] sm:$0xff]
    %v2981 = vld [vmem:[#allocation14 + $0x590] sm:$0xf]
    %v2982 = vld [vmem:[#allocation14 + $0x594] sm:$0xff]
    %v2983 = vld [vmem:[#allocation14 + $0x59c] sm:$0xff]
    %v2984 = vld [vmem:[#allocation14 + $0x5a4] sm:$0xff]
    %v2985 = vld [vmem:[#allocation14 + $0x5ac] sm:$0xf]
    %v2986 = vld [vmem:[#allocation14 + $0x5b0] sm:$0xff]
    %v2987 = vld [vmem:[#allocation14 + $0x5b8] sm:$0xff]
    %v2988 = vld [vmem:[#allocation14 + $0x5c0] sm:$0xff]
    %v2989 = vld [vmem:[#allocation14 + $0x5c8] sm:$0xf]
    %v2990 = vld [vmem:[#allocation14 + $0x5cc] sm:$0xff]
    %v2991 = vld [vmem:[#allocation14 + $0x5d4] sm:$0xff]
    %v2992 = vld [vmem:[#allocation14 + $0x5dc] sm:$0xff]
    %v2993 = vld [vmem:[#allocation14 + $0x5e4] sm:$0xf]
    %v2994 = vld [vmem:[#allocation14 + $0x5e8] sm:$0xff]
    %v2995 = vld [vmem:[#allocation14 + $0x5f0] sm:$0xff]
    %v2996 = vld [vmem:[#allocation14 + $0x5f8] sm:$0xff]
    %v2997 = vld [vmem:[#allocation14 + $0x600] sm:$0xf]
    %v2998 = vld [vmem:[#allocation14 + $0x604] sm:$0xff]
    %v2999 = vld [vmem:[#allocation14 + $0x60c] sm:$0xff]
    %v3000 = vld [vmem:[#allocation14 + $0x614] sm:$0xff]
    %v3001 = vld [vmem:[#allocation14 + $0x61c] sm:$0xf]
    %v3002 = vld [vmem:[#allocation14 + $0x620] sm:$0xff]
    %v3003 = vld [vmem:[#allocation14 + $0x628] sm:$0xff]
    %v3004 = vld [vmem:[#allocation14 + $0x630] sm:$0xff]
    %v3005 = vld [vmem:[#allocation14 + $0x638] sm:$0xf]
    %v3006 = vld [vmem:[#allocation14 + $0x63c] sm:$0xff]
    %v3007 = vld [vmem:[#allocation14 + $0x644] sm:$0xff]
    %v3008 = vld [vmem:[#allocation14 + $0x64c] sm:$0xff]
    %v3009 = vld [vmem:[#allocation14 + $0x654] sm:$0xf]
    %v3010 = vld [vmem:[#allocation14 + $0x658] sm:$0xff]
    %v3011 = vld [vmem:[#allocation14 + $0x660] sm:$0xff]
    %v3012 = vld [vmem:[#allocation14 + $0x668] sm:$0xff]
    %v3013 = vld [vmem:[#allocation14 + $0x670] sm:$0xf]
    %v3014 = vld [vmem:[#allocation14 + $0x674] sm:$0xff]
    %v3015 = vld [vmem:[#allocation14 + $0x67c] sm:$0xff]
    %v3016 = vld [vmem:[#allocation14 + $0x684] sm:$0xff]
    %v3017 = vld [vmem:[#allocation14 + $0x68c] sm:$0xf]
    %v3018 = vld [vmem:[#allocation14 + $0x690] sm:$0xff]
    %v3019 = vld [vmem:[#allocation14 + $0x698] sm:$0xff]
    %v3020 = vld [vmem:[#allocation14 + $0x6a0] sm:$0xff]
    %v3021 = vld [vmem:[#allocation14 + $0x6a8] sm:$0xf]
    %v3022 = vld [vmem:[#allocation14 + $0x6ac] sm:$0xff]
    %v3023 = vld [vmem:[#allocation14 + $0x6b4] sm:$0xff]
    %v3024 = vld [vmem:[#allocation14 + $0x6bc] sm:$0xff]
    %v3025 = vld [vmem:[#allocation14 + $0x6c4] sm:$0xf]
    %v3026 = vld [vmem:[#allocation14 + $0x6c8] sm:$0xff]
    %v3027 = vld [vmem:[#allocation14 + $0x6d0] sm:$0xff]
    %v3028 = vld [vmem:[#allocation14 + $0x6d8] sm:$0xff]
    %v3029 = vld [vmem:[#allocation14 + $0x6e0] sm:$0xf]
    %v3030 = vld [vmem:[#allocation14 + $0x6e4] sm:$0xff]
    %v3031 = vld [vmem:[#allocation14 + $0x6ec] sm:$0xff]
    %v3032 = vld [vmem:[#allocation14 + $0x6f4] sm:$0xff]
    %v3033 = vld [vmem:[#allocation14 + $0x6fc] sm:$0xf]
    %v3034 = vld [vmem:[#allocation14 + $0x700] sm:$0xff]
    %v3035 = vld [vmem:[#allocation14 + $0x708] sm:$0xff]
    %v3036 = vld [vmem:[#allocation14 + $0x710] sm:$0xff]
    %v3037 = vld [vmem:[#allocation14 + $0x718] sm:$0xf]
    %v3038 = vld [vmem:[#allocation14 + $0x71c] sm:$0xff]
    %v3039 = vld [vmem:[#allocation14 + $0x724] sm:$0xff]
    %v3040 = vld [vmem:[#allocation14 + $0x72c] sm:$0xff]
    %v3041 = vld [vmem:[#allocation14 + $0x734] sm:$0xf]
    %v3042 = vld [vmem:[#allocation14 + $0x738] sm:$0xff]
    %v3043 = vld [vmem:[#allocation14 + $0x740] sm:$0xff]
    %v3044 = vld [vmem:[#allocation14 + $0x748] sm:$0xff]
    %v3045 = vld [vmem:[#allocation14 + $0x750] sm:$0xf]
    %v3046 = vld [vmem:[#allocation14 + $0x754] sm:$0xff]
    %v3047 = vld [vmem:[#allocation14 + $0x75c] sm:$0xff]
    %v3048 = vld [vmem:[#allocation14 + $0x764] sm:$0xff]
    %v3049 = vld [vmem:[#allocation14 + $0x76c] sm:$0xf]
    %v3050 = vld [vmem:[#allocation14 + $0x770] sm:$0xff]
    %v3051 = vld [vmem:[#allocation14 + $0x778] sm:$0xff]
    %v3052 = vld [vmem:[#allocation14 + $0x780] sm:$0xff]
    %v3053 = vld [vmem:[#allocation14 + $0x788] sm:$0xf]
    %v3054 = vld [vmem:[#allocation14 + $0x78c] sm:$0xff]
    %v3055 = vld [vmem:[#allocation14 + $0x794] sm:$0xff]
    %v3056 = vld [vmem:[#allocation14 + $0x79c] sm:$0xff]
    %v3057 = vld [vmem:[#allocation14 + $0x7a4] sm:$0xf]
    %v3058 = vld [vmem:[#allocation14 + $0x7a8] sm:$0xff]
    %v3059 = vld [vmem:[#allocation14 + $0x7b0] sm:$0xff]
    %v3060 = vld [vmem:[#allocation14 + $0x7b8] sm:$0xff]
    %v3061 = vld [vmem:[#allocation14 + $0x7c0] sm:$0xf]
    %v3062 = vld [vmem:[#allocation14 + $0x7c4] sm:$0xff]
    %v3063 = vld [vmem:[#allocation14 + $0x7cc] sm:$0xff]
    %v3064 = vld [vmem:[#allocation14 + $0x7d4] sm:$0xff]
    %v3065 = vld [vmem:[#allocation14 + $0x7dc] sm:$0xf]
    %v3066 = vld [vmem:[#allocation14 + $0x7e0] sm:$0xff]
    %v3067 = vld [vmem:[#allocation14 + $0x7e8] sm:$0xff]
    %v3068 = vld [vmem:[#allocation14 + $0x7f0] sm:$0xff]
    %v3069 = vld [vmem:[#allocation14 + $0x7f8] sm:$0xf]
    %v3070 = vld [vmem:[#allocation14 + $0x7fc] sm:$0xff]
    %v3071 = vld [vmem:[#allocation14 + $0x804] sm:$0xff]
    %v3072 = vld [vmem:[#allocation14 + $0x80c] sm:$0xff]
    %v3073 = vld [vmem:[#allocation14 + $0x814] sm:$0xf]
    %v3074 = vld [vmem:[#allocation14 + $0x818] sm:$0xff]
    %v3075 = vld [vmem:[#allocation14 + $0x820] sm:$0xff]
    %v3076 = vld [vmem:[#allocation14 + $0x828] sm:$0xff]
    %v3077 = vld [vmem:[#allocation14 + $0x830] sm:$0xf]
    %v3078 = vld [vmem:[#allocation14 + $0x834] sm:$0xff]
    %v3079 = vld [vmem:[#allocation14 + $0x83c] sm:$0xff]
    %v3080 = vld [vmem:[#allocation14 + $0x844] sm:$0xff]
    %v3081 = vld [vmem:[#allocation14 + $0x84c] sm:$0xf]
    %v3082 = vld [vmem:[#allocation14 + $0x850] sm:$0xff]
    %v3083 = vld [vmem:[#allocation14 + $0x858] sm:$0xff]
    %v3084 = vld [vmem:[#allocation14 + $0x860] sm:$0xff]
    %v3085 = vld [vmem:[#allocation14 + $0x868] sm:$0xf]
    %v3086 = vld [vmem:[#allocation14 + $0x86c] sm:$0xff]
    %v3087 = vld [vmem:[#allocation14 + $0x874] sm:$0xff]
    %v3088 = vld [vmem:[#allocation14 + $0x87c] sm:$0xff]
    %v3089 = vld [vmem:[#allocation14 + $0x884] sm:$0xf]
    %v3090 = vld [vmem:[#allocation14 + $0x888] sm:$0xff]
    %v3091 = vld [vmem:[#allocation14 + $0x890] sm:$0xff]
    %v3092 = vld [vmem:[#allocation14 + $0x898] sm:$0xff]
    %v3093 = vld [vmem:[#allocation14 + $0x8a0] sm:$0xf]
    %v3094 = vld [vmem:[#allocation14 + $0x8a4] sm:$0xff]
    %v3095 = vld [vmem:[#allocation14 + $0x8ac] sm:$0xff]
    %v3096 = vld [vmem:[#allocation14 + $0x8b4] sm:$0xff]
    %v3097 = vld [vmem:[#allocation14 + $0x8bc] sm:$0xf]
    %v3098 = vld [vmem:[#allocation14 + $0x8c0] sm:$0xff]
    %v3099 = vld [vmem:[#allocation14 + $0x8c8] sm:$0xff]
    %v3100 = vld [vmem:[#allocation14 + $0x8d0] sm:$0xff]
    %v3101 = vld [vmem:[#allocation14 + $0x8d8] sm:$0xf]
    %v3102 = vld [vmem:[#allocation14 + $0x8dc] sm:$0xff]
    %v3103 = vld [vmem:[#allocation14 + $0x8e4] sm:$0xff]
    %v3104 = vld [vmem:[#allocation14 + $0x8ec] sm:$0xff]
    %v3105 = vld [vmem:[#allocation14 + $0x8f4] sm:$0xf]
    %v3106 = vld [vmem:[#allocation14 + $0x8f8] sm:$0xff]
    %v3107 = vld [vmem:[#allocation14 + $0x900] sm:$0xff]
    %v3108 = vld [vmem:[#allocation14 + $0x908] sm:$0xff]
    %v3109 = vld [vmem:[#allocation14 + $0x910] sm:$0xf]
    %v3110 = vld [vmem:[#allocation14 + $0x914] sm:$0xff]
    %v3111 = vld [vmem:[#allocation14 + $0x91c] sm:$0xff]
    %v3112 = vld [vmem:[#allocation14 + $0x924] sm:$0xff]
    %v3113 = vld [vmem:[#allocation14 + $0x92c] sm:$0xf]
    %v3114 = vld [vmem:[#allocation14 + $0x930] sm:$0xff]
    %v3115 = vld [vmem:[#allocation14 + $0x938] sm:$0xff]
    %v3116 = vld [vmem:[#allocation14 + $0x940] sm:$0xff]
    %v3117 = vld [vmem:[#allocation14 + $0x948] sm:$0xf]
    %v3118 = vld [vmem:[#allocation14 + $0x94c] sm:$0xff]
    %v3119 = vld [vmem:[#allocation14 + $0x954] sm:$0xff]
    %v3120 = vld [vmem:[#allocation14 + $0x95c] sm:$0xff]
    %v3121 = vld [vmem:[#allocation14 + $0x964] sm:$0xf]
    %v3122 = vld [vmem:[#allocation14 + $0x968] sm:$0xff]
    %v3123 = vld [vmem:[#allocation14 + $0x970] sm:$0xff]
    %v3124 = vld [vmem:[#allocation14 + $0x978] sm:$0xff]
    %v3125 = vld [vmem:[#allocation14 + $0x980] sm:$0xf]
    %v3126 = vld [vmem:[#allocation14 + $0x984] sm:$0xff]
    %v3127 = vld [vmem:[#allocation14 + $0x98c] sm:$0xff]
    %v3128 = vld [vmem:[#allocation14 + $0x994] sm:$0xff]
    %v3129 = vld [vmem:[#allocation14 + $0x99c] sm:$0xf]
    %v3130 = vld [vmem:[#allocation14 + $0x9a0] sm:$0xff]
    %v3131 = vld [vmem:[#allocation14 + $0x9a8] sm:$0xff]
    %v3132 = vld [vmem:[#allocation14 + $0x9b0] sm:$0xff]
    %v3133 = vld [vmem:[#allocation14 + $0x9b8] sm:$0xf]
    %v3134 = vld [vmem:[#allocation14 + $0x9bc] sm:$0xff]
    %v3135 = vld [vmem:[#allocation14 + $0x9c4] sm:$0xff]
    %v3136 = vld [vmem:[#allocation14 + $0x9cc] sm:$0xff]
    %v3137 = vld [vmem:[#allocation14 + $0x9d4] sm:$0xf]
    %v3138 = vld [vmem:[#allocation14 + $0x9d8] sm:$0xff]
    %v3139 = vld [vmem:[#allocation14 + $0x9e0] sm:$0xff]
    %v3140 = vld [vmem:[#allocation14 + $0x9e8] sm:$0xff]
    %v3141 = vld [vmem:[#allocation14 + $0x9f0] sm:$0xf]
    %v3142 = vld [vmem:[#allocation14 + $0x9f4] sm:$0xff]
    %v3143 = vld [vmem:[#allocation14 + $0x9fc] sm:$0xff]
    %v3144 = vld [vmem:[#allocation14 + $0xa04] sm:$0xff]
    %v3145 = vld [vmem:[#allocation14 + $0xa0c] sm:$0xf]
    %v3146 = vld [vmem:[#allocation14 + $0xa10] sm:$0xff]
    %v3147 = vld [vmem:[#allocation14 + $0xa18] sm:$0xff]
    %v3148 = vld [vmem:[#allocation14 + $0xa20] sm:$0xff]
    %v3149 = vld [vmem:[#allocation14 + $0xa28] sm:$0xf]
    %v3150 = vld [vmem:[#allocation14 + $0xa2c] sm:$0xff]
    %v3151 = vld [vmem:[#allocation14 + $0xa34] sm:$0xff]
    %v3152 = vld [vmem:[#allocation14 + $0xa3c] sm:$0xff]
    %v3153 = vld [vmem:[#allocation14 + $0xa44] sm:$0xf]
    %v3154 = vld [vmem:[#allocation14 + $0xa48] sm:$0xff]
    %v3155 = vld [vmem:[#allocation14 + $0xa50] sm:$0xff]
    %v3156 = vld [vmem:[#allocation14 + $0xa58] sm:$0xff]
    %v3157 = vld [vmem:[#allocation14 + $0xa60] sm:$0xf]
    %v3158 = vld [vmem:[#allocation14 + $0xa64] sm:$0xff]
    %v3159 = vld [vmem:[#allocation14 + $0xa6c] sm:$0xff]
    %v3160 = vld [vmem:[#allocation14 + $0xa74] sm:$0xff]
    %v3161 = vld [vmem:[#allocation14 + $0xa7c] sm:$0xf]
    %v3162 = vld [vmem:[#allocation14 + $0xa80] sm:$0xff]
    %v3163 = vld [vmem:[#allocation14 + $0xa88] sm:$0xff]
    %v3164 = vld [vmem:[#allocation14 + $0xa90] sm:$0xff]
    %v3165 = vld [vmem:[#allocation14 + $0xa98] sm:$0xf]
    %v3166 = vld [vmem:[#allocation14 + $0xa9c] sm:$0xff]
    %v3167 = vld [vmem:[#allocation14 + $0xaa4] sm:$0xff]
    %v3168 = vld [vmem:[#allocation14 + $0xaac] sm:$0xff]
    %v3169 = vld [vmem:[#allocation14 + $0xab4] sm:$0xf]
    %v3170 = vld [vmem:[#allocation14 + $0xab8] sm:$0xff]
    %v3171 = vld [vmem:[#allocation14 + $0xac0] sm:$0xff]
    %v3172 = vld [vmem:[#allocation14 + $0xac8] sm:$0xff]
    %v3173 = vld [vmem:[#allocation14 + $0xad0] sm:$0xf]
    %v3174 = vld [vmem:[#allocation14 + $0xad4] sm:$0xff]
    %v3175 = vld [vmem:[#allocation14 + $0xadc] sm:$0xff]
    %v3176 = vld [vmem:[#allocation14 + $0xae4] sm:$0xff]
    %v3177 = vld [vmem:[#allocation14 + $0xaec] sm:$0xf]
    %v3178 = vld [vmem:[#allocation14 + $0xaf0] sm:$0xff]
    %v3179 = vld [vmem:[#allocation14 + $0xaf8] sm:$0xff]
    %v3180 = vld [vmem:[#allocation14 + $0xb00] sm:$0xff]
    %v3181 = vld [vmem:[#allocation14 + $0xb08] sm:$0xf]
    %v3182 = vld [vmem:[#allocation14 + $0xb0c] sm:$0xff]
    %v3183 = vld [vmem:[#allocation14 + $0xb14] sm:$0xff]
    %v3184 = vld [vmem:[#allocation14 + $0xb1c] sm:$0xff]
    %v3185 = vld [vmem:[#allocation14 + $0xb24] sm:$0xf]
    %v3186 = vld [vmem:[#allocation14 + $0xb28] sm:$0xff]
    %v3187 = vld [vmem:[#allocation14 + $0xb30] sm:$0xff]
    %v3188 = vld [vmem:[#allocation14 + $0xb38] sm:$0xff]
    %v3189 = vld [vmem:[#allocation14 + $0xb40] sm:$0xf]
    %v3190 = vld [vmem:[#allocation14 + $0xb44] sm:$0xff]
    %v3191 = vld [vmem:[#allocation14 + $0xb4c] sm:$0xff]
    %v3192 = vld [vmem:[#allocation14 + $0xb54] sm:$0xff]
    %v3193 = vld [vmem:[#allocation14 + $0xb5c] sm:$0xf]
    %v3194 = vld [vmem:[#allocation14 + $0xb60] sm:$0xff]
    %v3195 = vld [vmem:[#allocation14 + $0xb68] sm:$0xff]
    %v3196 = vld [vmem:[#allocation14 + $0xb70] sm:$0xff]
    %v3197 = vld [vmem:[#allocation14 + $0xb78] sm:$0xf]
    %v3198 = vld [vmem:[#allocation14 + $0xb7c] sm:$0xff]
    %v3199 = vld [vmem:[#allocation14 + $0xb84] sm:$0xff]
    %v3200 = vld [vmem:[#allocation14 + $0xb8c] sm:$0xff]
    %v3201 = vld [vmem:[#allocation14 + $0xb94] sm:$0xf]
    %v3202 = vld [vmem:[#allocation14 + $0xb98] sm:$0xff]
    %v3203 = vld [vmem:[#allocation14 + $0xba0] sm:$0xff]
    %v3204 = vld [vmem:[#allocation14 + $0xba8] sm:$0xff]
    %v3205 = vld [vmem:[#allocation14 + $0xbb0] sm:$0xf]
    %v3206 = vld [vmem:[#allocation14 + $0xbb4] sm:$0xff]
    %v3207 = vld [vmem:[#allocation14 + $0xbbc] sm:$0xff]
    %v3208 = vld [vmem:[#allocation14 + $0xbc4] sm:$0xff]
    %v3209 = vld [vmem:[#allocation14 + $0xbcc] sm:$0xf]
    %v3210 = vld [vmem:[#allocation14 + $0xbd0] sm:$0xff]
    %v3211 = vld [vmem:[#allocation14 + $0xbd8] sm:$0xff]
    %v3212 = vld [vmem:[#allocation14 + $0xbe0] sm:$0xff]
    %v3213 = vld [vmem:[#allocation14 + $0xbe8] sm:$0xf]
    %v3214 = vld [vmem:[#allocation14 + $0xbec] sm:$0xff]
    %v3215 = vld [vmem:[#allocation14 + $0xbf4] sm:$0xff]
    %v3216 = vld [vmem:[#allocation14 + $0xbfc] sm:$0xff]
    %v3217 = vld [vmem:[#allocation14 + $0xc04] sm:$0xf]
    %v3218 = vld [vmem:[#allocation14 + $0xc08] sm:$0xff]
    %v3219 = vld [vmem:[#allocation14 + $0xc10] sm:$0xff]
    %v3220 = vld [vmem:[#allocation14 + $0xc18] sm:$0xff]
    %v3221 = vld [vmem:[#allocation14 + $0xc20] sm:$0xf]
    %v3222 = vld [vmem:[#allocation14 + $0xc24] sm:$0xff]
    %v3223 = vld [vmem:[#allocation14 + $0xc2c] sm:$0xff]
    %v3224 = vld [vmem:[#allocation14 + $0xc34] sm:$0xff]
    %v3225 = vld [vmem:[#allocation14 + $0xc3c] sm:$0xf]
    %v3226 = vld [vmem:[#allocation14 + $0xc40] sm:$0xff]
    %v3227 = vld [vmem:[#allocation14 + $0xc48] sm:$0xff]
    %v3228 = vld [vmem:[#allocation14 + $0xc50] sm:$0xff]
    %v3229 = vld [vmem:[#allocation14 + $0xc58] sm:$0xf]
    %v3230 = vld [vmem:[#allocation14 + $0xc5c] sm:$0xff]
    %v3231 = vld [vmem:[#allocation14 + $0xc64] sm:$0xff]
    %v3232 = vld [vmem:[#allocation14 + $0xc6c] sm:$0xff]
    %v3233 = vld [vmem:[#allocation14 + $0xc74] sm:$0xf]
    %v3234 = vld [vmem:[#allocation14 + $0xc78] sm:$0xff]
    %v3235 = vld [vmem:[#allocation14 + $0xc80] sm:$0xff]
    %v3236 = vld [vmem:[#allocation14 + $0xc88] sm:$0xff]
    %v3237 = vld [vmem:[#allocation14 + $0xc90] sm:$0xf]
    %v3238 = vld [vmem:[#allocation14 + $0xc94] sm:$0xff]
    %v3239 = vld [vmem:[#allocation14 + $0xc9c] sm:$0xff]
    %v3240 = vld [vmem:[#allocation14 + $0xca4] sm:$0xff]
    %v3241 = vld [vmem:[#allocation14 + $0xcac] sm:$0xf]
    %v3242 = vld [vmem:[#allocation14 + $0xcb0] sm:$0xff]
    %v3243 = vld [vmem:[#allocation14 + $0xcb8] sm:$0xff]
    %v3244 = vld [vmem:[#allocation14 + $0xcc0] sm:$0xff]
    %v3245 = vld [vmem:[#allocation14 + $0xcc8] sm:$0xf]
    %v3246 = vld [vmem:[#allocation14 + $0xccc] sm:$0xff]
    %v3247 = vld [vmem:[#allocation14 + $0xcd4] sm:$0xff]
    %v3248 = vld [vmem:[#allocation14 + $0xcdc] sm:$0xff]
    %v3249 = vld [vmem:[#allocation14 + $0xce4] sm:$0xf]
    %v3250 = vld [vmem:[#allocation14 + $0xce8] sm:$0xff]
    %v3251 = vld [vmem:[#allocation14 + $0xcf0] sm:$0xff]
    %v3252 = vld [vmem:[#allocation14 + $0xcf8] sm:$0xff]
    %v3253 = vld [vmem:[#allocation14 + $0xd00] sm:$0xf]
    %v3254 = vld [vmem:[#allocation14 + $0xd04] sm:$0xff]
    %v3255 = vld [vmem:[#allocation14 + $0xd0c] sm:$0xff]
    %v3256 = vld [vmem:[#allocation14 + $0xd14] sm:$0xff]
    %v3257 = vld [vmem:[#allocation14 + $0xd1c] sm:$0xf]
    %v3258 = vld [vmem:[#allocation14 + $0xd20] sm:$0xff]
    %v3259 = vld [vmem:[#allocation14 + $0xd28] sm:$0xff]
    %v3260 = vld [vmem:[#allocation14 + $0xd30] sm:$0xff]
    %v3261 = vld [vmem:[#allocation14 + $0xd38] sm:$0xf]
    %v3262 = vld [vmem:[#allocation14 + $0xd3c] sm:$0xff]
    %v3263 = vld [vmem:[#allocation14 + $0xd44] sm:$0xff]
    %v3264 = vld [vmem:[#allocation14 + $0xd4c] sm:$0xff]
    %v3265 = vld [vmem:[#allocation14 + $0xd54] sm:$0xf]
    %v3266 = vld [vmem:[#allocation14 + $0xd58] sm:$0xff]
    %v3267 = vld [vmem:[#allocation14 + $0xd60] sm:$0xff]
    %v3268 = vld [vmem:[#allocation14 + $0xd68] sm:$0xff]
    %v3269 = vld [vmem:[#allocation14 + $0xd70] sm:$0xf]
    %v3270 = vld [vmem:[#allocation14 + $0xd74] sm:$0xff]
    %v3271 = vld [vmem:[#allocation14 + $0xd7c] sm:$0xff]
    %v3272 = vld [vmem:[#allocation14 + $0xd84] sm:$0xff]
    %v3273 = vld [vmem:[#allocation14 + $0xd8c] sm:$0xf]
    %v3274 = vld [vmem:[#allocation14 + $0xd90] sm:$0xff]
    %v3275 = vld [vmem:[#allocation14 + $0xd98] sm:$0xff]
    %v3276 = vld [vmem:[#allocation14 + $0xda0] sm:$0xff]
    %v3277 = vld [vmem:[#allocation14 + $0xda8] sm:$0xf]
    %v3278 = vld [vmem:[#allocation14 + $0xdac] sm:$0xff]
    %v3279 = vld [vmem:[#allocation14 + $0xdb4] sm:$0xff]
    %v3280 = vld [vmem:[#allocation14 + $0xdbc] sm:$0xff]
    %v3281 = vld [vmem:[#allocation14 + $0xdc4] sm:$0xf]
    %v3282 = vld [vmem:[#allocation14 + $0xdc8] sm:$0xff]
    %v3283 = vld [vmem:[#allocation14 + $0xdd0] sm:$0xff]
    %v3284 = vld [vmem:[#allocation14 + $0xdd8] sm:$0xff]
    %v3285 = vld [vmem:[#allocation14 + $0xde0] sm:$0xf]
    %v3286 = vld [vmem:[#allocation14 + $0xde4] sm:$0xff]
    %v3287 = vld [vmem:[#allocation14 + $0xdec] sm:$0xff]
    %v3288 = vld [vmem:[#allocation14 + $0xdf4] sm:$0xff]
    %v3289 = vld [vmem:[#allocation14 + $0xdfc] sm:$0xf]
    %v3290 = vld [vmem:[#allocation16] sm:$0xff]
    %v3292 = vlaneseq
    %v3293 = vshrl.u32 %v3292, 7
    %v3294 = vsub.s32 0, %v3293
    %v3295 = vrot.slane %v3290, %v3294
    %v3296 = vlaneseq
    %v3297 = vshrl.u32 %v3296, 7
    %v3298 = vsub.s32 1, %v3297
    %v3299 = vrot.slane %v3290, %v3298
    %v3300 = vlaneseq
    %v3301 = vshrl.u32 %v3300, 7
    %v3302 = vsub.s32 2, %v3301
    %v3303 = vrot.slane %v3290, %v3302
    %v3304 = vlaneseq
    %v3305 = vshrl.u32 %v3304, 7
    %v3306 = vsub.s32 3, %v3305
    %v3307 = vrot.slane %v3290, %v3306
    %v3308 = vlaneseq
    %v3309 = vshrl.u32 %v3308, 7
    %v3310 = vsub.s32 4, %v3309
    %v3311 = vrot.slane %v3290, %v3310
    %v3312 = vlaneseq
    %v3313 = vshrl.u32 %v3312, 7
    %v3314 = vsub.s32 5, %v3313
    %v3315 = vrot.slane %v3290, %v3314
    %v3316 = vlaneseq
    %v3317 = vshrl.u32 %v3316, 7
    %v3318 = vsub.s32 6, %v3317
    %v3319 = vrot.slane %v3290, %v3318
    %v3839 = vunpack.c.l.b16 %v2778
    %v3840 = vunpack.c.h.b16 %v2778
    %v3841 = vunpack.c.l.b16 %v2779
    %v3842 = vunpack.c.h.b16 %v2779
    %v3843 = vunpack.c.l.b16 %v2780
    %v3844 = vunpack.c.h.b16 %v2780
    %v3845 = vunpack.c.l.b16 %v2781
    %v3846 = vunpack.c.l.b16 %v2782
    %v3847 = vunpack.c.h.b16 %v2782
    %v3848 = vunpack.c.l.b16 %v2783
    %v3849 = vunpack.c.h.b16 %v2783
    %v3850 = vunpack.c.l.b16 %v2784
    %v3851 = vunpack.c.h.b16 %v2784
    %v3852 = vunpack.c.l.b16 %v2785
    %v3853 = vunpack.c.l.b16 %v2786
    %v3854 = vunpack.c.h.b16 %v2786
    %v3855 = vunpack.c.l.b16 %v2787
    %v3856 = vunpack.c.h.b16 %v2787
    %v3857 = vunpack.c.l.b16 %v2788
    %v3858 = vunpack.c.h.b16 %v2788
    %v3859 = vunpack.c.l.b16 %v2789
    %v3860 = vunpack.c.l.b16 %v2790
    %v3861 = vunpack.c.h.b16 %v2790
    %v3862 = vunpack.c.l.b16 %v2791
    %v3863 = vunpack.c.h.b16 %v2791
    %v3864 = vunpack.c.l.b16 %v2792
    %v3865 = vunpack.c.h.b16 %v2792
    %v3866 = vunpack.c.l.b16 %v2793
    %v3867 = vunpack.c.l.b16 %v2794
    %v3868 = vunpack.c.h.b16 %v2794
    %v3869 = vunpack.c.l.b16 %v2795
    %v3870 = vunpack.c.h.b16 %v2795
    %v3871 = vunpack.c.l.b16 %v2796
    %v3872 = vunpack.c.h.b16 %v2796
    %v3873 = vunpack.c.l.b16 %v2797
    %v3874 = vunpack.c.l.b16 %v2798
    %v3875 = vunpack.c.h.b16 %v2798
    %v3876 = vunpack.c.l.b16 %v2799
    %v3877 = vunpack.c.h.b16 %v2799
    %v3878 = vunpack.c.l.b16 %v2800
    %v3879 = vunpack.c.h.b16 %v2800
    %v3880 = vunpack.c.l.b16 %v2801
    %v3881 = vunpack.c.l.b16 %v2802
    %v3882 = vunpack.c.h.b16 %v2802
    %v3883 = vunpack.c.l.b16 %v2803
    %v3884 = vunpack.c.h.b16 %v2803
    %v3885 = vunpack.c.l.b16 %v2804
    %v3886 = vunpack.c.h.b16 %v2804
    %v3887 = vunpack.c.l.b16 %v2805
    %v3888 = vunpack.c.l.b16 %v2806
    %v3889 = vunpack.c.h.b16 %v2806
    %v3890 = vunpack.c.l.b16 %v2807
    %v3891 = vunpack.c.h.b16 %v2807
    %v3892 = vunpack.c.l.b16 %v2808
    %v3893 = vunpack.c.h.b16 %v2808
    %v3894 = vunpack.c.l.b16 %v2809
    %v3895 = vunpack.c.l.b16 %v2810
    %v3896 = vunpack.c.h.b16 %v2810
    %v3897 = vunpack.c.l.b16 %v2811
    %v3898 = vunpack.c.h.b16 %v2811
    %v3899 = vunpack.c.l.b16 %v2812
    %v3900 = vunpack.c.h.b16 %v2812
    %v3901 = vunpack.c.l.b16 %v2813
    %v3902 = vunpack.c.l.b16 %v2814
    %v3903 = vunpack.c.h.b16 %v2814
    %v3904 = vunpack.c.l.b16 %v2815
    %v3905 = vunpack.c.h.b16 %v2815
    %v3906 = vunpack.c.l.b16 %v2816
    %v3907 = vunpack.c.h.b16 %v2816
    %v3908 = vunpack.c.l.b16 %v2817
    %v3909 = vunpack.c.l.b16 %v2818
    %v3910 = vunpack.c.h.b16 %v2818
    %v3911 = vunpack.c.l.b16 %v2819
    %v3912 = vunpack.c.h.b16 %v2819
    %v3913 = vunpack.c.l.b16 %v2820
    %v3914 = vunpack.c.h.b16 %v2820
    %v3915 = vunpack.c.l.b16 %v2821
    %v3916 = vunpack.c.l.b16 %v2822
    %v3917 = vunpack.c.h.b16 %v2822
    %v3918 = vunpack.c.l.b16 %v2823
    %v3919 = vunpack.c.h.b16 %v2823
    %v3920 = vunpack.c.l.b16 %v2824
    %v3921 = vunpack.c.h.b16 %v2824
    %v3922 = vunpack.c.l.b16 %v2825
    %v3923 = vunpack.c.l.b16 %v2826
    %v3924 = vunpack.c.h.b16 %v2826
    %v3925 = vunpack.c.l.b16 %v2827
    %v3926 = vunpack.c.h.b16 %v2827
    %v3927 = vunpack.c.l.b16 %v2828
    %v3928 = vunpack.c.h.b16 %v2828
    %v3929 = vunpack.c.l.b16 %v2829
    %v3930 = vunpack.c.l.b16 %v2830
    %v3931 = vunpack.c.h.b16 %v2830
    %v3932 = vunpack.c.l.b16 %v2831
    %v3933 = vunpack.c.h.b16 %v2831
    %v3934 = vunpack.c.l.b16 %v2832
    %v3935 = vunpack.c.h.b16 %v2832
    %v3936 = vunpack.c.l.b16 %v2833
    %v3937 = vunpack.c.l.b16 %v2834
    %v3938 = vunpack.c.h.b16 %v2834
    %v3939 = vunpack.c.l.b16 %v2835
    %v3940 = vunpack.c.h.b16 %v2835
    %v3941 = vunpack.c.l.b16 %v2836
    %v3942 = vunpack.c.h.b16 %v2836
    %v3943 = vunpack.c.l.b16 %v2837
    %v3944 = vunpack.c.l.b16 %v2838
    %v3945 = vunpack.c.h.b16 %v2838
    %v3946 = vunpack.c.l.b16 %v2839
    %v3947 = vunpack.c.h.b16 %v2839
    %v3948 = vunpack.c.l.b16 %v2840
    %v3949 = vunpack.c.h.b16 %v2840
    %v3950 = vunpack.c.l.b16 %v2841
    %v3951 = vunpack.c.l.b16 %v2842
    %v3952 = vunpack.c.h.b16 %v2842
    %v3953 = vunpack.c.l.b16 %v2843
    %v3954 = vunpack.c.h.b16 %v2843
    %v3955 = vunpack.c.l.b16 %v2844
    %v3956 = vunpack.c.h.b16 %v2844
    %v3957 = vunpack.c.l.b16 %v2845
    %v3958 = vunpack.c.l.b16 %v2846
    %v3959 = vunpack.c.h.b16 %v2846
    %v3960 = vunpack.c.l.b16 %v2847
    %v3961 = vunpack.c.h.b16 %v2847
    %v3962 = vunpack.c.l.b16 %v2848
    %v3963 = vunpack.c.h.b16 %v2848
    %v3964 = vunpack.c.l.b16 %v2849
    %v3965 = vunpack.c.l.b16 %v2850
    %v3966 = vunpack.c.h.b16 %v2850
    %v3967 = vunpack.c.l.b16 %v2851
    %v3968 = vunpack.c.h.b16 %v2851
    %v3969 = vunpack.c.l.b16 %v2852
    %v3970 = vunpack.c.h.b16 %v2852
    %v3971 = vunpack.c.l.b16 %v2853
    %v3972 = vunpack.c.l.b16 %v2854
    %v3973 = vunpack.c.h.b16 %v2854
    %v3974 = vunpack.c.l.b16 %v2855
    %v3975 = vunpack.c.h.b16 %v2855
    %v3976 = vunpack.c.l.b16 %v2856
    %v3977 = vunpack.c.h.b16 %v2856
    %v3978 = vunpack.c.l.b16 %v2857
    %v3979 = vunpack.c.l.b16 %v2858
    %v3980 = vunpack.c.h.b16 %v2858
    %v3981 = vunpack.c.l.b16 %v2859
    %v3982 = vunpack.c.h.b16 %v2859
    %v3983 = vunpack.c.l.b16 %v2860
    %v3984 = vunpack.c.h.b16 %v2860
    %v3985 = vunpack.c.l.b16 %v2861
    %v3986 = vunpack.c.l.b16 %v2862
    %v3987 = vunpack.c.h.b16 %v2862
    %v3988 = vunpack.c.l.b16 %v2863
    %v3989 = vunpack.c.h.b16 %v2863
    %v3990 = vunpack.c.l.b16 %v2864
    %v3991 = vunpack.c.h.b16 %v2864
    %v3992 = vunpack.c.l.b16 %v2865
    %v3993 = vunpack.c.l.b16 %v2866
    %v3994 = vunpack.c.h.b16 %v2866
    %v3995 = vunpack.c.l.b16 %v2867
    %v3996 = vunpack.c.h.b16 %v2867
    %v3997 = vunpack.c.l.b16 %v2868
    %v3998 = vunpack.c.h.b16 %v2868
    %v3999 = vunpack.c.l.b16 %v2869
    %v4000 = vunpack.c.l.b16 %v2870
    %v4001 = vunpack.c.h.b16 %v2870
    %v4002 = vunpack.c.l.b16 %v2871
    %v4003 = vunpack.c.h.b16 %v2871
    %v4004 = vunpack.c.l.b16 %v2872
    %v4005 = vunpack.c.h.b16 %v2872
    %v4006 = vunpack.c.l.b16 %v2873
    %v4007 = vunpack.c.l.b16 %v2874
    %v4008 = vunpack.c.h.b16 %v2874
    %v4009 = vunpack.c.l.b16 %v2875
    %v4010 = vunpack.c.h.b16 %v2875
    %v4011 = vunpack.c.l.b16 %v2876
    %v4012 = vunpack.c.h.b16 %v2876
    %v4013 = vunpack.c.l.b16 %v2877
    %v4014 = vunpack.c.l.b16 %v2878
    %v4015 = vunpack.c.h.b16 %v2878
    %v4016 = vunpack.c.l.b16 %v2879
    %v4017 = vunpack.c.h.b16 %v2879
    %v4018 = vunpack.c.l.b16 %v2880
    %v4019 = vunpack.c.h.b16 %v2880
    %v4020 = vunpack.c.l.b16 %v2881
    %v4021 = vunpack.c.l.b16 %v2882
    %v4022 = vunpack.c.h.b16 %v2882
    %v4023 = vunpack.c.l.b16 %v2883
    %v4024 = vunpack.c.h.b16 %v2883
    %v4025 = vunpack.c.l.b16 %v2884
    %v4026 = vunpack.c.h.b16 %v2884
    %v4027 = vunpack.c.l.b16 %v2885
    %v4028 = vunpack.c.l.b16 %v2886
    %v4029 = vunpack.c.h.b16 %v2886
    %v4030 = vunpack.c.l.b16 %v2887
    %v4031 = vunpack.c.h.b16 %v2887
    %v4032 = vunpack.c.l.b16 %v2888
    %v4033 = vunpack.c.h.b16 %v2888
    %v4034 = vunpack.c.l.b16 %v2889
    %v4035 = vunpack.c.l.b16 %v2890
    %v4036 = vunpack.c.h.b16 %v2890
    %v4037 = vunpack.c.l.b16 %v2891
    %v4038 = vunpack.c.h.b16 %v2891
    %v4039 = vunpack.c.l.b16 %v2892
    %v4040 = vunpack.c.h.b16 %v2892
    %v4041 = vunpack.c.l.b16 %v2893
    %v4042 = vunpack.c.l.b16 %v2894
    %v4043 = vunpack.c.h.b16 %v2894
    %v4044 = vunpack.c.l.b16 %v2895
    %v4045 = vunpack.c.h.b16 %v2895
    %v4046 = vunpack.c.l.b16 %v2896
    %v4047 = vunpack.c.h.b16 %v2896
    %v4048 = vunpack.c.l.b16 %v2897
    %v4049 = vunpack.c.l.b16 %v2898
    %v4050 = vunpack.c.h.b16 %v2898
    %v4051 = vunpack.c.l.b16 %v2899
    %v4052 = vunpack.c.h.b16 %v2899
    %v4053 = vunpack.c.l.b16 %v2900
    %v4054 = vunpack.c.h.b16 %v2900
    %v4055 = vunpack.c.l.b16 %v2901
    %v4056 = vunpack.c.l.b16 %v2902
    %v4057 = vunpack.c.h.b16 %v2902
    %v4058 = vunpack.c.l.b16 %v2903
    %v4059 = vunpack.c.h.b16 %v2903
    %v4060 = vunpack.c.l.b16 %v2904
    %v4061 = vunpack.c.h.b16 %v2904
    %v4062 = vunpack.c.l.b16 %v2905
    %v4063 = vunpack.c.l.b16 %v2906
    %v4064 = vunpack.c.h.b16 %v2906
    %v4065 = vunpack.c.l.b16 %v2907
    %v4066 = vunpack.c.h.b16 %v2907
    %v4067 = vunpack.c.l.b16 %v2908
    %v4068 = vunpack.c.h.b16 %v2908
    %v4069 = vunpack.c.l.b16 %v2909
    %v4070 = vunpack.c.l.b16 %v2910
    %v4071 = vunpack.c.h.b16 %v2910
    %v4072 = vunpack.c.l.b16 %v2911
    %v4073 = vunpack.c.h.b16 %v2911
    %v4074 = vunpack.c.l.b16 %v2912
    %v4075 = vunpack.c.h.b16 %v2912
    %v4076 = vunpack.c.l.b16 %v2913
    %v4077 = vunpack.c.l.b16 %v2914
    %v4078 = vunpack.c.h.b16 %v2914
    %v4079 = vunpack.c.l.b16 %v2915
    %v4080 = vunpack.c.h.b16 %v2915
    %v4081 = vunpack.c.l.b16 %v2916
    %v4082 = vunpack.c.h.b16 %v2916
    %v4083 = vunpack.c.l.b16 %v2917
    %v4084 = vunpack.c.l.b16 %v2918
    %v4085 = vunpack.c.h.b16 %v2918
    %v4086 = vunpack.c.l.b16 %v2919
    %v4087 = vunpack.c.h.b16 %v2919
    %v4088 = vunpack.c.l.b16 %v2920
    %v4089 = vunpack.c.h.b16 %v2920
    %v4090 = vunpack.c.l.b16 %v2921
    %v4091 = vunpack.c.l.b16 %v2922
    %v4092 = vunpack.c.h.b16 %v2922
    %v4093 = vunpack.c.l.b16 %v2923
    %v4094 = vunpack.c.h.b16 %v2923
    %v4095 = vunpack.c.l.b16 %v2924
    %v4096 = vunpack.c.h.b16 %v2924
    %v4097 = vunpack.c.l.b16 %v2925
    %v4098 = vunpack.c.l.b16 %v2926
    %v4099 = vunpack.c.h.b16 %v2926
    %v4100 = vunpack.c.l.b16 %v2927
    %v4101 = vunpack.c.h.b16 %v2927
    %v4102 = vunpack.c.l.b16 %v2928
    %v4103 = vunpack.c.h.b16 %v2928
    %v4104 = vunpack.c.l.b16 %v2929
    %v4105 = vunpack.c.l.b16 %v2930
    %v4106 = vunpack.c.h.b16 %v2930
    %v4107 = vunpack.c.l.b16 %v2931
    %v4108 = vunpack.c.h.b16 %v2931
    %v4109 = vunpack.c.l.b16 %v2932
    %v4110 = vunpack.c.h.b16 %v2932
    %v4111 = vunpack.c.l.b16 %v2933
    %v4112 = vunpack.c.l.b16 %v2934
    %v4113 = vunpack.c.h.b16 %v2934
    %v4114 = vunpack.c.l.b16 %v2935
    %v4115 = vunpack.c.h.b16 %v2935
    %v4116 = vunpack.c.l.b16 %v2936
    %v4117 = vunpack.c.h.b16 %v2936
    %v4118 = vunpack.c.l.b16 %v2937
    %v4119 = vunpack.c.l.b16 %v2938
    %v4120 = vunpack.c.h.b16 %v2938
    %v4121 = vunpack.c.l.b16 %v2939
    %v4122 = vunpack.c.h.b16 %v2939
    %v4123 = vunpack.c.l.b16 %v2940
    %v4124 = vunpack.c.h.b16 %v2940
    %v4125 = vunpack.c.l.b16 %v2941
    %v4126 = vunpack.c.l.b16 %v2942
    %v4127 = vunpack.c.h.b16 %v2942
    %v4128 = vunpack.c.l.b16 %v2943
    %v4129 = vunpack.c.h.b16 %v2943
    %v4130 = vunpack.c.l.b16 %v2944
    %v4131 = vunpack.c.h.b16 %v2944
    %v4132 = vunpack.c.l.b16 %v2945
    %v4133 = vunpack.c.l.b16 %v2946
    %v4134 = vunpack.c.h.b16 %v2946
    %v4135 = vunpack.c.l.b16 %v2947
    %v4136 = vunpack.c.h.b16 %v2947
    %v4137 = vunpack.c.l.b16 %v2948
    %v4138 = vunpack.c.h.b16 %v2948
    %v4139 = vunpack.c.l.b16 %v2949
    %v4140 = vunpack.c.l.b16 %v2950
    %v4141 = vunpack.c.h.b16 %v2950
    %v4142 = vunpack.c.l.b16 %v2951
    %v4143 = vunpack.c.h.b16 %v2951
    %v4144 = vunpack.c.l.b16 %v2952
    %v4145 = vunpack.c.h.b16 %v2952
    %v4146 = vunpack.c.l.b16 %v2953
    %v4147 = vunpack.c.l.b16 %v2954
    %v4148 = vunpack.c.h.b16 %v2954
    %v4149 = vunpack.c.l.b16 %v2955
    %v4150 = vunpack.c.h.b16 %v2955
    %v4151 = vunpack.c.l.b16 %v2956
    %v4152 = vunpack.c.h.b16 %v2956
    %v4153 = vunpack.c.l.b16 %v2957
    %v4154 = vunpack.c.l.b16 %v2958
    %v4155 = vunpack.c.h.b16 %v2958
    %v4156 = vunpack.c.l.b16 %v2959
    %v4157 = vunpack.c.h.b16 %v2959
    %v4158 = vunpack.c.l.b16 %v2960
    %v4159 = vunpack.c.h.b16 %v2960
    %v4160 = vunpack.c.l.b16 %v2961
    %v4161 = vunpack.c.l.b16 %v2962
    %v4162 = vunpack.c.h.b16 %v2962
    %v4163 = vunpack.c.l.b16 %v2963
    %v4164 = vunpack.c.h.b16 %v2963
    %v4165 = vunpack.c.l.b16 %v2964
    %v4166 = vunpack.c.h.b16 %v2964
    %v4167 = vunpack.c.l.b16 %v2965
    %v4168 = vunpack.c.l.b16 %v2966
    %v4169 = vunpack.c.h.b16 %v2966
    %v4170 = vunpack.c.l.b16 %v2967
    %v4171 = vunpack.c.h.b16 %v2967
    %v4172 = vunpack.c.l.b16 %v2968
    %v4173 = vunpack.c.h.b16 %v2968
    %v4174 = vunpack.c.l.b16 %v2969
    %v4175 = vunpack.c.l.b16 %v2970
    %v4176 = vunpack.c.h.b16 %v2970
    %v4177 = vunpack.c.l.b16 %v2971
    %v4178 = vunpack.c.h.b16 %v2971
    %v4179 = vunpack.c.l.b16 %v2972
    %v4180 = vunpack.c.h.b16 %v2972
    %v4181 = vunpack.c.l.b16 %v2973
    %v4182 = vunpack.c.l.b16 %v2974
    %v4183 = vunpack.c.h.b16 %v2974
    %v4184 = vunpack.c.l.b16 %v2975
    %v4185 = vunpack.c.h.b16 %v2975
    %v4186 = vunpack.c.l.b16 %v2976
    %v4187 = vunpack.c.h.b16 %v2976
    %v4188 = vunpack.c.l.b16 %v2977
    %v4189 = vunpack.c.l.b16 %v2978
    %v4190 = vunpack.c.h.b16 %v2978
    %v4191 = vunpack.c.l.b16 %v2979
    %v4192 = vunpack.c.h.b16 %v2979
    %v4193 = vunpack.c.l.b16 %v2980
    %v4194 = vunpack.c.h.b16 %v2980
    %v4195 = vunpack.c.l.b16 %v2981
    %v4196 = vunpack.c.l.b16 %v2982
    %v4197 = vunpack.c.h.b16 %v2982
    %v4198 = vunpack.c.l.b16 %v2983
    %v4199 = vunpack.c.h.b16 %v2983
    %v4200 = vunpack.c.l.b16 %v2984
    %v4201 = vunpack.c.h.b16 %v2984
    %v4202 = vunpack.c.l.b16 %v2985
    %v4203 = vunpack.c.l.b16 %v2986
    %v4204 = vunpack.c.h.b16 %v2986
    %v4205 = vunpack.c.l.b16 %v2987
    %v4206 = vunpack.c.h.b16 %v2987
    %v4207 = vunpack.c.l.b16 %v2988
    %v4208 = vunpack.c.h.b16 %v2988
    %v4209 = vunpack.c.l.b16 %v2989
    %v4210 = vunpack.c.l.b16 %v2990
    %v4211 = vunpack.c.h.b16 %v2990
    %v4212 = vunpack.c.l.b16 %v2991
    %v4213 = vunpack.c.h.b16 %v2991
    %v4214 = vunpack.c.l.b16 %v2992
    %v4215 = vunpack.c.h.b16 %v2992
    %v4216 = vunpack.c.l.b16 %v2993
    %v4217 = vunpack.c.l.b16 %v2994
    %v4218 = vunpack.c.h.b16 %v2994
    %v4219 = vunpack.c.l.b16 %v2995
    %v4220 = vunpack.c.h.b16 %v2995
    %v4221 = vunpack.c.l.b16 %v2996
    %v4222 = vunpack.c.h.b16 %v2996
    %v4223 = vunpack.c.l.b16 %v2997
    %v4224 = vunpack.c.l.b16 %v2998
    %v4225 = vunpack.c.h.b16 %v2998
    %v4226 = vunpack.c.l.b16 %v2999
    %v4227 = vunpack.c.h.b16 %v2999
    %v4228 = vunpack.c.l.b16 %v3000
    %v4229 = vunpack.c.h.b16 %v3000
    %v4230 = vunpack.c.l.b16 %v3001
    %v4231 = vunpack.c.l.b16 %v3002
    %v4232 = vunpack.c.h.b16 %v3002
    %v4233 = vunpack.c.l.b16 %v3003
    %v4234 = vunpack.c.h.b16 %v3003
    %v4235 = vunpack.c.l.b16 %v3004
    %v4236 = vunpack.c.h.b16 %v3004
    %v4237 = vunpack.c.l.b16 %v3005
    %v4238 = vunpack.c.l.b16 %v3006
    %v4239 = vunpack.c.h.b16 %v3006
    %v4240 = vunpack.c.l.b16 %v3007
    %v4241 = vunpack.c.h.b16 %v3007
    %v4242 = vunpack.c.l.b16 %v3008
    %v4243 = vunpack.c.h.b16 %v3008
    %v4244 = vunpack.c.l.b16 %v3009
    %v4245 = vunpack.c.l.b16 %v3010
    %v4246 = vunpack.c.h.b16 %v3010
    %v4247 = vunpack.c.l.b16 %v3011
    %v4248 = vunpack.c.h.b16 %v3011
    %v4249 = vunpack.c.l.b16 %v3012
    %v4250 = vunpack.c.h.b16 %v3012
    %v4251 = vunpack.c.l.b16 %v3013
    %v4252 = vunpack.c.l.b16 %v3014
    %v4253 = vunpack.c.h.b16 %v3014
    %v4254 = vunpack.c.l.b16 %v3015
    %v4255 = vunpack.c.h.b16 %v3015
    %v4256 = vunpack.c.l.b16 %v3016
    %v4257 = vunpack.c.h.b16 %v3016
    %v4258 = vunpack.c.l.b16 %v3017
    %v4259 = vunpack.c.l.b16 %v3018
    %v4260 = vunpack.c.h.b16 %v3018
    %v4261 = vunpack.c.l.b16 %v3019
    %v4262 = vunpack.c.h.b16 %v3019
    %v4263 = vunpack.c.l.b16 %v3020
    %v4264 = vunpack.c.h.b16 %v3020
    %v4265 = vunpack.c.l.b16 %v3021
    %v4266 = vunpack.c.l.b16 %v3022
    %v4267 = vunpack.c.h.b16 %v3022
    %v4268 = vunpack.c.l.b16 %v3023
    %v4269 = vunpack.c.h.b16 %v3023
    %v4270 = vunpack.c.l.b16 %v3024
    %v4271 = vunpack.c.h.b16 %v3024
    %v4272 = vunpack.c.l.b16 %v3025
    %v4273 = vunpack.c.l.b16 %v3026
    %v4274 = vunpack.c.h.b16 %v3026
    %v4275 = vunpack.c.l.b16 %v3027
    %v4276 = vunpack.c.h.b16 %v3027
    %v4277 = vunpack.c.l.b16 %v3028
    %v4278 = vunpack.c.h.b16 %v3028
    %v4279 = vunpack.c.l.b16 %v3029
    %v4280 = vunpack.c.l.b16 %v3030
    %v4281 = vunpack.c.h.b16 %v3030
    %v4282 = vunpack.c.l.b16 %v3031
    %v4283 = vunpack.c.h.b16 %v3031
    %v4284 = vunpack.c.l.b16 %v3032
    %v4285 = vunpack.c.h.b16 %v3032
    %v4286 = vunpack.c.l.b16 %v3033
    %v4287 = vunpack.c.l.b16 %v3034
    %v4288 = vunpack.c.h.b16 %v3034
    %v4289 = vunpack.c.l.b16 %v3035
    %v4290 = vunpack.c.h.b16 %v3035
    %v4291 = vunpack.c.l.b16 %v3036
    %v4292 = vunpack.c.h.b16 %v3036
    %v4293 = vunpack.c.l.b16 %v3037
    %v4294 = vunpack.c.l.b16 %v3038
    %v4295 = vunpack.c.h.b16 %v3038
    %v4296 = vunpack.c.l.b16 %v3039
    %v4297 = vunpack.c.h.b16 %v3039
    %v4298 = vunpack.c.l.b16 %v3040
    %v4299 = vunpack.c.h.b16 %v3040
    %v4300 = vunpack.c.l.b16 %v3041
    %v4301 = vunpack.c.l.b16 %v3042
    %v4302 = vunpack.c.h.b16 %v3042
    %v4303 = vunpack.c.l.b16 %v3043
    %v4304 = vunpack.c.h.b16 %v3043
    %v4305 = vunpack.c.l.b16 %v3044
    %v4306 = vunpack.c.h.b16 %v3044
    %v4307 = vunpack.c.l.b16 %v3045
    %v4308 = vunpack.c.l.b16 %v3046
    %v4309 = vunpack.c.h.b16 %v3046
    %v4310 = vunpack.c.l.b16 %v3047
    %v4311 = vunpack.c.h.b16 %v3047
    %v4312 = vunpack.c.l.b16 %v3048
    %v4313 = vunpack.c.h.b16 %v3048
    %v4314 = vunpack.c.l.b16 %v3049
    %v4315 = vunpack.c.l.b16 %v3050
    %v4316 = vunpack.c.h.b16 %v3050
    %v4317 = vunpack.c.l.b16 %v3051
    %v4318 = vunpack.c.h.b16 %v3051
    %v4319 = vunpack.c.l.b16 %v3052
    %v4320 = vunpack.c.h.b16 %v3052
    %v4321 = vunpack.c.l.b16 %v3053
    %v4322 = vunpack.c.l.b16 %v3054
    %v4323 = vunpack.c.h.b16 %v3054
    %v4324 = vunpack.c.l.b16 %v3055
    %v4325 = vunpack.c.h.b16 %v3055
    %v4326 = vunpack.c.l.b16 %v3056
    %v4327 = vunpack.c.h.b16 %v3056
    %v4328 = vunpack.c.l.b16 %v3057
    %v4329 = vunpack.c.l.b16 %v3058
    %v4330 = vunpack.c.h.b16 %v3058
    %v4331 = vunpack.c.l.b16 %v3059
    %v4332 = vunpack.c.h.b16 %v3059
    %v4333 = vunpack.c.l.b16 %v3060
    %v4334 = vunpack.c.h.b16 %v3060
    %v4335 = vunpack.c.l.b16 %v3061
    %v4336 = vunpack.c.l.b16 %v3062
    %v4337 = vunpack.c.h.b16 %v3062
    %v4338 = vunpack.c.l.b16 %v3063
    %v4339 = vunpack.c.h.b16 %v3063
    %v4340 = vunpack.c.l.b16 %v3064
    %v4341 = vunpack.c.h.b16 %v3064
    %v4342 = vunpack.c.l.b16 %v3065
    %v4343 = vunpack.c.l.b16 %v3066
    %v4344 = vunpack.c.h.b16 %v3066
    %v4345 = vunpack.c.l.b16 %v3067
    %v4346 = vunpack.c.h.b16 %v3067
    %v4347 = vunpack.c.l.b16 %v3068
    %v4348 = vunpack.c.h.b16 %v3068
    %v4349 = vunpack.c.l.b16 %v3069
    %v4350 = vunpack.c.l.b16 %v3070
    %v4351 = vunpack.c.h.b16 %v3070
    %v4352 = vunpack.c.l.b16 %v3071
    %v4353 = vunpack.c.h.b16 %v3071
    %v4354 = vunpack.c.l.b16 %v3072
    %v4355 = vunpack.c.h.b16 %v3072
    %v4356 = vunpack.c.l.b16 %v3073
    %v4357 = vunpack.c.l.b16 %v3074
    %v4358 = vunpack.c.h.b16 %v3074
    %v4359 = vunpack.c.l.b16 %v3075
    %v4360 = vunpack.c.h.b16 %v3075
    %v4361 = vunpack.c.l.b16 %v3076
    %v4362 = vunpack.c.h.b16 %v3076
    %v4363 = vunpack.c.l.b16 %v3077
    %v4364 = vunpack.c.l.b16 %v3078
    %v4365 = vunpack.c.h.b16 %v3078
    %v4366 = vunpack.c.l.b16 %v3079
    %v4367 = vunpack.c.h.b16 %v3079
    %v4368 = vunpack.c.l.b16 %v3080
    %v4369 = vunpack.c.h.b16 %v3080
    %v4370 = vunpack.c.l.b16 %v3081
    %v4371 = vunpack.c.l.b16 %v3082
    %v4372 = vunpack.c.h.b16 %v3082
    %v4373 = vunpack.c.l.b16 %v3083
    %v4374 = vunpack.c.h.b16 %v3083
    %v4375 = vunpack.c.l.b16 %v3084
    %v4376 = vunpack.c.h.b16 %v3084
    %v4377 = vunpack.c.l.b16 %v3085
    %v4378 = vunpack.c.l.b16 %v3086
    %v4379 = vunpack.c.h.b16 %v3086
    %v4380 = vunpack.c.l.b16 %v3087
    %v4381 = vunpack.c.h.b16 %v3087
    %v4382 = vunpack.c.l.b16 %v3088
    %v4383 = vunpack.c.h.b16 %v3088
    %v4384 = vunpack.c.l.b16 %v3089
    %v4385 = vunpack.c.l.b16 %v3090
    %v4386 = vunpack.c.h.b16 %v3090
    %v4387 = vunpack.c.l.b16 %v3091
    %v4388 = vunpack.c.h.b16 %v3091
    %v4389 = vunpack.c.l.b16 %v3092
    %v4390 = vunpack.c.h.b16 %v3092
    %v4391 = vunpack.c.l.b16 %v3093
    %v4392 = vunpack.c.l.b16 %v3094
    %v4393 = vunpack.c.h.b16 %v3094
    %v4394 = vunpack.c.l.b16 %v3095
    %v4395 = vunpack.c.h.b16 %v3095
    %v4396 = vunpack.c.l.b16 %v3096
    %v4397 = vunpack.c.h.b16 %v3096
    %v4398 = vunpack.c.l.b16 %v3097
    %v4399 = vunpack.c.l.b16 %v3098
    %v4400 = vunpack.c.h.b16 %v3098
    %v4401 = vunpack.c.l.b16 %v3099
    %v4402 = vunpack.c.h.b16 %v3099
    %v4403 = vunpack.c.l.b16 %v3100
    %v4404 = vunpack.c.h.b16 %v3100
    %v4405 = vunpack.c.l.b16 %v3101
    %v4406 = vunpack.c.l.b16 %v3102
    %v4407 = vunpack.c.h.b16 %v3102
    %v4408 = vunpack.c.l.b16 %v3103
    %v4409 = vunpack.c.h.b16 %v3103
    %v4410 = vunpack.c.l.b16 %v3104
    %v4411 = vunpack.c.h.b16 %v3104
    %v4412 = vunpack.c.l.b16 %v3105
    %v4413 = vunpack.c.l.b16 %v3106
    %v4414 = vunpack.c.h.b16 %v3106
    %v4415 = vunpack.c.l.b16 %v3107
    %v4416 = vunpack.c.h.b16 %v3107
    %v4417 = vunpack.c.l.b16 %v3108
    %v4418 = vunpack.c.h.b16 %v3108
    %v4419 = vunpack.c.l.b16 %v3109
    %v4420 = vunpack.c.l.b16 %v3110
    %v4421 = vunpack.c.h.b16 %v3110
    %v4422 = vunpack.c.l.b16 %v3111
    %v4423 = vunpack.c.h.b16 %v3111
    %v4424 = vunpack.c.l.b16 %v3112
    %v4425 = vunpack.c.h.b16 %v3112
    %v4426 = vunpack.c.l.b16 %v3113
    %v4427 = vunpack.c.l.b16 %v3114
    %v4428 = vunpack.c.h.b16 %v3114
    %v4429 = vunpack.c.l.b16 %v3115
    %v4430 = vunpack.c.h.b16 %v3115
    %v4431 = vunpack.c.l.b16 %v3116
    %v4432 = vunpack.c.h.b16 %v3116
    %v4433 = vunpack.c.l.b16 %v3117
    %v4434 = vunpack.c.l.b16 %v3118
    %v4435 = vunpack.c.h.b16 %v3118
    %v4436 = vunpack.c.l.b16 %v3119
    %v4437 = vunpack.c.h.b16 %v3119
    %v4438 = vunpack.c.l.b16 %v3120
    %v4439 = vunpack.c.h.b16 %v3120
    %v4440 = vunpack.c.l.b16 %v3121
    %v4441 = vunpack.c.l.b16 %v3122
    %v4442 = vunpack.c.h.b16 %v3122
    %v4443 = vunpack.c.l.b16 %v3123
    %v4444 = vunpack.c.h.b16 %v3123
    %v4445 = vunpack.c.l.b16 %v3124
    %v4446 = vunpack.c.h.b16 %v3124
    %v4447 = vunpack.c.l.b16 %v3125
    %v4448 = vunpack.c.l.b16 %v3126
    %v4449 = vunpack.c.h.b16 %v3126
    %v4450 = vunpack.c.l.b16 %v3127
    %v4451 = vunpack.c.h.b16 %v3127
    %v4452 = vunpack.c.l.b16 %v3128
    %v4453 = vunpack.c.h.b16 %v3128
    %v4454 = vunpack.c.l.b16 %v3129
    %v4455 = vunpack.c.l.b16 %v3130
    %v4456 = vunpack.c.h.b16 %v3130
    %v4457 = vunpack.c.l.b16 %v3131
    %v4458 = vunpack.c.h.b16 %v3131
    %v4459 = vunpack.c.l.b16 %v3132
    %v4460 = vunpack.c.h.b16 %v3132
    %v4461 = vunpack.c.l.b16 %v3133
    %v4462 = vunpack.c.l.b16 %v3134
    %v4463 = vunpack.c.h.b16 %v3134
    %v4464 = vunpack.c.l.b16 %v3135
    %v4465 = vunpack.c.h.b16 %v3135
    %v4466 = vunpack.c.l.b16 %v3136
    %v4467 = vunpack.c.h.b16 %v3136
    %v4468 = vunpack.c.l.b16 %v3137
    %v4469 = vunpack.c.l.b16 %v3138
    %v4470 = vunpack.c.h.b16 %v3138
    %v4471 = vunpack.c.l.b16 %v3139
    %v4472 = vunpack.c.h.b16 %v3139
    %v4473 = vunpack.c.l.b16 %v3140
    %v4474 = vunpack.c.h.b16 %v3140
    %v4475 = vunpack.c.l.b16 %v3141
    %v4476 = vunpack.c.l.b16 %v3142
    %v4477 = vunpack.c.h.b16 %v3142
    %v4478 = vunpack.c.l.b16 %v3143
    %v4479 = vunpack.c.h.b16 %v3143
    %v4480 = vunpack.c.l.b16 %v3144
    %v4481 = vunpack.c.h.b16 %v3144
    %v4482 = vunpack.c.l.b16 %v3145
    %v4483 = vunpack.c.l.b16 %v3146
    %v4484 = vunpack.c.h.b16 %v3146
    %v4485 = vunpack.c.l.b16 %v3147
    %v4486 = vunpack.c.h.b16 %v3147
    %v4487 = vunpack.c.l.b16 %v3148
    %v4488 = vunpack.c.h.b16 %v3148
    %v4489 = vunpack.c.l.b16 %v3149
    %v4490 = vunpack.c.l.b16 %v3150
    %v4491 = vunpack.c.h.b16 %v3150
    %v4492 = vunpack.c.l.b16 %v3151
    %v4493 = vunpack.c.h.b16 %v3151
    %v4494 = vunpack.c.l.b16 %v3152
    %v4495 = vunpack.c.h.b16 %v3152
    %v4496 = vunpack.c.l.b16 %v3153
    %v4497 = vunpack.c.l.b16 %v3154
    %v4498 = vunpack.c.h.b16 %v3154
    %v4499 = vunpack.c.l.b16 %v3155
    %v4500 = vunpack.c.h.b16 %v3155
    %v4501 = vunpack.c.l.b16 %v3156
    %v4502 = vunpack.c.h.b16 %v3156
    %v4503 = vunpack.c.l.b16 %v3157
    %v4504 = vunpack.c.l.b16 %v3158
    %v4505 = vunpack.c.h.b16 %v3158
    %v4506 = vunpack.c.l.b16 %v3159
    %v4507 = vunpack.c.h.b16 %v3159
    %v4508 = vunpack.c.l.b16 %v3160
    %v4509 = vunpack.c.h.b16 %v3160
    %v4510 = vunpack.c.l.b16 %v3161
    %v4511 = vunpack.c.l.b16 %v3162
    %v4512 = vunpack.c.h.b16 %v3162
    %v4513 = vunpack.c.l.b16 %v3163
    %v4514 = vunpack.c.h.b16 %v3163
    %v4515 = vunpack.c.l.b16 %v3164
    %v4516 = vunpack.c.h.b16 %v3164
    %v4517 = vunpack.c.l.b16 %v3165
    %v4518 = vunpack.c.l.b16 %v3166
    %v4519 = vunpack.c.h.b16 %v3166
    %v4520 = vunpack.c.l.b16 %v3167
    %v4521 = vunpack.c.h.b16 %v3167
    %v4522 = vunpack.c.l.b16 %v3168
    %v4523 = vunpack.c.h.b16 %v3168
    %v4524 = vunpack.c.l.b16 %v3169
    %v4525 = vunpack.c.l.b16 %v3170
    %v4526 = vunpack.c.h.b16 %v3170
    %v4527 = vunpack.c.l.b16 %v3171
    %v4528 = vunpack.c.h.b16 %v3171
    %v4529 = vunpack.c.l.b16 %v3172
    %v4530 = vunpack.c.h.b16 %v3172
    %v4531 = vunpack.c.l.b16 %v3173
    %v4532 = vunpack.c.l.b16 %v3174
    %v4533 = vunpack.c.h.b16 %v3174
    %v4534 = vunpack.c.l.b16 %v3175
    %v4535 = vunpack.c.h.b16 %v3175
    %v4536 = vunpack.c.l.b16 %v3176
    %v4537 = vunpack.c.h.b16 %v3176
    %v4538 = vunpack.c.l.b16 %v3177
    %v4539 = vunpack.c.l.b16 %v3178
    %v4540 = vunpack.c.h.b16 %v3178
    %v4541 = vunpack.c.l.b16 %v3179
    %v4542 = vunpack.c.h.b16 %v3179
    %v4543 = vunpack.c.l.b16 %v3180
    %v4544 = vunpack.c.h.b16 %v3180
    %v4545 = vunpack.c.l.b16 %v3181
    %v4546 = vunpack.c.l.b16 %v3182
    %v4547 = vunpack.c.h.b16 %v3182
    %v4548 = vunpack.c.l.b16 %v3183
    %v4549 = vunpack.c.h.b16 %v3183
    %v4550 = vunpack.c.l.b16 %v3184
    %v4551 = vunpack.c.h.b16 %v3184
    %v4552 = vunpack.c.l.b16 %v3185
    %v4553 = vunpack.c.l.b16 %v3186
    %v4554 = vunpack.c.h.b16 %v3186
    %v4555 = vunpack.c.l.b16 %v3187
    %v4556 = vunpack.c.h.b16 %v3187
    %v4557 = vunpack.c.l.b16 %v3188
    %v4558 = vunpack.c.h.b16 %v3188
    %v4559 = vunpack.c.l.b16 %v3189
    %v4560 = vunpack.c.l.b16 %v3190
    %v4561 = vunpack.c.h.b16 %v3190
    %v4562 = vunpack.c.l.b16 %v3191
    %v4563 = vunpack.c.h.b16 %v3191
    %v4564 = vunpack.c.l.b16 %v3192
    %v4565 = vunpack.c.h.b16 %v3192
    %v4566 = vunpack.c.l.b16 %v3193
    %v4567 = vunpack.c.l.b16 %v3194
    %v4568 = vunpack.c.h.b16 %v3194
    %v4569 = vunpack.c.l.b16 %v3195
    %v4570 = vunpack.c.h.b16 %v3195
    %v4571 = vunpack.c.l.b16 %v3196
    %v4572 = vunpack.c.h.b16 %v3196
    %v4573 = vunpack.c.l.b16 %v3197
    %v4574 = vunpack.c.l.b16 %v3198
    %v4575 = vunpack.c.h.b16 %v3198
    %v4576 = vunpack.c.l.b16 %v3199
    %v4577 = vunpack.c.h.b16 %v3199
    %v4578 = vunpack.c.l.b16 %v3200
    %v4579 = vunpack.c.h.b16 %v3200
    %v4580 = vunpack.c.l.b16 %v3201
    %v4581 = vunpack.c.l.b16 %v3202
    %v4582 = vunpack.c.h.b16 %v3202
    %v4583 = vunpack.c.l.b16 %v3203
    %v4584 = vunpack.c.h.b16 %v3203
    %v4585 = vunpack.c.l.b16 %v3204
    %v4586 = vunpack.c.h.b16 %v3204
    %v4587 = vunpack.c.l.b16 %v3205
    %v4588 = vunpack.c.l.b16 %v3206
    %v4589 = vunpack.c.h.b16 %v3206
    %v4590 = vunpack.c.l.b16 %v3207
    %v4591 = vunpack.c.h.b16 %v3207
    %v4592 = vunpack.c.l.b16 %v3208
    %v4593 = vunpack.c.h.b16 %v3208
    %v4594 = vunpack.c.l.b16 %v3209
    %v4595 = vunpack.c.l.b16 %v3210
    %v4596 = vunpack.c.h.b16 %v3210
    %v4597 = vunpack.c.l.b16 %v3211
    %v4598 = vunpack.c.h.b16 %v3211
    %v4599 = vunpack.c.l.b16 %v3212
    %v4600 = vunpack.c.h.b16 %v3212
    %v4601 = vunpack.c.l.b16 %v3213
    %v4602 = vunpack.c.l.b16 %v3214
    %v4603 = vunpack.c.h.b16 %v3214
    %v4604 = vunpack.c.l.b16 %v3215
    %v4605 = vunpack.c.h.b16 %v3215
    %v4606 = vunpack.c.l.b16 %v3216
    %v4607 = vunpack.c.h.b16 %v3216
    %v4608 = vunpack.c.l.b16 %v3217
    %v4609 = vunpack.c.l.b16 %v3218
    %v4610 = vunpack.c.h.b16 %v3218
    %v4611 = vunpack.c.l.b16 %v3219
    %v4612 = vunpack.c.h.b16 %v3219
    %v4613 = vunpack.c.l.b16 %v3220
    %v4614 = vunpack.c.h.b16 %v3220
    %v4615 = vunpack.c.l.b16 %v3221
    %v4616 = vunpack.c.l.b16 %v3222
    %v4617 = vunpack.c.h.b16 %v3222
    %v4618 = vunpack.c.l.b16 %v3223
    %v4619 = vunpack.c.h.b16 %v3223
    %v4620 = vunpack.c.l.b16 %v3224
    %v4621 = vunpack.c.h.b16 %v3224
    %v4622 = vunpack.c.l.b16 %v3225
    %v4623 = vunpack.c.l.b16 %v3226
    %v4624 = vunpack.c.h.b16 %v3226
    %v4625 = vunpack.c.l.b16 %v3227
    %v4626 = vunpack.c.h.b16 %v3227
    %v4627 = vunpack.c.l.b16 %v3228
    %v4628 = vunpack.c.h.b16 %v3228
    %v4629 = vunpack.c.l.b16 %v3229
    %v4630 = vunpack.c.l.b16 %v3230
    %v4631 = vunpack.c.h.b16 %v3230
    %v4632 = vunpack.c.l.b16 %v3231
    %v4633 = vunpack.c.h.b16 %v3231
    %v4634 = vunpack.c.l.b16 %v3232
    %v4635 = vunpack.c.h.b16 %v3232
    %v4636 = vunpack.c.l.b16 %v3233
    %v4637 = vunpack.c.l.b16 %v3234
    %v4638 = vunpack.c.h.b16 %v3234
    %v4639 = vunpack.c.l.b16 %v3235
    %v4640 = vunpack.c.h.b16 %v3235
    %v4641 = vunpack.c.l.b16 %v3236
    %v4642 = vunpack.c.h.b16 %v3236
    %v4643 = vunpack.c.l.b16 %v3237
    %v4644 = vunpack.c.l.b16 %v3238
    %v4645 = vunpack.c.h.b16 %v3238
    %v4646 = vunpack.c.l.b16 %v3239
    %v4647 = vunpack.c.h.b16 %v3239
    %v4648 = vunpack.c.l.b16 %v3240
    %v4649 = vunpack.c.h.b16 %v3240
    %v4650 = vunpack.c.l.b16 %v3241
    %v4651 = vunpack.c.l.b16 %v3242
    %v4652 = vunpack.c.h.b16 %v3242
    %v4653 = vunpack.c.l.b16 %v3243
    %v4654 = vunpack.c.h.b16 %v3243
    %v4655 = vunpack.c.l.b16 %v3244
    %v4656 = vunpack.c.h.b16 %v3244
    %v4657 = vunpack.c.l.b16 %v3245
    %v4658 = vunpack.c.l.b16 %v3246
    %v4659 = vunpack.c.h.b16 %v3246
    %v4660 = vunpack.c.l.b16 %v3247
    %v4661 = vunpack.c.h.b16 %v3247
    %v4662 = vunpack.c.l.b16 %v3248
    %v4663 = vunpack.c.h.b16 %v3248
    %v4664 = vunpack.c.l.b16 %v3249
    %v4665 = vunpack.c.l.b16 %v3250
    %v4666 = vunpack.c.h.b16 %v3250
    %v4667 = vunpack.c.l.b16 %v3251
    %v4668 = vunpack.c.h.b16 %v3251
    %v4669 = vunpack.c.l.b16 %v3252
    %v4670 = vunpack.c.h.b16 %v3252
    %v4671 = vunpack.c.l.b16 %v3253
    %v4672 = vunpack.c.l.b16 %v3254
    %v4673 = vunpack.c.h.b16 %v3254
    %v4674 = vunpack.c.l.b16 %v3255
    %v4675 = vunpack.c.h.b16 %v3255
    %v4676 = vunpack.c.l.b16 %v3256
    %v4677 = vunpack.c.h.b16 %v3256
    %v4678 = vunpack.c.l.b16 %v3257
    %v4679 = vunpack.c.l.b16 %v3258
    %v4680 = vunpack.c.h.b16 %v3258
    %v4681 = vunpack.c.l.b16 %v3259
    %v4682 = vunpack.c.h.b16 %v3259
    %v4683 = vunpack.c.l.b16 %v3260
    %v4684 = vunpack.c.h.b16 %v3260
    %v4685 = vunpack.c.l.b16 %v3261
    %v4686 = vunpack.c.l.b16 %v3262
    %v4687 = vunpack.c.h.b16 %v3262
    %v4688 = vunpack.c.l.b16 %v3263
    %v4689 = vunpack.c.h.b16 %v3263
    %v4690 = vunpack.c.l.b16 %v3264
    %v4691 = vunpack.c.h.b16 %v3264
    %v4692 = vunpack.c.l.b16 %v3265
    %v4693 = vunpack.c.l.b16 %v3266
    %v4694 = vunpack.c.h.b16 %v3266
    %v4695 = vunpack.c.l.b16 %v3267
    %v4696 = vunpack.c.h.b16 %v3267
    %v4697 = vunpack.c.l.b16 %v3268
    %v4698 = vunpack.c.h.b16 %v3268
    %v4699 = vunpack.c.l.b16 %v3269
    %v4700 = vunpack.c.l.b16 %v3270
    %v4701 = vunpack.c.h.b16 %v3270
    %v4702 = vunpack.c.l.b16 %v3271
    %v4703 = vunpack.c.h.b16 %v3271
    %v4704 = vunpack.c.l.b16 %v3272
    %v4705 = vunpack.c.h.b16 %v3272
    %v4706 = vunpack.c.l.b16 %v3273
    %v4707 = vunpack.c.l.b16 %v3274
    %v4708 = vunpack.c.h.b16 %v3274
    %v4709 = vunpack.c.l.b16 %v3275
    %v4710 = vunpack.c.h.b16 %v3275
    %v4711 = vunpack.c.l.b16 %v3276
    %v4712 = vunpack.c.h.b16 %v3276
    %v4713 = vunpack.c.l.b16 %v3277
    %v4714 = vunpack.c.l.b16 %v3278
    %v4715 = vunpack.c.h.b16 %v3278
    %v4716 = vunpack.c.l.b16 %v3279
    %v4717 = vunpack.c.h.b16 %v3279
    %v4718 = vunpack.c.l.b16 %v3280
    %v4719 = vunpack.c.h.b16 %v3280
    %v4720 = vunpack.c.l.b16 %v3281
    %v4721 = vunpack.c.l.b16 %v3282
    %v4722 = vunpack.c.h.b16 %v3282
    %v4723 = vunpack.c.l.b16 %v3283
    %v4724 = vunpack.c.h.b16 %v3283
    %v4725 = vunpack.c.l.b16 %v3284
    %v4726 = vunpack.c.h.b16 %v3284
    %v4727 = vunpack.c.l.b16 %v3285
    %v4728 = vunpack.c.l.b16 %v3286
    %v4729 = vunpack.c.h.b16 %v3286
    %v4730 = vunpack.c.l.b16 %v3287
    %v4731 = vunpack.c.h.b16 %v3287
    %v4732 = vunpack.c.l.b16 %v3288
    %v4733 = vunpack.c.h.b16 %v3288
    %v4734 = vunpack.c.l.b16 %v3289
    %v4735 = vpack.c.b16 %v3846, %v3839
    %v4736 = vpack.c.b16 %v3847, %v3840
    %v4737 = vpack.c.b16 %v3848, %v3841
    %v4738 = vpack.c.b16 %v3849, %v3842
    %v4739 = vpack.c.b16 %v3850, %v3843
    %v4740 = vpack.c.b16 %v3851, %v3844
    %v4741 = vpack.c.b16 %v3852, %v3845
    %v4742 = vpack.c.b16 %v3860, %v3853
    %v4743 = vpack.c.b16 %v3861, %v3854
    %v4744 = vpack.c.b16 %v3862, %v3855
    %v4745 = vpack.c.b16 %v3863, %v3856
    %v4746 = vpack.c.b16 %v3864, %v3857
    %v4747 = vpack.c.b16 %v3865, %v3858
    %v4748 = vpack.c.b16 %v3866, %v3859
    %v4749 = vpack.c.b16 %v3874, %v3867
    %v4750 = vpack.c.b16 %v3875, %v3868
    %v4751 = vpack.c.b16 %v3876, %v3869
    %v4752 = vpack.c.b16 %v3877, %v3870
    %v4753 = vpack.c.b16 %v3878, %v3871
    %v4754 = vpack.c.b16 %v3879, %v3872
    %v4755 = vpack.c.b16 %v3880, %v3873
    %v4756 = vpack.c.b16 %v3888, %v3881
    %v4757 = vpack.c.b16 %v3889, %v3882
    %v4758 = vpack.c.b16 %v3890, %v3883
    %v4759 = vpack.c.b16 %v3891, %v3884
    %v4760 = vpack.c.b16 %v3892, %v3885
    %v4761 = vpack.c.b16 %v3893, %v3886
    %v4762 = vpack.c.b16 %v3894, %v3887
    %v4763 = vpack.c.b16 %v3902, %v3895
    %v4764 = vpack.c.b16 %v3903, %v3896
    %v4765 = vpack.c.b16 %v3904, %v3897
    %v4766 = vpack.c.b16 %v3905, %v3898
    %v4767 = vpack.c.b16 %v3906, %v3899
    %v4768 = vpack.c.b16 %v3907, %v3900
    %v4769 = vpack.c.b16 %v3908, %v3901
    %v4770 = vpack.c.b16 %v3916, %v3909
    %v4771 = vpack.c.b16 %v3917, %v3910
    %v4772 = vpack.c.b16 %v3918, %v3911
    %v4773 = vpack.c.b16 %v3919, %v3912
    %v4774 = vpack.c.b16 %v3920, %v3913
    %v4775 = vpack.c.b16 %v3921, %v3914
    %v4776 = vpack.c.b16 %v3922, %v3915
    %v4777 = vpack.c.b16 %v3930, %v3923
    %v4778 = vpack.c.b16 %v3931, %v3924
    %v4779 = vpack.c.b16 %v3932, %v3925
    %v4780 = vpack.c.b16 %v3933, %v3926
    %v4781 = vpack.c.b16 %v3934, %v3927
    %v4782 = vpack.c.b16 %v3935, %v3928
    %v4783 = vpack.c.b16 %v3936, %v3929
    %v4784 = vpack.c.b16 %v3944, %v3937
    %v4785 = vpack.c.b16 %v3945, %v3938
    %v4786 = vpack.c.b16 %v3946, %v3939
    %v4787 = vpack.c.b16 %v3947, %v3940
    %v4788 = vpack.c.b16 %v3948, %v3941
    %v4789 = vpack.c.b16 %v3949, %v3942
    %v4790 = vpack.c.b16 %v3950, %v3943
    %v4791 = vpack.c.b16 %v3958, %v3951
    %v4792 = vpack.c.b16 %v3959, %v3952
    %v4793 = vpack.c.b16 %v3960, %v3953
    %v4794 = vpack.c.b16 %v3961, %v3954
    %v4795 = vpack.c.b16 %v3962, %v3955
    %v4796 = vpack.c.b16 %v3963, %v3956
    %v4797 = vpack.c.b16 %v3964, %v3957
    %v4798 = vpack.c.b16 %v3972, %v3965
    %v4799 = vpack.c.b16 %v3973, %v3966
    %v4800 = vpack.c.b16 %v3974, %v3967
    %v4801 = vpack.c.b16 %v3975, %v3968
    %v4802 = vpack.c.b16 %v3976, %v3969
    %v4803 = vpack.c.b16 %v3977, %v3970
    %v4804 = vpack.c.b16 %v3978, %v3971
    %v4805 = vpack.c.b16 %v3986, %v3979
    %v4806 = vpack.c.b16 %v3987, %v3980
    %v4807 = vpack.c.b16 %v3988, %v3981
    %v4808 = vpack.c.b16 %v3989, %v3982
    %v4809 = vpack.c.b16 %v3990, %v3983
    %v4810 = vpack.c.b16 %v3991, %v3984
    %v4811 = vpack.c.b16 %v3992, %v3985
    %v4812 = vpack.c.b16 %v4000, %v3993
    %v4813 = vpack.c.b16 %v4001, %v3994
    %v4814 = vpack.c.b16 %v4002, %v3995
    %v4815 = vpack.c.b16 %v4003, %v3996
    %v4816 = vpack.c.b16 %v4004, %v3997
    %v4817 = vpack.c.b16 %v4005, %v3998
    %v4818 = vpack.c.b16 %v4006, %v3999
    %v4819 = vpack.c.b16 %v4014, %v4007
    %v4820 = vpack.c.b16 %v4015, %v4008
    %v4821 = vpack.c.b16 %v4016, %v4009
    %v4822 = vpack.c.b16 %v4017, %v4010
    %v4823 = vpack.c.b16 %v4018, %v4011
    %v4824 = vpack.c.b16 %v4019, %v4012
    %v4825 = vpack.c.b16 %v4020, %v4013
    %v4826 = vpack.c.b16 %v4028, %v4021
    %v4827 = vpack.c.b16 %v4029, %v4022
    %v4828 = vpack.c.b16 %v4030, %v4023
    %v4829 = vpack.c.b16 %v4031, %v4024
    %v4830 = vpack.c.b16 %v4032, %v4025
    %v4831 = vpack.c.b16 %v4033, %v4026
    %v4832 = vpack.c.b16 %v4034, %v4027
    %v4833 = vpack.c.b16 %v4042, %v4035
    %v4834 = vpack.c.b16 %v4043, %v4036
    %v4835 = vpack.c.b16 %v4044, %v4037
    %v4836 = vpack.c.b16 %v4045, %v4038
    %v4837 = vpack.c.b16 %v4046, %v4039
    %v4838 = vpack.c.b16 %v4047, %v4040
    %v4839 = vpack.c.b16 %v4048, %v4041
    %v4840 = vpack.c.b16 %v4056, %v4049
    %v4841 = vpack.c.b16 %v4057, %v4050
    %v4842 = vpack.c.b16 %v4058, %v4051
    %v4843 = vpack.c.b16 %v4059, %v4052
    %v4844 = vpack.c.b16 %v4060, %v4053
    %v4845 = vpack.c.b16 %v4061, %v4054
    %v4846 = vpack.c.b16 %v4062, %v4055
    %v4847 = vpack.c.b16 %v4070, %v4063
    %v4848 = vpack.c.b16 %v4071, %v4064
    %v4849 = vpack.c.b16 %v4072, %v4065
    %v4850 = vpack.c.b16 %v4073, %v4066
    %v4851 = vpack.c.b16 %v4074, %v4067
    %v4852 = vpack.c.b16 %v4075, %v4068
    %v4853 = vpack.c.b16 %v4076, %v4069
    %v4854 = vpack.c.b16 %v4084, %v4077
    %v4855 = vpack.c.b16 %v4085, %v4078
    %v4856 = vpack.c.b16 %v4086, %v4079
    %v4857 = vpack.c.b16 %v4087, %v4080
    %v4858 = vpack.c.b16 %v4088, %v4081
    %v4859 = vpack.c.b16 %v4089, %v4082
    %v4860 = vpack.c.b16 %v4090, %v4083
    %v4861 = vpack.c.b16 %v4098, %v4091
    %v4862 = vpack.c.b16 %v4099, %v4092
    %v4863 = vpack.c.b16 %v4100, %v4093
    %v4864 = vpack.c.b16 %v4101, %v4094
    %v4865 = vpack.c.b16 %v4102, %v4095
    %v4866 = vpack.c.b16 %v4103, %v4096
    %v4867 = vpack.c.b16 %v4104, %v4097
    %v4868 = vpack.c.b16 %v4112, %v4105
    %v4869 = vpack.c.b16 %v4113, %v4106
    %v4870 = vpack.c.b16 %v4114, %v4107
    %v4871 = vpack.c.b16 %v4115, %v4108
    %v4872 = vpack.c.b16 %v4116, %v4109
    %v4873 = vpack.c.b16 %v4117, %v4110
    %v4874 = vpack.c.b16 %v4118, %v4111
    %v4875 = vpack.c.b16 %v4126, %v4119
    %v4876 = vpack.c.b16 %v4127, %v4120
    %v4877 = vpack.c.b16 %v4128, %v4121
    %v4878 = vpack.c.b16 %v4129, %v4122
    %v4879 = vpack.c.b16 %v4130, %v4123
    %v4880 = vpack.c.b16 %v4131, %v4124
    %v4881 = vpack.c.b16 %v4132, %v4125
    %v4882 = vpack.c.b16 %v4140, %v4133
    %v4883 = vpack.c.b16 %v4141, %v4134
    %v4884 = vpack.c.b16 %v4142, %v4135
    %v4885 = vpack.c.b16 %v4143, %v4136
    %v4886 = vpack.c.b16 %v4144, %v4137
    %v4887 = vpack.c.b16 %v4145, %v4138
    %v4888 = vpack.c.b16 %v4146, %v4139
    %v4889 = vpack.c.b16 %v4154, %v4147
    %v4890 = vpack.c.b16 %v4155, %v4148
    %v4891 = vpack.c.b16 %v4156, %v4149
    %v4892 = vpack.c.b16 %v4157, %v4150
    %v4893 = vpack.c.b16 %v4158, %v4151
    %v4894 = vpack.c.b16 %v4159, %v4152
    %v4895 = vpack.c.b16 %v4160, %v4153
    %v4896 = vpack.c.b16 %v4168, %v4161
    %v4897 = vpack.c.b16 %v4169, %v4162
    %v4898 = vpack.c.b16 %v4170, %v4163
    %v4899 = vpack.c.b16 %v4171, %v4164
    %v4900 = vpack.c.b16 %v4172, %v4165
    %v4901 = vpack.c.b16 %v4173, %v4166
    %v4902 = vpack.c.b16 %v4174, %v4167
    %v4903 = vpack.c.b16 %v4182, %v4175
    %v4904 = vpack.c.b16 %v4183, %v4176
    %v4905 = vpack.c.b16 %v4184, %v4177
    %v4906 = vpack.c.b16 %v4185, %v4178
    %v4907 = vpack.c.b16 %v4186, %v4179
    %v4908 = vpack.c.b16 %v4187, %v4180
    %v4909 = vpack.c.b16 %v4188, %v4181
    %v4910 = vpack.c.b16 %v4196, %v4189
    %v4911 = vpack.c.b16 %v4197, %v4190
    %v4912 = vpack.c.b16 %v4198, %v4191
    %v4913 = vpack.c.b16 %v4199, %v4192
    %v4914 = vpack.c.b16 %v4200, %v4193
    %v4915 = vpack.c.b16 %v4201, %v4194
    %v4916 = vpack.c.b16 %v4202, %v4195
    %v4917 = vpack.c.b16 %v4210, %v4203
    %v4918 = vpack.c.b16 %v4211, %v4204
    %v4919 = vpack.c.b16 %v4212, %v4205
    %v4920 = vpack.c.b16 %v4213, %v4206
    %v4921 = vpack.c.b16 %v4214, %v4207
    %v4922 = vpack.c.b16 %v4215, %v4208
    %v4923 = vpack.c.b16 %v4216, %v4209
    %v4924 = vpack.c.b16 %v4224, %v4217
    %v4925 = vpack.c.b16 %v4225, %v4218
    %v4926 = vpack.c.b16 %v4226, %v4219
    %v4927 = vpack.c.b16 %v4227, %v4220
    %v4928 = vpack.c.b16 %v4228, %v4221
    %v4929 = vpack.c.b16 %v4229, %v4222
    %v4930 = vpack.c.b16 %v4230, %v4223
    %v4931 = vpack.c.b16 %v4238, %v4231
    %v4932 = vpack.c.b16 %v4239, %v4232
    %v4933 = vpack.c.b16 %v4240, %v4233
    %v4934 = vpack.c.b16 %v4241, %v4234
    %v4935 = vpack.c.b16 %v4242, %v4235
    %v4936 = vpack.c.b16 %v4243, %v4236
    %v4937 = vpack.c.b16 %v4244, %v4237
    %v4938 = vpack.c.b16 %v4252, %v4245
    %v4939 = vpack.c.b16 %v4253, %v4246
    %v4940 = vpack.c.b16 %v4254, %v4247
    %v4941 = vpack.c.b16 %v4255, %v4248
    %v4942 = vpack.c.b16 %v4256, %v4249
    %v4943 = vpack.c.b16 %v4257, %v4250
    %v4944 = vpack.c.b16 %v4258, %v4251
    %v4945 = vpack.c.b16 %v4266, %v4259
    %v4946 = vpack.c.b16 %v4267, %v4260
    %v4947 = vpack.c.b16 %v4268, %v4261
    %v4948 = vpack.c.b16 %v4269, %v4262
    %v4949 = vpack.c.b16 %v4270, %v4263
    %v4950 = vpack.c.b16 %v4271, %v4264
    %v4951 = vpack.c.b16 %v4272, %v4265
    %v4952 = vpack.c.b16 %v4280, %v4273
    %v4953 = vpack.c.b16 %v4281, %v4274
    %v4954 = vpack.c.b16 %v4282, %v4275
    %v4955 = vpack.c.b16 %v4283, %v4276
    %v4956 = vpack.c.b16 %v4284, %v4277
    %v4957 = vpack.c.b16 %v4285, %v4278
    %v4958 = vpack.c.b16 %v4286, %v4279
    %v4959 = vpack.c.b16 %v4294, %v4287
    %v4960 = vpack.c.b16 %v4295, %v4288
    %v4961 = vpack.c.b16 %v4296, %v4289
    %v4962 = vpack.c.b16 %v4297, %v4290
    %v4963 = vpack.c.b16 %v4298, %v4291
    %v4964 = vpack.c.b16 %v4299, %v4292
    %v4965 = vpack.c.b16 %v4300, %v4293
    %v4966 = vpack.c.b16 %v4308, %v4301
    %v4967 = vpack.c.b16 %v4309, %v4302
    %v4968 = vpack.c.b16 %v4310, %v4303
    %v4969 = vpack.c.b16 %v4311, %v4304
    %v4970 = vpack.c.b16 %v4312, %v4305
    %v4971 = vpack.c.b16 %v4313, %v4306
    %v4972 = vpack.c.b16 %v4314, %v4307
    %v4973 = vpack.c.b16 %v4322, %v4315
    %v4974 = vpack.c.b16 %v4323, %v4316
    %v4975 = vpack.c.b16 %v4324, %v4317
    %v4976 = vpack.c.b16 %v4325, %v4318
    %v4977 = vpack.c.b16 %v4326, %v4319
    %v4978 = vpack.c.b16 %v4327, %v4320
    %v4979 = vpack.c.b16 %v4328, %v4321
    %v4980 = vpack.c.b16 %v4336, %v4329
    %v4981 = vpack.c.b16 %v4337, %v4330
    %v4982 = vpack.c.b16 %v4338, %v4331
    %v4983 = vpack.c.b16 %v4339, %v4332
    %v4984 = vpack.c.b16 %v4340, %v4333
    %v4985 = vpack.c.b16 %v4341, %v4334
    %v4986 = vpack.c.b16 %v4342, %v4335
    %v4987 = vpack.c.b16 %v4350, %v4343
    %v4988 = vpack.c.b16 %v4351, %v4344
    %v4989 = vpack.c.b16 %v4352, %v4345
    %v4990 = vpack.c.b16 %v4353, %v4346
    %v4991 = vpack.c.b16 %v4354, %v4347
    %v4992 = vpack.c.b16 %v4355, %v4348
    %v4993 = vpack.c.b16 %v4356, %v4349
    %v4994 = vpack.c.b16 %v4364, %v4357
    %v4995 = vpack.c.b16 %v4365, %v4358
    %v4996 = vpack.c.b16 %v4366, %v4359
    %v4997 = vpack.c.b16 %v4367, %v4360
    %v4998 = vpack.c.b16 %v4368, %v4361
    %v4999 = vpack.c.b16 %v4369, %v4362
    %v5000 = vpack.c.b16 %v4370, %v4363
    %v5001 = vpack.c.b16 %v4378, %v4371
    %v5002 = vpack.c.b16 %v4379, %v4372
    %v5003 = vpack.c.b16 %v4380, %v4373
    %v5004 = vpack.c.b16 %v4381, %v4374
    %v5005 = vpack.c.b16 %v4382, %v4375
    %v5006 = vpack.c.b16 %v4383, %v4376
    %v5007 = vpack.c.b16 %v4384, %v4377
    %v5008 = vpack.c.b16 %v4392, %v4385
    %v5009 = vpack.c.b16 %v4393, %v4386
    %v5010 = vpack.c.b16 %v4394, %v4387
    %v5011 = vpack.c.b16 %v4395, %v4388
    %v5012 = vpack.c.b16 %v4396, %v4389
    %v5013 = vpack.c.b16 %v4397, %v4390
    %v5014 = vpack.c.b16 %v4398, %v4391
    %v5015 = vpack.c.b16 %v4406, %v4399
    %v5016 = vpack.c.b16 %v4407, %v4400
    %v5017 = vpack.c.b16 %v4408, %v4401
    %v5018 = vpack.c.b16 %v4409, %v4402
    %v5019 = vpack.c.b16 %v4410, %v4403
    %v5020 = vpack.c.b16 %v4411, %v4404
    %v5021 = vpack.c.b16 %v4412, %v4405
    %v5022 = vpack.c.b16 %v4420, %v4413
    %v5023 = vpack.c.b16 %v4421, %v4414
    %v5024 = vpack.c.b16 %v4422, %v4415
    %v5025 = vpack.c.b16 %v4423, %v4416
    %v5026 = vpack.c.b16 %v4424, %v4417
    %v5027 = vpack.c.b16 %v4425, %v4418
    %v5028 = vpack.c.b16 %v4426, %v4419
    %v5029 = vpack.c.b16 %v4434, %v4427
    %v5030 = vpack.c.b16 %v4435, %v4428
    %v5031 = vpack.c.b16 %v4436, %v4429
    %v5032 = vpack.c.b16 %v4437, %v4430
    %v5033 = vpack.c.b16 %v4438, %v4431
    %v5034 = vpack.c.b16 %v4439, %v4432
    %v5035 = vpack.c.b16 %v4440, %v4433
    %v5036 = vpack.c.b16 %v4448, %v4441
    %v5037 = vpack.c.b16 %v4449, %v4442
    %v5038 = vpack.c.b16 %v4450, %v4443
    %v5039 = vpack.c.b16 %v4451, %v4444
    %v5040 = vpack.c.b16 %v4452, %v4445
    %v5041 = vpack.c.b16 %v4453, %v4446
    %v5042 = vpack.c.b16 %v4454, %v4447
    %v5043 = vpack.c.b16 %v4462, %v4455
    %v5044 = vpack.c.b16 %v4463, %v4456
    %v5045 = vpack.c.b16 %v4464, %v4457
    %v5046 = vpack.c.b16 %v4465, %v4458
    %v5047 = vpack.c.b16 %v4466, %v4459
    %v5048 = vpack.c.b16 %v4467, %v4460
    %v5049 = vpack.c.b16 %v4468, %v4461
    %v5050 = vpack.c.b16 %v4476, %v4469
    %v5051 = vpack.c.b16 %v4477, %v4470
    %v5052 = vpack.c.b16 %v4478, %v4471
    %v5053 = vpack.c.b16 %v4479, %v4472
    %v5054 = vpack.c.b16 %v4480, %v4473
    %v5055 = vpack.c.b16 %v4481, %v4474
    %v5056 = vpack.c.b16 %v4482, %v4475
    %v5057 = vpack.c.b16 %v4490, %v4483
    %v5058 = vpack.c.b16 %v4491, %v4484
    %v5059 = vpack.c.b16 %v4492, %v4485
    %v5060 = vpack.c.b16 %v4493, %v4486
    %v5061 = vpack.c.b16 %v4494, %v4487
    %v5062 = vpack.c.b16 %v4495, %v4488
    %v5063 = vpack.c.b16 %v4496, %v4489
    %v5064 = vpack.c.b16 %v4504, %v4497
    %v5065 = vpack.c.b16 %v4505, %v4498
    %v5066 = vpack.c.b16 %v4506, %v4499
    %v5067 = vpack.c.b16 %v4507, %v4500
    %v5068 = vpack.c.b16 %v4508, %v4501
    %v5069 = vpack.c.b16 %v4509, %v4502
    %v5070 = vpack.c.b16 %v4510, %v4503
    %v5071 = vpack.c.b16 %v4518, %v4511
    %v5072 = vpack.c.b16 %v4519, %v4512
    %v5073 = vpack.c.b16 %v4520, %v4513
    %v5074 = vpack.c.b16 %v4521, %v4514
    %v5075 = vpack.c.b16 %v4522, %v4515
    %v5076 = vpack.c.b16 %v4523, %v4516
    %v5077 = vpack.c.b16 %v4524, %v4517
    %v5078 = vpack.c.b16 %v4532, %v4525
    %v5079 = vpack.c.b16 %v4533, %v4526
    %v5080 = vpack.c.b16 %v4534, %v4527
    %v5081 = vpack.c.b16 %v4535, %v4528
    %v5082 = vpack.c.b16 %v4536, %v4529
    %v5083 = vpack.c.b16 %v4537, %v4530
    %v5084 = vpack.c.b16 %v4538, %v4531
    %v5085 = vpack.c.b16 %v4546, %v4539
    %v5086 = vpack.c.b16 %v4547, %v4540
    %v5087 = vpack.c.b16 %v4548, %v4541
    %v5088 = vpack.c.b16 %v4549, %v4542
    %v5089 = vpack.c.b16 %v4550, %v4543
    %v5090 = vpack.c.b16 %v4551, %v4544
    %v5091 = vpack.c.b16 %v4552, %v4545
    %v5092 = vpack.c.b16 %v4560, %v4553
    %v5093 = vpack.c.b16 %v4561, %v4554
    %v5094 = vpack.c.b16 %v4562, %v4555
    %v5095 = vpack.c.b16 %v4563, %v4556
    %v5096 = vpack.c.b16 %v4564, %v4557
    %v5097 = vpack.c.b16 %v4565, %v4558
    %v5098 = vpack.c.b16 %v4566, %v4559
    %v5099 = vpack.c.b16 %v4574, %v4567
    %v5100 = vpack.c.b16 %v4575, %v4568
    %v5101 = vpack.c.b16 %v4576, %v4569
    %v5102 = vpack.c.b16 %v4577, %v4570
    %v5103 = vpack.c.b16 %v4578, %v4571
    %v5104 = vpack.c.b16 %v4579, %v4572
    %v5105 = vpack.c.b16 %v4580, %v4573
    %v5106 = vpack.c.b16 %v4588, %v4581
    %v5107 = vpack.c.b16 %v4589, %v4582
    %v5108 = vpack.c.b16 %v4590, %v4583
    %v5109 = vpack.c.b16 %v4591, %v4584
    %v5110 = vpack.c.b16 %v4592, %v4585
    %v5111 = vpack.c.b16 %v4593, %v4586
    %v5112 = vpack.c.b16 %v4594, %v4587
    %v5113 = vpack.c.b16 %v4602, %v4595
    %v5114 = vpack.c.b16 %v4603, %v4596
    %v5115 = vpack.c.b16 %v4604, %v4597
    %v5116 = vpack.c.b16 %v4605, %v4598
    %v5117 = vpack.c.b16 %v4606, %v4599
    %v5118 = vpack.c.b16 %v4607, %v4600
    %v5119 = vpack.c.b16 %v4608, %v4601
    %v5120 = vpack.c.b16 %v4616, %v4609
    %v5121 = vpack.c.b16 %v4617, %v4610
    %v5122 = vpack.c.b16 %v4618, %v4611
    %v5123 = vpack.c.b16 %v4619, %v4612
    %v5124 = vpack.c.b16 %v4620, %v4613
    %v5125 = vpack.c.b16 %v4621, %v4614
    %v5126 = vpack.c.b16 %v4622, %v4615
    %v5127 = vpack.c.b16 %v4630, %v4623
    %v5128 = vpack.c.b16 %v4631, %v4624
    %v5129 = vpack.c.b16 %v4632, %v4625
    %v5130 = vpack.c.b16 %v4633, %v4626
    %v5131 = vpack.c.b16 %v4634, %v4627
    %v5132 = vpack.c.b16 %v4635, %v4628
    %v5133 = vpack.c.b16 %v4636, %v4629
    %v5134 = vpack.c.b16 %v4644, %v4637
    %v5135 = vpack.c.b16 %v4645, %v4638
    %v5136 = vpack.c.b16 %v4646, %v4639
    %v5137 = vpack.c.b16 %v4647, %v4640
    %v5138 = vpack.c.b16 %v4648, %v4641
    %v5139 = vpack.c.b16 %v4649, %v4642
    %v5140 = vpack.c.b16 %v4650, %v4643
    %v5141 = vpack.c.b16 %v4658, %v4651
    %v5142 = vpack.c.b16 %v4659, %v4652
    %v5143 = vpack.c.b16 %v4660, %v4653
    %v5144 = vpack.c.b16 %v4661, %v4654
    %v5145 = vpack.c.b16 %v4662, %v4655
    %v5146 = vpack.c.b16 %v4663, %v4656
    %v5147 = vpack.c.b16 %v4664, %v4657
    %v5148 = vpack.c.b16 %v4672, %v4665
    %v5149 = vpack.c.b16 %v4673, %v4666
    %v5150 = vpack.c.b16 %v4674, %v4667
    %v5151 = vpack.c.b16 %v4675, %v4668
    %v5152 = vpack.c.b16 %v4676, %v4669
    %v5153 = vpack.c.b16 %v4677, %v4670
    %v5154 = vpack.c.b16 %v4678, %v4671
    %v5155 = vpack.c.b16 %v4686, %v4679
    %v5156 = vpack.c.b16 %v4687, %v4680
    %v5157 = vpack.c.b16 %v4688, %v4681
    %v5158 = vpack.c.b16 %v4689, %v4682
    %v5159 = vpack.c.b16 %v4690, %v4683
    %v5160 = vpack.c.b16 %v4691, %v4684
    %v5161 = vpack.c.b16 %v4692, %v4685
    %v5162 = vpack.c.b16 %v4700, %v4693
    %v5163 = vpack.c.b16 %v4701, %v4694
    %v5164 = vpack.c.b16 %v4702, %v4695
    %v5165 = vpack.c.b16 %v4703, %v4696
    %v5166 = vpack.c.b16 %v4704, %v4697
    %v5167 = vpack.c.b16 %v4705, %v4698
    %v5168 = vpack.c.b16 %v4706, %v4699
    %v5169 = vpack.c.b16 %v4714, %v4707
    %v5170 = vpack.c.b16 %v4715, %v4708
    %v5171 = vpack.c.b16 %v4716, %v4709
    %v5172 = vpack.c.b16 %v4717, %v4710
    %v5173 = vpack.c.b16 %v4718, %v4711
    %v5174 = vpack.c.b16 %v4719, %v4712
    %v5175 = vpack.c.b16 %v4720, %v4713
    %v5176 = vpack.c.b16 %v4728, %v4721
    %v5177 = vpack.c.b16 %v4729, %v4722
    %v5178 = vpack.c.b16 %v4730, %v4723
    %v5179 = vpack.c.b16 %v4731, %v4724
    %v5180 = vpack.c.b16 %v4732, %v4725
    %v5181 = vpack.c.b16 %v4733, %v4726
    %v5182 = vpack.c.b16 %v4734, %v4727
    %5631 = vmatprep.subr.bf16.mxu0 %v4736
    %5632 = vmatpush1.bf16.msra.mxu0 %v4735
    %5633 = vmatprep.subr.bf16.mxu0 %v4743
    %5634 = vmatpush1.bf16.msra.mxu0 %v4742
    %5635 = vmatprep.subr.bf16.mxu0 %v4750
    %5636 = vmatpush1.bf16.msra.mxu0 %v4749
    %5637 = vmatprep.subr.bf16.mxu0 %v4757
    %5638 = vmatpush1.bf16.msra.mxu0 %v4756
    %5639 = vmatprep.subr.bf16.mxu0 %v4764
    %5640 = vmatpush1.bf16.msra.mxu0 %v4763
    %5641 = vmatprep.subr.bf16.mxu0 %v4771
    %5642 = vmatpush1.bf16.msra.mxu0 %v4770
    %5643 = vmatprep.subr.bf16.mxu0 %v4778
    %5644 = vmatpush1.bf16.msra.mxu0 %v4777
    %5645 = vmatprep.subr.bf16.mxu0 %v4785
    %5646 = vmatpush1.bf16.msra.mxu0 %v4784
    %5647 = vmatprep.subr.bf16.mxu0 %v4792
    %5648 = vmatpush1.bf16.msra.mxu0 %v4791
    %5649 = vmatprep.subr.bf16.mxu0 %v4799
    %5650 = vmatpush1.bf16.msra.mxu0 %v4798
    %5651 = vmatprep.subr.bf16.mxu0 %v4806
    %5652 = vmatpush1.bf16.msra.mxu0 %v4805
    %5653 = vmatprep.subr.bf16.mxu0 %v4813
    %5654 = vmatpush1.bf16.msra.mxu0 %v4812
    %5655 = vmatprep.subr.bf16.mxu0 %v4820
    %5656 = vmatpush1.bf16.msra.mxu0 %v4819
    %5657 = vmatprep.subr.bf16.mxu0 %v4827
    %5658 = vmatpush1.bf16.msra.mxu0 %v4826
    %5659 = vmatprep.subr.bf16.mxu0 %v4834
    %5660 = vmatpush1.bf16.msra.mxu0 %v4833
    %5661 = vmatprep.subr.bf16.mxu0 %v4841
    %5662 = vmatpush1.bf16.msra.mxu0 %v4840
    %5663 = vmatprep.mubr.bf16.mxu0 %v2771
    %5664 = vmatmul.mubr.bf16.gmra.mrb[0].mxu0 %v2770
    %v5665 = vpop.f32.mrb[0].mxu0
    %v5666 = vadd.f32 %v3295, %v5665
    %v5667 = vpop.f32.mrb[0].mxu0
    %v5668 = vadd.f32 %v3299, %v5667
    %v5669 = vpop.f32.mrb[0].mxu0
    %v5670 = vadd.f32 %v3295, %v5669
    %v5671 = vpop.f32.mrb[0].mxu0
    %v5672 = vadd.f32 %v3299, %v5671
    %5673 = vdwg.mxu0
    %5674 = vmatprep.subr.bf16.mxu0 %v4848
    %5675 = vmatpush1.bf16.msra.mxu0 %v4847
    %5676 = vmatprep.subr.bf16.mxu0 %v4855
    %5677 = vmatpush1.bf16.msra.mxu0 %v4854
    %5678 = vmatprep.subr.bf16.mxu0 %v4862
    %5679 = vmatpush1.bf16.msra.mxu0 %v4861
    %5680 = vmatprep.subr.bf16.mxu0 %v4869
    %5681 = vmatpush1.bf16.msra.mxu0 %v4868
    %5682 = vmatprep.subr.bf16.mxu0 %v4876
    %5683 = vmatpush1.bf16.msra.mxu0 %v4875
    %5684 = vmatprep.subr.bf16.mxu0 %v4883
    %5685 = vmatpush1.bf16.msra.mxu0 %v4882
    %5686 = vmatprep.subr.bf16.mxu0 %v4890
    %5687 = vmatpush1.bf16.msra.mxu0 %v4889
    %5688 = vmatprep.subr.bf16.mxu0 %v4897
    %5689 = vmatpush1.bf16.msra.mxu0 %v4896
    %5690 = vmatprep.subr.bf16.mxu0 %v4904
    %5691 = vmatpush1.bf16.msra.mxu0 %v4903
    %5692 = vmatprep.subr.bf16.mxu0 %v4911
    %5693 = vmatpush1.bf16.msra.mxu0 %v4910
    %5694 = vmatprep.subr.bf16.mxu0 %v4918
    %5695 = vmatpush1.bf16.msra.mxu0 %v4917
    %5696 = vmatprep.subr.bf16.mxu0 %v4925
    %5697 = vmatpush1.bf16.msra.mxu0 %v4924
    %5698 = vmatprep.subr.bf16.mxu0 %v4932
    %5699 = vmatpush1.bf16.msra.mxu0 %v4931
    %5700 = vmatprep.subr.bf16.mxu0 %v4939
    %5701 = vmatpush1.bf16.msra.mxu0 %v4938
    %5702 = vmatprep.subr.bf16.mxu0 %v4946
    %5703 = vmatpush1.bf16.msra.mxu0 %v4945
    %5704 = vmatprep.subr.bf16.mxu0 %v4953
    %5705 = vmatpush1.bf16.msra.mxu0 %v4952
    %5706 = vmatprep.mubr.bf16.mxu0 %v2773
    %5707 = vmatmul.mubr.bf16.gmra.mrb[0].mxu0 %v2772
    %v5708 = vpop.f32.mrb[0].mxu0
    %v5709 = vadd.f32 %v5666, %v5708
    %v5710 = vpop.f32.mrb[0].mxu0
    %v5711 = vadd.f32 %v5668, %v5710
    %v5712 = vpop.f32.mrb[0].mxu0
    %v5713 = vadd.f32 %v5670, %v5712
    %v5714 = vpop.f32.mrb[0].mxu0
    %v5715 = vadd.f32 %v5672, %v5714
    %5716 = vdwg.mxu0
    %5717 = vmatprep.subr.bf16.mxu0 %v4960
    %5718 = vmatpush1.bf16.msra.mxu0 %v4959
    %5719 = vmatprep.subr.bf16.mxu0 %v4967
    %5720 = vmatpush1.bf16.msra.mxu0 %v4966
    %5721 = vmatprep.subr.bf16.mxu0 %v4974
    %5722 = vmatpush1.bf16.msra.mxu0 %v4973
    %5723 = vmatprep.subr.bf16.mxu0 %v4981
    %5724 = vmatpush1.bf16.msra.mxu0 %v4980
    %5725 = vmatprep.subr.bf16.mxu0 %v4988
    %5726 = vmatpush1.bf16.msra.mxu0 %v4987
    %5727 = vmatprep.subr.bf16.mxu0 %v4995
    %5728 = vmatpush1.bf16.msra.mxu0 %v4994
    %5729 = vmatprep.subr.bf16.mxu0 %v5002
    %5730 = vmatpush1.bf16.msra.mxu0 %v5001
    %5731 = vmatprep.subr.bf16.mxu0 %v5009
    %5732 = vmatpush1.bf16.msra.mxu0 %v5008
    %5733 = vmatprep.subr.bf16.mxu0 %v5016
    %5734 = vmatpush1.bf16.msra.mxu0 %v5015
    %5735 = vmatprep.subr.bf16.mxu0 %v5023
    %5736 = vmatpush1.bf16.msra.mxu0 %v5022
    %5737 = vmatprep.subr.bf16.mxu0 %v5030
    %5738 = vmatpush1.bf16.msra.mxu0 %v5029
    %5739 = vmatprep.subr.bf16.mxu0 %v5037
    %5740 = vmatpush1.bf16.msra.mxu0 %v5036
    %5741 = vmatprep.subr.bf16.mxu0 %v5044
    %5742 = vmatpush1.bf16.msra.mxu0 %v5043
    %5743 = vmatprep.subr.bf16.mxu0 %v5051
    %5744 = vmatpush1.bf16.msra.mxu0 %v5050
    %5745 = vmatprep.subr.bf16.mxu0 %v5058
    %5746 = vmatpush1.bf16.msra.mxu0 %v5057
    %5747 = vmatprep.subr.bf16.mxu0 %v5065
    %5748 = vmatpush1.bf16.msra.mxu0 %v5064
    %5749 = vmatprep.mubr.bf16.mxu0 %v2775
    %5750 = vmatmul.mubr.bf16.gmra.mrb[0].mxu0 %v2774
    %v5751 = vpop.f32.mrb[0].mxu0
    %v5752 = vadd.f32 %v5709, %v5751
    %v5753 = vpop.f32.mrb[0].mxu0
    %v5754 = vadd.f32 %v5711, %v5753
    %v5755 = vpop.f32.mrb[0].mxu0
    %v5756 = vadd.f32 %v5713, %v5755
    %v5757 = vpop.f32.mrb[0].mxu0
    %v5758 = vadd.f32 %v5715, %v5757
    %5759 = vdwg.mxu0
    %5760 = vmatprep.subr.bf16.mxu0 %v5072
    %5761 = vmatpush1.bf16.msra.mxu0 %v5071
    %5762 = vmatprep.subr.bf16.mxu0 %v5079
    %5763 = vmatpush1.bf16.msra.mxu0 %v5078
    %5764 = vmatprep.subr.bf16.mxu0 %v5086
    %5765 = vmatpush1.bf16.msra.mxu0 %v5085
    %5766 = vmatprep.subr.bf16.mxu0 %v5093
    %5767 = vmatpush1.bf16.msra.mxu0 %v5092
    %5768 = vmatprep.subr.bf16.mxu0 %v5100
    %5769 = vmatpush1.bf16.msra.mxu0 %v5099
    %5770 = vmatprep.subr.bf16.mxu0 %v5107
    %5771 = vmatpush1.bf16.msra.mxu0 %v5106
    %5772 = vmatprep.subr.bf16.mxu0 %v5114
    %5773 = vmatpush1.bf16.msra.mxu0 %v5113
    %5774 = vmatprep.subr.bf16.mxu0 %v5121
    %5775 = vmatpush1.bf16.msra.mxu0 %v5120
    %5776 = vmatprep.subr.bf16.mxu0 %v5128
    %5777 = vmatpush1.bf16.msra.mxu0 %v5127
    %5778 = vmatprep.subr.bf16.mxu0 %v5135
    %5779 = vmatpush1.bf16.msra.mxu0 %v5134
    %5780 = vmatprep.subr.bf16.mxu0 %v5142
    %5781 = vmatpush1.bf16.msra.mxu0 %v5141
    %5782 = vmatprep.subr.bf16.mxu0 %v5149
    %5783 = vmatpush1.bf16.msra.mxu0 %v5148
    %5784 = vmatprep.subr.bf16.mxu0 %v5156
    %5785 = vmatpush1.bf16.msra.mxu0 %v5155
    %5786 = vmatprep.subr.bf16.mxu0 %v5163
    %5787 = vmatpush1.bf16.msra.mxu0 %v5162
    %5788 = vmatprep.subr.bf16.mxu0 %v5170
    %5789 = vmatpush1.bf16.msra.mxu0 %v5169
    %5790 = vmatprep.subr.bf16.mxu0 %v5177
    %5791 = vmatpush1.bf16.msra.mxu0 %v5176
    %5792 = vmatprep.mubr.bf16.mxu0 %v2777
    %5793 = vmatmul.mubr.bf16.gmra.mrb[0].mxu0 %v2776
    %v5794 = vpop.f32.mrb[0].mxu0
    %v5795 = vadd.f32 %v5752, %v5794
    %v5796 = vpop.f32.mrb[0].mxu0
    %v5797 = vadd.f32 %v5754, %v5796
    %v5798 = vpop.f32.mrb[0].mxu0
    %v5799 = vadd.f32 %v5756, %v5798
    %v5800 = vpop.f32.mrb[0].mxu0
    %v5801 = vadd.f32 %v5758, %v5800
    %5802 = vdwg.mxu0
    %5803 = vmatprep.subr.bf16.mxu0 %v4738
    %5804 = vmatpush1.bf16.msra.mxu0 %v4737
    %5805 = vmatprep.subr.bf16.mxu0 %v4745
    %5806 = vmatpush1.bf16.msra.mxu0 %v4744
    %5807 = vmatprep.subr.bf16.mxu0 %v4752
    %5808 = vmatpush1.bf16.msra.mxu0 %v4751
    %5809 = vmatprep.subr.bf16.mxu0 %v4759
    %5810 = vmatpush1.bf16.msra.mxu0 %v4758
    %5811 = vmatprep.subr.bf16.mxu0 %v4766
    %5812 = vmatpush1.bf16.msra.mxu0 %v4765
    %5813 = vmatprep.subr.bf16.mxu0 %v4773
    %5814 = vmatpush1.bf16.msra.mxu0 %v4772
    %5815 = vmatprep.subr.bf16.mxu0 %v4780
    %5816 = vmatpush1.bf16.msra.mxu0 %v4779
    %5817 = vmatprep.subr.bf16.mxu0 %v4787
    %5818 = vmatpush1.bf16.msra.mxu0 %v4786
    %5819 = vmatprep.subr.bf16.mxu0 %v4794
    %5820 = vmatpush1.bf16.msra.mxu0 %v4793
    %5821 = vmatprep.subr.bf16.mxu0 %v4801
    %5822 = vmatpush1.bf16.msra.mxu0 %v4800
    %5823 = vmatprep.subr.bf16.mxu0 %v4808
    %5824 = vmatpush1.bf16.msra.mxu0 %v4807
    %5825 = vmatprep.subr.bf16.mxu0 %v4815
    %5826 = vmatpush1.bf16.msra.mxu0 %v4814
    %5827 = vmatprep.subr.bf16.mxu0 %v4822
    %5828 = vmatpush1.bf16.msra.mxu0 %v4821
    %5829 = vmatprep.subr.bf16.mxu0 %v4829
    %5830 = vmatpush1.bf16.msra.mxu0 %v4828
    %5831 = vmatprep.subr.bf16.mxu0 %v4836
    %5832 = vmatpush1.bf16.msra.mxu0 %v4835
    %5833 = vmatprep.subr.bf16.mxu0 %v4843
    %5834 = vmatpush1.bf16.msra.mxu0 %v4842
    %5835 = vmatprep.mubr.bf16.mxu0 %v2771
    %5836 = vmatmul.mubr.bf16.gmra.mrb[0].mxu0 %v2770
    %v5837 = vpop.f32.mrb[0].mxu0
    %v5838 = vadd.f32 %v3303, %v5837
    %v5839 = vpop.f32.mrb[0].mxu0
    %v5840 = vadd.f32 %v3307, %v5839
    %v5841 = vpop.f32.mrb[0].mxu0
    %v5842 = vadd.f32 %v3303, %v5841
    %v5843 = vpop.f32.mrb[0].mxu0
    %v5844 = vadd.f32 %v3307, %v5843
    %5845 = vdwg.mxu0
    %5846 = vmatprep.subr.bf16.mxu0 %v4850
    %5847 = vmatpush1.bf16.msra.mxu0 %v4849
    %5848 = vmatprep.subr.bf16.mxu0 %v4857
    %5849 = vmatpush1.bf16.msra.mxu0 %v4856
    %5850 = vmatprep.subr.bf16.mxu0 %v4864
    %5851 = vmatpush1.bf16.msra.mxu0 %v4863
    %5852 = vmatprep.subr.bf16.mxu0 %v4871
    %5853 = vmatpush1.bf16.msra.mxu0 %v4870
    %5854 = vmatprep.subr.bf16.mxu0 %v4878
    %5855 = vmatpush1.bf16.msra.mxu0 %v4877
    %5856 = vmatprep.subr.bf16.mxu0 %v4885
    %5857 = vmatpush1.bf16.msra.mxu0 %v4884
    %5858 = vmatprep.subr.bf16.mxu0 %v4892
    %5859 = vmatpush1.bf16.msra.mxu0 %v4891
    %5860 = vmatprep.subr.bf16.mxu0 %v4899
    %5861 = vmatpush1.bf16.msra.mxu0 %v4898
    %5862 = vmatprep.subr.bf16.mxu0 %v4906
    %5863 = vmatpush1.bf16.msra.mxu0 %v4905
    %5864 = vmatprep.subr.bf16.mxu0 %v4913
    %5865 = vmatpush1.bf16.msra.mxu0 %v4912
    %5866 = vmatprep.subr.bf16.mxu0 %v4920
    %5867 = vmatpush1.bf16.msra.mxu0 %v4919
    %5868 = vmatprep.subr.bf16.mxu0 %v4927
    %5869 = vmatpush1.bf16.msra.mxu0 %v4926
    %5870 = vmatprep.subr.bf16.mxu0 %v4934
    %5871 = vmatpush1.bf16.msra.mxu0 %v4933
    %5872 = vmatprep.subr.bf16.mxu0 %v4941
    %5873 = vmatpush1.bf16.msra.mxu0 %v4940
    %5874 = vmatprep.subr.bf16.mxu0 %v4948
    %5875 = vmatpush1.bf16.msra.mxu0 %v4947
    %5876 = vmatprep.subr.bf16.mxu0 %v4955
    %5877 = vmatpush1.bf16.msra.mxu0 %v4954
    %5878 = vmatprep.mubr.bf16.mxu0 %v2773
    %5879 = vmatmul.mubr.bf16.gmra.mrb[0].mxu0 %v2772
    %v5880 = vpop.f32.mrb[0].mxu0
    %v5881 = vadd.f32 %v5838, %v5880
    %v5882 = vpop.f32.mrb[0].mxu0
    %v5883 = vadd.f32 %v5840, %v5882
    %v5884 = vpop.f32.mrb[0].mxu0
    %v5885 = vadd.f32 %v5842, %v5884
    %v5886 = vpop.f32.mrb[0].mxu0
    %v5887 = vadd.f32 %v5844, %v5886
    %5888 = vdwg.mxu0
    %5889 = vmatprep.subr.bf16.mxu0 %v4962
    %5890 = vmatpush1.bf16.msra.mxu0 %v4961
    %5891 = vmatprep.subr.bf16.mxu0 %v4969
    %5892 = vmatpush1.bf16.msra.mxu0 %v4968
    %5893 = vmatprep.subr.bf16.mxu0 %v4976
    %5894 = vmatpush1.bf16.msra.mxu0 %v4975
    %5895 = vmatprep.subr.bf16.mxu0 %v4983
    %5896 = vmatpush1.bf16.msra.mxu0 %v4982
    %5897 = vmatprep.subr.bf16.mxu0 %v4990
    %5898 = vmatpush1.bf16.msra.mxu0 %v4989
    %5899 = vmatprep.subr.bf16.mxu0 %v4997
    %5900 = vmatpush1.bf16.msra.mxu0 %v4996
    %5901 = vmatprep.subr.bf16.mxu0 %v5004
    %5902 = vmatpush1.bf16.msra.mxu0 %v5003
    %5903 = vmatprep.subr.bf16.mxu0 %v5011
    %5904 = vmatpush1.bf16.msra.mxu0 %v5010
    %5905 = vmatprep.subr.bf16.mxu0 %v5018
    %5906 = vmatpush1.bf16.msra.mxu0 %v5017
    %5907 = vmatprep.subr.bf16.mxu0 %v5025
    %5908 = vmatpush1.bf16.msra.mxu0 %v5024
    %5909 = vmatprep.subr.bf16.mxu0 %v5032
    %5910 = vmatpush1.bf16.msra.mxu0 %v5031
    %5911 = vmatprep.subr.bf16.mxu0 %v5039
    %5912 = vmatpush1.bf16.msra.mxu0 %v5038
    %5913 = vmatprep.subr.bf16.mxu0 %v5046
    %5914 = vmatpush1.bf16.msra.mxu0 %v5045
    %5915 = vmatprep.subr.bf16.mxu0 %v5053
    %5916 = vmatpush1.bf16.msra.mxu0 %v5052
    %5917 = vmatprep.subr.bf16.mxu0 %v5060
    %5918 = vmatpush1.bf16.msra.mxu0 %v5059
    %5919 = vmatprep.subr.bf16.mxu0 %v5067
    %5920 = vmatpush1.bf16.msra.mxu0 %v5066
    %5921 = vmatprep.mubr.bf16.mxu0 %v2775
    %5922 = vmatmul.mubr.bf16.gmra.mrb[0].mxu0 %v2774
    %v5923 = vpop.f32.mrb[0].mxu0
    %v5924 = vadd.f32 %v5881, %v5923
    %v5925 = vpop.f32.mrb[0].mxu0
    %v5926 = vadd.f32 %v5883, %v5925
    %v5927 = vpop.f32.mrb[0].mxu0
    %v5928 = vadd.f32 %v5885, %v5927
    %v5929 = vpop.f32.mrb[0].mxu0
    %v5930 = vadd.f32 %v5887, %v5929
    %5931 = vdwg.mxu0
    %5932 = vmatprep.subr.bf16.mxu0 %v5074
    %5933 = vmatpush1.bf16.msra.mxu0 %v5073
    %5934 = vmatprep.subr.bf16.mxu0 %v5081
    %5935 = vmatpush1.bf16.msra.mxu0 %v5080
    %5936 = vmatprep.subr.bf16.mxu0 %v5088
    %5937 = vmatpush1.bf16.msra.mxu0 %v5087
    %5938 = vmatprep.subr.bf16.mxu0 %v5095
    %5939 = vmatpush1.bf16.msra.mxu0 %v5094
    %5940 = vmatprep.subr.bf16.mxu0 %v5102
    %5941 = vmatpush1.bf16.msra.mxu0 %v5101
    %5942 = vmatprep.subr.bf16.mxu0 %v5109
    %5943 = vmatpush1.bf16.msra.mxu0 %v5108
    %5944 = vmatprep.subr.bf16.mxu0 %v5116
    %5945 = vmatpush1.bf16.msra.mxu0 %v5115
    %5946 = vmatprep.subr.bf16.mxu0 %v5123
    %5947 = vmatpush1.bf16.msra.mxu0 %v5122
    %5948 = vmatprep.subr.bf16.mxu0 %v5130
    %5949 = vmatpush1.bf16.msra.mxu0 %v5129
    %5950 = vmatprep.subr.bf16.mxu0 %v5137
    %5951 = vmatpush1.bf16.msra.mxu0 %v5136
    %5952 = vmatprep.subr.bf16.mxu0 %v5144
    %5953 = vmatpush1.bf16.msra.mxu0 %v5143
    %5954 = vmatprep.subr.bf16.mxu0 %v5151
    %5955 = vmatpush1.bf16.msra.mxu0 %v5150
    %5956 = vmatprep.subr.bf16.mxu0 %v5158
    %5957 = vmatpush1.bf16.msra.mxu0 %v5157
    %5958 = vmatprep.subr.bf16.mxu0 %v5165
    %5959 = vmatpush1.bf16.msra.mxu0 %v5164
    %5960 = vmatprep.subr.bf16.mxu0 %v5172
    %5961 = vmatpush1.bf16.msra.mxu0 %v5171
    %5962 = vmatprep.subr.bf16.mxu0 %v5179
    %5963 = vmatpush1.bf16.msra.mxu0 %v5178
    %5964 = vmatprep.mubr.bf16.mxu0 %v2777
    %5965 = vmatmul.mubr.bf16.gmra.mrb[0].mxu0 %v2776
    %v5966 = vpop.f32.mrb[0].mxu0
    %v5967 = vadd.f32 %v5924, %v5966
    %v5968 = vpop.f32.mrb[0].mxu0
    %v5969 = vadd.f32 %v5926, %v5968
    %v5970 = vpop.f32.mrb[0].mxu0
    %v5971 = vadd.f32 %v5928, %v5970
    %v5972 = vpop.f32.mrb[0].mxu0
    %v5973 = vadd.f32 %v5930, %v5972
    %5974 = vdwg.mxu0
    %5975 = vmatprep.subr.bf16.mxu0 %v4740
    %5976 = vmatpush1.bf16.msra.mxu0 %v4739
    %5977 = vmatprep.subr.bf16.mxu0 %v4747
    %5978 = vmatpush1.bf16.msra.mxu0 %v4746
    %5979 = vmatprep.subr.bf16.mxu0 %v4754
    %5980 = vmatpush1.bf16.msra.mxu0 %v4753
    %5981 = vmatprep.subr.bf16.mxu0 %v4761
    %5982 = vmatpush1.bf16.msra.mxu0 %v4760
    %5983 = vmatprep.subr.bf16.mxu0 %v4768
    %5984 = vmatpush1.bf16.msra.mxu0 %v4767
    %5985 = vmatprep.subr.bf16.mxu0 %v4775
    %5986 = vmatpush1.bf16.msra.mxu0 %v4774
    %5987 = vmatprep.subr.bf16.mxu0 %v4782
    %5988 = vmatpush1.bf16.msra.mxu0 %v4781
    %5989 = vmatprep.subr.bf16.mxu0 %v4789
    %5990 = vmatpush1.bf16.msra.mxu0 %v4788
    %5991 = vmatprep.subr.bf16.mxu0 %v4796
    %5992 = vmatpush1.bf16.msra.mxu0 %v4795
    %5993 = vmatprep.subr.bf16.mxu0 %v4803
    %5994 = vmatpush1.bf16.msra.mxu0 %v4802
    %5995 = vmatprep.subr.bf16.mxu0 %v4810
    %5996 = vmatpush1.bf16.msra.mxu0 %v4809
    %5997 = vmatprep.subr.bf16.mxu0 %v4817
    %5998 = vmatpush1.bf16.msra.mxu0 %v4816
    %5999 = vmatprep.subr.bf16.mxu0 %v4824
    %6000 = vmatpush1.bf16.msra.mxu0 %v4823
    %6001 = vmatprep.subr.bf16.mxu0 %v4831
    %6002 = vmatpush1.bf16.msra.mxu0 %v4830
    %6003 = vmatprep.subr.bf16.mxu0 %v4838
    %6004 = vmatpush1.bf16.msra.mxu0 %v4837
    %6005 = vmatprep.subr.bf16.mxu0 %v4845
    %6006 = vmatpush1.bf16.msra.mxu0 %v4844
    %6007 = vmatprep.mubr.bf16.mxu0 %v2771
    %6008 = vmatmul.mubr.bf16.gmra.mrb[0].mxu0 %v2770
    %v6009 = vpop.f32.mrb[0].mxu0
    %v6010 = vadd.f32 %v3311, %v6009
    %v6011 = vpop.f32.mrb[0].mxu0
    %v6012 = vadd.f32 %v3315, %v6011
    %v6013 = vpop.f32.mrb[0].mxu0
    %v6014 = vadd.f32 %v3311, %v6013
    %v6015 = vpop.f32.mrb[0].mxu0
    %v6016 = vadd.f32 %v3315, %v6015
    %6017 = vdwg.mxu0
    %6018 = vmatprep.subr.bf16.mxu0 %v4852
    %6019 = vmatpush1.bf16.msra.mxu0 %v4851
    %6020 = vmatprep.subr.bf16.mxu0 %v4859
    %6021 = vmatpush1.bf16.msra.mxu0 %v4858
    %6022 = vmatprep.subr.bf16.mxu0 %v4866
    %6023 = vmatpush1.bf16.msra.mxu0 %v4865
    %6024 = vmatprep.subr.bf16.mxu0 %v4873
    %6025 = vmatpush1.bf16.msra.mxu0 %v4872
    %6026 = vmatprep.subr.bf16.mxu0 %v4880
    %6027 = vmatpush1.bf16.msra.mxu0 %v4879
    %6028 = vmatprep.subr.bf16.mxu0 %v4887
    %6029 = vmatpush1.bf16.msra.mxu0 %v4886
    %6030 = vmatprep.subr.bf16.mxu0 %v4894
    %6031 = vmatpush1.bf16.msra.mxu0 %v4893
    %6032 = vmatprep.subr.bf16.mxu0 %v4901
    %6033 = vmatpush1.bf16.msra.mxu0 %v4900
    %6034 = vmatprep.subr.bf16.mxu0 %v4908
    %6035 = vmatpush1.bf16.msra.mxu0 %v4907
    %6036 = vmatprep.subr.bf16.mxu0 %v4915
    %6037 = vmatpush1.bf16.msra.mxu0 %v4914
    %6038 = vmatprep.subr.bf16.mxu0 %v4922
    %6039 = vmatpush1.bf16.msra.mxu0 %v4921
    %6040 = vmatprep.subr.bf16.mxu0 %v4929
    %6041 = vmatpush1.bf16.msra.mxu0 %v4928
    %6042 = vmatprep.subr.bf16.mxu0 %v4936
    %6043 = vmatpush1.bf16.msra.mxu0 %v4935
    %6044 = vmatprep.subr.bf16.mxu0 %v4943
    %6045 = vmatpush1.bf16.msra.mxu0 %v4942
    %6046 = vmatprep.subr.bf16.mxu0 %v4950
    %6047 = vmatpush1.bf16.msra.mxu0 %v4949
    %6048 = vmatprep.subr.bf16.mxu0 %v4957
    %6049 = vmatpush1.bf16.msra.mxu0 %v4956
    %6050 = vmatprep.mubr.bf16.mxu0 %v2773
    %6051 = vmatmul.mubr.bf16.gmra.mrb[0].mxu0 %v2772
    %v6052 = vpop.f32.mrb[0].mxu0
    %v6053 = vadd.f32 %v6010, %v6052
    %v6054 = vpop.f32.mrb[0].mxu0
    %v6055 = vadd.f32 %v6012, %v6054
    %v6056 = vpop.f32.mrb[0].mxu0
    %v6057 = vadd.f32 %v6014, %v6056
    %v6058 = vpop.f32.mrb[0].mxu0
    %v6059 = vadd.f32 %v6016, %v6058
    %6060 = vdwg.mxu0
    %6061 = vmatprep.subr.bf16.mxu0 %v4964
    %6062 = vmatpush1.bf16.msra.mxu0 %v4963
    %6063 = vmatprep.subr.bf16.mxu0 %v4971
    %6064 = vmatpush1.bf16.msra.mxu0 %v4970
    %6065 = vmatprep.subr.bf16.mxu0 %v4978
    %6066 = vmatpush1.bf16.msra.mxu0 %v4977
    %6067 = vmatprep.subr.bf16.mxu0 %v4985
    %6068 = vmatpush1.bf16.msra.mxu0 %v4984
    %6069 = vmatprep.subr.bf16.mxu0 %v4992
    %6070 = vmatpush1.bf16.msra.mxu0 %v4991
    %6071 = vmatprep.subr.bf16.mxu0 %v4999
    %6072 = vmatpush1.bf16.msra.mxu0 %v4998
    %6073 = vmatprep.subr.bf16.mxu0 %v5006
    %6074 = vmatpush1.bf16.msra.mxu0 %v5005
    %6075 = vmatprep.subr.bf16.mxu0 %v5013
    %6076 = vmatpush1.bf16.msra.mxu0 %v5012
    %6077 = vmatprep.subr.bf16.mxu0 %v5020
    %6078 = vmatpush1.bf16.msra.mxu0 %v5019
    %6079 = vmatprep.subr.bf16.mxu0 %v5027
    %6080 = vmatpush1.bf16.msra.mxu0 %v5026
    %6081 = vmatprep.subr.bf16.mxu0 %v5034
    %6082 = vmatpush1.bf16.msra.mxu0 %v5033
    %6083 = vmatprep.subr.bf16.mxu0 %v5041
    %6084 = vmatpush1.bf16.msra.mxu0 %v5040
    %6085 = vmatprep.subr.bf16.mxu0 %v5048
    %6086 = vmatpush1.bf16.msra.mxu0 %v5047
    %6087 = vmatprep.subr.bf16.mxu0 %v5055
    %6088 = vmatpush1.bf16.msra.mxu0 %v5054
    %6089 = vmatprep.subr.bf16.mxu0 %v5062
    %6090 = vmatpush1.bf16.msra.mxu0 %v5061
    %6091 = vmatprep.subr.bf16.mxu0 %v5069
    %6092 = vmatpush1.bf16.msra.mxu0 %v5068
    %6093 = vmatprep.mubr.bf16.mxu0 %v2775
    %6094 = vmatmul.mubr.bf16.gmra.mrb[0].mxu0 %v2774
    %v6095 = vpop.f32.mrb[0].mxu0
    %v6096 = vadd.f32 %v6053, %v6095
    %v6097 = vpop.f32.mrb[0].mxu0
    %v6098 = vadd.f32 %v6055, %v6097
    %v6099 = vpop.f32.mrb[0].mxu0
    %v6100 = vadd.f32 %v6057, %v6099
    %v6101 = vpop.f32.mrb[0].mxu0
    %v6102 = vadd.f32 %v6059, %v6101
    %6103 = vdwg.mxu0
    %6104 = vmatprep.subr.bf16.mxu0 %v5076
    %6105 = vmatpush1.bf16.msra.mxu0 %v5075
    %6106 = vmatprep.subr.bf16.mxu0 %v5083
    %6107 = vmatpush1.bf16.msra.mxu0 %v5082
    %6108 = vmatprep.subr.bf16.mxu0 %v5090
    %6109 = vmatpush1.bf16.msra.mxu0 %v5089
    %6110 = vmatprep.subr.bf16.mxu0 %v5097
    %6111 = vmatpush1.bf16.msra.mxu0 %v5096
    %6112 = vmatprep.subr.bf16.mxu0 %v5104
    %6113 = vmatpush1.bf16.msra.mxu0 %v5103
    %6114 = vmatprep.subr.bf16.mxu0 %v5111
    %6115 = vmatpush1.bf16.msra.mxu0 %v5110
    %6116 = vmatprep.subr.bf16.mxu0 %v5118
    %6117 = vmatpush1.bf16.msra.mxu0 %v5117
    %6118 = vmatprep.subr.bf16.mxu0 %v5125
    %6119 = vmatpush1.bf16.msra.mxu0 %v5124
    %6120 = vmatprep.subr.bf16.mxu0 %v5132
    %6121 = vmatpush1.bf16.msra.mxu0 %v5131
    %6122 = vmatprep.subr.bf16.mxu0 %v5139
    %6123 = vmatpush1.bf16.msra.mxu0 %v5138
    %6124 = vmatprep.subr.bf16.mxu0 %v5146
    %6125 = vmatpush1.bf16.msra.mxu0 %v5145
    %6126 = vmatprep.subr.bf16.mxu0 %v5153
    %6127 = vmatpush1.bf16.msra.mxu0 %v5152
    %6128 = vmatprep.subr.bf16.mxu0 %v5160
    %6129 = vmatpush1.bf16.msra.mxu0 %v5159
    %6130 = vmatprep.subr.bf16.mxu0 %v5167
    %6131 = vmatpush1.bf16.msra.mxu0 %v5166
    %6132 = vmatprep.subr.bf16.mxu0 %v5174
    %6133 = vmatpush1.bf16.msra.mxu0 %v5173
    %6134 = vmatprep.subr.bf16.mxu0 %v5181
    %6135 = vmatpush1.bf16.msra.mxu0 %v5180
    %6136 = vmatprep.mubr.bf16.mxu0 %v2777
    %6137 = vmatmul.mubr.bf16.gmra.mrb[0].mxu0 %v2776
    %v6138 = vpop.f32.mrb[0].mxu0
    %v6139 = vadd.f32 %v6096, %v6138
    %v6140 = vpop.f32.mrb[0].mxu0
    %v6141 = vadd.f32 %v6098, %v6140
    %v6142 = vpop.f32.mrb[0].mxu0
    %v6143 = vadd.f32 %v6100, %v6142
    %v6144 = vpop.f32.mrb[0].mxu0
    %v6145 = vadd.f32 %v6102, %v6144
    %6146 = vdwg.mxu0
    %6147 = vmatprep.subr.bf16.mxu0 0
    %6148 = vmatpush1.bf16.msra.mxu0 %v4741
    %6149 = vmatprep.subr.bf16.mxu0 0
    %6150 = vmatpush1.bf16.msra.mxu0 %v4748
    %6151 = vmatprep.subr.bf16.mxu0 0
    %6152 = vmatpush1.bf16.msra.mxu0 %v4755
    %6153 = vmatprep.subr.bf16.mxu0 0
    %6154 = vmatpush1.bf16.msra.mxu0 %v4762
    %6155 = vmatprep.subr.bf16.mxu0 0
    %6156 = vmatpush1.bf16.msra.mxu0 %v4769
    %6157 = vmatprep.subr.bf16.mxu0 0
    %6158 = vmatpush1.bf16.msra.mxu0 %v4776
    %6159 = vmatprep.subr.bf16.mxu0 0
    %6160 = vmatpush1.bf16.msra.mxu0 %v4783
    %6161 = vmatprep.subr.bf16.mxu0 0
    %6162 = vmatpush1.bf16.msra.mxu0 %v4790
    %6163 = vmatprep.subr.bf16.mxu0 0
    %6164 = vmatpush1.bf16.msra.mxu0 %v4797
    %6165 = vmatprep.subr.bf16.mxu0 0
    %6166 = vmatpush1.bf16.msra.mxu0 %v4804
    %6167 = vmatprep.subr.bf16.mxu0 0
    %6168 = vmatpush1.bf16.msra.mxu0 %v4811
    %6169 = vmatprep.subr.bf16.mxu0 0
    %6170 = vmatpush1.bf16.msra.mxu0 %v4818
    %6171 = vmatprep.subr.bf16.mxu0 0
    %6172 = vmatpush1.bf16.msra.mxu0 %v4825
    %6173 = vmatprep.subr.bf16.mxu0 0
    %6174 = vmatpush1.bf16.msra.mxu0 %v4832
    %6175 = vmatprep.subr.bf16.mxu0 0
    %6176 = vmatpush1.bf16.msra.mxu0 %v4839
    %6177 = vmatprep.subr.bf16.mxu0 0
    %6178 = vmatpush1.bf16.msra.mxu0 %v4846
    %6179 = vmatprep.mubr.bf16.mxu0 %v2771
    %6180 = vmatmul.mubr.bf16.gmra.mrb[0].mxu0 %v2770
    %v6181 = vpop.f32.mrb[0].mxu0
    %v6182 = vadd.f32 %v3319, %v6181
    %v6183 = vpop.f32.mrb[0].mxu0
    %v6184 = vpop.f32.mrb[0].mxu0
    %v6185 = vadd.f32 %v3319, %v6184
    %v6186 = vpop.f32.mrb[0].mxu0
    %6187 = vdwg.mxu0
    %6188 = vmatprep.subr.bf16.mxu0 0
    %6189 = vmatpush1.bf16.msra.mxu0 %v4853
    %6190 = vmatprep.subr.bf16.mxu0 0
    %6191 = vmatpush1.bf16.msra.mxu0 %v4860
    %6192 = vmatprep.subr.bf16.mxu0 0
    %6193 = vmatpush1.bf16.msra.mxu0 %v4867
    %6194 = vmatprep.subr.bf16.mxu0 0
    %6195 = vmatpush1.bf16.msra.mxu0 %v4874
    %6196 = vmatprep.subr.bf16.mxu0 0
    %6197 = vmatpush1.bf16.msra.mxu0 %v4881
    %6198 = vmatprep.subr.bf16.mxu0 0
    %6199 = vmatpush1.bf16.msra.mxu0 %v4888
    %6200 = vmatprep.subr.bf16.mxu0 0
    %6201 = vmatpush1.bf16.msra.mxu0 %v4895
    %6202 = vmatprep.subr.bf16.mxu0 0
    %6203 = vmatpush1.bf16.msra.mxu0 %v4902
    %6204 = vmatprep.subr.bf16.mxu0 0
    %6205 = vmatpush1.bf16.msra.mxu0 %v4909
    %6206 = vmatprep.subr.bf16.mxu0 0
    %6207 = vmatpush1.bf16.msra.mxu0 %v4916
    %6208 = vmatprep.subr.bf16.mxu0 0
    %6209 = vmatpush1.bf16.msra.mxu0 %v4923
    %6210 = vmatprep.subr.bf16.mxu0 0
    %6211 = vmatpush1.bf16.msra.mxu0 %v4930
    %6212 = vmatprep.subr.bf16.mxu0 0
    %6213 = vmatpush1.bf16.msra.mxu0 %v4937
    %6214 = vmatprep.subr.bf16.mxu0 0
    %6215 = vmatpush1.bf16.msra.mxu0 %v4944
    %6216 = vmatprep.subr.bf16.mxu0 0
    %6217 = vmatpush1.bf16.msra.mxu0 %v4951
    %6218 = vmatprep.subr.bf16.mxu0 0
    %6219 = vmatpush1.bf16.msra.mxu0 %v4958
    %6220 = vmatprep.mubr.bf16.mxu0 %v2773
    %6221 = vmatmul.mubr.bf16.gmra.mrb[0].mxu0 %v2772
    %v6222 = vpop.f32.mrb[0].mxu0
    %v6223 = vadd.f32 %v6182, %v6222
    %v6224 = vpop.f32.mrb[0].mxu0
    %v6225 = vpop.f32.mrb[0].mxu0
    %v6226 = vadd.f32 %v6185, %v6225
    %v6227 = vpop.f32.mrb[0].mxu0
    %6228 = vdwg.mxu0
    %6229 = vmatprep.subr.bf16.mxu0 0
    %6230 = vmatpush1.bf16.msra.mxu0 %v4965
    %6231 = vmatprep.subr.bf16.mxu0 0
    %6232 = vmatpush1.bf16.msra.mxu0 %v4972
    %6233 = vmatprep.subr.bf16.mxu0 0
    %6234 = vmatpush1.bf16.msra.mxu0 %v4979
    %6235 = vmatprep.subr.bf16.mxu0 0
    %6236 = vmatpush1.bf16.msra.mxu0 %v4986
    %6237 = vmatprep.subr.bf16.mxu0 0
    %6238 = vmatpush1.bf16.msra.mxu0 %v4993
    %6239 = vmatprep.subr.bf16.mxu0 0
    %6240 = vmatpush1.bf16.msra.mxu0 %v5000
    %6241 = vmatprep.subr.bf16.mxu0 0
    %6242 = vmatpush1.bf16.msra.mxu0 %v5007
    %6243 = vmatprep.subr.bf16.mxu0 0
    %6244 = vmatpush1.bf16.msra.mxu0 %v5014
    %6245 = vmatprep.subr.bf16.mxu0 0
    %6246 = vmatpush1.bf16.msra.mxu0 %v5021
    %6247 = vmatprep.subr.bf16.mxu0 0
    %6248 = vmatpush1.bf16.msra.mxu0 %v5028
    %6249 = vmatprep.subr.bf16.mxu0 0
    %6250 = vmatpush1.bf16.msra.mxu0 %v5035
    %6251 = vmatprep.subr.bf16.mxu0 0
    %6252 = vmatpush1.bf16.msra.mxu0 %v5042
    %6253 = vmatprep.subr.bf16.mxu0 0
    %6254 = vmatpush1.bf16.msra.mxu0 %v5049
    %6255 = vmatprep.subr.bf16.mxu0 0
    %6256 = vmatpush1.bf16.msra.mxu0 %v5056
    %6257 = vmatprep.subr.bf16.mxu0 0
    %6258 = vmatpush1.bf16.msra.mxu0 %v5063
    %6259 = vmatprep.subr.bf16.mxu0 0
    %6260 = vmatpush1.bf16.msra.mxu0 %v5070
    %6261 = vmatprep.mubr.bf16.mxu0 %v2775
    %6262 = vmatmul.mubr.bf16.gmra.mrb[0].mxu0 %v2774
    %v6263 = vpop.f32.mrb[0].mxu0
    %v6264 = vadd.f32 %v6223, %v6263
    %v6265 = vpop.f32.mrb[0].mxu0
    %v6266 = vpop.f32.mrb[0].mxu0
    %v6267 = vadd.f32 %v6226, %v6266
    %v6268 = vpop.f32.mrb[0].mxu0
    %6269 = vdwg.mxu0
    %6270 = vmatprep.subr.bf16.mxu0 0
    %6271 = vmatpush1.bf16.msra.mxu0 %v5077
    %6272 = vmatprep.subr.bf16.mxu0 0
    %6273 = vmatpush1.bf16.msra.mxu0 %v5084
    %6274 = vmatprep.subr.bf16.mxu0 0
    %6275 = vmatpush1.bf16.msra.mxu0 %v5091
    %6276 = vmatprep.subr.bf16.mxu0 0
    %6277 = vmatpush1.bf16.msra.mxu0 %v5098
    %6278 = vmatprep.subr.bf16.mxu0 0
    %6279 = vmatpush1.bf16.msra.mxu0 %v5105
    %6280 = vmatprep.subr.bf16.mxu0 0
    %6281 = vmatpush1.bf16.msra.mxu0 %v5112
    %6282 = vmatprep.subr.bf16.mxu0 0
    %6283 = vmatpush1.bf16.msra.mxu0 %v5119
    %6284 = vmatprep.subr.bf16.mxu0 0
    %6285 = vmatpush1.bf16.msra.mxu0 %v5126
    %6286 = vmatprep.subr.bf16.mxu0 0
    %6287 = vmatpush1.bf16.msra.mxu0 %v5133
    %6288 = vmatprep.subr.bf16.mxu0 0
    %6289 = vmatpush1.bf16.msra.mxu0 %v5140
    %6290 = vmatprep.subr.bf16.mxu0 0
    %6291 = vmatpush1.bf16.msra.mxu0 %v5147
    %6292 = vmatprep.subr.bf16.mxu0 0
    %6293 = vmatpush1.bf16.msra.mxu0 %v5154
    %6294 = vmatprep.subr.bf16.mxu0 0
    %6295 = vmatpush1.bf16.msra.mxu0 %v5161
    %6296 = vmatprep.subr.bf16.mxu0 0
    %6297 = vmatpush1.bf16.msra.mxu0 %v5168
    %6298 = vmatprep.subr.bf16.mxu0 0
    %6299 = vmatpush1.bf16.msra.mxu0 %v5175
    %6300 = vmatprep.subr.bf16.mxu0 0
    %6301 = vmatpush1.bf16.msra.mxu0 %v5182
    %6302 = vmatprep.mubr.bf16.mxu0 %v2777
    %6303 = vmatmul.mubr.bf16.gmra.mrb[0].mxu0 %v2776
    %v6304 = vpop.f32.mrb[0].mxu0
    %v6305 = vadd.f32 %v6264, %v6304
    %v6306 = vpop.f32.mrb[0].mxu0
    %v6307 = vpop.f32.mrb[0].mxu0
    %v6308 = vadd.f32 %v6267, %v6307
    %v6309 = vpop.f32.mrb[0].mxu0
    %6310 = vdwg.mxu0
    %v6311 = vtanh.pop %v5795
    %v6312 = vtanh.pop %v5797
    %v6313 = vtanh.pop %v5967
    %v6314 = vtanh.pop %v5969
    %v6315 = vtanh.pop %v6139
    %v6316 = vtanh.pop %v6141
    %v6317 = vtanh.pop %v6305
    %v6318 = vtanh.pop %v5799
    %v6319 = vtanh.pop %v5801
    %v6320 = vtanh.pop %v5971
    %v6321 = vtanh.pop %v5973
    %v6322 = vtanh.pop %v6143
    %v6323 = vtanh.pop %v6145
    %v6324 = vtanh.pop %v6308
    %6325 = vst [vmem:[#allocation17] sm:$0xff] %v6311
    %6326 = vst [vmem:[#allocation17 + $0x8] sm:$0xff] %v6312
    %6327 = vst [vmem:[#allocation17 + $0x10] sm:$0xff] %v6313
    %6328 = vst [vmem:[#allocation17 + $0x18] sm:$0xff] %v6314
    %6329 = vst [vmem:[#allocation17 + $0x20] sm:$0xff] %v6315
    %6330 = vst [vmem:[#allocation17 + $0x28] sm:$0xff] %v6316
    %6331 = vst [vmem:[#allocation17 + $0x30] sm:$0xff] %v6317
    %6332 = vst [vmem:[#allocation17 + $0x38] sm:$0xff] %v6318
    %6333 = vst [vmem:[#allocation17 + $0x40] sm:$0xff] %v6319
    %6334 = vst [vmem:[#allocation17 + $0x48] sm:$0xff] %v6320
    %6335 = vst [vmem:[#allocation17 + $0x50] sm:$0xff] %v6321
    %6336 = vst [vmem:[#allocation17 + $0x58] sm:$0xff] %v6322
    %6337 = vst [vmem:[#allocation17 + $0x60] sm:$0xff] %v6323
    %6338 = vst [vmem:[#allocation17 + $0x68] sm:$0xff] %v6324
    // Predicated region
    $region74: #{tpu_custom_call.1} parent=1 // pred_check
      _
    $region75: #{tpu_custom_call.1} parent=1 // pred_check_branch
      %6340 = sbr.rel (0) target = $region77
    $region76: #{tpu_custom_call.1} parent=1 // pred_region
      %s6342 = ssub.s32 1792, 1792
      %6343 = vsyncadd [#allocation4], %s6342
      %s6344 = sshll.u32 [#allocation17], 4
      %s6345 = int_to_ptr.vmem [resolvable:$true] %s6344
      %6350 = dma.vmem_to_hbm [thread:$0]  %s6345, 1792, %s9, [#allocation4], 896, 896, 56
    $region77: #{tpu_custom_call.1} parent=1 // pred_fallthru
      _
    // Predicated region
    $region78: #{tpu_custom_call.1} parent=1 // pred_check
      _
    $region79: #{tpu_custom_call.1} parent=1 // pred_check_branch
      %6352 = sbr.rel (0) target = $region81
    $region80: #{tpu_custom_call.1} parent=1 // pred_region
      %6353 = dma.done [#allocation4], 1792
    $region81: #{tpu_custom_call.1} parent=1 // pred_fallthru
      _
    %6354 = vsyncpa [#allocation3], 1
    %6355 = vsyncpa [#allocation6], 1
    %6356 = vsyncpa [#allocation9], 1
    %6357 = vsyncpa [#allocation12], 1
    %6358 = vsyncpa [#allocation15], 1
    %6359 = vsyncpa [#allocation4], 1

// kernel: tpu_custom_call.1
$region0: #{tpu_custom_call.1}
  #allocation0 [shape = 'u32[]', space=smem, size = 0x4, offset = 0x4, fixed_abs, tag = 'smem constant byte address 0x4 - core index']
  #allocation1 [shape = 'u32[144,128]{1,0:T(1,128)}', space=vmem, size = 0x12000, scoped, tag = 'internal scratch']
  %s0 = inlined_call_operand.hbm [shape: bf16[16,128], index: 0, kind: input, shape index: {}]
  %s1 = inlined_call_operand.hbm [shape: bf16[128,256], index: 1, kind: input, shape index: {}]
  %s2 = inlined_call_operand.hbm [shape: f32[1,256], index: 2, kind: input, shape index: {}]
  %s3 = inlined_call_operand.hbm [shape: bf16[256,512], index: 3, kind: input, shape index: {}]
  %s4 = inlined_call_operand.hbm [shape: f32[1,512], index: 4, kind: input, shape index: {}]
  %s5 = inlined_call_operand.hbm [shape: bf16[512,1024], index: 5, kind: input, shape index: {}]
  %s6 = inlined_call_operand.hbm [shape: f32[1,1024], index: 6, kind: input, shape index: {}]
  %s7 = inlined_call_operand.hbm [shape: bf16[1024,896], index: 7, kind: input, shape index: {}]
  %s8 = inlined_call_operand.hbm [shape: f32[1,896], index: 8, kind: input, shape index: {}]
  %s9 = inlined_call_operand.hbm [shape: f32[16,896], index: 9, kind: output, shape index: {}]
  %s10 = sld [smem:[#allocation0]]
  $region82: #{tpu_custom_call.1} parent=0
    _
  %s12 = ssub.s32 1, %s10
  %s13 = scalar_select 0, %s12, %s10
  $region1: #{tpu_custom_call.1} parent=0
    #allocation2 [shape = 'u8[4096]{0}', space=vmem, size = 0x1000, scoped, tag = 'input window, operand 0, single buffered']
    #allocation3 [shape = 's32[1]{0}', space=sflag, size = 0x4, scoped, tag = 'scoped memory for tpu_custom_call.1']
    #allocation4 [shape = 's32[1]{0}', space=sflag, size = 0x4, scoped, tag = 'scoped memory for tpu_custom_call.1']
    #allocation5 [shape = 'u8[65536]{0}', space=vmem, size = 0x10000, scoped, tag = 'input window, operand 1, single buffered']
    #allocation6 [shape = 's32[1]{0}', space=sflag, size = 0x4, scoped, tag = 'scoped memory for tpu_custom_call.1']
    #allocation7 [shape = 'u8[1024]{0}', space=vmem, size = 0x400, scoped, tag = 'input window, operand 2, single buffered']
    #allocation8 [shape = 'u8[262144]{0}', space=vmem, size = 0x40000, scoped, tag = 'input window, operand 3, single buffered']
    #allocation9 [shape = 's32[1]{0}', space=sflag, size = 0x4, scoped, tag = 'scoped memory for tpu_custom_call.1']
    #allocation10 [shape = 'u8[2048]{0}', space=vmem, size = 0x800, scoped, tag = 'input window, operand 4, single buffered']
    #allocation11 [shape = 'u8[1048576]{0}', space=vmem, size = 0x100000, scoped, tag = 'input window, operand 5, single buffered']
    #allocation12 [shape = 's32[1]{0}', space=sflag, size = 0x4, scoped, tag = 'scoped memory for tpu_custom_call.1']
    #allocation13 [shape = 'u8[4096]{0}', space=vmem, size = 0x1000, scoped, tag = 'input window, operand 6, single buffered']
    #allocation14 [shape = 'u8[1835008]{0}', space=vmem, size = 0x1c0000, scoped, tag = 'input window, operand 7, single buffered']
    #allocation15 [shape = 's32[1]{0}', space=sflag, size = 0x4, scoped, tag = 'scoped memory for tpu_custom_call.1']
    #allocation16 [shape = 'u8[3584]{0}', space=vmem, size = 0x1000, scoped, tag = 'input window, operand 8, single buffered']
    #allocation17 [shape = 'u8[57344]{0}', space=vmem, size = 0xe000, scoped, tag = 'output window, operand 0, single buffered']
    %14 = vsyncpa [#allocation3], 0
    %15 = vsyncpa [#allocation6], 0
    %16 = vsyncpa [#allocation9], 0
    %17 = vsyncpa [#allocation12], 0
    %18 = vsyncpa [#allocation15], 0
    %19 = vsyncpa [#allocation4], 0
    // Predicated region
    $region2: #{tpu_custom_call.1} parent=1 // pred_check
      _
    $region3: #{tpu_custom_call.1} parent=1 // pred_check_branch
      %21 = sbr.rel (0) target = $region5
    $region4: #{tpu_custom_call.1} parent=1 // pred_region
      %s23 = ssub.s32 128, 128
      %24 = vsyncadd [#allocation3], %s23
      %s25 = sshll.u32 [#allocation2], 4
      %s26 = int_to_ptr.vmem [resolvable:$true] %s25
      %31 = dma.hbm_to_vmem [thread:$0]  %s0, 128, %s26, [#allocation3], 64, 64, 4
    $region5: #{tpu_custom_call.1} parent=1 // pred_fallthru
      _
    // Predicated region
    $region6: #{tpu_custom_call.1} parent=1 // pred_check
      _
    $region7: #{tpu_custom_call.1} parent=1 // pred_check_branch
      %33 = sbr.rel (0) target = $region9
    $region8: #{tpu_custom_call.1} parent=1 // pred_region
      %s35 = ssub.s32 2048, 2048
      %36 = vsyncadd [#allocation6], %s35
      %s37 = sshll.u32 [#allocation5], 4
      %s38 = int_to_ptr.vmem [resolvable:$true] %s37
      %43 = dma.hbm_to_vmem [thread:$0]  %s1, 2048, %s38, [#allocation6], 128, 128, 8
    $region9: #{tpu_custom_call.1} parent=1 // pred_fallthru
      _
    // Predicated region
    $region10: #{tpu_custom_call.1} parent=1 // pred_check
      _
    $region11: #{tpu_custom_call.1} parent=1 // pred_check_branch
      %45 = sbr.rel (0) target = $region13
    $region12: #{tpu_custom_call.1} parent=1 // pred_region
      %s47 = ssub.s32 32, 32
      %48 = vsyncadd [#allocation6], %s47
      %s50 = sshll.u32 [#allocation7], 4
      %s51 = int_to_ptr.vmem [resolvable:$true] %s50
      %53 = dma.hbm_to_vmem [thread:$0]  %s2, 32, %s51, [#allocation6]
    $region13: #{tpu_custom_call.1} parent=1 // pred_fallthru
      _
    // Predicated region
    $region14: #{tpu_custom_call.1} parent=1 // pred_check
      _
    $region15: #{tpu_custom_call.1} parent=1 // pred_check_branch
      %55 = sbr.rel (0) target = $region17
    $region16: #{tpu_custom_call.1} parent=1 // pred_region
      %s57 = ssub.s32 8192, 8192
      %58 = vsyncadd [#allocation9], %s57
      %s59 = sshll.u32 [#allocation8], 4
      %s60 = int_to_ptr.vmem [resolvable:$true] %s59
      %65 = dma.hbm_to_vmem [thread:$0]  %s3, 8192, %s60, [#allocation9], 256, 256, 16
    $region17: #{tpu_custom_call.1} parent=1 // pred_fallthru
      _
    // Predicated region
    $region18: #{tpu_custom_call.1} parent=1 // pred_check
      _
    $region19: #{tpu_custom_call.1} parent=1 // pred_check_branch
      %67 = sbr.rel (0) target = $region21
    $region20: #{tpu_custom_call.1} parent=1 // pred_region
      %s69 = ssub.s32 64, 64
      %70 = vsyncadd [#allocation9], %s69
      %s72 = sshll.u32 [#allocation10], 4
      %s73 = int_to_ptr.vmem [resolvable:$true] %s72
      %75 = dma.hbm_to_vmem [thread:$0]  %s4, 64, %s73, [#allocation9]
    $region21: #{tpu_custom_call.1} parent=1 // pred_fallthru
      _
    // Predicated region
    $region22: #{tpu_custom_call.1} parent=1 // pred_check
      _
    $region23: #{tpu_custom_call.1} parent=1 // pred_check_branch
      %77 = sbr.rel (0) target = $region25
    $region24: #{tpu_custom_call.1} parent=1 // pred_region
      %s79 = ssub.s32 32768, 32768
      %80 = vsyncadd [#allocation12], %s79
      %s81 = sshll.u32 [#allocation11], 4
      %s82 = int_to_ptr.vmem [resolvable:$true] %s81
      %87 = dma.hbm_to_vmem [thread:$0]  %s5, 32768, %s82, [#allocation12], 512, 512, 32
    $region25: #{tpu_custom_call.1} parent=1 // pred_fallthru
      _
    // Predicated region
    $region26: #{tpu_custom_call.1} parent=1 // pred_check
      _
    $region27: #{tpu_custom_call.1} parent=1 // pred_check_branch
      %89 = sbr.rel (0) target = $region29
    $region28: #{tpu_custom_call.1} parent=1 // pred_region
      %s91 = ssub.s32 128, 128
      %92 = vsyncadd [#allocation12], %s91
      %s94 = sshll.u32 [#allocation13], 4
      %s95 = int_to_ptr.vmem [resolvable:$true] %s94
      %97 = dma.hbm_to_vmem [thread:$0]  %s6, 128, %s95, [#allocation12]
    $region29: #{tpu_custom_call.1} parent=1 // pred_fallthru
      _
    // Predicated region
    $region30: #{tpu_custom_call.1} parent=1 // pred_check
      _
    $region31: #{tpu_custom_call.1} parent=1 // pred_check_branch
      %99 = sbr.rel (0) target = $region33
    $region32: #{tpu_custom_call.1} parent=1 // pred_region
      %s101 = ssub.s32 57344, 57344
      %102 = vsyncadd [#allocation15], %s101
      %s103 = sshll.u32 [#allocation14], 4
      %s104 = int_to_ptr.vmem [resolvable:$true] %s103
      %109 = dma.hbm_to_vmem [thread:$0]  %s7, 57344, %s104, [#allocation15], 448, 448, 28
    $region33: #{tpu_custom_call.1} parent=1 // pred_fallthru
      _
    // Predicated region
    $region34: #{tpu_custom_call.1} parent=1 // pred_check
      _
    $region35: #{tpu_custom_call.1} parent=1 // pred_check_branch
      %111 = sbr.rel (0) target = $region37
    $region36: #{tpu_custom_call.1} parent=1 // pred_region
      %s113 = ssub.s32 112, 112
      %114 = vsyncadd [#allocation15], %s113
      %s116 = sshll.u32 [#allocation16], 4
      %s117 = int_to_ptr.vmem [resolvable:$true] %s116
      %119 = dma.hbm_to_vmem [thread:$0]  %s8, 112, %s117, [#allocation15]
    $region37: #{tpu_custom_call.1} parent=1 // pred_fallthru
      _
    // Predicated region
    $region38: #{tpu_custom_call.1} parent=1 // pred_check
      _
    $region39: #{tpu_custom_call.1} parent=1 // pred_check_branch
      %121 = sbr.rel (0) target = $region41
    $region40: #{tpu_custom_call.1} parent=1 // pred_region
      %122 = dma.done [#allocation3], 128
    $region41: #{tpu_custom_call.1} parent=1 // pred_fallthru
      _
    // Predicated region
    $region42: #{tpu_custom_call.1} parent=1 // pred_check
      _
    $region43: #{tpu_custom_call.1} parent=1 // pred_check_branch
      %124 = sbr.rel (0) target = $region45
    $region44: #{tpu_custom_call.1} parent=1 // pred_region
      %125 = dma.done [#allocation6], 2048
    $region45: #{tpu_custom_call.1} parent=1 // pred_fallthru
      _
    // Predicated region
    $region46: #{tpu_custom_call.1} parent=1 // pred_check
      _
    $region47: #{tpu_custom_call.1} parent=1 // pred_check_branch
      %127 = sbr.rel (0) target = $region49
    $region48: #{tpu_custom_call.1} parent=1 // pred_region
      %128 = dma.done [#allocation6], 32
    $region49: #{tpu_custom_call.1} parent=1 // pred_fallthru
      _
    // Predicated region
    $region50: #{tpu_custom_call.1} parent=1 // pred_check
      _
    $region51: #{tpu_custom_call.1} parent=1 // pred_check_branch
      %130 = sbr.rel (0) target = $region53
    $region52: #{tpu_custom_call.1} parent=1 // pred_region
      %131 = dma.done [#allocation9], 8192
    $region53: #{tpu_custom_call.1} parent=1 // pred_fallthru
      _
    // Predicated region
    $region54: #{tpu_custom_call.1} parent=1 // pred_check
      _
    $region55: #{tpu_custom_call.1} parent=1 // pred_check_branch
      %133 = sbr.rel (0) target = $region57
    $region56: #{tpu_custom_call.1} parent=1 // pred_region
      %134 = dma.done [#allocation9], 64
    $region57: #{tpu_custom_call.1} parent=1 // pred_fallthru
      _
    // Predicated region
    $region58: #{tpu_custom_call.1} parent=1 // pred_check
      _
    $region59: #{tpu_custom_call.1} parent=1 // pred_check_branch
      %136 = sbr.rel (0) target = $region61
    $region60: #{tpu_custom_call.1} parent=1 // pred_region
      %137 = dma.done [#allocation12], 32768
    $region61: #{tpu_custom_call.1} parent=1 // pred_fallthru
      _
    // Predicated region
    $region62: #{tpu_custom_call.1} parent=1 // pred_check
      _
    $region63: #{tpu_custom_call.1} parent=1 // pred_check_branch
      %139 = sbr.rel (0) target = $region65
    $region64: #{tpu_custom_call.1} parent=1 // pred_region
      %140 = dma.done [#allocation12], 128
    $region65: #{tpu_custom_call.1} parent=1 // pred_fallthru
      _
    // Predicated region
    $region66: #{tpu_custom_call.1} parent=1 // pred_check
      _
    $region67: #{tpu_custom_call.1} parent=1 // pred_check_branch
      %142 = sbr.rel (0) target = $region69
    $region68: #{tpu_custom_call.1} parent=1 // pred_region
      %143 = dma.done [#allocation15], 57344
    $region69: #{tpu_custom_call.1} parent=1 // pred_fallthru
      _
    // Predicated region
    $region70: #{tpu_custom_call.1} parent=1 // pred_check
      _
    $region71: #{tpu_custom_call.1} parent=1 // pred_check_branch
      %145 = sbr.rel (0) target = $region73
    $region72: #{tpu_custom_call.1} parent=1 // pred_region
      %146 = dma.done [#allocation15], 112
    $region73: #{tpu_custom_call.1} parent=1 // pred_fallthru
      _
    %v149 = vld [vmem:[#allocation2] sm:$0xf]
    %v150 = vld [vmem:[#allocation2 + $0x4] sm:$0xf]
    %v151 = vld [vmem:[#allocation5] sm:$0xff]
    %v152 = vld [vmem:[#allocation5 + $0x8] sm:$0xff]
    %v153 = vld [vmem:[#allocation5 + $0x10] sm:$0xff]
    %v154 = vld [vmem:[#allocation5 + $0x18] sm:$0xff]
    %v155 = vld [vmem:[#allocation5 + $0x20] sm:$0xff]
    %v156 = vld [vmem:[#allocation5 + $0x28] sm:$0xff]
    %v157 = vld [vmem:[#allocation5 + $0x30] sm:$0xff]
    %v158 = vld [vmem:[#allocation5 + $0x38] sm:$0xff]
    %v159 = vld [vmem:[#allocation5 + $0x40] sm:$0xff]
    %v160 = vld [vmem:[#allocation5 + $0x48] sm:$0xff]
    %v161 = vld [vmem:[#allocation5 + $0x50] sm:$0xff]
    %v162 = vld [vmem:[#allocation5 + $0x58] sm:$0xff]
    %v163 = vld [vmem:[#allocation5 + $0x60] sm:$0xff]
    %v164 = vld [vmem:[#allocation5 + $0x68] sm:$0xff]
    %v165 = vld [vmem:[#allocation5 + $0x70] sm:$0xff]
    %v166 = vld [vmem:[#allocation5 + $0x78] sm:$0xff]
    %v167 = vld [vmem:[#allocation7] sm:$0x3]
    %v169 = vlaneseq
    %v170 = vshrl.u32 %v169, 7
    %v171 = vsub.s32 0, %v170
    %v172 = vrot.slane %v167, %v171
    %v173 = vlaneseq
    %v174 = vshrl.u32 %v173, 7
    %v175 = vsub.s32 1, %v174
    %v176 = vrot.slane %v167, %v175
    %v181 = vunpack.c.l.b16 %v149
    %v182 = vunpack.c.l.b16 %v150
    %v183 = vpack.c.b16 %v182, %v181
    %v201 = vunpack.c.l.b16 %v151
    %v202 = vunpack.c.h.b16 %v151
    %v203 = vunpack.c.l.b16 %v152
    %v204 = vunpack.c.h.b16 %v152
    %v205 = vunpack.c.l.b16 %v153
    %v206 = vunpack.c.h.b16 %v153
    %v207 = vunpack.c.l.b16 %v154
    %v208 = vunpack.c.h.b16 %v154
    %v209 = vunpack.c.l.b16 %v155
    %v210 = vunpack.c.h.b16 %v155
    %v211 = vunpack.c.l.b16 %v156
    %v212 = vunpack.c.h.b16 %v156
    %v213 = vunpack.c.l.b16 %v157
    %v214 = vunpack.c.h.b16 %v157
    %v215 = vunpack.c.l.b16 %v158
    %v216 = vunpack.c.h.b16 %v158
    %v217 = vunpack.c.l.b16 %v159
    %v218 = vunpack.c.h.b16 %v159
    %v219 = vunpack.c.l.b16 %v160
    %v220 = vunpack.c.h.b16 %v160
    %v221 = vunpack.c.l.b16 %v161
    %v222 = vunpack.c.h.b16 %v161
    %v223 = vunpack.c.l.b16 %v162
    %v224 = vunpack.c.h.b16 %v162
    %v225 = vunpack.c.l.b16 %v163
    %v226 = vunpack.c.h.b16 %v163
    %v227 = vunpack.c.l.b16 %v164
    %v228 = vunpack.c.h.b16 %v164
    %v229 = vunpack.c.l.b16 %v165
    %v230 = vunpack.c.h.b16 %v165
    %v231 = vunpack.c.l.b16 %v166
    %v232 = vunpack.c.h.b16 %v166
    %v233 = vpack.c.b16 %v203, %v201
    %v234 = vpack.c.b16 %v204, %v202
    %v235 = vpack.c.b16 %v207, %v205
    %v236 = vpack.c.b16 %v208, %v206
    %v237 = vpack.c.b16 %v211, %v209
    %v238 = vpack.c.b16 %v212, %v210
    %v239 = vpack.c.b16 %v215, %v213
    %v240 = vpack.c.b16 %v216, %v214
    %v241 = vpack.c.b16 %v219, %v217
    %v242 = vpack.c.b16 %v220, %v218
    %v243 = vpack.c.b16 %v223, %v221
    %v244 = vpack.c.b16 %v224, %v222
    %v245 = vpack.c.b16 %v227, %v225
    %v246 = vpack.c.b16 %v228, %v226
    %v247 = vpack.c.b16 %v231, %v229
    %v248 = vpack.c.b16 %v232, %v230
    %265 = vmatprep.subr.bf16.mxu0 %v234
    %266 = vmatpush1.bf16.msra.mxu0 %v233
    %267 = vmatprep.subr.bf16.mxu0 %v236
    %268 = vmatpush1.bf16.msra.mxu0 %v235
    %269 = vmatprep.subr.bf16.mxu0 %v238
    %270 = vmatpush1.bf16.msra.mxu0 %v237
    %271 = vmatprep.subr.bf16.mxu0 %v240
    %272 = vmatpush1.bf16.msra.mxu0 %v239
    %273 = vmatprep.subr.bf16.mxu0 %v242
    %274 = vmatpush1.bf16.msra.mxu0 %v241
    %275 = vmatprep.subr.bf16.mxu0 %v244
    %276 = vmatpush1.bf16.msra.mxu0 %v243
    %277 = vmatprep.subr.bf16.mxu0 %v246
    %278 = vmatpush1.bf16.msra.mxu0 %v245
    %279 = vmatprep.subr.bf16.mxu0 %v248
    %280 = vmatpush1.bf16.msra.mxu0 %v247
    %281 = vmatprep.subr.bf16.mxu0 0
    %282 = vmatpush1.bf16.msra.mxu0 0
    %283 = vmatprep.subr.bf16.mxu0 0
    %284 = vmatpush1.bf16.msra.mxu0 0
    %285 = vmatprep.subr.bf16.mxu0 0
    %286 = vmatpush1.bf16.msra.mxu0 0
    %287 = vmatprep.subr.bf16.mxu0 0
    %288 = vmatpush1.bf16.msra.mxu0 0
    %289 = vmatprep.subr.bf16.mxu0 0
    %290 = vmatpush1.bf16.msra.mxu0 0
    %291 = vmatprep.subr.bf16.mxu0 0
    %292 = vmatpush1.bf16.msra.mxu0 0
    %293 = vmatprep.subr.bf16.mxu0 0
    %294 = vmatpush1.bf16.msra.mxu0 0
    %295 = vmatprep.subr.bf16.mxu0 0
    %296 = vmatpush1.bf16.msra.mxu0 0
    %297 = vmatprep.mubr.bf16.mxu0 0
    %298 = vmatmul.mubr.bf16.gmra.mrb[0].mxu0 %v183
    %v299 = vpop.f32.mrb[0].mxu0
    %v300 = vadd.f32 %v172, %v299
    %v301 = vpop.f32.mrb[0].mxu0
    %v302 = vadd.f32 %v176, %v301
    %v303 = vpop.f32.mrb[0].mxu0
    %v304 = vadd.f32 %v172, %v303
    %v305 = vpop.f32.mrb[0].mxu0
    %v306 = vadd.f32 %v176, %v305
    %307 = vdwg.mxu0
    %v308 = vpack.c.bf16 %v304, %v300
    %v309 = vpack.c.bf16 %v306, %v302
    %vm310 = vcmp.gt.bf16.partialorder %v308, 0
    %vm311 = vcmp.gt.bf16.partialorder %v309, 0
    %v312 = vmul.bf16 %v308, 1045249613
    %v313 = vmul.bf16 %v309, 1045249613
    %v314 = vsel %vm310, %v308, %v312
    %v315 = vsel %vm311, %v309, %v313
    %v316 = vld [vmem:[#allocation8] sm:$0xff]
    %v317 = vld [vmem:[#allocation8 + $0x8] sm:$0xff]
    %v318 = vld [vmem:[#allocation8 + $0x10] sm:$0xff]
    %v319 = vld [vmem:[#allocation8 + $0x18] sm:$0xff]
    %v320 = vld [vmem:[#allocation8 + $0x20] sm:$0xff]
    %v321 = vld [vmem:[#allocation8 + $0x28] sm:$0xff]
    %v322 = vld [vmem:[#allocation8 + $0x30] sm:$0xff]
    %v323 = vld [vmem:[#allocation8 + $0x38] sm:$0xff]
    %v324 = vld [vmem:[#allocation8 + $0x40] sm:$0xff]
    %v325 = vld [vmem:[#allocation8 + $0x48] sm:$0xff]
    %v326 = vld [vmem:[#allocation8 + $0x50] sm:$0xff]
    %v327 = vld [vmem:[#allocation8 + $0x58] sm:$0xff]
    %v328 = vld [vmem:[#allocation8 + $0x60] sm:$0xff]
    %v329 = vld [vmem:[#allocation8 + $0x68] sm:$0xff]
    %v330 = vld [vmem:[#allocation8 + $0x70] sm:$0xff]
    %v331 = vld [vmem:[#allocation8 + $0x78] sm:$0xff]
    %v332 = vld [vmem:[#allocation8 + $0x80] sm:$0xff]
    %v333 = vld [vmem:[#allocation8 + $0x88] sm:$0xff]
    %v334 = vld [vmem:[#allocation8 + $0x90] sm:$0xff]
    %v335 = vld [vmem:[#allocation8 + $0x98] sm:$0xff]
    %v336 = vld [vmem:[#allocation8 + $0xa0] sm:$0xff]
    %v337 = vld [vmem:[#allocation8 + $0xa8] sm:$0xff]
    %v338 = vld [vmem:[#allocation8 + $0xb0] sm:$0xff]
    %v339 = vld [vmem:[#allocation8 + $0xb8] sm:$0xff]
    %v340 = vld [vmem:[#allocation8 + $0xc0] sm:$0xff]
    %v341 = vld [vmem:[#allocation8 + $0xc8] sm:$0xff]
    %v342 = vld [vmem:[#allocation8 + $0xd0] sm:$0xff]
    %v343 = vld [vmem:[#allocation8 + $0xd8] sm:$0xff]
    %v344 = vld [vmem:[#allocation8 + $0xe0] sm:$0xff]
    %v345 = vld [vmem:[#allocation8 + $0xe8] sm:$0xff]
    %v346 = vld [vmem:[#allocation8 + $0xf0] sm:$0xff]
    %v347 = vld [vmem:[#allocation8 + $0xf8] sm:$0xff]
    %v348 = vld [vmem:[#allocation8 + $0x100] sm:$0xff]
    %v349 = vld [vmem:[#allocation8 + $0x108] sm:$0xff]
    %v350 = vld [vmem:[#allocation8 + $0x110] sm:$0xff]
    %v351 = vld [vmem:[#allocation8 + $0x118] sm:$0xff]
    %v352 = vld [vmem:[#allocation8 + $0x120] sm:$0xff]
    %v353 = vld [vmem:[#allocation8 + $0x128] sm:$0xff]
    %v354 = vld [vmem:[#allocation8 + $0x130] sm:$0xff]
    %v355 = vld [vmem:[#allocation8 + $0x138] sm:$0xff]
    %v356 = vld [vmem:[#allocation8 + $0x140] sm:$0xff]
    %v357 = vld [vmem:[#allocation8 + $0x148] sm:$0xff]
    %v358 = vld [vmem:[#allocation8 + $0x150] sm:$0xff]
    %v359 = vld [vmem:[#allocation8 + $0x158] sm:$0xff]
    %v360 = vld [vmem:[#allocation8 + $0x160] sm:$0xff]
    %v361 = vld [vmem:[#allocation8 + $0x168] sm:$0xff]
    %v362 = vld [vmem:[#allocation8 + $0x170] sm:$0xff]
    %v363 = vld [vmem:[#allocation8 + $0x178] sm:$0xff]
    %v364 = vld [vmem:[#allocation8 + $0x180] sm:$0xff]
    %v365 = vld [vmem:[#allocation8 + $0x188] sm:$0xff]
    %v366 = vld [vmem:[#allocation8 + $0x190] sm:$0xff]
    %v367 = vld [vmem:[#allocation8 + $0x198] sm:$0xff]
    %v368 = vld [vmem:[#allocation8 + $0x1a0] sm:$0xff]
    %v369 = vld [vmem:[#allocation8 + $0x1a8] sm:$0xff]
    %v370 = vld [vmem:[#allocation8 + $0x1b0] sm:$0xff]
    %v371 = vld [vmem:[#allocation8 + $0x1b8] sm:$0xff]
    %v372 = vld [vmem:[#allocation8 + $0x1c0] sm:$0xff]
    %v373 = vld [vmem:[#allocation8 + $0x1c8] sm:$0xff]
    %v374 = vld [vmem:[#allocation8 + $0x1d0] sm:$0xff]
    %v375 = vld [vmem:[#allocation8 + $0x1d8] sm:$0xff]
    %v376 = vld [vmem:[#allocation8 + $0x1e0] sm:$0xff]
    %v377 = vld [vmem:[#allocation8 + $0x1e8] sm:$0xff]
    %v378 = vld [vmem:[#allocation8 + $0x1f0] sm:$0xff]
    %v379 = vld [vmem:[#allocation8 + $0x1f8] sm:$0xff]
    %v380 = vld [vmem:[#allocation10] sm:$0xf]
    %v382 = vlaneseq
    %v383 = vshrl.u32 %v382, 7
    %v384 = vsub.s32 0, %v383
    %v385 = vrot.slane %v380, %v384
    %v386 = vlaneseq
    %v387 = vshrl.u32 %v386, 7
    %v388 = vsub.s32 1, %v387
    %v389 = vrot.slane %v380, %v388
    %v390 = vlaneseq
    %v391 = vshrl.u32 %v390, 7
    %v392 = vsub.s32 2, %v391
    %v393 = vrot.slane %v380, %v392
    %v394 = vlaneseq
    %v395 = vshrl.u32 %v394, 7
    %v396 = vsub.s32 3, %v395
    %v397 = vrot.slane %v380, %v396
    %v466 = vunpack.c.l.b16 %v316
    %v467 = vunpack.c.h.b16 %v316
    %v468 = vunpack.c.l.b16 %v317
    %v469 = vunpack.c.h.b16 %v317
    %v470 = vunpack.c.l.b16 %v318
    %v471 = vunpack.c.h.b16 %v318
    %v472 = vunpack.c.l.b16 %v319
    %v473 = vunpack.c.h.b16 %v319
    %v474 = vunpack.c.l.b16 %v320
    %v475 = vunpack.c.h.b16 %v320
    %v476 = vunpack.c.l.b16 %v321
    %v477 = vunpack.c.h.b16 %v321
    %v478 = vunpack.c.l.b16 %v322
    %v479 = vunpack.c.h.b16 %v322
    %v480 = vunpack.c.l.b16 %v323
    %v481 = vunpack.c.h.b16 %v323
    %v482 = vunpack.c.l.b16 %v324
    %v483 = vunpack.c.h.b16 %v324
    %v484 = vunpack.c.l.b16 %v325
    %v485 = vunpack.c.h.b16 %v325
    %v486 = vunpack.c.l.b16 %v326
    %v487 = vunpack.c.h.b16 %v326
    %v488 = vunpack.c.l.b16 %v327
    %v489 = vunpack.c.h.b16 %v327
    %v490 = vunpack.c.l.b16 %v328
    %v491 = vunpack.c.h.b16 %v328
    %v492 = vunpack.c.l.b16 %v329
    %v493 = vunpack.c.h.b16 %v329
    %v494 = vunpack.c.l.b16 %v330
    %v495 = vunpack.c.h.b16 %v330
    %v496 = vunpack.c.l.b16 %v331
    %v497 = vunpack.c.h.b16 %v331
    %v498 = vunpack.c.l.b16 %v332
    %v499 = vunpack.c.h.b16 %v332
    %v500 = vunpack.c.l.b16 %v333
    %v501 = vunpack.c.h.b16 %v333
    %v502 = vunpack.c.l.b16 %v334
    %v503 = vunpack.c.h.b16 %v334
    %v504 = vunpack.c.l.b16 %v335
    %v505 = vunpack.c.h.b16 %v335
    %v506 = vunpack.c.l.b16 %v336
    %v507 = vunpack.c.h.b16 %v336
    %v508 = vunpack.c.l.b16 %v337
    %v509 = vunpack.c.h.b16 %v337
    %v510 = vunpack.c.l.b16 %v338
    %v511 = vunpack.c.h.b16 %v338
    %v512 = vunpack.c.l.b16 %v339
    %v513 = vunpack.c.h.b16 %v339
    %v514 = vunpack.c.l.b16 %v340
    %v515 = vunpack.c.h.b16 %v340
    %v516 = vunpack.c.l.b16 %v341
    %v517 = vunpack.c.h.b16 %v341
    %v518 = vunpack.c.l.b16 %v342
    %v519 = vunpack.c.h.b16 %v342
    %v520 = vunpack.c.l.b16 %v343
    %v521 = vunpack.c.h.b16 %v343
    %v522 = vunpack.c.l.b16 %v344
    %v523 = vunpack.c.h.b16 %v344
    %v524 = vunpack.c.l.b16 %v345
    %v525 = vunpack.c.h.b16 %v345
    %v526 = vunpack.c.l.b16 %v346
    %v527 = vunpack.c.h.b16 %v346
    %v528 = vunpack.c.l.b16 %v347
    %v529 = vunpack.c.h.b16 %v347
    %v530 = vunpack.c.l.b16 %v348
    %v531 = vunpack.c.h.b16 %v348
    %v532 = vunpack.c.l.b16 %v349
    %v533 = vunpack.c.h.b16 %v349
    %v534 = vunpack.c.l.b16 %v350
    %v535 = vunpack.c.h.b16 %v350
    %v536 = vunpack.c.l.b16 %v351
    %v537 = vunpack.c.h.b16 %v351
    %v538 = vunpack.c.l.b16 %v352
    %v539 = vunpack.c.h.b16 %v352
    %v540 = vunpack.c.l.b16 %v353
    %v541 = vunpack.c.h.b16 %v353
    %v542 = vunpack.c.l.b16 %v354
    %v543 = vunpack.c.h.b16 %v354
    %v544 = vunpack.c.l.b16 %v355
    %v545 = vunpack.c.h.b16 %v355
    %v546 = vunpack.c.l.b16 %v356
    %v547 = vunpack.c.h.b16 %v356
    %v548 = vunpack.c.l.b16 %v357
    %v549 = vunpack.c.h.b16 %v357
    %v550 = vunpack.c.l.b16 %v358
    %v551 = vunpack.c.h.b16 %v358
    %v552 = vunpack.c.l.b16 %v359
    %v553 = vunpack.c.h.b16 %v359
    %v554 = vunpack.c.l.b16 %v360
    %v555 = vunpack.c.h.b16 %v360
    %v556 = vunpack.c.l.b16 %v361
    %v557 = vunpack.c.h.b16 %v361
    %v558 = vunpack.c.l.b16 %v362
    %v559 = vunpack.c.h.b16 %v362
    %v560 = vunpack.c.l.b16 %v363
    %v561 = vunpack.c.h.b16 %v363
    %v562 = vunpack.c.l.b16 %v364
    %v563 = vunpack.c.h.b16 %v364
    %v564 = vunpack.c.l.b16 %v365
    %v565 = vunpack.c.h.b16 %v365
    %v566 = vunpack.c.l.b16 %v366
    %v567 = vunpack.c.h.b16 %v366
    %v568 = vunpack.c.l.b16 %v367
    %v569 = vunpack.c.h.b16 %v367
    %v570 = vunpack.c.l.b16 %v368
    %v571 = vunpack.c.h.b16 %v368
    %v572 = vunpack.c.l.b16 %v369
    %v573 = vunpack.c.h.b16 %v369
    %v574 = vunpack.c.l.b16 %v370
    %v575 = vunpack.c.h.b16 %v370
    %v576 = vunpack.c.l.b16 %v371
    %v577 = vunpack.c.h.b16 %v371
    %v578 = vunpack.c.l.b16 %v372
    %v579 = vunpack.c.h.b16 %v372
    %v580 = vunpack.c.l.b16 %v373
    %v581 = vunpack.c.h.b16 %v373
    %v582 = vunpack.c.l.b16 %v374
    %v583 = vunpack.c.h.b16 %v374
    %v584 = vunpack.c.l.b16 %v375
    %v585 = vunpack.c.h.b16 %v375
    %v586 = vunpack.c.l.b16 %v376
    %v587 = vunpack.c.h.b16 %v376
    %v588 = vunpack.c.l.b16 %v377
    %v589 = vunpack.c.h.b16 %v377
    %v590 = vunpack.c.l.b16 %v378
    %v591 = vunpack.c.h.b16 %v378
    %v592 = vunpack.c.l.b16 %v379
    %v593 = vunpack.c.h.b16 %v379
    %v594 = vpack.c.b16 %v470, %v466
    %v595 = vpack.c.b16 %v471, %v467
    %v596 = vpack.c.b16 %v472, %v468
    %v597 = vpack.c.b16 %v473, %v469
    %v598 = vpack.c.b16 %v478, %v474
    %v599 = vpack.c.b16 %v479, %v475
    %v600 = vpack.c.b16 %v480, %v476
    %v601 = vpack.c.b16 %v481, %v477
    %v602 = vpack.c.b16 %v486, %v482
    %v603 = vpack.c.b16 %v487, %v483
    %v604 = vpack.c.b16 %v488, %v484
    %v605 = vpack.c.b16 %v489, %v485
    %v606 = vpack.c.b16 %v494, %v490
    %v607 = vpack.c.b16 %v495, %v491
    %v608 = vpack.c.b16 %v496, %v492
    %v609 = vpack.c.b16 %v497, %v493
    %v610 = vpack.c.b16 %v502, %v498
    %v611 = vpack.c.b16 %v503, %v499
    %v612 = vpack.c.b16 %v504, %v500
    %v613 = vpack.c.b16 %v505, %v501
    %v614 = vpack.c.b16 %v510, %v506
    %v615 = vpack.c.b16 %v511, %v507
    %v616 = vpack.c.b16 %v512, %v508
    %v617 = vpack.c.b16 %v513, %v509
    %v618 = vpack.c.b16 %v518, %v514
    %v619 = vpack.c.b16 %v519, %v515
    %v620 = vpack.c.b16 %v520, %v516
    %v621 = vpack.c.b16 %v521, %v517
    %v622 = vpack.c.b16 %v526, %v522
    %v623 = vpack.c.b16 %v527, %v523
    %v624 = vpack.c.b16 %v528, %v524
    %v625 = vpack.c.b16 %v529, %v525
    %v626 = vpack.c.b16 %v534, %v530
    %v627 = vpack.c.b16 %v535, %v531
    %v628 = vpack.c.b16 %v536, %v532
    %v629 = vpack.c.b16 %v537, %v533
    %v630 = vpack.c.b16 %v542, %v538
    %v631 = vpack.c.b16 %v543, %v539
    %v632 = vpack.c.b16 %v544, %v540
    %v633 = vpack.c.b16 %v545, %v541
    %v634 = vpack.c.b16 %v550, %v546
    %v635 = vpack.c.b16 %v551, %v547
    %v636 = vpack.c.b16 %v552, %v548
    %v637 = vpack.c.b16 %v553, %v549
    %v638 = vpack.c.b16 %v558, %v554
    %v639 = vpack.c.b16 %v559, %v555
    %v640 = vpack.c.b16 %v560, %v556
    %v641 = vpack.c.b16 %v561, %v557
    %v642 = vpack.c.b16 %v566, %v562
    %v643 = vpack.c.b16 %v567, %v563
    %v644 = vpack.c.b16 %v568, %v564
    %v645 = vpack.c.b16 %v569, %v565
    %v646 = vpack.c.b16 %v574, %v570
    %v647 = vpack.c.b16 %v575, %v571
    %v648 = vpack.c.b16 %v576, %v572
    %v649 = vpack.c.b16 %v577, %v573
    %v650 = vpack.c.b16 %v582, %v578
    %v651 = vpack.c.b16 %v583, %v579
    %v652 = vpack.c.b16 %v584, %v580
    %v653 = vpack.c.b16 %v585, %v581
    %v654 = vpack.c.b16 %v590, %v586
    %v655 = vpack.c.b16 %v591, %v587
    %v656 = vpack.c.b16 %v592, %v588
    %v657 = vpack.c.b16 %v593, %v589
    %722 = vmatprep.subr.bf16.mxu0 %v595
    %723 = vmatpush1.bf16.msra.mxu0 %v594
    %724 = vmatprep.subr.bf16.mxu0 %v599
    %725 = vmatpush1.bf16.msra.mxu0 %v598
    %726 = vmatprep.subr.bf16.mxu0 %v603
    %727 = vmatpush1.bf16.msra.mxu0 %v602
    %728 = vmatprep.subr.bf16.mxu0 %v607
    %729 = vmatpush1.bf16.msra.mxu0 %v606
    %730 = vmatprep.subr.bf16.mxu0 %v611
    %731 = vmatpush1.bf16.msra.mxu0 %v610
    %732 = vmatprep.subr.bf16.mxu0 %v615
    %733 = vmatpush1.bf16.msra.mxu0 %v614
    %734 = vmatprep.subr.bf16.mxu0 %v619
    %735 = vmatpush1.bf16.msra.mxu0 %v618
    %736 = vmatprep.subr.bf16.mxu0 %v623
    %737 = vmatpush1.bf16.msra.mxu0 %v622
    %738 = vmatprep.subr.bf16.mxu0 %v627
    %739 = vmatpush1.bf16.msra.mxu0 %v626
    %740 = vmatprep.subr.bf16.mxu0 %v631
    %741 = vmatpush1.bf16.msra.mxu0 %v630
    %742 = vmatprep.subr.bf16.mxu0 %v635
    %743 = vmatpush1.bf16.msra.mxu0 %v634
    %744 = vmatprep.subr.bf16.mxu0 %v639
    %745 = vmatpush1.bf16.msra.mxu0 %v638
    %746 = vmatprep.subr.bf16.mxu0 %v643
    %747 = vmatpush1.bf16.msra.mxu0 %v642
    %748 = vmatprep.subr.bf16.mxu0 %v647
    %749 = vmatpush1.bf16.msra.mxu0 %v646
    %750 = vmatprep.subr.bf16.mxu0 %v651
    %751 = vmatpush1.bf16.msra.mxu0 %v650
    %752 = vmatprep.subr.bf16.mxu0 %v655
    %753 = vmatpush1.bf16.msra.mxu0 %v654
    %754 = vmatprep.mubr.bf16.mxu0 %v315
    %755 = vmatmul.mubr.bf16.gmra.mrb[0].mxu0 %v314
    %v756 = vpop.f32.mrb[0].mxu0
    %v757 = vadd.f32 %v385, %v756
    %v758 = vpop.f32.mrb[0].mxu0
    %v759 = vadd.f32 %v389, %v758
    %v760 = vpop.f32.mrb[0].mxu0
    %v761 = vadd.f32 %v385, %v760
    %v762 = vpop.f32.mrb[0].mxu0
    %v763 = vadd.f32 %v389, %v762
    %764 = vdwg.mxu0
    %765 = vmatprep.subr.bf16.mxu0 %v597
    %766 = vmatpush1.bf16.msra.mxu0 %v596
    %767 = vmatprep.subr.bf16.mxu0 %v601
    %768 = vmatpush1.bf16.msra.mxu0 %v600
    %769 = vmatprep.subr.bf16.mxu0 %v605
    %770 = vmatpush1.bf16.msra.mxu0 %v604
    %771 = vmatprep.subr.bf16.mxu0 %v609
    %772 = vmatpush1.bf16.msra.mxu0 %v608
    %773 = vmatprep.subr.bf16.mxu0 %v613
    %774 = vmatpush1.bf16.msra.mxu0 %v612
    %775 = vmatprep.subr.bf16.mxu0 %v617
    %776 = vmatpush1.bf16.msra.mxu0 %v616
    %777 = vmatprep.subr.bf16.mxu0 %v621
    %778 = vmatpush1.bf16.msra.mxu0 %v620
    %779 = vmatprep.subr.bf16.mxu0 %v625
    %780 = vmatpush1.bf16.msra.mxu0 %v624
    %781 = vmatprep.subr.bf16.mxu0 %v629
    %782 = vmatpush1.bf16.msra.mxu0 %v628
    %783 = vmatprep.subr.bf16.mxu0 %v633
    %784 = vmatpush1.bf16.msra.mxu0 %v632
    %785 = vmatprep.subr.bf16.mxu0 %v637
    %786 = vmatpush1.bf16.msra.mxu0 %v636
    %787 = vmatprep.subr.bf16.mxu0 %v641
    %788 = vmatpush1.bf16.msra.mxu0 %v640
    %789 = vmatprep.subr.bf16.mxu0 %v645
    %790 = vmatpush1.bf16.msra.mxu0 %v644
    %791 = vmatprep.subr.bf16.mxu0 %v649
    %792 = vmatpush1.bf16.msra.mxu0 %v648
    %793 = vmatprep.subr.bf16.mxu0 %v653
    %794 = vmatpush1.bf16.msra.mxu0 %v652
    %795 = vmatprep.subr.bf16.mxu0 %v657
    %796 = vmatpush1.bf16.msra.mxu0 %v656
    %797 = vmatprep.mubr.bf16.mxu0 %v315
    %798 = vmatmul.mubr.bf16.gmra.mrb[0].mxu0 %v314
    %v799 = vpop.f32.mrb[0].mxu0
    %v800 = vadd.f32 %v393, %v799
    %v801 = vpop.f32.mrb[0].mxu0
    %v802 = vadd.f32 %v397, %v801
    %v803 = vpop.f32.mrb[0].mxu0
    %v804 = vadd.f32 %v393, %v803
    %v805 = vpop.f32.mrb[0].mxu0
    %v806 = vadd.f32 %v397, %v805
    %807 = vdwg.mxu0
    %v808 = vpack.c.bf16 %v761, %v757
    %v809 = vpack.c.bf16 %v763, %v759
    %v810 = vpack.c.bf16 %v804, %v800
    %v811 = vpack.c.bf16 %v806, %v802
    %vm812 = vcmp.gt.bf16.partialorder %v808, 0
    %vm813 = vcmp.gt.bf16.partialorder %v809, 0
    %vm814 = vcmp.gt.bf16.partialorder %v810, 0
    %vm815 = vcmp.gt.bf16.partialorder %v811, 0
    %v816 = vmul.bf16 %v808, 1045249613
    %v817 = vmul.bf16 %v809, 1045249613
    %v818 = vmul.bf16 %v810, 1045249613
    %v819 = vmul.bf16 %v811, 1045249613
    %v820 = vsel %vm812, %v808, %v816
    %v821 = vsel %vm813, %v809, %v817
    %v822 = vsel %vm814, %v810, %v818
    %v823 = vsel %vm815, %v811, %v819
    %v824 = vld [vmem:[#allocation11] sm:$0xff]
    %v825 = vld [vmem:[#allocation11 + $0x8] sm:$0xff]
    %v826 = vld [vmem:[#allocation11 + $0x10] sm:$0xff]
    %v827 = vld [vmem:[#allocation11 + $0x18] sm:$0xff]
    %v828 = vld [vmem:[#allocation11 + $0x20] sm:$0xff]
    %v829 = vld [vmem:[#allocation11 + $0x28] sm:$0xff]
    %v830 = vld [vmem:[#allocation11 + $0x30] sm:$0xff]
    %v831 = vld [vmem:[#allocation11 + $0x38] sm:$0xff]
    %v832 = vld [vmem:[#allocation11 + $0x40] sm:$0xff]
    %v833 = vld [vmem:[#allocation11 + $0x48] sm:$0xff]
    %v834 = vld [vmem:[#allocation11 + $0x50] sm:$0xff]
    %v835 = vld [vmem:[#allocation11 + $0x58] sm:$0xff]
    %v836 = vld [vmem:[#allocation11 + $0x60] sm:$0xff]
    %v837 = vld [vmem:[#allocation11 + $0x68] sm:$0xff]
    %v838 = vld [vmem:[#allocation11 + $0x70] sm:$0xff]
    %v839 = vld [vmem:[#allocation11 + $0x78] sm:$0xff]
    %v840 = vld [vmem:[#allocation11 + $0x80] sm:$0xff]
    %v841 = vld [vmem:[#allocation11 + $0x88] sm:$0xff]
    %v842 = vld [vmem:[#allocation11 + $0x90] sm:$0xff]
    %v843 = vld [vmem:[#allocation11 + $0x98] sm:$0xff]
    %v844 = vld [vmem:[#allocation11 + $0xa0] sm:$0xff]
    %v845 = vld [vmem:[#allocation11 + $0xa8] sm:$0xff]
    %v846 = vld [vmem:[#allocation11 + $0xb0] sm:$0xff]
    %v847 = vld [vmem:[#allocation11 + $0xb8] sm:$0xff]
    %v848 = vld [vmem:[#allocation11 + $0xc0] sm:$0xff]
    %v849 = vld [vmem:[#allocation11 + $0xc8] sm:$0xff]
    %v850 = vld [vmem:[#allocation11 + $0xd0] sm:$0xff]
    %v851 = vld [vmem:[#allocation11 + $0xd8] sm:$0xff]
    %v852 = vld [vmem:[#allocation11 + $0xe0] sm:$0xff]
    %v853 = vld [vmem:[#allocation11 + $0xe8] sm:$0xff]
    %v854 = vld [vmem:[#allocation11 + $0xf0] sm:$0xff]
    %v855 = vld [vmem:[#allocation11 + $0xf8] sm:$0xff]
    %v856 = vld [vmem:[#allocation11 + $0x100] sm:$0xff]
    %v857 = vld [vmem:[#allocation11 + $0x108] sm:$0xff]
    %v858 = vld [vmem:[#allocation11 + $0x110] sm:$0xff]
    %v859 = vld [vmem:[#allocation11 + $0x118] sm:$0xff]
    %v860 = vld [vmem:[#allocation11 + $0x120] sm:$0xff]
    %v861 = vld [vmem:[#allocation11 + $0x128] sm:$0xff]
    %v862 = vld [vmem:[#allocation11 + $0x130] sm:$0xff]
    %v863 = vld [vmem:[#allocation11 + $0x138] sm:$0xff]
    %v864 = vld [vmem:[#allocation11 + $0x140] sm:$0xff]
    %v865 = vld [vmem:[#allocation11 + $0x148] sm:$0xff]
    %v866 = vld [vmem:[#allocation11 + $0x150] sm:$0xff]
    %v867 = vld [vmem:[#allocation11 + $0x158] sm:$0xff]
    %v868 = vld [vmem:[#allocation11 + $0x160] sm:$0xff]
    %v869 = vld [vmem:[#allocation11 + $0x168] sm:$0xff]
    %v870 = vld [vmem:[#allocation11 + $0x170] sm:$0xff]
    %v871 = vld [vmem:[#allocation11 + $0x178] sm:$0xff]
    %v872 = vld [vmem:[#allocation11 + $0x180] sm:$0xff]
    %v873 = vld [vmem:[#allocation11 + $0x188] sm:$0xff]
    %v874 = vld [vmem:[#allocation11 + $0x190] sm:$0xff]
    %v875 = vld [vmem:[#allocation11 + $0x198] sm:$0xff]
    %v876 = vld [vmem:[#allocation11 + $0x1a0] sm:$0xff]
    %v877 = vld [vmem:[#allocation11 + $0x1a8] sm:$0xff]
    %v878 = vld [vmem:[#allocation11 + $0x1b0] sm:$0xff]
    %v879 = vld [vmem:[#allocation11 + $0x1b8] sm:$0xff]
    %v880 = vld [vmem:[#allocation11 + $0x1c0] sm:$0xff]
    %v881 = vld [vmem:[#allocation11 + $0x1c8] sm:$0xff]
    %v882 = vld [vmem:[#allocation11 + $0x1d0] sm:$0xff]
    %v883 = vld [vmem:[#allocation11 + $0x1d8] sm:$0xff]
    %v884 = vld [vmem:[#allocation11 + $0x1e0] sm:$0xff]
    %v885 = vld [vmem:[#allocation11 + $0x1e8] sm:$0xff]
    %v886 = vld [vmem:[#allocation11 + $0x1f0] sm:$0xff]
    %v887 = vld [vmem:[#allocation11 + $0x1f8] sm:$0xff]
    %v888 = vld [vmem:[#allocation11 + $0x200] sm:$0xff]
    %v889 = vld [vmem:[#allocation11 + $0x208] sm:$0xff]
    %v890 = vld [vmem:[#allocation11 + $0x210] sm:$0xff]
    %v891 = vld [vmem:[#allocation11 + $0x218] sm:$0xff]
    %v892 = vld [vmem:[#allocation11 + $0x220] sm:$0xff]
    %v893 = vld [vmem:[#allocation11 + $0x228] sm:$0xff]
    %v894 = vld [vmem:[#allocation11 + $0x230] sm:$0xff]
    %v895 = vld [vmem:[#allocation11 + $0x238] sm:$0xff]
    %v896 = vld [vmem:[#allocation11 + $0x240] sm:$0xff]
    %v897 = vld [vmem:[#allocation11 + $0x248] sm:$0xff]
    %v898 = vld [vmem:[#allocation11 + $0x250] sm:$0xff]
    %v899 = vld [vmem:[#allocation11 + $0x258] sm:$0xff]
    %v900 = vld [vmem:[#allocation11 + $0x260] sm:$0xff]
    %v901 = vld [vmem:[#allocation11 + $0x268] sm:$0xff]
    %v902 = vld [vmem:[#allocation11 + $0x270] sm:$0xff]
    %v903 = vld [vmem:[#allocation11 + $0x278] sm:$0xff]
    %v904 = vld [vmem:[#allocation11 + $0x280] sm:$0xff]
    %v905 = vld [vmem:[#allocation11 + $0x288] sm:$0xff]
    %v906 = vld [vmem:[#allocation11 + $0x290] sm:$0xff]
    %v907 = vld [vmem:[#allocation11 + $0x298] sm:$0xff]
    %v908 = vld [vmem:[#allocation11 + $0x2a0] sm:$0xff]
    %v909 = vld [vmem:[#allocation11 + $0x2a8] sm:$0xff]
    %v910 = vld [vmem:[#allocation11 + $0x2b0] sm:$0xff]
    %v911 = vld [vmem:[#allocation11 + $0x2b8] sm:$0xff]
    %v912 = vld [vmem:[#allocation11 + $0x2c0] sm:$0xff]
    %v913 = vld [vmem:[#allocation11 + $0x2c8] sm:$0xff]
    %v914 = vld [vmem:[#allocation11 + $0x2d0] sm:$0xff]
    %v915 = vld [vmem:[#allocation11 + $0x2d8] sm:$0xff]
    %v916 = vld [vmem:[#allocation11 + $0x2e0] sm:$0xff]
    %v917 = vld [vmem:[#allocation11 + $0x2e8] sm:$0xff]
    %v918 = vld [vmem:[#allocation11 + $0x2f0] sm:$0xff]
    %v919 = vld [vmem:[#allocation11 + $0x2f8] sm:$0xff]
    %v920 = vld [vmem:[#allocation11 + $0x300] sm:$0xff]
    %v921 = vld [vmem:[#allocation11 + $0x308] sm:$0xff]
    %v922 = vld [vmem:[#allocation11 + $0x310] sm:$0xff]
    %v923 = vld [vmem:[#allocation11 + $0x318] sm:$0xff]
    %v924 = vld [vmem:[#allocation11 + $0x320] sm:$0xff]
    %v925 = vld [vmem:[#allocation11 + $0x328] sm:$0xff]
    %v926 = vld [vmem:[#allocation11 + $0x330] sm:$0xff]
    %v927 = vld [vmem:[#allocation11 + $0x338] sm:$0xff]
    %v928 = vld [vmem:[#allocation11 + $0x340] sm:$0xff]
    %v929 = vld [vmem:[#allocation11 + $0x348] sm:$0xff]
    %v930 = vld [vmem:[#allocation11 + $0x350] sm:$0xff]
    %v931 = vld [vmem:[#allocation11 + $0x358] sm:$0xff]
    %v932 = vld [vmem:[#allocation11 + $0x360] sm:$0xff]
    %v933 = vld [vmem:[#allocation11 + $0x368] sm:$0xff]
    %v934 = vld [vmem:[#allocation11 + $0x370] sm:$0xff]
    %v935 = vld [vmem:[#allocation11 + $0x378] sm:$0xff]
    %v936 = vld [vmem:[#allocation11 + $0x380] sm:$0xff]
    %v937 = vld [vmem:[#allocation11 + $0x388] sm:$0xff]
    %v938 = vld [vmem:[#allocation11 + $0x390] sm:$0xff]
    %v939 = vld [vmem:[#allocation11 + $0x398] sm:$0xff]
    %v940 = vld [vmem:[#allocation11 + $0x3a0] sm:$0xff]
    %v941 = vld [vmem:[#allocation11 + $0x3a8] sm:$0xff]
    %v942 = vld [vmem:[#allocation11 + $0x3b0] sm:$0xff]
    %v943 = vld [vmem:[#allocation11 + $0x3b8] sm:$0xff]
    %v944 = vld [vmem:[#allocation11 + $0x3c0] sm:$0xff]
    %v945 = vld [vmem:[#allocation11 + $0x3c8] sm:$0xff]
    %v946 = vld [vmem:[#allocation11 + $0x3d0] sm:$0xff]
    %v947 = vld [vmem:[#allocation11 + $0x3d8] sm:$0xff]
    %v948 = vld [vmem:[#allocation11 + $0x3e0] sm:$0xff]
    %v949 = vld [vmem:[#allocation11 + $0x3e8] sm:$0xff]
    %v950 = vld [vmem:[#allocation11 + $0x3f0] sm:$0xff]
    %v951 = vld [vmem:[#allocation11 + $0x3f8] sm:$0xff]
    %v952 = vld [vmem:[#allocation11 + $0x400] sm:$0xff]
    %v953 = vld [vmem:[#allocation11 + $0x408] sm:$0xff]
    %v954 = vld [vmem:[#allocation11 + $0x410] sm:$0xff]
    %v955 = vld [vmem:[#allocation11 + $0x418] sm:$0xff]
    %v956 = vld [vmem:[#allocation11 + $0x420] sm:$0xff]
    %v957 = vld [vmem:[#allocation11 + $0x428] sm:$0xff]
    %v958 = vld [vmem:[#allocation11 + $0x430] sm:$0xff]
    %v959 = vld [vmem:[#allocation11 + $0x438] sm:$0xff]
    %v960 = vld [vmem:[#allocation11 + $0x440] sm:$0xff]
    %v961 = vld [vmem:[#allocation11 + $0x448] sm:$0xff]
    %v962 = vld [vmem:[#allocation11 + $0x450] sm:$0xff]
    %v963 = vld [vmem:[#allocation11 + $0x458] sm:$0xff]
    %v964 = vld [vmem:[#allocation11 + $0x460] sm:$0xff]
    %v965 = vld [vmem:[#allocation11 + $0x468] sm:$0xff]
    %v966 = vld [vmem:[#allocation11 + $0x470] sm:$0xff]
    %v967 = vld [vmem:[#allocation11 + $0x478] sm:$0xff]
    %v968 = vld [vmem:[#allocation11 + $0x480] sm:$0xff]
    %v969 = vld [vmem:[#allocation11 + $0x488] sm:$0xff]
    %v970 = vld [vmem:[#allocation11 + $0x490] sm:$0xff]
    %v971 = vld [vmem:[#allocation11 + $0x498] sm:$0xff]
    %v972 = vld [vmem:[#allocation11 + $0x4a0] sm:$0xff]
    %v973 = vld [vmem:[#allocation11 + $0x4a8] sm:$0xff]
    %v974 = vld [vmem:[#allocation11 + $0x4b0] sm:$0xff]
    %v975 = vld [vmem:[#allocation11 + $0x4b8] sm:$0xff]
    %v976 = vld [vmem:[#allocation11 + $0x4c0] sm:$0xff]
    %v977 = vld [vmem:[#allocation11 + $0x4c8] sm:$0xff]
    %v978 = vld [vmem:[#allocation11 + $0x4d0] sm:$0xff]
    %v979 = vld [vmem:[#allocation11 + $0x4d8] sm:$0xff]
    %v980 = vld [vmem:[#allocation11 + $0x4e0] sm:$0xff]
    %v981 = vld [vmem:[#allocation11 + $0x4e8] sm:$0xff]
    %v982 = vld [vmem:[#allocation11 + $0x4f0] sm:$0xff]
    %v983 = vld [vmem:[#allocation11 + $0x4f8] sm:$0xff]
    %v984 = vld [vmem:[#allocation11 + $0x500] sm:$0xff]
    %v985 = vld [vmem:[#allocation11 + $0x508] sm:$0xff]
    %v986 = vld [vmem:[#allocation11 + $0x510] sm:$0xff]
    %v987 = vld [vmem:[#allocation11 + $0x518] sm:$0xff]
    %v988 = vld [vmem:[#allocation11 + $0x520] sm:$0xff]
    %v989 = vld [vmem:[#allocation11 + $0x528] sm:$0xff]
    %v990 = vld [vmem:[#allocation11 + $0x530] sm:$0xff]
    %v991 = vld [vmem:[#allocation11 + $0x538] sm:$0xff]
    %v992 = vld [vmem:[#allocation11 + $0x540] sm:$0xff]
    %v993 = vld [vmem:[#allocation11 + $0x548] sm:$0xff]
    %v994 = vld [vmem:[#allocation11 + $0x550] sm:$0xff]
    %v995 = vld [vmem:[#allocation11 + $0x558] sm:$0xff]
    %v996 = vld [vmem:[#allocation11 + $0x560] sm:$0xff]
    %v997 = vld [vmem:[#allocation11 + $0x568] sm:$0xff]
    %v998 = vld [vmem:[#allocation11 + $0x570] sm:$0xff]
    %v999 = vld [vmem:[#allocation11 + $0x578] sm:$0xff]
    %v1000 = vld [vmem:[#allocation11 + $0x580] sm:$0xff]
    %v1001 = vld [vmem:[#allocation11 + $0x588] sm:$0xff]
    %v1002 = vld [vmem:[#allocation11 + $0x590] sm:$0xff]
    %v1003 = vld [vmem:[#allocation11 + $0x598] sm:$0xff]
    %v1004 = vld [vmem:[#allocation11 + $0x5a0] sm:$0xff]
    %v1005 = vld [vmem:[#allocation11 + $0x5a8] sm:$0xff]
    %v1006 = vld [vmem:[#allocation11 + $0x5b0] sm:$0xff]
    %v1007 = vld [vmem:[#allocation11 + $0x5b8] sm:$0xff]
    %v1008 = vld [vmem:[#allocation11 + $0x5c0] sm:$0xff]
    %v1009 = vld [vmem:[#allocation11 + $0x5c8] sm:$0xff]
    %v1010 = vld [vmem:[#allocation11 + $0x5d0] sm:$0xff]
    %v1011 = vld [vmem:[#allocation11 + $0x5d8] sm:$0xff]
    %v1012 = vld [vmem:[#allocation11 + $0x5e0] sm:$0xff]
    %v1013 = vld [vmem:[#allocation11 + $0x5e8] sm:$0xff]
    %v1014 = vld [vmem:[#allocation11 + $0x5f0] sm:$0xff]
    %v1015 = vld [vmem:[#allocation11 + $0x5f8] sm:$0xff]
    %v1016 = vld [vmem:[#allocation11 + $0x600] sm:$0xff]
    %v1017 = vld [vmem:[#allocation11 + $0x608] sm:$0xff]
    %v1018 = vld [vmem:[#allocation11 + $0x610] sm:$0xff]
    %v1019 = vld [vmem:[#allocation11 + $0x618] sm:$0xff]
    %v1020 = vld [vmem:[#allocation11 + $0x620] sm:$0xff]
    %v1021 = vld [vmem:[#allocation11 + $0x628] sm:$0xff]
    %v1022 = vld [vmem:[#allocation11 + $0x630] sm:$0xff]
    %v1023 = vld [vmem:[#allocation11 + $0x638] sm:$0xff]
    %v1024 = vld [vmem:[#allocation11 + $0x640] sm:$0xff]
    %v1025 = vld [vmem:[#allocation11 + $0x648] sm:$0xff]
    %v1026 = vld [vmem:[#allocation11 + $0x650] sm:$0xff]
    %v1027 = vld [vmem:[#allocation11 + $0x658] sm:$0xff]
    %v1028 = vld [vmem:[#allocation11 + $0x660] sm:$0xff]
    %v1029 = vld [vmem:[#allocation11 + $0x668] sm:$0xff]
    %v1030 = vld [vmem:[#allocation11 + $0x670] sm:$0xff]
    %v1031 = vld [vmem:[#allocation11 + $0x678] sm:$0xff]
    %v1032 = vld [vmem:[#allocation11 + $0x680] sm:$0xff]
    %v1033 = vld [vmem:[#allocation11 + $0x688] sm:$0xff]
    %v1034 = vld [vmem:[#allocation11 + $0x690] sm:$0xff]
    %v1035 = vld [vmem:[#allocation11 + $0x698] sm:$0xff]
    %v1036 = vld [vmem:[#allocation11 + $0x6a0] sm:$0xff]
    %v1037 = vld [vmem:[#allocation11 + $0x6a8] sm:$0xff]
    %v1038 = vld [vmem:[#allocation11 + $0x6b0] sm:$0xff]
    %v1039 = vld [vmem:[#allocation11 + $0x6b8] sm:$0xff]
    %v1040 = vld [vmem:[#allocation11 + $0x6c0] sm:$0xff]
    %v1041 = vld [vmem:[#allocation11 + $0x6c8] sm:$0xff]
    %v1042 = vld [vmem:[#allocation11 + $0x6d0] sm:$0xff]
    %v1043 = vld [vmem:[#allocation11 + $0x6d8] sm:$0xff]
    %v1044 = vld [vmem:[#allocation11 + $0x6e0] sm:$0xff]
    %v1045 = vld [vmem:[#allocation11 + $0x6e8] sm:$0xff]
    %v1046 = vld [vmem:[#allocation11 + $0x6f0] sm:$0xff]
    %v1047 = vld [vmem:[#allocation11 + $0x6f8] sm:$0xff]
    %v1048 = vld [vmem:[#allocation11 + $0x700] sm:$0xff]
    %v1049 = vld [vmem:[#allocation11 + $0x708] sm:$0xff]
    %v1050 = vld [vmem:[#allocation11 + $0x710] sm:$0xff]
    %v1051 = vld [vmem:[#allocation11 + $0x718] sm:$0xff]
    %v1052 = vld [vmem:[#allocation11 + $0x720] sm:$0xff]
    %v1053 = vld [vmem:[#allocation11 + $0x728] sm:$0xff]
    %v1054 = vld [vmem:[#allocation11 + $0x730] sm:$0xff]
    %v1055 = vld [vmem:[#allocation11 + $0x738] sm:$0xff]
    %v1056 = vld [vmem:[#allocation11 + $0x740] sm:$0xff]
    %v1057 = vld [vmem:[#allocation11 + $0x748] sm:$0xff]
    %v1058 = vld [vmem:[#allocation11 + $0x750] sm:$0xff]
    %v1059 = vld [vmem:[#allocation11 + $0x758] sm:$0xff]
    %v1060 = vld [vmem:[#allocation11 + $0x760] sm:$0xff]
    %v1061 = vld [vmem:[#allocation11 + $0x768] sm:$0xff]
    %v1062 = vld [vmem:[#allocation11 + $0x770] sm:$0xff]
    %v1063 = vld [vmem:[#allocation11 + $0x778] sm:$0xff]
    %v1064 = vld [vmem:[#allocation11 + $0x780] sm:$0xff]
    %v1065 = vld [vmem:[#allocation11 + $0x788] sm:$0xff]
    %v1066 = vld [vmem:[#allocation11 + $0x790] sm:$0xff]
    %v1067 = vld [vmem:[#allocation11 + $0x798] sm:$0xff]
    %v1068 = vld [vmem:[#allocation11 + $0x7a0] sm:$0xff]
    %v1069 = vld [vmem:[#allocation11 + $0x7a8] sm:$0xff]
    %v1070 = vld [vmem:[#allocation11 + $0x7b0] sm:$0xff]
    %v1071 = vld [vmem:[#allocation11 + $0x7b8] sm:$0xff]
    %v1072 = vld [vmem:[#allocation11 + $0x7c0] sm:$0xff]
    %v1073 = vld [vmem:[#allocation11 + $0x7c8] sm:$0xff]
    %v1074 = vld [vmem:[#allocation11 + $0x7d0] sm:$0xff]
    %v1075 = vld [vmem:[#allocation11 + $0x7d8] sm:$0xff]
    %v1076 = vld [vmem:[#allocation11 + $0x7e0] sm:$0xff]
    %v1077 = vld [vmem:[#allocation11 + $0x7e8] sm:$0xff]
    %v1078 = vld [vmem:[#allocation11 + $0x7f0] sm:$0xff]
    %v1079 = vld [vmem:[#allocation11 + $0x7f8] sm:$0xff]
    %v1080 = vld [vmem:[#allocation13] sm:$0xff]
    %v1082 = vlaneseq
    %v1083 = vshrl.u32 %v1082, 7
    %v1084 = vsub.s32 0, %v1083
    %v1085 = vrot.slane %v1080, %v1084
    %v1086 = vlaneseq
    %v1087 = vshrl.u32 %v1086, 7
    %v1088 = vsub.s32 1, %v1087
    %v1089 = vrot.slane %v1080, %v1088
    %v1090 = vlaneseq
    %v1091 = vshrl.u32 %v1090, 7
    %v1092 = vsub.s32 2, %v1091
    %v1093 = vrot.slane %v1080, %v1092
    %v1094 = vlaneseq
    %v1095 = vshrl.u32 %v1094, 7
    %v1096 = vsub.s32 3, %v1095
    %v1097 = vrot.slane %v1080, %v1096
    %v1098 = vlaneseq
    %v1099 = vshrl.u32 %v1098, 7
    %v1100 = vsub.s32 4, %v1099
    %v1101 = vrot.slane %v1080, %v1100
    %v1102 = vlaneseq
    %v1103 = vshrl.u32 %v1102, 7
    %v1104 = vsub.s32 5, %v1103
    %v1105 = vrot.slane %v1080, %v1104
    %v1106 = vlaneseq
    %v1107 = vshrl.u32 %v1106, 7
    %v1108 = vsub.s32 6, %v1107
    %v1109 = vrot.slane %v1080, %v1108
    %v1110 = vlaneseq
    %v1111 = vshrl.u32 %v1110, 7
    %v1112 = vsub.s32 7, %v1111
    %v1113 = vrot.slane %v1080, %v1112
    %v1378 = vunpack.c.l.b16 %v824
    %v1379 = vunpack.c.h.b16 %v824
    %v1380 = vunpack.c.l.b16 %v825
    %v1381 = vunpack.c.h.b16 %v825
    %v1382 = vunpack.c.l.b16 %v826
    %v1383 = vunpack.c.h.b16 %v826
    %v1384 = vunpack.c.l.b16 %v827
    %v1385 = vunpack.c.h.b16 %v827
    %v1386 = vunpack.c.l.b16 %v828
    %v1387 = vunpack.c.h.b16 %v828
    %v1388 = vunpack.c.l.b16 %v829
    %v1389 = vunpack.c.h.b16 %v829
    %v1390 = vunpack.c.l.b16 %v830
    %v1391 = vunpack.c.h.b16 %v830
    %v1392 = vunpack.c.l.b16 %v831
    %v1393 = vunpack.c.h.b16 %v831
    %v1394 = vunpack.c.l.b16 %v832
    %v1395 = vunpack.c.h.b16 %v832
    %v1396 = vunpack.c.l.b16 %v833
    %v1397 = vunpack.c.h.b16 %v833
    %v1398 = vunpack.c.l.b16 %v834
    %v1399 = vunpack.c.h.b16 %v834
    %v1400 = vunpack.c.l.b16 %v835
    %v1401 = vunpack.c.h.b16 %v835
    %v1402 = vunpack.c.l.b16 %v836
    %v1403 = vunpack.c.h.b16 %v836
    %v1404 = vunpack.c.l.b16 %v837
    %v1405 = vunpack.c.h.b16 %v837
    %v1406 = vunpack.c.l.b16 %v838
    %v1407 = vunpack.c.h.b16 %v838
    %v1408 = vunpack.c.l.b16 %v839
    %v1409 = vunpack.c.h.b16 %v839
    %v1410 = vunpack.c.l.b16 %v840
    %v1411 = vunpack.c.h.b16 %v840
    %v1412 = vunpack.c.l.b16 %v841
    %v1413 = vunpack.c.h.b16 %v841
    %v1414 = vunpack.c.l.b16 %v842
    %v1415 = vunpack.c.h.b16 %v842
    %v1416 = vunpack.c.l.b16 %v843
    %v1417 = vunpack.c.h.b16 %v843
    %v1418 = vunpack.c.l.b16 %v844
    %v1419 = vunpack.c.h.b16 %v844
    %v1420 = vunpack.c.l.b16 %v845
    %v1421 = vunpack.c.h.b16 %v845
    %v1422 = vunpack.c.l.b16 %v846
    %v1423 = vunpack.c.h.b16 %v846
    %v1424 = vunpack.c.l.b16 %v847
    %v1425 = vunpack.c.h.b16 %v847
    %v1426 = vunpack.c.l.b16 %v848
    %v1427 = vunpack.c.h.b16 %v848
    %v1428 = vunpack.c.l.b16 %v849
    %v1429 = vunpack.c.h.b16 %v849
    %v1430 = vunpack.c.l.b16 %v850
    %v1431 = vunpack.c.h.b16 %v850
    %v1432 = vunpack.c.l.b16 %v851
    %v1433 = vunpack.c.h.b16 %v851
    %v1434 = vunpack.c.l.b16 %v852
    %v1435 = vunpack.c.h.b16 %v852
    %v1436 = vunpack.c.l.b16 %v853
    %v1437 = vunpack.c.h.b16 %v853
    %v1438 = vunpack.c.l.b16 %v854
    %v1439 = vunpack.c.h.b16 %v854
    %v1440 = vunpack.c.l.b16 %v855
    %v1441 = vunpack.c.h.b16 %v855
    %v1442 = vunpack.c.l.b16 %v856
    %v1443 = vunpack.c.h.b16 %v856
    %v1444 = vunpack.c.l.b16 %v857
    %v1445 = vunpack.c.h.b16 %v857
    %v1446 = vunpack.c.l.b16 %v858
    %v1447 = vunpack.c.h.b16 %v858
    %v1448 = vunpack.c.l.b16 %v859
    %v1449 = vunpack.c.h.b16 %v859
    %v1450 = vunpack.c.l.b16 %v860
    %v1451 = vunpack.c.h.b16 %v860
    %v1452 = vunpack.c.l.b16 %v861
    %v1453 = vunpack.c.h.b16 %v861
    %v1454 = vunpack.c.l.b16 %v862
    %v1455 = vunpack.c.h.b16 %v862
    %v1456 = vunpack.c.l.b16 %v863
    %v1457 = vunpack.c.h.b16 %v863
    %v1458 = vunpack.c.l.b16 %v864
    %v1459 = vunpack.c.h.b16 %v864
    %v1460 = vunpack.c.l.b16 %v865
    %v1461 = vunpack.c.h.b16 %v865
    %v1462 = vunpack.c.l.b16 %v866
    %v1463 = vunpack.c.h.b16 %v866
    %v1464 = vunpack.c.l.b16 %v867
    %v1465 = vunpack.c.h.b16 %v867
    %v1466 = vunpack.c.l.b16 %v868
    %v1467 = vunpack.c.h.b16 %v868
    %v1468 = vunpack.c.l.b16 %v869
    %v1469 = vunpack.c.h.b16 %v869
    %v1470 = vunpack.c.l.b16 %v870
    %v1471 = vunpack.c.h.b16 %v870
    %v1472 = vunpack.c.l.b16 %v871
    %v1473 = vunpack.c.h.b16 %v871
    %v1474 = vunpack.c.l.b16 %v872
    %v1475 = vunpack.c.h.b16 %v872
    %v1476 = vunpack.c.l.b16 %v873
    %v1477 = vunpack.c.h.b16 %v873
    %v1478 = vunpack.c.l.b16 %v874
    %v1479 = vunpack.c.h.b16 %v874
    %v1480 = vunpack.c.l.b16 %v875
    %v1481 = vunpack.c.h.b16 %v875
    %v1482 = vunpack.c.l.b16 %v876
    %v1483 = vunpack.c.h.b16 %v876
    %v1484 = vunpack.c.l.b16 %v877
    %v1485 = vunpack.c.h.b16 %v877
    %v1486 = vunpack.c.l.b16 %v878
    %v1487 = vunpack.c.h.b16 %v878
    %v1488 = vunpack.c.l.b16 %v879
    %v1489 = vunpack.c.h.b16 %v879
    %v1490 = vunpack.c.l.b16 %v880
    %v1491 = vunpack.c.h.b16 %v880
    %v1492 = vunpack.c.l.b16 %v881
    %v1493 = vunpack.c.h.b16 %v881
    %v1494 = vunpack.c.l.b16 %v882
    %v1495 = vunpack.c.h.b16 %v882
    %v1496 = vunpack.c.l.b16 %v883
    %v1497 = vunpack.c.h.b16 %v883
    %v1498 = vunpack.c.l.b16 %v884
    %v1499 = vunpack.c.h.b16 %v884
    %v1500 = vunpack.c.l.b16 %v885
    %v1501 = vunpack.c.h.b16 %v885
    %v1502 = vunpack.c.l.b16 %v886
    %v1503 = vunpack.c.h.b16 %v886
    %v1504 = vunpack.c.l.b16 %v887
    %v1505 = vunpack.c.h.b16 %v887
    %v1506 = vunpack.c.l.b16 %v888
    %v1507 = vunpack.c.h.b16 %v888
    %v1508 = vunpack.c.l.b16 %v889
    %v1509 = vunpack.c.h.b16 %v889
    %v1510 = vunpack.c.l.b16 %v890
    %v1511 = vunpack.c.h.b16 %v890
    %v1512 = vunpack.c.l.b16 %v891
    %v1513 = vunpack.c.h.b16 %v891
    %v1514 = vunpack.c.l.b16 %v892
    %v1515 = vunpack.c.h.b16 %v892
    %v1516 = vunpack.c.l.b16 %v893
    %v1517 = vunpack.c.h.b16 %v893
    %v1518 = vunpack.c.l.b16 %v894
    %v1519 = vunpack.c.h.b16 %v894
    %v1520 = vunpack.c.l.b16 %v895
    %v1521 = vunpack.c.h.b16 %v895
    %v1522 = vunpack.c.l.b16 %v896
    %v1523 = vunpack.c.h.b16 %v896
    %v1524 = vunpack.c.l.b16 %v897
    %v1525 = vunpack.c.h.b16 %v897
    %v1526 = vunpack.c.l.b16 %v898
    %v1527 = vunpack.c.h.b16 %v898
    %v1528 = vunpack.c.l.b16 %v899
    %v1529 = vunpack.c.h.b16 %v899
    %v1530 = vunpack.c.l.b16 %v900
    %v1531 = vunpack.c.h.b16 %v900
    %v1532 = vunpack.c.l.b16 %v901
    %v1533 = vunpack.c.h.b16 %v901
    %v1534 = vunpack.c.l.b16 %v902
    %v1535 = vunpack.c.h.b16 %v902
    %v1536 = vunpack.c.l.b16 %v903
    %v1537 = vunpack.c.h.b16 %v903
    %v1538 = vunpack.c.l.b16 %v904
    %v1539 = vunpack.c.h.b16 %v904
    %v1540 = vunpack.c.l.b16 %v905
    %v1541 = vunpack.c.h.b16 %v905
    %v1542 = vunpack.c.l.b16 %v906
    %v1543 = vunpack.c.h.b16 %v906
    %v1544 = vunpack.c.l.b16 %v907
    %v1545 = vunpack.c.h.b16 %v907
    %v1546 = vunpack.c.l.b16 %v908
    %v1547 = vunpack.c.h.b16 %v908
    %v1548 = vunpack.c.l.b16 %v909
    %v1549 = vunpack.c.h.b16 %v909
    %v1550 = vunpack.c.l.b16 %v910
    %v1551 = vunpack.c.h.b16 %v910
    %v1552 = vunpack.c.l.b16 %v911
    %v1553 = vunpack.c.h.b16 %v911
    %v1554 = vunpack.c.l.b16 %v912
    %v1555 = vunpack.c.h.b16 %v912
    %v1556 = vunpack.c.l.b16 %v913
    %v1557 = vunpack.c.h.b16 %v913
    %v1558 = vunpack.c.l.b16 %v914
    %v1559 = vunpack.c.h.b16 %v914
    %v1560 = vunpack.c.l.b16 %v915
    %v1561 = vunpack.c.h.b16 %v915
    %v1562 = vunpack.c.l.b16 %v916
    %v1563 = vunpack.c.h.b16 %v916
    %v1564 = vunpack.c.l.b16 %v917
    %v1565 = vunpack.c.h.b16 %v917
    %v1566 = vunpack.c.l.b16 %v918
    %v1567 = vunpack.c.h.b16 %v918
    %v1568 = vunpack.c.l.b16 %v919
    %v1569 = vunpack.c.h.b16 %v919
    %v1570 = vunpack.c.l.b16 %v920
    %v1571 = vunpack.c.h.b16 %v920
    %v1572 = vunpack.c.l.b16 %v921
    %v1573 = vunpack.c.h.b16 %v921
    %v1574 = vunpack.c.l.b16 %v922
    %v1575 = vunpack.c.h.b16 %v922
    %v1576 = vunpack.c.l.b16 %v923
    %v1577 = vunpack.c.h.b16 %v923
    %v1578 = vunpack.c.l.b16 %v924
    %v1579 = vunpack.c.h.b16 %v924
    %v1580 = vunpack.c.l.b16 %v925
    %v1581 = vunpack.c.h.b16 %v925
    %v1582 = vunpack.c.l.b16 %v926
    %v1583 = vunpack.c.h.b16 %v926
    %v1584 = vunpack.c.l.b16 %v927
    %v1585 = vunpack.c.h.b16 %v927
    %v1586 = vunpack.c.l.b16 %v928
    %v1587 = vunpack.c.h.b16 %v928
    %v1588 = vunpack.c.l.b16 %v929
    %v1589 = vunpack.c.h.b16 %v929
    %v1590 = vunpack.c.l.b16 %v930
    %v1591 = vunpack.c.h.b16 %v930
    %v1592 = vunpack.c.l.b16 %v931
    %v1593 = vunpack.c.h.b16 %v931
    %v1594 = vunpack.c.l.b16 %v932
    %v1595 = vunpack.c.h.b16 %v932
    %v1596 = vunpack.c.l.b16 %v933
    %v1597 = vunpack.c.h.b16 %v933
    %v1598 = vunpack.c.l.b16 %v934
    %v1599 = vunpack.c.h.b16 %v934
    %v1600 = vunpack.c.l.b16 %v935
    %v1601 = vunpack.c.h.b16 %v935
    %v1602 = vunpack.c.l.b16 %v936
    %v1603 = vunpack.c.h.b16 %v936
    %v1604 = vunpack.c.l.b16 %v937
    %v1605 = vunpack.c.h.b16 %v937
    %v1606 = vunpack.c.l.b16 %v938
    %v1607 = vunpack.c.h.b16 %v938
    %v1608 = vunpack.c.l.b16 %v939
    %v1609 = vunpack.c.h.b16 %v939
    %v1610 = vunpack.c.l.b16 %v940
    %v1611 = vunpack.c.h.b16 %v940
    %v1612 = vunpack.c.l.b16 %v941
    %v1613 = vunpack.c.h.b16 %v941
    %v1614 = vunpack.c.l.b16 %v942
    %v1615 = vunpack.c.h.b16 %v942
    %v1616 = vunpack.c.l.b16 %v943
    %v1617 = vunpack.c.h.b16 %v943
    %v1618 = vunpack.c.l.b16 %v944
    %v1619 = vunpack.c.h.b16 %v944
    %v1620 = vunpack.c.l.b16 %v945
    %v1621 = vunpack.c.h.b16 %v945
    %v1622 = vunpack.c.l.b16 %v946
    %v1623 = vunpack.c.h.b16 %v946
    %v1624 = vunpack.c.l.b16 %v947
    %v1625 = vunpack.c.h.b16 %v947
    %v1626 = vunpack.c.l.b16 %v948
    %v1627 = vunpack.c.h.b16 %v948
    %v1628 = vunpack.c.l.b16 %v949
    %v1629 = vunpack.c.h.b16 %v949
    %v1630 = vunpack.c.l.b16 %v950
    %v1631 = vunpack.c.h.b16 %v950
    %v1632 = vunpack.c.l.b16 %v951
    %v1633 = vunpack.c.h.b16 %v951
    %v1634 = vunpack.c.l.b16 %v952
    %v1635 = vunpack.c.h.b16 %v952
    %v1636 = vunpack.c.l.b16 %v953
    %v1637 = vunpack.c.h.b16 %v953
    %v1638 = vunpack.c.l.b16 %v954
    %v1639 = vunpack.c.h.b16 %v954
    %v1640 = vunpack.c.l.b16 %v955
    %v1641 = vunpack.c.h.b16 %v955
    %v1642 = vunpack.c.l.b16 %v956
    %v1643 = vunpack.c.h.b16 %v956
    %v1644 = vunpack.c.l.b16 %v957
    %v1645 = vunpack.c.h.b16 %v957
    %v1646 = vunpack.c.l.b16 %v958
    %v1647 = vunpack.c.h.b16 %v958
    %v1648 = vunpack.c.l.b16 %v959
    %v1649 = vunpack.c.h.b16 %v959
    %v1650 = vunpack.c.l.b16 %v960
    %v1651 = vunpack.c.h.b16 %v960
    %v1652 = vunpack.c.l.b16 %v961
    %v1653 = vunpack.c.h.b16 %v961
    %v1654 = vunpack.c.l.b16 %v962
    %v1655 = vunpack.c.h.b16 %v962
    %v1656 = vunpack.c.l.b16 %v963
    %v1657 = vunpack.c.h.b16 %v963
    %v1658 = vunpack.c.l.b16 %v964
    %v1659 = vunpack.c.h.b16 %v964
    %v1660 = vunpack.c.l.b16 %v965
    %v1661 = vunpack.c.h.b16 %v965
    %v1662 = vunpack.c.l.b16 %v966
    %v1663 = vunpack.c.h.b16 %v966
    %v1664 = vunpack.c.l.b16 %v967
    %v1665 = vunpack.c.h.b16 %v967
    %v1666 = vunpack.c.l.b16 %v968
    %v1667 = vunpack.c.h.b16 %v968
    %v1668 = vunpack.c.l.b16 %v969
    %v1669 = vunpack.c.h.b16 %v969
    %v1670 = vunpack.c.l.b16 %v970
    %v1671 = vunpack.c.h.b16 %v970
    %v1672 = vunpack.c.l.b16 %v971
    %v1673 = vunpack.c.h.b16 %v971
    %v1674 = vunpack.c.l.b16 %v972
    %v1675 = vunpack.c.h.b16 %v972
    %v1676 = vunpack.c.l.b16 %v973
    %v1677 = vunpack.c.h.b16 %v973
    %v1678 = vunpack.c.l.b16 %v974
    %v1679 = vunpack.c.h.b16 %v974
    %v1680 = vunpack.c.l.b16 %v975
    %v1681 = vunpack.c.h.b16 %v975
    %v1682 = vunpack.c.l.b16 %v976
    %v1683 = vunpack.c.h.b16 %v976
    %v1684 = vunpack.c.l.b16 %v977
    %v1685 = vunpack.c.h.b16 %v977
    %v1686 = vunpack.c.l.b16 %v978
    %v1687 = vunpack.c.h.b16 %v978
    %v1688 = vunpack.c.l.b16 %v979
    %v1689 = vunpack.c.h.b16 %v979
    %v1690 = vunpack.c.l.b16 %v980
    %v1691 = vunpack.c.h.b16 %v980
    %v1692 = vunpack.c.l.b16 %v981
    %v1693 = vunpack.c.h.b16 %v981
    %v1694 = vunpack.c.l.b16 %v982
    %v1695 = vunpack.c.h.b16 %v982
    %v1696 = vunpack.c.l.b16 %v983
    %v1697 = vunpack.c.h.b16 %v983
    %v1698 = vunpack.c.l.b16 %v984
    %v1699 = vunpack.c.h.b16 %v984
    %v1700 = vunpack.c.l.b16 %v985
    %v1701 = vunpack.c.h.b16 %v985
    %v1702 = vunpack.c.l.b16 %v986
    %v1703 = vunpack.c.h.b16 %v986
    %v1704 = vunpack.c.l.b16 %v987
    %v1705 = vunpack.c.h.b16 %v987
    %v1706 = vunpack.c.l.b16 %v988
    %v1707 = vunpack.c.h.b16 %v988
    %v1708 = vunpack.c.l.b16 %v989
    %v1709 = vunpack.c.h.b16 %v989
    %v1710 = vunpack.c.l.b16 %v990
    %v1711 = vunpack.c.h.b16 %v990
    %v1712 = vunpack.c.l.b16 %v991
    %v1713 = vunpack.c.h.b16 %v991
    %v1714 = vunpack.c.l.b16 %v992
    %v1715 = vunpack.c.h.b16 %v992
    %v1716 = vunpack.c.l.b16 %v993
    %v1717 = vunpack.c.h.b16 %v993
    %v1718 = vunpack.c.l.b16 %v994
    %v1719 = vunpack.c.h.b16 %v994
    %v1720 = vunpack.c.l.b16 %v995
    %v1721 = vunpack.c.h.b16 %v995
    %v1722 = vunpack.c.l.b16 %v996
    %v1723 = vunpack.c.h.b16 %v996
    %v1724 = vunpack.c.l.b16 %v997
    %v1725 = vunpack.c.h.b16 %v997
    %v1726 = vunpack.c.l.b16 %v998
    %v1727 = vunpack.c.h.b16 %v998
    %v1728 = vunpack.c.l.b16 %v999
    %v1729 = vunpack.c.h.b16 %v999
    %v1730 = vunpack.c.l.b16 %v1000
    %v1731 = vunpack.c.h.b16 %v1000
    %v1732 = vunpack.c.l.b16 %v1001
    %v1733 = vunpack.c.h.b16 %v1001
    %v1734 = vunpack.c.l.b16 %v1002
    %v1735 = vunpack.c.h.b16 %v1002
    %v1736 = vunpack.c.l.b16 %v1003
    %v1737 = vunpack.c.h.b16 %v1003
    %v1738 = vunpack.c.l.b16 %v1004
    %v1739 = vunpack.c.h.b16 %v1004
    %v1740 = vunpack.c.l.b16 %v1005
    %v1741 = vunpack.c.h.b16 %v1005
    %v1742 = vunpack.c.l.b16 %v1006
    %v1743 = vunpack.c.h.b16 %v1006
    %v1744 = vunpack.c.l.b16 %v1007
    %v1745 = vunpack.c.h.b16 %v1007
    %v1746 = vunpack.c.l.b16 %v1008
    %v1747 = vunpack.c.h.b16 %v1008
    %v1748 = vunpack.c.l.b16 %v1009
    %v1749 = vunpack.c.h.b16 %v1009
    %v1750 = vunpack.c.l.b16 %v1010
    %v1751 = vunpack.c.h.b16 %v1010
    %v1752 = vunpack.c.l.b16 %v1011
    %v1753 = vunpack.c.h.b16 %v1011
    %v1754 = vunpack.c.l.b16 %v1012
    %v1755 = vunpack.c.h.b16 %v1012
    %v1756 = vunpack.c.l.b16 %v1013
    %v1757 = vunpack.c.h.b16 %v1013
    %v1758 = vunpack.c.l.b16 %v1014
    %v1759 = vunpack.c.h.b16 %v1014
    %v1760 = vunpack.c.l.b16 %v1015
    %v1761 = vunpack.c.h.b16 %v1015
    %v1762 = vunpack.c.l.b16 %v1016
    %v1763 = vunpack.c.h.b16 %v1016
    %v1764 = vunpack.c.l.b16 %v1017
    %v1765 = vunpack.c.h.b16 %v1017
    %v1766 = vunpack.c.l.b16 %v1018
    %v1767 = vunpack.c.h.b16 %v1018
    %v1768 = vunpack.c.l.b16 %v1019
    %v1769 = vunpack.c.h.b16 %v1019
    %v1770 = vunpack.c.l.b16 %v1020
    %v1771 = vunpack.c.h.b16 %v1020
    %v1772 = vunpack.c.l.b16 %v1021
    %v1773 = vunpack.c.h.b16 %v1021
    %v1774 = vunpack.c.l.b16 %v1022
    %v1775 = vunpack.c.h.b16 %v1022
    %v1776 = vunpack.c.l.b16 %v1023
    %v1777 = vunpack.c.h.b16 %v1023
    %v1778 = vunpack.c.l.b16 %v1024
    %v1779 = vunpack.c.h.b16 %v1024
    %v1780 = vunpack.c.l.b16 %v1025
    %v1781 = vunpack.c.h.b16 %v1025
    %v1782 = vunpack.c.l.b16 %v1026
    %v1783 = vunpack.c.h.b16 %v1026
    %v1784 = vunpack.c.l.b16 %v1027
    %v1785 = vunpack.c.h.b16 %v1027
    %v1786 = vunpack.c.l.b16 %v1028
    %v1787 = vunpack.c.h.b16 %v1028
    %v1788 = vunpack.c.l.b16 %v1029
    %v1789 = vunpack.c.h.b16 %v1029
    %v1790 = vunpack.c.l.b16 %v1030
    %v1791 = vunpack.c.h.b16 %v1030
    %v1792 = vunpack.c.l.b16 %v1031
    %v1793 = vunpack.c.h.b16 %v1031
    %v1794 = vunpack.c.l.b16 %v1032
    %v1795 = vunpack.c.h.b16 %v1032
    %v1796 = vunpack.c.l.b16 %v1033
    %v1797 = vunpack.c.h.b16 %v1033
    %v1798 = vunpack.c.l.b16 %v1034
    %v1799 = vunpack.c.h.b16 %v1034
    %v1800 = vunpack.c.l.b16 %v1035
    %v1801 = vunpack.c.h.b16 %v1035
    %v1802 = vunpack.c.l.b16 %v1036
    %v1803 = vunpack.c.h.b16 %v1036
    %v1804 = vunpack.c.l.b16 %v1037
    %v1805 = vunpack.c.h.b16 %v1037
    %v1806 = vunpack.c.l.b16 %v1038
    %v1807 = vunpack.c.h.b16 %v1038
    %v1808 = vunpack.c.l.b16 %v1039
    %v1809 = vunpack.c.h.b16 %v1039
    %v1810 = vunpack.c.l.b16 %v1040
    %v1811 = vunpack.c.h.b16 %v1040
    %v1812 = vunpack.c.l.b16 %v1041
    %v1813 = vunpack.c.h.b16 %v1041
    %v1814 = vunpack.c.l.b16 %v1042
    %v1815 = vunpack.c.h.b16 %v1042
    %v1816 = vunpack.c.l.b16 %v1043
    %v1817 = vunpack.c.h.b16 %v1043
    %v1818 = vunpack.c.l.b16 %v1044
    %v1819 = vunpack.c.h.b16 %v1044
    %v1820 = vunpack.c.l.b16 %v1045
    %v1821 = vunpack.c.h.b16 %v1045
    %v1822 = vunpack.c.l.b16 %v1046
    %v1823 = vunpack.c.h.b16 %v1046
    %v1824 = vunpack.c.l.b16 %v1047
    %v1825 = vunpack.c.h.b16 %v1047
    %v1826 = vunpack.c.l.b16 %v1048
    %v1827 = vunpack.c.h.b16 %v1048
    %v1828 = vunpack.c.l.b16 %v1049
    %v1829 = vunpack.c.h.b16 %v1049
    %v1830 = vunpack.c.l.b16 %v1050
    %v1831 = vunpack.c.h.b16 %v1050
    %v1832 = vunpack.c.l.b16 %v1051
    %v1833 = vunpack.c.h.b16 %v1051
    %v1834 = vunpack.c.l.b16 %v1052
    %v1835 = vunpack.c.h.b16 %v1052
    %v1836 = vunpack.c.l.b16 %v1053
    %v1837 = vunpack.c.h.b16 %v1053
    %v1838 = vunpack.c.l.b16 %v1054
    %v1839 = vunpack.c.h.b16 %v1054
    %v1840 = vunpack.c.l.b16 %v1055
    %v1841 = vunpack.c.h.b16 %v1055
    %v1842 = vunpack.c.l.b16 %v1056
    %v1843 = vunpack.c.h.b16 %v1056
    %v1844 = vunpack.c.l.b16 %v1057
    %v1845 = vunpack.c.h.b16 %v1057
    %v1846 = vunpack.c.l.b16 %v1058
    %v1847 = vunpack.c.h.b16 %v1058
    %v1848 = vunpack.c.l.b16 %v1059
    %v1849 = vunpack.c.h.b16 %v1059
    %v1850 = vunpack.c.l.b16 %v1060
    %v1851 = vunpack.c.h.b16 %v1060
    %v1852 = vunpack.c.l.b16 %v1061
    %v1853 = vunpack.c.h.b16 %v1061
    %v1854 = vunpack.c.l.b16 %v1062
    %v1855 = vunpack.c.h.b16 %v1062
    %v1856 = vunpack.c.l.b16 %v1063
    %v1857 = vunpack.c.h.b16 %v1063
    %v1858 = vunpack.c.l.b16 %v1064
    %v1859 = vunpack.c.h.b16 %v1064
    %v1860 = vunpack.c.l.b16 %v1065
    %v1861 = vunpack.c.h.b16 %v1065
    %v1862 = vunpack.c.l.b16 %v1066
    %v1863 = vunpack.c.h.b16 %v1066
    %v1864 = vunpack.c.l.b16 %v1067
    %v1865 = vunpack.c.h.b16 %v1067
    %v1866 = vunpack.c.l.b16 %v1068
    %v1867 = vunpack.c.h.b16 %v1068
    %v1868 = vunpack.c.l.b16 %v1069
    %v1869 = vunpack.c.h.b16 %v1069
    %v1870 = vunpack.c.l.b16 %v1070
    %v1871 = vunpack.c.h.b16 %v1070
    %v1872 = vunpack.c.l.b16 %v1071
    %v1873 = vunpack.c.h.b16 %v1071
    %v1874 = vunpack.c.l.b16 %v1072
    %v1875 = vunpack.c.h.b16 %v1072
    %v1876 = vunpack.c.l.b16 %v1073
    %v1877 = vunpack.c.h.b16 %v1073
    %v1878 = vunpack.c.l.b16 %v1074
    %v1879 = vunpack.c.h.b16 %v1074
    %v1880 = vunpack.c.l.b16 %v1075
    %v1881 = vunpack.c.h.b16 %v1075
    %v1882 = vunpack.c.l.b16 %v1076
    %v1883 = vunpack.c.h.b16 %v1076
    %v1884 = vunpack.c.l.b16 %v1077
    %v1885 = vunpack.c.h.b16 %v1077
    %v1886 = vunpack.c.l.b16 %v1078
    %v1887 = vunpack.c.h.b16 %v1078
    %v1888 = vunpack.c.l.b16 %v1079
    %v1889 = vunpack.c.h.b16 %v1079
    %v1890 = vpack.c.b16 %v1386, %v1378
    %v1891 = vpack.c.b16 %v1387, %v1379
    %v1892 = vpack.c.b16 %v1388, %v1380
    %v1893 = vpack.c.b16 %v1389, %v1381
    %v1894 = vpack.c.b16 %v1390, %v1382
    %v1895 = vpack.c.b16 %v1391, %v1383
    %v1896 = vpack.c.b16 %v1392, %v1384
    %v1897 = vpack.c.b16 %v1393, %v1385
    %v1898 = vpack.c.b16 %v1402, %v1394
    %v1899 = vpack.c.b16 %v1403, %v1395
    %v1900 = vpack.c.b16 %v1404, %v1396
    %v1901 = vpack.c.b16 %v1405, %v1397
    %v1902 = vpack.c.b16 %v1406, %v1398
    %v1903 = vpack.c.b16 %v1407, %v1399
    %v1904 = vpack.c.b16 %v1408, %v1400
    %v1905 = vpack.c.b16 %v1409, %v1401
    %v1906 = vpack.c.b16 %v1418, %v1410
    %v1907 = vpack.c.b16 %v1419, %v1411
    %v1908 = vpack.c.b16 %v1420, %v1412
    %v1909 = vpack.c.b16 %v1421, %v1413
    %v1910 = vpack.c.b16 %v1422, %v1414
    %v1911 = vpack.c.b16 %v1423, %v1415
    %v1912 = vpack.c.b16 %v1424, %v1416
    %v1913 = vpack.c.b16 %v1425, %v1417
    %v1914 = vpack.c.b16 %v1434, %v1426
    %v1915 = vpack.c.b16 %v1435, %v1427
    %v1916 = vpack.c.b16 %v1436, %v1428
    %v1917 = vpack.c.b16 %v1437, %v1429
    %v1918 = vpack.c.b16 %v1438, %v1430
    %v1919 = vpack.c.b16 %v1439, %v1431
    %v1920 = vpack.c.b16 %v1440, %v1432
    %v1921 = vpack.c.b16 %v1441, %v1433
    %v1922 = vpack.c.b16 %v1450, %v1442
    %v1923 = vpack.c.b16 %v1451, %v1443
    %v1924 = vpack.c.b16 %v1452, %v1444
    %v1925 = vpack.c.b16 %v1453, %v1445
    %v1926 = vpack.c.b16 %v1454, %v1446
    %v1927 = vpack.c.b16 %v1455, %v1447
    %v1928 = vpack.c.b16 %v1456, %v1448
    %v1929 = vpack.c.b16 %v1457, %v1449
    %v1930 = vpack.c.b16 %v1466, %v1458
    %v1931 = vpack.c.b16 %v1467, %v1459
    %v1932 = vpack.c.b16 %v1468, %v1460
    %v1933 = vpack.c.b16 %v1469, %v1461
    %v1934 = vpack.c.b16 %v1470, %v1462
    %v1935 = vpack.c.b16 %v1471, %v1463
    %v1936 = vpack.c.b16 %v1472, %v1464
    %v1937 = vpack.c.b16 %v1473, %v1465
    %v1938 = vpack.c.b16 %v1482, %v1474
    %v1939 = vpack.c.b16 %v1483, %v1475
    %v1940 = vpack.c.b16 %v1484, %v1476
    %v1941 = vpack.c.b16 %v1485, %v1477
    %v1942 = vpack.c.b16 %v1486, %v1478
    %v1943 = vpack.c.b16 %v1487, %v1479
    %v1944 = vpack.c.b16 %v1488, %v1480
    %v1945 = vpack.c.b16 %v1489, %v1481
    %v1946 = vpack.c.b16 %v1498, %v1490
    %v1947 = vpack.c.b16 %v1499, %v1491
    %v1948 = vpack.c.b16 %v1500, %v1492
    %v1949 = vpack.c.b16 %v1501, %v1493
    %v1950 = vpack.c.b16 %v1502, %v1494
    %v1951 = vpack.c.b16 %v1503, %v1495
    %v1952 = vpack.c.b16 %v1504, %v1496
    %v1953 = vpack.c.b16 %v1505, %v1497
    %v1954 = vpack.c.b16 %v1514, %v1506
    %v1955 = vpack.c.b16 %v1515, %v1507
    %v1956 = vpack.c.b16 %v1516, %v1508
    %v1957 = vpack.c.b16 %v1517, %v1509
    %v1958 = vpack.c.b16 %v1518, %v1510
    %v1959 = vpack.c.b16 %v1519, %v1511
    %v1960 = vpack.c.b16 %v1520, %v1512
    %v1961 = vpack.c.b16 %v1521, %v1513
    %v1962 = vpack.c.b16 %v1530, %v1522
    %v1963 = vpack.c.b16 %v1531, %v1523
    %v1964 = vpack.c.b16 %v1532, %v1524
    %v1965 = vpack.c.b16 %v1533, %v1525
    %v1966 = vpack.c.b16 %v1534, %v1526
    %v1967 = vpack.c.b16 %v1535, %v1527
    %v1968 = vpack.c.b16 %v1536, %v1528
    %v1969 = vpack.c.b16 %v1537, %v1529
    %v1970 = vpack.c.b16 %v1546, %v1538
    %v1971 = vpack.c.b16 %v1547, %v1539
    %v1972 = vpack.c.b16 %v1548, %v1540
    %v1973 = vpack.c.b16 %v1549, %v1541
    %v1974 = vpack.c.b16 %v1550, %v1542
    %v1975 = vpack.c.b16 %v1551, %v1543
    %v1976 = vpack.c.b16 %v1552, %v1544
    %v1977 = vpack.c.b16 %v1553, %v1545
    %v1978 = vpack.c.b16 %v1562, %v1554
    %v1979 = vpack.c.b16 %v1563, %v1555
    %v1980 = vpack.c.b16 %v1564, %v1556
    %v1981 = vpack.c.b16 %v1565, %v1557
    %v1982 = vpack.c.b16 %v1566, %v1558
    %v1983 = vpack.c.b16 %v1567, %v1559
    %v1984 = vpack.c.b16 %v1568, %v1560
    %v1985 = vpack.c.b16 %v1569, %v1561
    %v1986 = vpack.c.b16 %v1578, %v1570
    %v1987 = vpack.c.b16 %v1579, %v1571
    %v1988 = vpack.c.b16 %v1580, %v1572
    %v1989 = vpack.c.b16 %v1581, %v1573
    %v1990 = vpack.c.b16 %v1582, %v1574
    %v1991 = vpack.c.b16 %v1583, %v1575
    %v1992 = vpack.c.b16 %v1584, %v1576
    %v1993 = vpack.c.b16 %v1585, %v1577
    %v1994 = vpack.c.b16 %v1594, %v1586
    %v1995 = vpack.c.b16 %v1595, %v1587
    %v1996 = vpack.c.b16 %v1596, %v1588
    %v1997 = vpack.c.b16 %v1597, %v1589
    %v1998 = vpack.c.b16 %v1598, %v1590
    %v1999 = vpack.c.b16 %v1599, %v1591
    %v2000 = vpack.c.b16 %v1600, %v1592
    %v2001 = vpack.c.b16 %v1601, %v1593
    %v2002 = vpack.c.b16 %v1610, %v1602
    %v2003 = vpack.c.b16 %v1611, %v1603
    %v2004 = vpack.c.b16 %v1612, %v1604
    %v2005 = vpack.c.b16 %v1613, %v1605
    %v2006 = vpack.c.b16 %v1614, %v1606
    %v2007 = vpack.c.b16 %v1615, %v1607
    %v2008 = vpack.c.b16 %v1616, %v1608
    %v2009 = vpack.c.b16 %v1617, %v1609
    %v2010 = vpack.c.b16 %v1626, %v1618
    %v2011 = vpack.c.b16 %v1627, %v1619
    %v2012 = vpack.c.b16 %v1628, %v1620
    %v2013 = vpack.c.b16 %v1629, %v1621
    %v2014 = vpack.c.b16 %v1630, %v1622
    %v2015 = vpack.c.b16 %v1631, %v1623
    %v2016 = vpack.c.b16 %v1632, %v1624
    %v2017 = vpack.c.b16 %v1633, %v1625
    %v2018 = vpack.c.b16 %v1642, %v1634
    %v2019 = vpack.c.b16 %v1643, %v1635
    %v2020 = vpack.c.b16 %v1644, %v1636
    %v2021 = vpack.c.b16 %v1645, %v1637
    %v2022 = vpack.c.b16 %v1646, %v1638
    %v2023 = vpack.c.b16 %v1647, %v1639
    %v2024 = vpack.c.b16 %v1648, %v1640
    %v2025 = vpack.c.b16 %v1649, %v1641
    %v2026 = vpack.c.b16 %v1658, %v1650
    %v2027 = vpack.c.b16 %v1659, %v1651
    %v2028 = vpack.c.b16 %v1660, %v1652
    %v2029 = vpack.c.b16 %v1661, %v1653
    %v2030 = vpack.c.b16 %v1662, %v1654
    %v2031 = vpack.c.b16 %v1663, %v1655
    %v2032 = vpack.c.b16 %v1664, %v1656
    %v2033 = vpack.c.b16 %v1665, %v1657
    %v2034 = vpack.c.b16 %v1674, %v1666
    %v2035 = vpack.c.b16 %v1675, %v1667
    %v2036 = vpack.c.b16 %v1676, %v1668
    %v2037 = vpack.c.b16 %v1677, %v1669
    %v2038 = vpack.c.b16 %v1678, %v1670
    %v2039 = vpack.c.b16 %v1679, %v1671
    %v2040 = vpack.c.b16 %v1680, %v1672
    %v2041 = vpack.c.b16 %v1681, %v1673
    %v2042 = vpack.c.b16 %v1690, %v1682
    %v2043 = vpack.c.b16 %v1691, %v1683
    %v2044 = vpack.c.b16 %v1692, %v1684
    %v2045 = vpack.c.b16 %v1693, %v1685
    %v2046 = vpack.c.b16 %v1694, %v1686
    %v2047 = vpack.c.b16 %v1695, %v1687
    %v2048 = vpack.c.b16 %v1696, %v1688
    %v2049 = vpack.c.b16 %v1697, %v1689
    %v2050 = vpack.c.b16 %v1706, %v1698
    %v2051 = vpack.c.b16 %v1707, %v1699
    %v2052 = vpack.c.b16 %v1708, %v1700
    %v2053 = vpack.c.b16 %v1709, %v1701
    %v2054 = vpack.c.b16 %v1710, %v1702
    %v2055 = vpack.c.b16 %v1711, %v1703
    %v2056 = vpack.c.b16 %v1712, %v1704
    %v2057 = vpack.c.b16 %v1713, %v1705
    %v2058 = vpack.c.b16 %v1722, %v1714
    %v2059 = vpack.c.b16 %v1723, %v1715
    %v2060 = vpack.c.b16 %v1724, %v1716
    %v2061 = vpack.c.b16 %v1725, %v1717
    %v2062 = vpack.c.b16 %v1726, %v1718
    %v2063 = vpack.c.b16 %v1727, %v1719
    %v2064 = vpack.c.b16 %v1728, %v1720
    %v2065 = vpack.c.b16 %v1729, %v1721
    %v2066 = vpack.c.b16 %v1738, %v1730
    %v2067 = vpack.c.b16 %v1739, %v1731
    %v2068 = vpack.c.b16 %v1740, %v1732
    %v2069 = vpack.c.b16 %v1741, %v1733
    %v2070 = vpack.c.b16 %v1742, %v1734
    %v2071 = vpack.c.b16 %v1743, %v1735
    %v2072 = vpack.c.b16 %v1744, %v1736
    %v2073 = vpack.c.b16 %v1745, %v1737
    %v2074 = vpack.c.b16 %v1754, %v1746
    %v2075 = vpack.c.b16 %v1755, %v1747
    %v2076 = vpack.c.b16 %v1756, %v1748
    %v2077 = vpack.c.b16 %v1757, %v1749
    %v2078 = vpack.c.b16 %v1758, %v1750
    %v2079 = vpack.c.b16 %v1759, %v1751
    %v2080 = vpack.c.b16 %v1760, %v1752
    %v2081 = vpack.c.b16 %v1761, %v1753
    %v2082 = vpack.c.b16 %v1770, %v1762
    %v2083 = vpack.c.b16 %v1771, %v1763
    %v2084 = vpack.c.b16 %v1772, %v1764
    %v2085 = vpack.c.b16 %v1773, %v1765
    %v2086 = vpack.c.b16 %v1774, %v1766
    %v2087 = vpack.c.b16 %v1775, %v1767
    %v2088 = vpack.c.b16 %v1776, %v1768
    %v2089 = vpack.c.b16 %v1777, %v1769
    %v2090 = vpack.c.b16 %v1786, %v1778
    %v2091 = vpack.c.b16 %v1787, %v1779
    %v2092 = vpack.c.b16 %v1788, %v1780
    %v2093 = vpack.c.b16 %v1789, %v1781
    %v2094 = vpack.c.b16 %v1790, %v1782
    %v2095 = vpack.c.b16 %v1791, %v1783
    %v2096 = vpack.c.b16 %v1792, %v1784
    %v2097 = vpack.c.b16 %v1793, %v1785
    %v2098 = vpack.c.b16 %v1802, %v1794
    %v2099 = vpack.c.b16 %v1803, %v1795
    %v2100 = vpack.c.b16 %v1804, %v1796
    %v2101 = vpack.c.b16 %v1805, %v1797
    %v2102 = vpack.c.b16 %v1806, %v1798
    %v2103 = vpack.c.b16 %v1807, %v1799
    %v2104 = vpack.c.b16 %v1808, %v1800
    %v2105 = vpack.c.b16 %v1809, %v1801
    %v2106 = vpack.c.b16 %v1818, %v1810
    %v2107 = vpack.c.b16 %v1819, %v1811
    %v2108 = vpack.c.b16 %v1820, %v1812
    %v2109 = vpack.c.b16 %v1821, %v1813
    %v2110 = vpack.c.b16 %v1822, %v1814
    %v2111 = vpack.c.b16 %v1823, %v1815
    %v2112 = vpack.c.b16 %v1824, %v1816
    %v2113 = vpack.c.b16 %v1825, %v1817
    %v2114 = vpack.c.b16 %v1834, %v1826
    %v2115 = vpack.c.b16 %v1835, %v1827
    %v2116 = vpack.c.b16 %v1836, %v1828
    %v2117 = vpack.c.b16 %v1837, %v1829
    %v2118 = vpack.c.b16 %v1838, %v1830
    %v2119 = vpack.c.b16 %v1839, %v1831
    %v2120 = vpack.c.b16 %v1840, %v1832
    %v2121 = vpack.c.b16 %v1841, %v1833
    %v2122 = vpack.c.b16 %v1850, %v1842
    %v2123 = vpack.c.b16 %v1851, %v1843
    %v2124 = vpack.c.b16 %v1852, %v1844
    %v2125 = vpack.c.b16 %v1853, %v1845
    %v2126 = vpack.c.b16 %v1854, %v1846
    %v2127 = vpack.c.b16 %v1855, %v1847
    %v2128 = vpack.c.b16 %v1856, %v1848
    %v2129 = vpack.c.b16 %v1857, %v1849
    %v2130 = vpack.c.b16 %v1866, %v1858
    %v2131 = vpack.c.b16 %v1867, %v1859
    %v2132 = vpack.c.b16 %v1868, %v1860
    %v2133 = vpack.c.b16 %v1869, %v1861
    %v2134 = vpack.c.b16 %v1870, %v1862
    %v2135 = vpack.c.b16 %v1871, %v1863
    %v2136 = vpack.c.b16 %v1872, %v1864
    %v2137 = vpack.c.b16 %v1873, %v1865
    %v2138 = vpack.c.b16 %v1882, %v1874
    %v2139 = vpack.c.b16 %v1883, %v1875
    %v2140 = vpack.c.b16 %v1884, %v1876
    %v2141 = vpack.c.b16 %v1885, %v1877
    %v2142 = vpack.c.b16 %v1886, %v1878
    %v2143 = vpack.c.b16 %v1887, %v1879
    %v2144 = vpack.c.b16 %v1888, %v1880
    %v2145 = vpack.c.b16 %v1889, %v1881
    %2402 = vmatprep.subr.bf16.mxu0 %v1891
    %2403 = vmatpush1.bf16.msra.mxu0 %v1890
    %2404 = vmatprep.subr.bf16.mxu0 %v1899
    %2405 = vmatpush1.bf16.msra.mxu0 %v1898
    %2406 = vmatprep.subr.bf16.mxu0 %v1907
    %2407 = vmatpush1.bf16.msra.mxu0 %v1906
    %2408 = vmatprep.subr.bf16.mxu0 %v1915
    %2409 = vmatpush1.bf16.msra.mxu0 %v1914
    %2410 = vmatprep.subr.bf16.mxu0 %v1923
    %2411 = vmatpush1.bf16.msra.mxu0 %v1922
    %2412 = vmatprep.subr.bf16.mxu0 %v1931
    %2413 = vmatpush1.bf16.msra.mxu0 %v1930
    %2414 = vmatprep.subr.bf16.mxu0 %v1939
    %2415 = vmatpush1.bf16.msra.mxu0 %v1938
    %2416 = vmatprep.subr.bf16.mxu0 %v1947
    %2417 = vmatpush1.bf16.msra.mxu0 %v1946
    %2418 = vmatprep.subr.bf16.mxu0 %v1955
    %2419 = vmatpush1.bf16.msra.mxu0 %v1954
    %2420 = vmatprep.subr.bf16.mxu0 %v1963
    %2421 = vmatpush1.bf16.msra.mxu0 %v1962
    %2422 = vmatprep.subr.bf16.mxu0 %v1971
    %2423 = vmatpush1.bf16.msra.mxu0 %v1970
    %2424 = vmatprep.subr.bf16.mxu0 %v1979
    %2425 = vmatpush1.bf16.msra.mxu0 %v1978
    %2426 = vmatprep.subr.bf16.mxu0 %v1987
    %2427 = vmatpush1.bf16.msra.mxu0 %v1986
    %2428 = vmatprep.subr.bf16.mxu0 %v1995
    %2429 = vmatpush1.bf16.msra.mxu0 %v1994
    %2430 = vmatprep.subr.bf16.mxu0 %v2003
    %2431 = vmatpush1.bf16.msra.mxu0 %v2002
    %2432 = vmatprep.subr.bf16.mxu0 %v2011
    %2433 = vmatpush1.bf16.msra.mxu0 %v2010
    %2434 = vmatprep.mubr.bf16.mxu0 %v821
    %2435 = vmatmul.mubr.bf16.gmra.mrb[0].mxu0 %v820
    %v2436 = vpop.f32.mrb[0].mxu0
    %v2437 = vadd.f32 %v1085, %v2436
    %v2438 = vpop.f32.mrb[0].mxu0
    %v2439 = vadd.f32 %v1089, %v2438
    %v2440 = vpop.f32.mrb[0].mxu0
    %v2441 = vadd.f32 %v1085, %v2440
    %v2442 = vpop.f32.mrb[0].mxu0
    %v2443 = vadd.f32 %v1089, %v2442
    %2444 = vdwg.mxu0
    %2445 = vmatprep.subr.bf16.mxu0 %v2019
    %2446 = vmatpush1.bf16.msra.mxu0 %v2018
    %2447 = vmatprep.subr.bf16.mxu0 %v2027
    %2448 = vmatpush1.bf16.msra.mxu0 %v2026
    %2449 = vmatprep.subr.bf16.mxu0 %v2035
    %2450 = vmatpush1.bf16.msra.mxu0 %v2034
    %2451 = vmatprep.subr.bf16.mxu0 %v2043
    %2452 = vmatpush1.bf16.msra.mxu0 %v2042
    %2453 = vmatprep.subr.bf16.mxu0 %v2051
    %2454 = vmatpush1.bf16.msra.mxu0 %v2050
    %2455 = vmatprep.subr.bf16.mxu0 %v2059
    %2456 = vmatpush1.bf16.msra.mxu0 %v2058
    %2457 = vmatprep.subr.bf16.mxu0 %v2067
    %2458 = vmatpush1.bf16.msra.mxu0 %v2066
    %2459 = vmatprep.subr.bf16.mxu0 %v2075
    %2460 = vmatpush1.bf16.msra.mxu0 %v2074
    %2461 = vmatprep.subr.bf16.mxu0 %v2083
    %2462 = vmatpush1.bf16.msra.mxu0 %v2082
    %2463 = vmatprep.subr.bf16.mxu0 %v2091
    %2464 = vmatpush1.bf16.msra.mxu0 %v2090
    %2465 = vmatprep.subr.bf16.mxu0 %v2099
    %2466 = vmatpush1.bf16.msra.mxu0 %v2098
    %2467 = vmatprep.subr.bf16.mxu0 %v2107
    %2468 = vmatpush1.bf16.msra.mxu0 %v2106
    %2469 = vmatprep.subr.bf16.mxu0 %v2115
    %2470 = vmatpush1.bf16.msra.mxu0 %v2114
    %2471 = vmatprep.subr.bf16.mxu0 %v2123
    %2472 = vmatpush1.bf16.msra.mxu0 %v2122
    %2473 = vmatprep.subr.bf16.mxu0 %v2131
    %2474 = vmatpush1.bf16.msra.mxu0 %v2130
    %2475 = vmatprep.subr.bf16.mxu0 %v2139
    %2476 = vmatpush1.bf16.msra.mxu0 %v2138
    %2477 = vmatprep.mubr.bf16.mxu0 %v823
    %2478 = vmatmul.mubr.bf16.gmra.mrb[0].mxu0 %v822
    %v2479 = vpop.f32.mrb[0].mxu0
    %v2480 = vadd.f32 %v2437, %v2479
    %v2481 = vpop.f32.mrb[0].mxu0
    %v2482 = vadd.f32 %v2439, %v2481
    %v2483 = vpop.f32.mrb[0].mxu0
    %v2484 = vadd.f32 %v2441, %v2483
    %v2485 = vpop.f32.mrb[0].mxu0
    %v2486 = vadd.f32 %v2443, %v2485
    %2487 = vdwg.mxu0
    %2488 = vmatprep.subr.bf16.mxu0 %v1893
    %2489 = vmatpush1.bf16.msra.mxu0 %v1892
    %2490 = vmatprep.subr.bf16.mxu0 %v1901
    %2491 = vmatpush1.bf16.msra.mxu0 %v1900
    %2492 = vmatprep.subr.bf16.mxu0 %v1909
    %2493 = vmatpush1.bf16.msra.mxu0 %v1908
    %2494 = vmatprep.subr.bf16.mxu0 %v1917
    %2495 = vmatpush1.bf16.msra.mxu0 %v1916
    %2496 = vmatprep.subr.bf16.mxu0 %v1925
    %2497 = vmatpush1.bf16.msra.mxu0 %v1924
    %2498 = vmatprep.subr.bf16.mxu0 %v1933
    %2499 = vmatpush1.bf16.msra.mxu0 %v1932
    %2500 = vmatprep.subr.bf16.mxu0 %v1941
    %2501 = vmatpush1.bf16.msra.mxu0 %v1940
    %2502 = vmatprep.subr.bf16.mxu0 %v1949
    %2503 = vmatpush1.bf16.msra.mxu0 %v1948
    %2504 = vmatprep.subr.bf16.mxu0 %v1957
    %2505 = vmatpush1.bf16.msra.mxu0 %v1956
    %2506 = vmatprep.subr.bf16.mxu0 %v1965
    %2507 = vmatpush1.bf16.msra.mxu0 %v1964
    %2508 = vmatprep.subr.bf16.mxu0 %v1973
    %2509 = vmatpush1.bf16.msra.mxu0 %v1972
    %2510 = vmatprep.subr.bf16.mxu0 %v1981
    %2511 = vmatpush1.bf16.msra.mxu0 %v1980
    %2512 = vmatprep.subr.bf16.mxu0 %v1989
    %2513 = vmatpush1.bf16.msra.mxu0 %v1988
    %2514 = vmatprep.subr.bf16.mxu0 %v1997
    %2515 = vmatpush1.bf16.msra.mxu0 %v1996
    %2516 = vmatprep.subr.bf16.mxu0 %v2005
    %2517 = vmatpush1.bf16.msra.mxu0 %v2004
    %2518 = vmatprep.subr.bf16.mxu0 %v2013
    %2519 = vmatpush1.bf16.msra.mxu0 %v2012
    %2520 = vmatprep.mubr.bf16.mxu0 %v821
    %2521 = vmatmul.mubr.bf16.gmra.mrb[0].mxu0 %v820
    %v2522 = vpop.f32.mrb[0].mxu0
    %v2523 = vadd.f32 %v1093, %v2522
    %v2524 = vpop.f32.mrb[0].mxu0
    %v2525 = vadd.f32 %v1097, %v2524
    %v2526 = vpop.f32.mrb[0].mxu0
    %v2527 = vadd.f32 %v1093, %v2526
    %v2528 = vpop.f32.mrb[0].mxu0
    %v2529 = vadd.f32 %v1097, %v2528
    %2530 = vdwg.mxu0
    %2531 = vmatprep.subr.bf16.mxu0 %v2021
    %2532 = vmatpush1.bf16.msra.mxu0 %v2020
    %2533 = vmatprep.subr.bf16.mxu0 %v2029
    %2534 = vmatpush1.bf16.msra.mxu0 %v2028
    %2535 = vmatprep.subr.bf16.mxu0 %v2037
    %2536 = vmatpush1.bf16.msra.mxu0 %v2036
    %2537 = vmatprep.subr.bf16.mxu0 %v2045
    %2538 = vmatpush1.bf16.msra.mxu0 %v2044
    %2539 = vmatprep.subr.bf16.mxu0 %v2053
    %2540 = vmatpush1.bf16.msra.mxu0 %v2052
    %2541 = vmatprep.subr.bf16.mxu0 %v2061
    %2542 = vmatpush1.bf16.msra.mxu0 %v2060
    %2543 = vmatprep.subr.bf16.mxu0 %v2069
    %2544 = vmatpush1.bf16.msra.mxu0 %v2068
    %2545 = vmatprep.subr.bf16.mxu0 %v2077
    %2546 = vmatpush1.bf16.msra.mxu0 %v2076
    %2547 = vmatprep.subr.bf16.mxu0 %v2085
    %2548 = vmatpush1.bf16.msra.mxu0 %v2084
    %2549 = vmatprep.subr.bf16.mxu0 %v2093
    %2550 = vmatpush1.bf16.msra.mxu0 %v2092
    %2551 = vmatprep.subr.bf16.mxu0 %v2101
    %2552 = vmatpush1.bf16.msra.mxu0 %v2100
    %2553 = vmatprep.subr.bf16.mxu0 %v2109
    %2554 = vmatpush1.bf16.msra.mxu0 %v2108
    %2555 = vmatprep.subr.bf16.mxu0 %v2117
    %2556 = vmatpush1.bf16.msra.mxu0 %v2116
    %2557 = vmatprep.subr.bf16.mxu0 %v2125
    %2558 = vmatpush1.bf16.msra.mxu0 %v2124
    %2559 = vmatprep.subr.bf16.mxu0 %v2133
    %2560 = vmatpush1.bf16.msra.mxu0 %v2132
    %2561 = vmatprep.subr.bf16.mxu0 %v2141
    %2562 = vmatpush1.bf16.msra.mxu0 %v2140
    %2563 = vmatprep.mubr.bf16.mxu0 %v823
    %2564 = vmatmul.mubr.bf16.gmra.mrb[0].mxu0 %v822
    %v2565 = vpop.f32.mrb[0].mxu0
    %v2566 = vadd.f32 %v2523, %v2565
    %v2567 = vpop.f32.mrb[0].mxu0
    %v2568 = vadd.f32 %v2525, %v2567
    %v2569 = vpop.f32.mrb[0].mxu0
    %v2570 = vadd.f32 %v2527, %v2569
    %v2571 = vpop.f32.mrb[0].mxu0
    %v2572 = vadd.f32 %v2529, %v2571
    %2573 = vdwg.mxu0
    %2574 = vmatprep.subr.bf16.mxu0 %v1895
    %2575 = vmatpush1.bf16.msra.mxu0 %v1894
    %2576 = vmatprep.subr.bf16.mxu0 %v1903
    %2577 = vmatpush1.bf16.msra.mxu0 %v1902
    %2578 = vmatprep.subr.bf16.mxu0 %v1911
    %2579 = vmatpush1.bf16.msra.mxu0 %v1910
    %2580 = vmatprep.subr.bf16.mxu0 %v1919
    %2581 = vmatpush1.bf16.msra.mxu0 %v1918
    %2582 = vmatprep.subr.bf16.mxu0 %v1927
    %2583 = vmatpush1.bf16.msra.mxu0 %v1926
    %2584 = vmatprep.subr.bf16.mxu0 %v1935
    %2585 = vmatpush1.bf16.msra.mxu0 %v1934
    %2586 = vmatprep.subr.bf16.mxu0 %v1943
    %2587 = vmatpush1.bf16.msra.mxu0 %v1942
    %2588 = vmatprep.subr.bf16.mxu0 %v1951
    %2589 = vmatpush1.bf16.msra.mxu0 %v1950
    %2590 = vmatprep.subr.bf16.mxu0 %v1959
    %2591 = vmatpush1.bf16.msra.mxu0 %v1958
    %2592 = vmatprep.subr.bf16.mxu0 %v1967
    %2593 = vmatpush1.bf16.msra.mxu0 %v1966
    %2594 = vmatprep.subr.bf16.mxu0 %v1975
    %2595 = vmatpush1.bf16.msra.mxu0 %v1974
    %2596 = vmatprep.subr.bf16.mxu0 %v1983
    %2597 = vmatpush1.bf16.msra.mxu0 %v1982
    %2598 = vmatprep.subr.bf16.mxu0 %v1991
    %2599 = vmatpush1.bf16.msra.mxu0 %v1990
    %2600 = vmatprep.subr.bf16.mxu0 %v1999
    %2601 = vmatpush1.bf16.msra.mxu0 %v1998
    %2602 = vmatprep.subr.bf16.mxu0 %v2007
    %2603 = vmatpush1.bf16.msra.mxu0 %v2006
    %2604 = vmatprep.subr.bf16.mxu0 %v2015
    %2605 = vmatpush1.bf16.msra.mxu0 %v2014
    %2606 = vmatprep.mubr.bf16.mxu0 %v821
    %2607 = vmatmul.mubr.bf16.gmra.mrb[0].mxu0 %v820
    %v2608 = vpop.f32.mrb[0].mxu0
    %v2609 = vadd.f32 %v1101, %v2608
    %v2610 = vpop.f32.mrb[0].mxu0
    %v2611 = vadd.f32 %v1105, %v2610
    %v2612 = vpop.f32.mrb[0].mxu0
    %v2613 = vadd.f32 %v1101, %v2612
    %v2614 = vpop.f32.mrb[0].mxu0
    %v2615 = vadd.f32 %v1105, %v2614
    %2616 = vdwg.mxu0
    %2617 = vmatprep.subr.bf16.mxu0 %v2023
    %2618 = vmatpush1.bf16.msra.mxu0 %v2022
    %2619 = vmatprep.subr.bf16.mxu0 %v2031
    %2620 = vmatpush1.bf16.msra.mxu0 %v2030
    %2621 = vmatprep.subr.bf16.mxu0 %v2039
    %2622 = vmatpush1.bf16.msra.mxu0 %v2038
    %2623 = vmatprep.subr.bf16.mxu0 %v2047
    %2624 = vmatpush1.bf16.msra.mxu0 %v2046
    %2625 = vmatprep.subr.bf16.mxu0 %v2055
    %2626 = vmatpush1.bf16.msra.mxu0 %v2054
    %2627 = vmatprep.subr.bf16.mxu0 %v2063
    %2628 = vmatpush1.bf16.msra.mxu0 %v2062
    %2629 = vmatprep.subr.bf16.mxu0 %v2071
    %2630 = vmatpush1.bf16.msra.mxu0 %v2070
    %2631 = vmatprep.subr.bf16.mxu0 %v2079
    %2632 = vmatpush1.bf16.msra.mxu0 %v2078
    %2633 = vmatprep.subr.bf16.mxu0 %v2087
    %2634 = vmatpush1.bf16.msra.mxu0 %v2086
    %2635 = vmatprep.subr.bf16.mxu0 %v2095
    %2636 = vmatpush1.bf16.msra.mxu0 %v2094
    %2637 = vmatprep.subr.bf16.mxu0 %v2103
    %2638 = vmatpush1.bf16.msra.mxu0 %v2102
    %2639 = vmatprep.subr.bf16.mxu0 %v2111
    %2640 = vmatpush1.bf16.msra.mxu0 %v2110
    %2641 = vmatprep.subr.bf16.mxu0 %v2119
    %2642 = vmatpush1.bf16.msra.mxu0 %v2118
    %2643 = vmatprep.subr.bf16.mxu0 %v2127
    %2644 = vmatpush1.bf16.msra.mxu0 %v2126
    %2645 = vmatprep.subr.bf16.mxu0 %v2135
    %2646 = vmatpush1.bf16.msra.mxu0 %v2134
    %2647 = vmatprep.subr.bf16.mxu0 %v2143
    %2648 = vmatpush1.bf16.msra.mxu0 %v2142
    %2649 = vmatprep.mubr.bf16.mxu0 %v823
    %2650 = vmatmul.mubr.bf16.gmra.mrb[0].mxu0 %v822
    %v2651 = vpop.f32.mrb[0].mxu0
    %v2652 = vadd.f32 %v2609, %v2651
    %v2653 = vpop.f32.mrb[0].mxu0
    %v2654 = vadd.f32 %v2611, %v2653
    %v2655 = vpop.f32.mrb[0].mxu0
    %v2656 = vadd.f32 %v2613, %v2655
    %v2657 = vpop.f32.mrb[0].mxu0
    %v2658 = vadd.f32 %v2615, %v2657
    %2659 = vdwg.mxu0
    %2660 = vmatprep.subr.bf16.mxu0 %v1897
    %2661 = vmatpush1.bf16.msra.mxu0 %v1896
    %2662 = vmatprep.subr.bf16.mxu0 %v1905
    %2663 = vmatpush1.bf16.msra.mxu0 %v1904
    %2664 = vmatprep.subr.bf16.mxu0 %v1913
    %2665 = vmatpush1.bf16.msra.mxu0 %v1912
    %2666 = vmatprep.subr.bf16.mxu0 %v1921
    %2667 = vmatpush1.bf16.msra.mxu0 %v1920
    %2668 = vmatprep.subr.bf16.mxu0 %v1929
    %2669 = vmatpush1.bf16.msra.mxu0 %v1928
    %2670 = vmatprep.subr.bf16.mxu0 %v1937
    %2671 = vmatpush1.bf16.msra.mxu0 %v1936
    %2672 = vmatprep.subr.bf16.mxu0 %v1945
    %2673 = vmatpush1.bf16.msra.mxu0 %v1944
    %2674 = vmatprep.subr.bf16.mxu0 %v1953
    %2675 = vmatpush1.bf16.msra.mxu0 %v1952
    %2676 = vmatprep.subr.bf16.mxu0 %v1961
    %2677 = vmatpush1.bf16.msra.mxu0 %v1960
    %2678 = vmatprep.subr.bf16.mxu0 %v1969
    %2679 = vmatpush1.bf16.msra.mxu0 %v1968
    %2680 = vmatprep.subr.bf16.mxu0 %v1977
    %2681 = vmatpush1.bf16.msra.mxu0 %v1976
    %2682 = vmatprep.subr.bf16.mxu0 %v1985
    %2683 = vmatpush1.bf16.msra.mxu0 %v1984
    %2684 = vmatprep.subr.bf16.mxu0 %v1993
    %2685 = vmatpush1.bf16.msra.mxu0 %v1992
    %2686 = vmatprep.subr.bf16.mxu0 %v2001
    %2687 = vmatpush1.bf16.msra.mxu0 %v2000
    %2688 = vmatprep.subr.bf16.mxu0 %v2009
    %2689 = vmatpush1.bf16.msra.mxu0 %v2008
    %2690 = vmatprep.subr.bf16.mxu0 %v2017
    %2691 = vmatpush1.bf16.msra.mxu0 %v2016
    %2692 = vmatprep.mubr.bf16.mxu0 %v821
    %2693 = vmatmul.mubr.bf16.gmra.mrb[0].mxu0 %v820
    %v2694 = vpop.f32.mrb[0].mxu0
    %v2695 = vadd.f32 %v1109, %v2694
    %v2696 = vpop.f32.mrb[0].mxu0
    %v2697 = vadd.f32 %v1113, %v2696
    %v2698 = vpop.f32.mrb[0].mxu0
    %v2699 = vadd.f32 %v1109, %v2698
    %v2700 = vpop.f32.mrb[0].mxu0
    %v2701 = vadd.f32 %v1113, %v2700
    %2702 = vdwg.mxu0
    %2703 = vmatprep.subr.bf16.mxu0 %v2025
    %2704 = vmatpush1.bf16.msra.mxu0 %v2024
    %2705 = vmatprep.subr.bf16.mxu0 %v2033
    %2706 = vmatpush1.bf16.msra.mxu0 %v2032
    %2707 = vmatprep.subr.bf16.mxu0 %v2041
    %2708 = vmatpush1.bf16.msra.mxu0 %v2040
    %2709 = vmatprep.subr.bf16.mxu0 %v2049
    %2710 = vmatpush1.bf16.msra.mxu0 %v2048
    %2711 = vmatprep.subr.bf16.mxu0 %v2057
    %2712 = vmatpush1.bf16.msra.mxu0 %v2056
    %2713 = vmatprep.subr.bf16.mxu0 %v2065
    %2714 = vmatpush1.bf16.msra.mxu0 %v2064
    %2715 = vmatprep.subr.bf16.mxu0 %v2073
    %2716 = vmatpush1.bf16.msra.mxu0 %v2072
    %2717 = vmatprep.subr.bf16.mxu0 %v2081
    %2718 = vmatpush1.bf16.msra.mxu0 %v2080
    %2719 = vmatprep.subr.bf16.mxu0 %v2089
    %2720 = vmatpush1.bf16.msra.mxu0 %v2088
    %2721 = vmatprep.subr.bf16.mxu0 %v2097
    %2722 = vmatpush1.bf16.msra.mxu0 %v2096
    %2723 = vmatprep.subr.bf16.mxu0 %v2105
    %2724 = vmatpush1.bf16.msra.mxu0 %v2104
    %2725 = vmatprep.subr.bf16.mxu0 %v2113
    %2726 = vmatpush1.bf16.msra.mxu0 %v2112
    %2727 = vmatprep.subr.bf16.mxu0 %v2121
    %2728 = vmatpush1.bf16.msra.mxu0 %v2120
    %2729 = vmatprep.subr.bf16.mxu0 %v2129
    %2730 = vmatpush1.bf16.msra.mxu0 %v2128
    %2731 = vmatprep.subr.bf16.mxu0 %v2137
    %2732 = vmatpush1.bf16.msra.mxu0 %v2136
    %2733 = vmatprep.subr.bf16.mxu0 %v2145
    %2734 = vmatpush1.bf16.msra.mxu0 %v2144
    %2735 = vmatprep.mubr.bf16.mxu0 %v823
    %2736 = vmatmul.mubr.bf16.gmra.mrb[0].mxu0 %v822
    %v2737 = vpop.f32.mrb[0].mxu0
    %v2738 = vadd.f32 %v2695, %v2737
    %v2739 = vpop.f32.mrb[0].mxu0
    %v2740 = vadd.f32 %v2697, %v2739
    %v2741 = vpop.f32.mrb[0].mxu0
    %v2742 = vadd.f32 %v2699, %v2741
    %v2743 = vpop.f32.mrb[0].mxu0
    %v2744 = vadd.f32 %v2701, %v2743
    %2745 = vdwg.mxu0
    %v2746 = vpack.c.bf16 %v2484, %v2480
    %v2747 = vpack.c.bf16 %v2486, %v2482
    %v2748 = vpack.c.bf16 %v2570, %v2566
    %v2749 = vpack.c.bf16 %v2572, %v2568
    %v2750 = vpack.c.bf16 %v2656, %v2652
    %v2751 = vpack.c.bf16 %v2658, %v2654
    %v2752 = vpack.c.bf16 %v2742, %v2738
    %v2753 = vpack.c.bf16 %v2744, %v2740
    %vm2754 = vcmp.gt.bf16.partialorder %v2746, 0
    %vm2755 = vcmp.gt.bf16.partialorder %v2747, 0
    %vm2756 = vcmp.gt.bf16.partialorder %v2748, 0
    %vm2757 = vcmp.gt.bf16.partialorder %v2749, 0
    %vm2758 = vcmp.gt.bf16.partialorder %v2750, 0
    %vm2759 = vcmp.gt.bf16.partialorder %v2751, 0
    %vm2760 = vcmp.gt.bf16.partialorder %v2752, 0
    %vm2761 = vcmp.gt.bf16.partialorder %v2753, 0
    %v2762 = vmul.bf16 %v2746, 1045249613
    %v2763 = vmul.bf16 %v2747, 1045249613
    %v2764 = vmul.bf16 %v2748, 1045249613
    %v2765 = vmul.bf16 %v2749, 1045249613
    %v2766 = vmul.bf16 %v2750, 1045249613
    %v2767 = vmul.bf16 %v2751, 1045249613
    %v2768 = vmul.bf16 %v2752, 1045249613
    %v2769 = vmul.bf16 %v2753, 1045249613
    %v2770 = vsel %vm2754, %v2746, %v2762
    %v2771 = vsel %vm2755, %v2747, %v2763
    %v2772 = vsel %vm2756, %v2748, %v2764
    %v2773 = vsel %vm2757, %v2749, %v2765
    %v2774 = vsel %vm2758, %v2750, %v2766
    %v2775 = vsel %vm2759, %v2751, %v2767
    %v2776 = vsel %vm2760, %v2752, %v2768
    %v2777 = vsel %vm2761, %v2753, %v2769
    %v2778 = vld [vmem:[#allocation14] sm:$0xff]
    %v2779 = vld [vmem:[#allocation14 + $0x8] sm:$0xff]
    %v2780 = vld [vmem:[#allocation14 + $0x10] sm:$0xff]
    %v2781 = vld [vmem:[#allocation14 + $0x18] sm:$0xf]
    %v2782 = vld [vmem:[#allocation14 + $0x1c] sm:$0xff]
    %v2783 = vld [vmem:[#allocation14 + $0x24] sm:$0xff]
    %v2784 = vld [vmem:[#allocation14 + $0x2c] sm:$0xff]
    %v2785 = vld [vmem:[#allocation14 + $0x34] sm:$0xf]
    %v2786 = vld [vmem:[#allocation14 + $0x38] sm:$0xff]
    %v2787 = vld [vmem:[#allocation14 + $0x40] sm:$0xff]
    %v2788 = vld [vmem:[#allocation14 + $0x48] sm:$0xff]
    %v2789 = vld [vmem:[#allocation14 + $0x50] sm:$0xf]
    %v2790 = vld [vmem:[#allocation14 + $0x54] sm:$0xff]
    %v2791 = vld [vmem:[#allocation14 + $0x5c] sm:$0xff]
    %v2792 = vld [vmem:[#allocation14 + $0x64] sm:$0xff]
    %v2793 = vld [vmem:[#allocation14 + $0x6c] sm:$0xf]
    %v2794 = vld [vmem:[#allocation14 + $0x70] sm:$0xff]
    %v2795 = vld [vmem:[#allocation14 + $0x78] sm:$0xff]
    %v2796 = vld [vmem:[#allocation14 + $0x80] sm:$0xff]
    %v2797 = vld [vmem:[#allocation14 + $0x88] sm:$0xf]
    %v2798 = vld [vmem:[#allocation14 + $0x8c] sm:$0xff]
    %v2799 = vld [vmem:[#allocation14 + $0x94] sm:$0xff]
    %v2800 = vld [vmem:[#allocation14 + $0x9c] sm:$0xff]
    %v2801 = vld [vmem:[#allocation14 + $0xa4] sm:$0xf]
    %v2802 = vld [vmem:[#allocation14 + $0xa8] sm:$0xff]
    %v2803 = vld [vmem:[#allocation14 + $0xb0] sm:$0xff]
    %v2804 = vld [vmem:[#allocation14 + $0xb8] sm:$0xff]
    %v2805 = vld [vmem:[#allocation14 + $0xc0] sm:$0xf]
    %v2806 = vld [vmem:[#allocation14 + $0xc4] sm:$0xff]
    %v2807 = vld [vmem:[#allocation14 + $0xcc] sm:$0xff]
    %v2808 = vld [vmem:[#allocation14 + $0xd4] sm:$0xff]
    %v2809 = vld [vmem:[#allocation14 + $0xdc] sm:$0xf]
    %v2810 = vld [vmem:[#allocation14 + $0xe0] sm:$0xff]
    %v2811 = vld [vmem:[#allocation14 + $0xe8] sm:$0xff]
    %v2812 = vld [vmem:[#allocation14 + $0xf0] sm:$0xff]
    %v2813 = vld [vmem:[#allocation14 + $0xf8] sm:$0xf]
    %v2814 = vld [vmem:[#allocation14 + $0xfc] sm:$0xff]
    %v2815 = vld [vmem:[#allocation14 + $0x104] sm:$0xff]
    %v2816 = vld [vmem:[#allocation14 + $0x10c] sm:$0xff]
    %v2817 = vld [vmem:[#allocation14 + $0x114] sm:$0xf]
    %v2818 = vld [vmem:[#allocation14 + $0x118] sm:$0xff]
    %v2819 = vld [vmem:[#allocation14 + $0x120] sm:$0xff]
    %v2820 = vld [vmem:[#allocation14 + $0x128] sm:$0xff]
    %v2821 = vld [vmem:[#allocation14 + $0x130] sm:$0xf]
    %v2822 = vld [vmem:[#allocation14 + $0x134] sm:$0xff]
    %v2823 = vld [vmem:[#allocation14 + $0x13c] sm:$0xff]
    %v2824 = vld [vmem:[#allocation14 + $0x144] sm:$0xff]
    %v2825 = vld [vmem:[#allocation14 + $0x14c] sm:$0xf]
    %v2826 = vld [vmem:[#allocation14 + $0x150] sm:$0xff]
    %v2827 = vld [vmem:[#allocation14 + $0x158] sm:$0xff]
    %v2828 = vld [vmem:[#allocation14 + $0x160] sm:$0xff]
    %v2829 = vld [vmem:[#allocation14 + $0x168] sm:$0xf]
    %v2830 = vld [vmem:[#allocation14 + $0x16c] sm:$0xff]
    %v2831 = vld [vmem:[#allocation14 + $0x174] sm:$0xff]
    %v2832 = vld [vmem:[#allocation14 + $0x17c] sm:$0xff]
    %v2833 = vld [vmem:[#allocation14 + $0x184] sm:$0xf]
    %v2834 = vld [vmem:[#allocation14 + $0x188] sm:$0xff]
    %v2835 = vld [vmem:[#allocation14 + $0x190] sm:$0xff]
    %v2836 = vld [vmem:[#allocation14 + $0x198] sm:$0xff]
    %v2837 = vld [vmem:[#allocation14 + $0x1a0] sm:$0xf]
    %v2838 = vld [vmem:[#allocation14 + $0x1a4] sm:$0xff]
    %v2839 = vld [vmem:[#allocation14 + $0x1ac] sm:$0xff]
    %v2840 = vld [vmem:[#allocation14 + $0x1b4] sm:$0xff]
    %v2841 = vld [vmem:[#allocation14 + $0x1bc] sm:$0xf]
    %v2842 = vld [vmem:[#allocation14 + $0x1c0] sm:$0xff]
    %v2843 = vld [vmem:[#allocation14 + $0x1c8] sm:$0xff]
    %v2844 = vld [vmem:[#allocation14 + $0x1d0] sm:$0xff]
    %v2845 = vld [vmem:[#allocation14 + $0x1d8] sm:$0xf]
    %v2846 = vld [vmem:[#allocation14 + $0x1dc] sm:$0xff]
    %v2847 = vld [vmem:[#allocation14 + $0x1e4] sm:$0xff]
    %v2848 = vld [vmem:[#allocation14 + $0x1ec] sm:$0xff]
    %v2849 = vld [vmem:[#allocation14 + $0x1f4] sm:$0xf]
    %v2850 = vld [vmem:[#allocation14 + $0x1f8] sm:$0xff]
    %v2851 = vld [vmem:[#allocation14 + $0x200] sm:$0xff]
    %v2852 = vld [vmem:[#allocation14 + $0x208] sm:$0xff]
    %v2853 = vld [vmem:[#allocation14 + $0x210] sm:$0xf]
    %v2854 = vld [vmem:[#allocation14 + $0x214] sm:$0xff]
    %v2855 = vld [vmem:[#allocation14 + $0x21c] sm:$0xff]
    %v2856 = vld [vmem:[#allocation14 + $0x224] sm:$0xff]
    %v2857 = vld [vmem:[#allocation14 + $0x22c] sm:$0xf]
    %v2858 = vld [vmem:[#allocation14 + $0x230] sm:$0xff]
    %v2859 = vld [vmem:[#allocation14 + $0x238] sm:$0xff]
    %v2860 = vld [vmem:[#allocation14 + $0x240] sm:$0xff]
    %v2861 = vld [vmem:[#allocation14 + $0x248] sm:$0xf]
    %v2862 = vld [vmem:[#allocation14 + $0x24c] sm:$0xff]
    %v2863 = vld [vmem:[#allocation14 + $0x254] sm:$0xff]
    %v2864 = vld [vmem:[#allocation14 + $0x25c] sm:$0xff]
    %v2865 = vld [vmem:[#allocation14 + $0x264] sm:$0xf]
    %v2866 = vld [vmem:[#allocation14 + $0x268] sm:$0xff]
    %v2867 = vld [vmem:[#allocation14 + $0x270] sm:$0xff]
    %v2868 = vld [vmem:[#allocation14 + $0x278] sm:$0xff]
    %v2869 = vld [vmem:[#allocation14 + $0x280] sm:$0xf]
    %v2870 = vld [vmem:[#allocation14 + $0x284] sm:$0xff]
    %v2871 = vld [vmem:[#allocation14 + $0x28c] sm:$0xff]
    %v2872 = vld [vmem:[#allocation14 + $0x294] sm:$0xff]
    %v2873 = vld [vmem:[#allocation14 + $0x29c] sm:$0xf]
    %v2874 = vld [vmem:[#allocation14 + $0x2a0] sm:$0xff]
    %v2875 = vld [vmem:[#allocation14 + $0x2a8] sm:$0xff]
    %v2876 = vld [vmem:[#allocation14 + $0x2b0] sm:$0xff]
    %v2877 = vld [vmem:[#allocation14 + $0x2b8] sm:$0xf]
    %v2878 = vld [vmem:[#allocation14 + $0x2bc] sm:$0xff]
    %v2879 = vld [vmem:[#allocation14 + $0x2c4] sm:$0xff]
    %v2880 = vld [vmem:[#allocation14 + $0x2cc] sm:$0xff]
    %v2881 = vld [vmem:[#allocation14 + $0x2d4] sm:$0xf]
    %v2882 = vld [vmem:[#allocation14 + $0x2d8] sm:$0xff]
    %v2883 = vld [vmem:[#allocation14 + $0x2e0] sm:$0xff]
    %v2884 = vld [vmem:[#allocation14 + $0x2e8] sm:$0xff]
    %v2885 = vld [vmem:[#allocation14 + $0x2f0] sm:$0xf]
    %v2886 = vld [vmem:[#allocation14 + $0x2f4] sm:$0xff]
    %v2887 = vld [vmem:[#allocation14 + $0x2fc] sm:$0xff]
    %v2888 = vld [vmem:[#allocation14 + $0x304] sm:$0xff]
    %v2889 = vld [vmem:[#allocation14 + $0x30c] sm:$0xf]
    %v2890 = vld [vmem:[#allocation14 + $0x310] sm:$0xff]
    %v2891 = vld [vmem:[#allocation14 + $0x318] sm:$0xff]
    %v2892 = vld [vmem:[#allocation14 + $0x320] sm:$0xff]
    %v2893 = vld [vmem:[#allocation14 + $0x328] sm:$0xf]
    %v2894 = vld [vmem:[#allocation14 + $0x32c] sm:$0xff]
    %v2895 = vld [vmem:[#allocation14 + $0x334] sm:$0xff]
    %v2896 = vld [vmem:[#allocation14 + $0x33c] sm:$0xff]
    %v2897 = vld [vmem:[#allocation14 + $0x344] sm:$0xf]
    %v2898 = vld [vmem:[#allocation14 + $0x348] sm:$0xff]
    %v2899 = vld [vmem:[#allocation14 + $0x350] sm:$0xff]
    %v2900 = vld [vmem:[#allocation14 + $0x358] sm:$0xff]
    %v2901 = vld [vmem:[#allocation14 + $0x360] sm:$0xf]
    %v2902 = vld [vmem:[#allocation14 + $0x364] sm:$0xff]
    %v2903 = vld [vmem:[#allocation14 + $0x36c] sm:$0xff]
    %v2904 = vld [vmem:[#allocation14 + $0x374] sm:$0xff]
    %v2905 = vld [vmem:[#allocation14 + $0x37c] sm:$0xf]
    %v2906 = vld [vmem:[#allocation14 + $0x380] sm:$0xff]
    %v2907 = vld [vmem:[#allocation14 + $0x388] sm:$0xff]
    %v2908 = vld [vmem:[#allocation14 + $0x390] sm:$0xff]
    %v2909 = vld [vmem:[#allocation14 + $0x398] sm:$0xf]
    %v2910 = vld [vmem:[#allocation14 + $0x39c] sm:$0xff]
    %v2911 = vld [vmem:[#allocation14 + $0x3a4] sm:$0xff]
    %v2912 = vld [vmem:[#allocation14 + $0x3ac] sm:$0xff]
    %v2913 = vld [vmem:[#allocation14 + $0x3b4] sm:$0xf]
    %v2914 = vld [vmem:[#allocation14 + $0x3b8] sm:$0xff]
    %v2915 = vld [vmem:[#allocation14 + $0x3c0] sm:$0xff]
    %v2916 = vld [vmem:[#allocation14 + $0x3c8] sm:$0xff]
    %v2917 = vld [vmem:[#allocation14 + $0x3d0] sm:$0xf]
    %v2918 = vld [vmem:[#allocation14 + $0x3d4] sm:$0xff]
    %v2919 = vld [vmem:[#allocation14 + $0x3dc] sm:$0xff]
    %v2920 = vld [vmem:[#allocation14 + $0x3e4] sm:$0xff]
    %v2921 = vld [vmem:[#allocation14 + $0x3ec] sm:$0xf]
    %v2922 = vld [vmem:[#allocation14 + $0x3f0] sm:$0xff]
    %v2923 = vld [vmem:[#allocation14 + $0x3f8] sm:$0xff]
    %v2924 = vld [vmem:[#allocation14 + $0x400] sm:$0xff]
    %v2925 = vld [vmem:[#allocation14 + $0x408] sm:$0xf]
    %v2926 = vld [vmem:[#allocation14 + $0x40c] sm:$0xff]
    %v2927 = vld [vmem:[#allocation14 + $0x414] sm:$0xff]
    %v2928 = vld [vmem:[#allocation14 + $0x41c] sm:$0xff]
    %v2929 = vld [vmem:[#allocation14 + $0x424] sm:$0xf]
    %v2930 = vld [vmem:[#allocation14 + $0x428] sm:$0xff]
    %v2931 = vld [vmem:[#allocation14 + $0x430] sm:$0xff]
    %v2932 = vld [vmem:[#allocation14 + $0x438] sm:$0xff]
    %v2933 = vld [vmem:[#allocation14 + $0x440] sm:$0xf]
    %v2934 = vld [vmem:[#allocation14 + $0x444] sm:$0xff]
    %v2935 = vld [vmem:[#allocation14 + $0x44c] sm:$0xff]
    %v2936 = vld [vmem:[#allocation14 + $0x454] sm:$0xff]
    %v2937 = vld [vmem:[#allocation14 + $0x45c] sm:$0xf]
    %v2938 = vld [vmem:[#allocation14 + $0x460] sm:$0xff]
    %v2939 = vld [vmem:[#allocation14 + $0x468] sm:$0xff]
    %v2940 = vld [vmem:[#allocation14 + $0x470] sm:$0xff]
    %v2941 = vld [vmem:[#allocation14 + $0x478] sm:$0xf]
    %v2942 = vld [vmem:[#allocation14 + $0x47c] sm:$0xff]
    %v2943 = vld [vmem:[#allocation14 + $0x484] sm:$0xff]
    %v2944 = vld [vmem:[#allocation14 + $0x48c] sm:$0xff]
    %v2945 = vld [vmem:[#allocation14 + $0x494] sm:$0xf]
    %v2946 = vld [vmem:[#allocation14 + $0x498] sm:$0xff]
    %v2947 = vld [vmem:[#allocation14 + $0x4a0] sm:$0xff]
    %v2948 = vld [vmem:[#allocation14 + $0x4a8] sm:$0xff]
    %v2949 = vld [vmem:[#allocation14 + $0x4b0] sm:$0xf]
    %v2950 = vld [vmem:[#allocation14 + $0x4b4] sm:$0xff]
    %v2951 = vld [vmem:[#allocation14 + $0x4bc] sm:$0xff]
    %v2952 = vld [vmem:[#allocation14 + $0x4c4] sm:$0xff]
    %v2953 = vld [vmem:[#allocation14 + $0x4cc] sm:$0xf]
    %v2954 = vld [vmem:[#allocation14 + $0x4d0] sm:$0xff]
    %v2955 = vld [vmem:[#allocation14 + $0x4d8] sm:$0xff]
    %v2956 = vld [vmem:[#allocation14 + $0x4e0] sm:$0xff]
    %v2957 = vld [vmem:[#allocation14 + $0x4e8] sm:$0xf]
    %v2958 = vld [vmem:[#allocation14 + $0x4ec] sm:$0xff]
    %v2959 = vld [vmem:[#allocation14 + $0x4f4] sm:$0xff]
    %v2960 = vld [vmem:[#allocation14 + $0x4fc] sm:$0xff]
    %v2961 = vld [vmem:[#allocation14 + $0x504] sm:$0xf]
    %v2962 = vld [vmem:[#allocation14 + $0x508] sm:$0xff]
    %v2963 = vld [vmem:[#allocation14 + $0x510] sm:$0xff]
    %v2964 = vld [vmem:[#allocation14 + $0x518] sm:$0xff]
    %v2965 = vld [vmem:[#allocation14 + $0x520] sm:$0xf]
    %v2966 = vld [vmem:[#allocation14 + $0x524] sm:$0xff]
    %v2967 = vld [vmem:[#allocation14 + $0x52c] sm:$0xff]
    %v2968 = vld [vmem:[#allocation14 + $0x534] sm:$0xff]
    %v2969 = vld [vmem:[#allocation14 + $0x53c] sm:$0xf]
    %v2970 = vld [vmem:[#allocation14 + $0x540] sm:$0xff]
    %v2971 = vld [vmem:[#allocation14 + $0x548] sm:$0xff]
    %v2972 = vld [vmem:[#allocation14 + $0x550] sm:$0xff]
    %v2973 = vld [vmem:[#allocation14 + $0x558] sm:$0xf]
    %v2974 = vld [vmem:[#allocation14 + $0x55c] sm:$0xff]
    %v2975 = vld [vmem:[#allocation14 + $0x564] sm:$0xff]
    %v2976 = vld [vmem:[#allocation14 + $0x56c] sm:$0xff]
    %v2977 = vld [vmem:[#allocation14 + $0x574] sm:$0xf]
    %v2978 = vld [vmem:[#allocation14 + $0x578] sm:$0xff]
    %v2979 = vld [vmem:[#allocation14 + $0x580] sm:$0xff]
    %v2980 = vld [vmem:[#allocation14 + $0x588] sm:$0xff]
    %v2981 = vld [vmem:[#allocation14 + $0x590] sm:$0xf]
    %v2982 = vld [vmem:[#allocation14 + $0x594] sm:$0xff]
    %v2983 = vld [vmem:[#allocation14 + $0x59c] sm:$0xff]
    %v2984 = vld [vmem:[#allocation14 + $0x5a4] sm:$0xff]
    %v2985 = vld [vmem:[#allocation14 + $0x5ac] sm:$0xf]
    %v2986 = vld [vmem:[#allocation14 + $0x5b0] sm:$0xff]
    %v2987 = vld [vmem:[#allocation14 + $0x5b8] sm:$0xff]
    %v2988 = vld [vmem:[#allocation14 + $0x5c0] sm:$0xff]
    %v2989 = vld [vmem:[#allocation14 + $0x5c8] sm:$0xf]
    %v2990 = vld [vmem:[#allocation14 + $0x5cc] sm:$0xff]
    %v2991 = vld [vmem:[#allocation14 + $0x5d4] sm:$0xff]
    %v2992 = vld [vmem:[#allocation14 + $0x5dc] sm:$0xff]
    %v2993 = vld [vmem:[#allocation14 + $0x5e4] sm:$0xf]
    %v2994 = vld [vmem:[#allocation14 + $0x5e8] sm:$0xff]
    %v2995 = vld [vmem:[#allocation14 + $0x5f0] sm:$0xff]
    %v2996 = vld [vmem:[#allocation14 + $0x5f8] sm:$0xff]
    %v2997 = vld [vmem:[#allocation14 + $0x600] sm:$0xf]
    %v2998 = vld [vmem:[#allocation14 + $0x604] sm:$0xff]
    %v2999 = vld [vmem:[#allocation14 + $0x60c] sm:$0xff]
    %v3000 = vld [vmem:[#allocation14 + $0x614] sm:$0xff]
    %v3001 = vld [vmem:[#allocation14 + $0x61c] sm:$0xf]
    %v3002 = vld [vmem:[#allocation14 + $0x620] sm:$0xff]
    %v3003 = vld [vmem:[#allocation14 + $0x628] sm:$0xff]
    %v3004 = vld [vmem:[#allocation14 + $0x630] sm:$0xff]
    %v3005 = vld [vmem:[#allocation14 + $0x638] sm:$0xf]
    %v3006 = vld [vmem:[#allocation14 + $0x63c] sm:$0xff]
    %v3007 = vld [vmem:[#allocation14 + $0x644] sm:$0xff]
    %v3008 = vld [vmem:[#allocation14 + $0x64c] sm:$0xff]
    %v3009 = vld [vmem:[#allocation14 + $0x654] sm:$0xf]
    %v3010 = vld [vmem:[#allocation14 + $0x658] sm:$0xff]
    %v3011 = vld [vmem:[#allocation14 + $0x660] sm:$0xff]
    %v3012 = vld [vmem:[#allocation14 + $0x668] sm:$0xff]
    %v3013 = vld [vmem:[#allocation14 + $0x670] sm:$0xf]
    %v3014 = vld [vmem:[#allocation14 + $0x674] sm:$0xff]
    %v3015 = vld [vmem:[#allocation14 + $0x67c] sm:$0xff]
    %v3016 = vld [vmem:[#allocation14 + $0x684] sm:$0xff]
    %v3017 = vld [vmem:[#allocation14 + $0x68c] sm:$0xf]
    %v3018 = vld [vmem:[#allocation14 + $0x690] sm:$0xff]
    %v3019 = vld [vmem:[#allocation14 + $0x698] sm:$0xff]
    %v3020 = vld [vmem:[#allocation14 + $0x6a0] sm:$0xff]
    %v3021 = vld [vmem:[#allocation14 + $0x6a8] sm:$0xf]
    %v3022 = vld [vmem:[#allocation14 + $0x6ac] sm:$0xff]
    %v3023 = vld [vmem:[#allocation14 + $0x6b4] sm:$0xff]
    %v3024 = vld [vmem:[#allocation14 + $0x6bc] sm:$0xff]
    %v3025 = vld [vmem:[#allocation14 + $0x6c4] sm:$0xf]
    %v3026 = vld [vmem:[#allocation14 + $0x6c8] sm:$0xff]
    %v3027 = vld [vmem:[#allocation14 + $0x6d0] sm:$0xff]
    %v3028 = vld [vmem:[#allocation14 + $0x6d8] sm:$0xff]
    %v3029 = vld [vmem:[#allocation14 + $0x6e0] sm:$0xf]
    %v3030 = vld [vmem:[#allocation14 + $0x6e4] sm:$0xff]
    %v3031 = vld [vmem:[#allocation14 + $0x6ec] sm:$0xff]
    %v3032 = vld [vmem:[#allocation14 + $0x6f4] sm:$0xff]
    %v3033 = vld [vmem:[#allocation14 + $0x6fc] sm:$0xf]
    %v3034 = vld [vmem:[#allocation14 + $0x700] sm:$0xff]
    %v3035 = vld [vmem:[#allocation14 + $0x708] sm:$0xff]
    %v3036 = vld [vmem:[#allocation14 + $0x710] sm:$0xff]
    %v3037 = vld [vmem:[#allocation14 + $0x718] sm:$0xf]
    %v3038 = vld [vmem:[#allocation14 + $0x71c] sm:$0xff]
    %v3039 = vld [vmem:[#allocation14 + $0x724] sm:$0xff]
    %v3040 = vld [vmem:[#allocation14 + $0x72c] sm:$0xff]
    %v3041 = vld [vmem:[#allocation14 + $0x734] sm:$0xf]
    %v3042 = vld [vmem:[#allocation14 + $0x738] sm:$0xff]
    %v3043 = vld [vmem:[#allocation14 + $0x740] sm:$0xff]
    %v3044 = vld [vmem:[#allocation14 + $0x748] sm:$0xff]
    %v3045 = vld [vmem:[#allocation14 + $0x750] sm:$0xf]
    %v3046 = vld [vmem:[#allocation14 + $0x754] sm:$0xff]
    %v3047 = vld [vmem:[#allocation14 + $0x75c] sm:$0xff]
    %v3048 = vld [vmem:[#allocation14 + $0x764] sm:$0xff]
    %v3049 = vld [vmem:[#allocation14 + $0x76c] sm:$0xf]
    %v3050 = vld [vmem:[#allocation14 + $0x770] sm:$0xff]
    %v3051 = vld [vmem:[#allocation14 + $0x778] sm:$0xff]
    %v3052 = vld [vmem:[#allocation14 + $0x780] sm:$0xff]
    %v3053 = vld [vmem:[#allocation14 + $0x788] sm:$0xf]
    %v3054 = vld [vmem:[#allocation14 + $0x78c] sm:$0xff]
    %v3055 = vld [vmem:[#allocation14 + $0x794] sm:$0xff]
    %v3056 = vld [vmem:[#allocation14 + $0x79c] sm:$0xff]
    %v3057 = vld [vmem:[#allocation14 + $0x7a4] sm:$0xf]
    %v3058 = vld [vmem:[#allocation14 + $0x7a8] sm:$0xff]
    %v3059 = vld [vmem:[#allocation14 + $0x7b0] sm:$0xff]
    %v3060 = vld [vmem:[#allocation14 + $0x7b8] sm:$0xff]
    %v3061 = vld [vmem:[#allocation14 + $0x7c0] sm:$0xf]
    %v3062 = vld [vmem:[#allocation14 + $0x7c4] sm:$0xff]
    %v3063 = vld [vmem:[#allocation14 + $0x7cc] sm:$0xff]
    %v3064 = vld [vmem:[#allocation14 + $0x7d4] sm:$0xff]
    %v3065 = vld [vmem:[#allocation14 + $0x7dc] sm:$0xf]
    %v3066 = vld [vmem:[#allocation14 + $0x7e0] sm:$0xff]
    %v3067 = vld [vmem:[#allocation14 + $0x7e8] sm:$0xff]
    %v3068 = vld [vmem:[#allocation14 + $0x7f0] sm:$0xff]
    %v3069 = vld [vmem:[#allocation14 + $0x7f8] sm:$0xf]
    %v3070 = vld [vmem:[#allocation14 + $0x7fc] sm:$0xff]
    %v3071 = vld [vmem:[#allocation14 + $0x804] sm:$0xff]
    %v3072 = vld [vmem:[#allocation14 + $0x80c] sm:$0xff]
    %v3073 = vld [vmem:[#allocation14 + $0x814] sm:$0xf]
    %v3074 = vld [vmem:[#allocation14 + $0x818] sm:$0xff]
    %v3075 = vld [vmem:[#allocation14 + $0x820] sm:$0xff]
    %v3076 = vld [vmem:[#allocation14 + $0x828] sm:$0xff]
    %v3077 = vld [vmem:[#allocation14 + $0x830] sm:$0xf]
    %v3078 = vld [vmem:[#allocation14 + $0x834] sm:$0xff]
    %v3079 = vld [vmem:[#allocation14 + $0x83c] sm:$0xff]
    %v3080 = vld [vmem:[#allocation14 + $0x844] sm:$0xff]
    %v3081 = vld [vmem:[#allocation14 + $0x84c] sm:$0xf]
    %v3082 = vld [vmem:[#allocation14 + $0x850] sm:$0xff]
    %v3083 = vld [vmem:[#allocation14 + $0x858] sm:$0xff]
    %v3084 = vld [vmem:[#allocation14 + $0x860] sm:$0xff]
    %v3085 = vld [vmem:[#allocation14 + $0x868] sm:$0xf]
    %v3086 = vld [vmem:[#allocation14 + $0x86c] sm:$0xff]
    %v3087 = vld [vmem:[#allocation14 + $0x874] sm:$0xff]
    %v3088 = vld [vmem:[#allocation14 + $0x87c] sm:$0xff]
    %v3089 = vld [vmem:[#allocation14 + $0x884] sm:$0xf]
    %v3090 = vld [vmem:[#allocation14 + $0x888] sm:$0xff]
    %v3091 = vld [vmem:[#allocation14 + $0x890] sm:$0xff]
    %v3092 = vld [vmem:[#allocation14 + $0x898] sm:$0xff]
    %v3093 = vld [vmem:[#allocation14 + $0x8a0] sm:$0xf]
    %v3094 = vld [vmem:[#allocation14 + $0x8a4] sm:$0xff]
    %v3095 = vld [vmem:[#allocation14 + $0x8ac] sm:$0xff]
    %v3096 = vld [vmem:[#allocation14 + $0x8b4] sm:$0xff]
    %v3097 = vld [vmem:[#allocation14 + $0x8bc] sm:$0xf]
    %v3098 = vld [vmem:[#allocation14 + $0x8c0] sm:$0xff]
    %v3099 = vld [vmem:[#allocation14 + $0x8c8] sm:$0xff]
    %v3100 = vld [vmem:[#allocation14 + $0x8d0] sm:$0xff]
    %v3101 = vld [vmem:[#allocation14 + $0x8d8] sm:$0xf]
    %v3102 = vld [vmem:[#allocation14 + $0x8dc] sm:$0xff]
    %v3103 = vld [vmem:[#allocation14 + $0x8e4] sm:$0xff]
    %v3104 = vld [vmem:[#allocation14 + $0x8ec] sm:$0xff]
    %v3105 = vld [vmem:[#allocation14 + $0x8f4] sm:$0xf]
    %v3106 = vld [vmem:[#allocation14 + $0x8f8] sm:$0xff]
    %v3107 = vld [vmem:[#allocation14 + $0x900] sm:$0xff]
    %v3108 = vld [vmem:[#allocation14 + $0x908] sm:$0xff]
    %v3109 = vld [vmem:[#allocation14 + $0x910] sm:$0xf]
    %v3110 = vld [vmem:[#allocation14 + $0x914] sm:$0xff]
    %v3111 = vld [vmem:[#allocation14 + $0x91c] sm:$0xff]
    %v3112 = vld [vmem:[#allocation14 + $0x924] sm:$0xff]
    %v3113 = vld [vmem:[#allocation14 + $0x92c] sm:$0xf]
    %v3114 = vld [vmem:[#allocation14 + $0x930] sm:$0xff]
    %v3115 = vld [vmem:[#allocation14 + $0x938] sm:$0xff]
    %v3116 = vld [vmem:[#allocation14 + $0x940] sm:$0xff]
    %v3117 = vld [vmem:[#allocation14 + $0x948] sm:$0xf]
    %v3118 = vld [vmem:[#allocation14 + $0x94c] sm:$0xff]
    %v3119 = vld [vmem:[#allocation14 + $0x954] sm:$0xff]
    %v3120 = vld [vmem:[#allocation14 + $0x95c] sm:$0xff]
    %v3121 = vld [vmem:[#allocation14 + $0x964] sm:$0xf]
    %v3122 = vld [vmem:[#allocation14 + $0x968] sm:$0xff]
    %v3123 = vld [vmem:[#allocation14 + $0x970] sm:$0xff]
    %v3124 = vld [vmem:[#allocation14 + $0x978] sm:$0xff]
    %v3125 = vld [vmem:[#allocation14 + $0x980] sm:$0xf]
    %v3126 = vld [vmem:[#allocation14 + $0x984] sm:$0xff]
    %v3127 = vld [vmem:[#allocation14 + $0x98c] sm:$0xff]
    %v3128 = vld [vmem:[#allocation14 + $0x994] sm:$0xff]
    %v3129 = vld [vmem:[#allocation14 + $0x99c] sm:$0xf]
    %v3130 = vld [vmem:[#allocation14 + $0x9a0] sm:$0xff]
    %v3131 = vld [vmem:[#allocation14 + $0x9a8] sm:$0xff]
    %v3132 = vld [vmem:[#allocation14 + $0x9b0] sm:$0xff]
    %v3133 = vld [vmem:[#allocation14 + $0x9b8] sm:$0xf]
    %v3134 = vld [vmem:[#allocation14 + $0x9bc] sm:$0xff]
    %v3135 = vld [vmem:[#allocation14 + $0x9c4] sm:$0xff]
    %v3136 = vld [vmem:[#allocation14 + $0x9cc] sm:$0xff]
    %v3137 = vld [vmem:[#allocation14 + $0x9d4] sm:$0xf]
    %v3138 = vld [vmem:[#allocation14 + $0x9d8] sm:$0xff]
    %v3139 = vld [vmem:[#allocation14 + $0x9e0] sm:$0xff]
    %v3140 = vld [vmem:[#allocation14 + $0x9e8] sm:$0xff]
    %v3141 = vld [vmem:[#allocation14 + $0x9f0] sm:$0xf]
    %v3142 = vld [vmem:[#allocation14 + $0x9f4] sm:$0xff]
    %v3143 = vld [vmem:[#allocation14 + $0x9fc] sm:$0xff]
    %v3144 = vld [vmem:[#allocation14 + $0xa04] sm:$0xff]
    %v3145 = vld [vmem:[#allocation14 + $0xa0c] sm:$0xf]
    %v3146 = vld [vmem:[#allocation14 + $0xa10] sm:$0xff]
    %v3147 = vld [vmem:[#allocation14 + $0xa18] sm:$0xff]
    %v3148 = vld [vmem:[#allocation14 + $0xa20] sm:$0xff]
    %v3149 = vld [vmem:[#allocation14 + $0xa28] sm:$0xf]
    %v3150 = vld [vmem:[#allocation14 + $0xa2c] sm:$0xff]
    %v3151 = vld [vmem:[#allocation14 + $0xa34] sm:$0xff]
    %v3152 = vld [vmem:[#allocation14 + $0xa3c] sm:$0xff]
    %v3153 = vld [vmem:[#allocation14 + $0xa44] sm:$0xf]
    %v3154 = vld [vmem:[#allocation14 + $0xa48] sm:$0xff]
    %v3155 = vld [vmem:[#allocation14 + $0xa50] sm:$0xff]
    %v3156 = vld [vmem:[#allocation14 + $0xa58] sm:$0xff]
    %v3157 = vld [vmem:[#allocation14 + $0xa60] sm:$0xf]
    %v3158 = vld [vmem:[#allocation14 + $0xa64] sm:$0xff]
    %v3159 = vld [vmem:[#allocation14 + $0xa6c] sm:$0xff]
    %v3160 = vld [vmem:[#allocation14 + $0xa74] sm:$0xff]
    %v3161 = vld [vmem:[#allocation14 + $0xa7c] sm:$0xf]
    %v3162 = vld [vmem:[#allocation14 + $0xa80] sm:$0xff]
    %v3163 = vld [vmem:[#allocation14 + $0xa88] sm:$0xff]
    %v3164 = vld [vmem:[#allocation14 + $0xa90] sm:$0xff]
    %v3165 = vld [vmem:[#allocation14 + $0xa98] sm:$0xf]
    %v3166 = vld [vmem:[#allocation14 + $0xa9c] sm:$0xff]
    %v3167 = vld [vmem:[#allocation14 + $0xaa4] sm:$0xff]
    %v3168 = vld [vmem:[#allocation14 + $0xaac] sm:$0xff]
    %v3169 = vld [vmem:[#allocation14 + $0xab4] sm:$0xf]
    %v3170 = vld [vmem:[#allocation14 + $0xab8] sm:$0xff]
    %v3171 = vld [vmem:[#allocation14 + $0xac0] sm:$0xff]
    %v3172 = vld [vmem:[#allocation14 + $0xac8] sm:$0xff]
    %v3173 = vld [vmem:[#allocation14 + $0xad0] sm:$0xf]
    %v3174 = vld [vmem:[#allocation14 + $0xad4] sm:$0xff]
    %v3175 = vld [vmem:[#allocation14 + $0xadc] sm:$0xff]
    %v3176 = vld [vmem:[#allocation14 + $0xae4] sm:$0xff]
    %v3177 = vld [vmem:[#allocation14 + $0xaec] sm:$0xf]
    %v3178 = vld [vmem:[#allocation14 + $0xaf0] sm:$0xff]
    %v3179 = vld [vmem:[#allocation14 + $0xaf8] sm:$0xff]
    %v3180 = vld [vmem:[#allocation14 + $0xb00] sm:$0xff]
    %v3181 = vld [vmem:[#allocation14 + $0xb08] sm:$0xf]
    %v3182 = vld [vmem:[#allocation14 + $0xb0c] sm:$0xff]
    %v3183 = vld [vmem:[#allocation14 + $0xb14] sm:$0xff]
    %v3184 = vld [vmem:[#allocation14 + $0xb1c] sm:$0xff]
    %v3185 = vld [vmem:[#allocation14 + $0xb24] sm:$0xf]
    %v3186 = vld [vmem:[#allocation14 + $0xb28] sm:$0xff]
    %v3187 = vld [vmem:[#allocation14 + $0xb30] sm:$0xff]
    %v3188 = vld [vmem:[#allocation14 + $0xb38] sm:$0xff]
    %v3189 = vld [vmem:[#allocation14 + $0xb40] sm:$0xf]
    %v3190 = vld [vmem:[#allocation14 + $0xb44] sm:$0xff]
    %v3191 = vld [vmem:[#allocation14 + $0xb4c] sm:$0xff]
    %v3192 = vld [vmem:[#allocation14 + $0xb54] sm:$0xff]
    %v3193 = vld [vmem:[#allocation14 + $0xb5c] sm:$0xf]
    %v3194 = vld [vmem:[#allocation14 + $0xb60] sm:$0xff]
    %v3195 = vld [vmem:[#allocation14 + $0xb68] sm:$0xff]
    %v3196 = vld [vmem:[#allocation14 + $0xb70] sm:$0xff]
    %v3197 = vld [vmem:[#allocation14 + $0xb78] sm:$0xf]
    %v3198 = vld [vmem:[#allocation14 + $0xb7c] sm:$0xff]
    %v3199 = vld [vmem:[#allocation14 + $0xb84] sm:$0xff]
    %v3200 = vld [vmem:[#allocation14 + $0xb8c] sm:$0xff]
    %v3201 = vld [vmem:[#allocation14 + $0xb94] sm:$0xf]
    %v3202 = vld [vmem:[#allocation14 + $0xb98] sm:$0xff]
    %v3203 = vld [vmem:[#allocation14 + $0xba0] sm:$0xff]
    %v3204 = vld [vmem:[#allocation14 + $0xba8] sm:$0xff]
    %v3205 = vld [vmem:[#allocation14 + $0xbb0] sm:$0xf]
    %v3206 = vld [vmem:[#allocation14 + $0xbb4] sm:$0xff]
    %v3207 = vld [vmem:[#allocation14 + $0xbbc] sm:$0xff]
    %v3208 = vld [vmem:[#allocation14 + $0xbc4] sm:$0xff]
    %v3209 = vld [vmem:[#allocation14 + $0xbcc] sm:$0xf]
    %v3210 = vld [vmem:[#allocation14 + $0xbd0] sm:$0xff]
    %v3211 = vld [vmem:[#allocation14 + $0xbd8] sm:$0xff]
    %v3212 = vld [vmem:[#allocation14 + $0xbe0] sm:$0xff]
    %v3213 = vld [vmem:[#allocation14 + $0xbe8] sm:$0xf]
    %v3214 = vld [vmem:[#allocation14 + $0xbec] sm:$0xff]
    %v3215 = vld [vmem:[#allocation14 + $0xbf4] sm:$0xff]
    %v3216 = vld [vmem:[#allocation14 + $0xbfc] sm:$0xff]
    %v3217 = vld [vmem:[#allocation14 + $0xc04] sm:$0xf]
    %v3218 = vld [vmem:[#allocation14 + $0xc08] sm:$0xff]
    %v3219 = vld [vmem:[#allocation14 + $0xc10] sm:$0xff]
    %v3220 = vld [vmem:[#allocation14 + $0xc18] sm:$0xff]
    %v3221 = vld [vmem:[#allocation14 + $0xc20] sm:$0xf]
    %v3222 = vld [vmem:[#allocation14 + $0xc24] sm:$0xff]
    %v3223 = vld [vmem:[#allocation14 + $0xc2c] sm:$0xff]
    %v3224 = vld [vmem:[#allocation14 + $0xc34] sm:$0xff]
    %v3225 = vld [vmem:[#allocation14 + $0xc3c] sm:$0xf]
    %v3226 = vld [vmem:[#allocation14 + $0xc40] sm:$0xff]
    %v3227 = vld [vmem:[#allocation14 + $0xc48] sm:$0xff]
    %v3228 = vld [vmem:[#allocation14 + $0xc50] sm:$0xff]
    %v3229 = vld [vmem:[#allocation14 + $0xc58] sm:$0xf]
    %v3230 = vld [vmem:[#allocation14 + $0xc5c] sm:$0xff]
    %v3231 = vld [vmem:[#allocation14 + $0xc64] sm:$0xff]
    %v3232 = vld [vmem:[#allocation14 + $0xc6c] sm:$0xff]
    %v3233 = vld [vmem:[#allocation14 + $0xc74] sm:$0xf]
    %v3234 = vld [vmem:[#allocation14 + $0xc78] sm:$0xff]
    %v3235 = vld [vmem:[#allocation14 + $0xc80] sm:$0xff]
    %v3236 = vld [vmem:[#allocation14 + $0xc88] sm:$0xff]
    %v3237 = vld [vmem:[#allocation14 + $0xc90] sm:$0xf]
    %v3238 = vld [vmem:[#allocation14 + $0xc94] sm:$0xff]
    %v3239 = vld [vmem:[#allocation14 + $0xc9c] sm:$0xff]
    %v3240 = vld [vmem:[#allocation14 + $0xca4] sm:$0xff]
    %v3241 = vld [vmem:[#allocation14 + $0xcac] sm:$0xf]
    %v3242 = vld [vmem:[#allocation14 + $0xcb0] sm:$0xff]
    %v3243 = vld [vmem:[#allocation14 + $0xcb8] sm:$0xff]
    %v3244 = vld [vmem:[#allocation14 + $0xcc0] sm:$0xff]
    %v3245 = vld [vmem:[#allocation14 + $0xcc8] sm:$0xf]
    %v3246 = vld [vmem:[#allocation14 + $0xccc] sm:$0xff]
    %v3247 = vld [vmem:[#allocation14 + $0xcd4] sm:$0xff]
    %v3248 = vld [vmem:[#allocation14 + $0xcdc] sm:$0xff]
    %v3249 = vld [vmem:[#allocation14 + $0xce4] sm:$0xf]
    %v3250 = vld [vmem:[#allocation14 + $0xce8] sm:$0xff]
    %v3251 = vld [vmem:[#allocation14 + $0xcf0] sm:$0xff]
    %v3252 = vld [vmem:[#allocation14 + $0xcf8] sm:$0xff]
    %v3253 = vld [vmem:[#allocation14 + $0xd00] sm:$0xf]
    %v3254 = vld [vmem:[#allocation14 + $0xd04] sm:$0xff]
    %v3255 = vld [vmem:[#allocation14 + $0xd0c] sm:$0xff]
    %v3256 = vld [vmem:[#allocation14 + $0xd14] sm:$0xff]
    %v3257 = vld [vmem:[#allocation14 + $0xd1c] sm:$0xf]
    %v3258 = vld [vmem:[#allocation14 + $0xd20] sm:$0xff]
    %v3259 = vld [vmem:[#allocation14 + $0xd28] sm:$0xff]
    %v3260 = vld [vmem:[#allocation14 + $0xd30] sm:$0xff]
    %v3261 = vld [vmem:[#allocation14 + $0xd38] sm:$0xf]
    %v3262 = vld [vmem:[#allocation14 + $0xd3c] sm:$0xff]
    %v3263 = vld [vmem:[#allocation14 + $0xd44] sm:$0xff]
    %v3264 = vld [vmem:[#allocation14 + $0xd4c] sm:$0xff]
    %v3265 = vld [vmem:[#allocation14 + $0xd54] sm:$0xf]
    %v3266 = vld [vmem:[#allocation14 + $0xd58] sm:$0xff]
    %v3267 = vld [vmem:[#allocation14 + $0xd60] sm:$0xff]
    %v3268 = vld [vmem:[#allocation14 + $0xd68] sm:$0xff]
    %v3269 = vld [vmem:[#allocation14 + $0xd70] sm:$0xf]
    %v3270 = vld [vmem:[#allocation14 + $0xd74] sm:$0xff]
    %v3271 = vld [vmem:[#allocation14 + $0xd7c] sm:$0xff]
    %v3272 = vld [vmem:[#allocation14 + $0xd84] sm:$0xff]
    %v3273 = vld [vmem:[#allocation14 + $0xd8c] sm:$0xf]
    %v3274 = vld [vmem:[#allocation14 + $0xd90] sm:$0xff]
    %v3275 = vld [vmem:[#allocation14 + $0xd98] sm:$0xff]
    %v3276 = vld [vmem:[#allocation14 + $0xda0] sm:$0xff]
    %v3277 = vld [vmem:[#allocation14 + $0xda8] sm:$0xf]
    %v3278 = vld [vmem:[#allocation14 + $0xdac] sm:$0xff]
    %v3279 = vld [vmem:[#allocation14 + $0xdb4] sm:$0xff]
    %v3280 = vld [vmem:[#allocation14 + $0xdbc] sm:$0xff]
    %v3281 = vld [vmem:[#allocation14 + $0xdc4] sm:$0xf]
    %v3282 = vld [vmem:[#allocation14 + $0xdc8] sm:$0xff]
    %v3283 = vld [vmem:[#allocation14 + $0xdd0] sm:$0xff]
    %v3284 = vld [vmem:[#allocation14 + $0xdd8] sm:$0xff]
    %v3285 = vld [vmem:[#allocation14 + $0xde0] sm:$0xf]
    %v3286 = vld [vmem:[#allocation14 + $0xde4] sm:$0xff]
    %v3287 = vld [vmem:[#allocation14 + $0xdec] sm:$0xff]
    %v3288 = vld [vmem:[#allocation14 + $0xdf4] sm:$0xff]
    %v3289 = vld [vmem:[#allocation14 + $0xdfc] sm:$0xf]
    %v3290 = vld [vmem:[#allocation16] sm:$0xff]
    %v3292 = vlaneseq
    %v3293 = vshrl.u32 %v3292, 7
    %v3294 = vsub.s32 0, %v3293
    %v3295 = vrot.slane %v3290, %v3294
    %v3296 = vlaneseq
    %v3297 = vshrl.u32 %v3296, 7
    %v3298 = vsub.s32 1, %v3297
    %v3299 = vrot.slane %v3290, %v3298
    %v3300 = vlaneseq
    %v3301 = vshrl.u32 %v3300, 7
    %v3302 = vsub.s32 2, %v3301
    %v3303 = vrot.slane %v3290, %v3302
    %v3304 = vlaneseq
    %v3305 = vshrl.u32 %v3304, 7
    %v3306 = vsub.s32 3, %v3305
    %v3307 = vrot.slane %v3290, %v3306
    %v3308 = vlaneseq
    %v3309 = vshrl.u32 %v3308, 7
    %v3310 = vsub.s32 4, %v3309
    %v3311 = vrot.slane %v3290, %v3310
    %v3312 = vlaneseq
    %v3313 = vshrl.u32 %v3312, 7
    %v3314 = vsub.s32 5, %v3313
    %v3315 = vrot.slane %v3290, %v3314
    %v3316 = vlaneseq
    %v3317 = vshrl.u32 %v3316, 7
    %v3318 = vsub.s32 6, %v3317
    %v3319 = vrot.slane %v3290, %v3318
    %v3839 = vunpack.c.l.b16 %v2778
    %v3840 = vunpack.c.h.b16 %v2778
    %v3841 = vunpack.c.l.b16 %v2779
    %v3842 = vunpack.c.h.b16 %v2779
    %v3843 = vunpack.c.l.b16 %v2780
    %v3844 = vunpack.c.h.b16 %v2780
    %v3845 = vunpack.c.l.b16 %v2781
    %v3846 = vunpack.c.l.b16 %v2782
    %v3847 = vunpack.c.h.b16 %v2782
    %v3848 = vunpack.c.l.b16 %v2783
    %v3849 = vunpack.c.h.b16 %v2783
    %v3850 = vunpack.c.l.b16 %v2784
    %v3851 = vunpack.c.h.b16 %v2784
    %v3852 = vunpack.c.l.b16 %v2785
    %v3853 = vunpack.c.l.b16 %v2786
    %v3854 = vunpack.c.h.b16 %v2786
    %v3855 = vunpack.c.l.b16 %v2787
    %v3856 = vunpack.c.h.b16 %v2787
    %v3857 = vunpack.c.l.b16 %v2788
    %v3858 = vunpack.c.h.b16 %v2788
    %v3859 = vunpack.c.l.b16 %v2789
    %v3860 = vunpack.c.l.b16 %v2790
    %v3861 = vunpack.c.h.b16 %v2790
    %v3862 = vunpack.c.l.b16 %v2791
    %v3863 = vunpack.c.h.b16 %v2791
    %v3864 = vunpack.c.l.b16 %v2792
    %v3865 = vunpack.c.h.b16 %v2792
    %v3866 = vunpack.c.l.b16 %v2793
    %v3867 = vunpack.c.l.b16 %v2794
    %v3868 = vunpack.c.h.b16 %v2794
    %v3869 = vunpack.c.l.b16 %v2795
    %v3870 = vunpack.c.h.b16 %v2795
    %v3871 = vunpack.c.l.b16 %v2796
    %v3872 = vunpack.c.h.b16 %v2796
    %v3873 = vunpack.c.l.b16 %v2797
    %v3874 = vunpack.c.l.b16 %v2798
    %v3875 = vunpack.c.h.b16 %v2798
    %v3876 = vunpack.c.l.b16 %v2799
    %v3877 = vunpack.c.h.b16 %v2799
    %v3878 = vunpack.c.l.b16 %v2800
    %v3879 = vunpack.c.h.b16 %v2800
    %v3880 = vunpack.c.l.b16 %v2801
    %v3881 = vunpack.c.l.b16 %v2802
    %v3882 = vunpack.c.h.b16 %v2802
    %v3883 = vunpack.c.l.b16 %v2803
    %v3884 = vunpack.c.h.b16 %v2803
    %v3885 = vunpack.c.l.b16 %v2804
    %v3886 = vunpack.c.h.b16 %v2804
    %v3887 = vunpack.c.l.b16 %v2805
    %v3888 = vunpack.c.l.b16 %v2806
    %v3889 = vunpack.c.h.b16 %v2806
    %v3890 = vunpack.c.l.b16 %v2807
    %v3891 = vunpack.c.h.b16 %v2807
    %v3892 = vunpack.c.l.b16 %v2808
    %v3893 = vunpack.c.h.b16 %v2808
    %v3894 = vunpack.c.l.b16 %v2809
    %v3895 = vunpack.c.l.b16 %v2810
    %v3896 = vunpack.c.h.b16 %v2810
    %v3897 = vunpack.c.l.b16 %v2811
    %v3898 = vunpack.c.h.b16 %v2811
    %v3899 = vunpack.c.l.b16 %v2812
    %v3900 = vunpack.c.h.b16 %v2812
    %v3901 = vunpack.c.l.b16 %v2813
    %v3902 = vunpack.c.l.b16 %v2814
    %v3903 = vunpack.c.h.b16 %v2814
    %v3904 = vunpack.c.l.b16 %v2815
    %v3905 = vunpack.c.h.b16 %v2815
    %v3906 = vunpack.c.l.b16 %v2816
    %v3907 = vunpack.c.h.b16 %v2816
    %v3908 = vunpack.c.l.b16 %v2817
    %v3909 = vunpack.c.l.b16 %v2818
    %v3910 = vunpack.c.h.b16 %v2818
    %v3911 = vunpack.c.l.b16 %v2819
    %v3912 = vunpack.c.h.b16 %v2819
    %v3913 = vunpack.c.l.b16 %v2820
    %v3914 = vunpack.c.h.b16 %v2820
    %v3915 = vunpack.c.l.b16 %v2821
    %v3916 = vunpack.c.l.b16 %v2822
    %v3917 = vunpack.c.h.b16 %v2822
    %v3918 = vunpack.c.l.b16 %v2823
    %v3919 = vunpack.c.h.b16 %v2823
    %v3920 = vunpack.c.l.b16 %v2824
    %v3921 = vunpack.c.h.b16 %v2824
    %v3922 = vunpack.c.l.b16 %v2825
    %v3923 = vunpack.c.l.b16 %v2826
    %v3924 = vunpack.c.h.b16 %v2826
    %v3925 = vunpack.c.l.b16 %v2827
    %v3926 = vunpack.c.h.b16 %v2827
    %v3927 = vunpack.c.l.b16 %v2828
    %v3928 = vunpack.c.h.b16 %v2828
    %v3929 = vunpack.c.l.b16 %v2829
    %v3930 = vunpack.c.l.b16 %v2830
    %v3931 = vunpack.c.h.b16 %v2830
    %v3932 = vunpack.c.l.b16 %v2831
    %v3933 = vunpack.c.h.b16 %v2831
    %v3934 = vunpack.c.l.b16 %v2832
    %v3935 = vunpack.c.h.b16 %v2832
    %v3936 = vunpack.c.l.b16 %v2833
    %v3937 = vunpack.c.l.b16 %v2834
    %v3938 = vunpack.c.h.b16 %v2834
    %v3939 = vunpack.c.l.b16 %v2835
    %v3940 = vunpack.c.h.b16 %v2835
    %v3941 = vunpack.c.l.b16 %v2836
    %v3942 = vunpack.c.h.b16 %v2836
    %v3943 = vunpack.c.l.b16 %v2837
    %v3944 = vunpack.c.l.b16 %v2838
    %v3945 = vunpack.c.h.b16 %v2838
    %v3946 = vunpack.c.l.b16 %v2839
    %v3947 = vunpack.c.h.b16 %v2839
    %v3948 = vunpack.c.l.b16 %v2840
    %v3949 = vunpack.c.h.b16 %v2840
    %v3950 = vunpack.c.l.b16 %v2841
    %v3951 = vunpack.c.l.b16 %v2842
    %v3952 = vunpack.c.h.b16 %v2842
    %v3953 = vunpack.c.l.b16 %v2843
    %v3954 = vunpack.c.h.b16 %v2843
    %v3955 = vunpack.c.l.b16 %v2844
    %v3956 = vunpack.c.h.b16 %v2844
    %v3957 = vunpack.c.l.b16 %v2845
    %v3958 = vunpack.c.l.b16 %v2846
    %v3959 = vunpack.c.h.b16 %v2846
    %v3960 = vunpack.c.l.b16 %v2847
    %v3961 = vunpack.c.h.b16 %v2847
    %v3962 = vunpack.c.l.b16 %v2848
    %v3963 = vunpack.c.h.b16 %v2848
    %v3964 = vunpack.c.l.b16 %v2849
    %v3965 = vunpack.c.l.b16 %v2850
    %v3966 = vunpack.c.h.b16 %v2850
    %v3967 = vunpack.c.l.b16 %v2851
    %v3968 = vunpack.c.h.b16 %v2851
    %v3969 = vunpack.c.l.b16 %v2852
    %v3970 = vunpack.c.h.b16 %v2852
    %v3971 = vunpack.c.l.b16 %v2853
    %v3972 = vunpack.c.l.b16 %v2854
    %v3973 = vunpack.c.h.b16 %v2854
    %v3974 = vunpack.c.l.b16 %v2855
    %v3975 = vunpack.c.h.b16 %v2855
    %v3976 = vunpack.c.l.b16 %v2856
    %v3977 = vunpack.c.h.b16 %v2856
    %v3978 = vunpack.c.l.b16 %v2857
    %v3979 = vunpack.c.l.b16 %v2858
    %v3980 = vunpack.c.h.b16 %v2858
    %v3981 = vunpack.c.l.b16 %v2859
    %v3982 = vunpack.c.h.b16 %v2859
    %v3983 = vunpack.c.l.b16 %v2860
    %v3984 = vunpack.c.h.b16 %v2860
    %v3985 = vunpack.c.l.b16 %v2861
    %v3986 = vunpack.c.l.b16 %v2862
    %v3987 = vunpack.c.h.b16 %v2862
    %v3988 = vunpack.c.l.b16 %v2863
    %v3989 = vunpack.c.h.b16 %v2863
    %v3990 = vunpack.c.l.b16 %v2864
    %v3991 = vunpack.c.h.b16 %v2864
    %v3992 = vunpack.c.l.b16 %v2865
    %v3993 = vunpack.c.l.b16 %v2866
    %v3994 = vunpack.c.h.b16 %v2866
    %v3995 = vunpack.c.l.b16 %v2867
    %v3996 = vunpack.c.h.b16 %v2867
    %v3997 = vunpack.c.l.b16 %v2868
    %v3998 = vunpack.c.h.b16 %v2868
    %v3999 = vunpack.c.l.b16 %v2869
    %v4000 = vunpack.c.l.b16 %v2870
    %v4001 = vunpack.c.h.b16 %v2870
    %v4002 = vunpack.c.l.b16 %v2871
    %v4003 = vunpack.c.h.b16 %v2871
    %v4004 = vunpack.c.l.b16 %v2872
    %v4005 = vunpack.c.h.b16 %v2872
    %v4006 = vunpack.c.l.b16 %v2873
    %v4007 = vunpack.c.l.b16 %v2874
    %v4008 = vunpack.c.h.b16 %v2874
    %v4009 = vunpack.c.l.b16 %v2875
    %v4010 = vunpack.c.h.b16 %v2875
    %v4011 = vunpack.c.l.b16 %v2876
    %v4012 = vunpack.c.h.b16 %v2876
    %v4013 = vunpack.c.l.b16 %v2877
    %v4014 = vunpack.c.l.b16 %v2878
    %v4015 = vunpack.c.h.b16 %v2878
    %v4016 = vunpack.c.l.b16 %v2879
    %v4017 = vunpack.c.h.b16 %v2879
    %v4018 = vunpack.c.l.b16 %v2880
    %v4019 = vunpack.c.h.b16 %v2880
    %v4020 = vunpack.c.l.b16 %v2881
    %v4021 = vunpack.c.l.b16 %v2882
    %v4022 = vunpack.c.h.b16 %v2882
    %v4023 = vunpack.c.l.b16 %v2883
    %v4024 = vunpack.c.h.b16 %v2883
    %v4025 = vunpack.c.l.b16 %v2884
    %v4026 = vunpack.c.h.b16 %v2884
    %v4027 = vunpack.c.l.b16 %v2885
    %v4028 = vunpack.c.l.b16 %v2886
    %v4029 = vunpack.c.h.b16 %v2886
    %v4030 = vunpack.c.l.b16 %v2887
    %v4031 = vunpack.c.h.b16 %v2887
    %v4032 = vunpack.c.l.b16 %v2888
    %v4033 = vunpack.c.h.b16 %v2888
    %v4034 = vunpack.c.l.b16 %v2889
    %v4035 = vunpack.c.l.b16 %v2890
    %v4036 = vunpack.c.h.b16 %v2890
    %v4037 = vunpack.c.l.b16 %v2891
    %v4038 = vunpack.c.h.b16 %v2891
    %v4039 = vunpack.c.l.b16 %v2892
    %v4040 = vunpack.c.h.b16 %v2892
    %v4041 = vunpack.c.l.b16 %v2893
    %v4042 = vunpack.c.l.b16 %v2894
    %v4043 = vunpack.c.h.b16 %v2894
    %v4044 = vunpack.c.l.b16 %v2895
    %v4045 = vunpack.c.h.b16 %v2895
    %v4046 = vunpack.c.l.b16 %v2896
    %v4047 = vunpack.c.h.b16 %v2896
    %v4048 = vunpack.c.l.b16 %v2897
    %v4049 = vunpack.c.l.b16 %v2898
    %v4050 = vunpack.c.h.b16 %v2898
    %v4051 = vunpack.c.l.b16 %v2899
    %v4052 = vunpack.c.h.b16 %v2899
    %v4053 = vunpack.c.l.b16 %v2900
    %v4054 = vunpack.c.h.b16 %v2900
    %v4055 = vunpack.c.l.b16 %v2901
    %v4056 = vunpack.c.l.b16 %v2902
    %v4057 = vunpack.c.h.b16 %v2902
    %v4058 = vunpack.c.l.b16 %v2903
    %v4059 = vunpack.c.h.b16 %v2903
    %v4060 = vunpack.c.l.b16 %v2904
    %v4061 = vunpack.c.h.b16 %v2904
    %v4062 = vunpack.c.l.b16 %v2905
    %v4063 = vunpack.c.l.b16 %v2906
    %v4064 = vunpack.c.h.b16 %v2906
    %v4065 = vunpack.c.l.b16 %v2907
    %v4066 = vunpack.c.h.b16 %v2907
    %v4067 = vunpack.c.l.b16 %v2908
    %v4068 = vunpack.c.h.b16 %v2908
    %v4069 = vunpack.c.l.b16 %v2909
    %v4070 = vunpack.c.l.b16 %v2910
    %v4071 = vunpack.c.h.b16 %v2910
    %v4072 = vunpack.c.l.b16 %v2911
    %v4073 = vunpack.c.h.b16 %v2911
    %v4074 = vunpack.c.l.b16 %v2912
    %v4075 = vunpack.c.h.b16 %v2912
    %v4076 = vunpack.c.l.b16 %v2913
    %v4077 = vunpack.c.l.b16 %v2914
    %v4078 = vunpack.c.h.b16 %v2914
    %v4079 = vunpack.c.l.b16 %v2915
    %v4080 = vunpack.c.h.b16 %v2915
    %v4081 = vunpack.c.l.b16 %v2916
    %v4082 = vunpack.c.h.b16 %v2916
    %v4083 = vunpack.c.l.b16 %v2917
    %v4084 = vunpack.c.l.b16 %v2918
    %v4085 = vunpack.c.h.b16 %v2918
    %v4086 = vunpack.c.l.b16 %v2919
    %v4087 = vunpack.c.h.b16 %v2919
    %v4088 = vunpack.c.l.b16 %v2920
    %v4089 = vunpack.c.h.b16 %v2920
    %v4090 = vunpack.c.l.b16 %v2921
    %v4091 = vunpack.c.l.b16 %v2922
    %v4092 = vunpack.c.h.b16 %v2922
    %v4093 = vunpack.c.l.b16 %v2923
    %v4094 = vunpack.c.h.b16 %v2923
    %v4095 = vunpack.c.l.b16 %v2924
    %v4096 = vunpack.c.h.b16 %v2924
    %v4097 = vunpack.c.l.b16 %v2925
    %v4098 = vunpack.c.l.b16 %v2926
    %v4099 = vunpack.c.h.b16 %v2926
    %v4100 = vunpack.c.l.b16 %v2927
    %v4101 = vunpack.c.h.b16 %v2927
    %v4102 = vunpack.c.l.b16 %v2928
    %v4103 = vunpack.c.h.b16 %v2928
    %v4104 = vunpack.c.l.b16 %v2929
    %v4105 = vunpack.c.l.b16 %v2930
    %v4106 = vunpack.c.h.b16 %v2930
    %v4107 = vunpack.c.l.b16 %v2931
    %v4108 = vunpack.c.h.b16 %v2931
    %v4109 = vunpack.c.l.b16 %v2932
    %v4110 = vunpack.c.h.b16 %v2932
    %v4111 = vunpack.c.l.b16 %v2933
    %v4112 = vunpack.c.l.b16 %v2934
    %v4113 = vunpack.c.h.b16 %v2934
    %v4114 = vunpack.c.l.b16 %v2935
    %v4115 = vunpack.c.h.b16 %v2935
    %v4116 = vunpack.c.l.b16 %v2936
    %v4117 = vunpack.c.h.b16 %v2936
    %v4118 = vunpack.c.l.b16 %v2937
    %v4119 = vunpack.c.l.b16 %v2938
    %v4120 = vunpack.c.h.b16 %v2938
    %v4121 = vunpack.c.l.b16 %v2939
    %v4122 = vunpack.c.h.b16 %v2939
    %v4123 = vunpack.c.l.b16 %v2940
    %v4124 = vunpack.c.h.b16 %v2940
    %v4125 = vunpack.c.l.b16 %v2941
    %v4126 = vunpack.c.l.b16 %v2942
    %v4127 = vunpack.c.h.b16 %v2942
    %v4128 = vunpack.c.l.b16 %v2943
    %v4129 = vunpack.c.h.b16 %v2943
    %v4130 = vunpack.c.l.b16 %v2944
    %v4131 = vunpack.c.h.b16 %v2944
    %v4132 = vunpack.c.l.b16 %v2945
    %v4133 = vunpack.c.l.b16 %v2946
    %v4134 = vunpack.c.h.b16 %v2946
    %v4135 = vunpack.c.l.b16 %v2947
    %v4136 = vunpack.c.h.b16 %v2947
    %v4137 = vunpack.c.l.b16 %v2948
    %v4138 = vunpack.c.h.b16 %v2948
    %v4139 = vunpack.c.l.b16 %v2949
    %v4140 = vunpack.c.l.b16 %v2950
    %v4141 = vunpack.c.h.b16 %v2950
    %v4142 = vunpack.c.l.b16 %v2951
    %v4143 = vunpack.c.h.b16 %v2951
    %v4144 = vunpack.c.l.b16 %v2952
    %v4145 = vunpack.c.h.b16 %v2952
    %v4146 = vunpack.c.l.b16 %v2953
    %v4147 = vunpack.c.l.b16 %v2954
    %v4148 = vunpack.c.h.b16 %v2954
    %v4149 = vunpack.c.l.b16 %v2955
    %v4150 = vunpack.c.h.b16 %v2955
    %v4151 = vunpack.c.l.b16 %v2956
    %v4152 = vunpack.c.h.b16 %v2956
    %v4153 = vunpack.c.l.b16 %v2957
    %v4154 = vunpack.c.l.b16 %v2958
    %v4155 = vunpack.c.h.b16 %v2958
    %v4156 = vunpack.c.l.b16 %v2959
    %v4157 = vunpack.c.h.b16 %v2959
    %v4158 = vunpack.c.l.b16 %v2960
    %v4159 = vunpack.c.h.b16 %v2960
    %v4160 = vunpack.c.l.b16 %v2961
    %v4161 = vunpack.c.l.b16 %v2962
    %v4162 = vunpack.c.h.b16 %v2962
    %v4163 = vunpack.c.l.b16 %v2963
    %v4164 = vunpack.c.h.b16 %v2963
    %v4165 = vunpack.c.l.b16 %v2964
    %v4166 = vunpack.c.h.b16 %v2964
    %v4167 = vunpack.c.l.b16 %v2965
    %v4168 = vunpack.c.l.b16 %v2966
    %v4169 = vunpack.c.h.b16 %v2966
    %v4170 = vunpack.c.l.b16 %v2967
    %v4171 = vunpack.c.h.b16 %v2967
    %v4172 = vunpack.c.l.b16 %v2968
    %v4173 = vunpack.c.h.b16 %v2968
    %v4174 = vunpack.c.l.b16 %v2969
    %v4175 = vunpack.c.l.b16 %v2970
    %v4176 = vunpack.c.h.b16 %v2970
    %v4177 = vunpack.c.l.b16 %v2971
    %v4178 = vunpack.c.h.b16 %v2971
    %v4179 = vunpack.c.l.b16 %v2972
    %v4180 = vunpack.c.h.b16 %v2972
    %v4181 = vunpack.c.l.b16 %v2973
    %v4182 = vunpack.c.l.b16 %v2974
    %v4183 = vunpack.c.h.b16 %v2974
    %v4184 = vunpack.c.l.b16 %v2975
    %v4185 = vunpack.c.h.b16 %v2975
    %v4186 = vunpack.c.l.b16 %v2976
    %v4187 = vunpack.c.h.b16 %v2976
    %v4188 = vunpack.c.l.b16 %v2977
    %v4189 = vunpack.c.l.b16 %v2978
    %v4190 = vunpack.c.h.b16 %v2978
    %v4191 = vunpack.c.l.b16 %v2979
    %v4192 = vunpack.c.h.b16 %v2979
    %v4193 = vunpack.c.l.b16 %v2980
    %v4194 = vunpack.c.h.b16 %v2980
    %v4195 = vunpack.c.l.b16 %v2981
    %v4196 = vunpack.c.l.b16 %v2982
    %v4197 = vunpack.c.h.b16 %v2982
    %v4198 = vunpack.c.l.b16 %v2983
    %v4199 = vunpack.c.h.b16 %v2983
    %v4200 = vunpack.c.l.b16 %v2984
    %v4201 = vunpack.c.h.b16 %v2984
    %v4202 = vunpack.c.l.b16 %v2985
    %v4203 = vunpack.c.l.b16 %v2986
    %v4204 = vunpack.c.h.b16 %v2986
    %v4205 = vunpack.c.l.b16 %v2987
    %v4206 = vunpack.c.h.b16 %v2987
    %v4207 = vunpack.c.l.b16 %v2988
    %v4208 = vunpack.c.h.b16 %v2988
    %v4209 = vunpack.c.l.b16 %v2989
    %v4210 = vunpack.c.l.b16 %v2990
    %v4211 = vunpack.c.h.b16 %v2990
    %v4212 = vunpack.c.l.b16 %v2991
    %v4213 = vunpack.c.h.b16 %v2991
    %v4214 = vunpack.c.l.b16 %v2992
    %v4215 = vunpack.c.h.b16 %v2992
    %v4216 = vunpack.c.l.b16 %v2993
    %v4217 = vunpack.c.l.b16 %v2994
    %v4218 = vunpack.c.h.b16 %v2994
    %v4219 = vunpack.c.l.b16 %v2995
    %v4220 = vunpack.c.h.b16 %v2995
    %v4221 = vunpack.c.l.b16 %v2996
    %v4222 = vunpack.c.h.b16 %v2996
    %v4223 = vunpack.c.l.b16 %v2997
    %v4224 = vunpack.c.l.b16 %v2998
    %v4225 = vunpack.c.h.b16 %v2998
    %v4226 = vunpack.c.l.b16 %v2999
    %v4227 = vunpack.c.h.b16 %v2999
    %v4228 = vunpack.c.l.b16 %v3000
    %v4229 = vunpack.c.h.b16 %v3000
    %v4230 = vunpack.c.l.b16 %v3001
    %v4231 = vunpack.c.l.b16 %v3002
    %v4232 = vunpack.c.h.b16 %v3002
    %v4233 = vunpack.c.l.b16 %v3003
    %v4234 = vunpack.c.h.b16 %v3003
    %v4235 = vunpack.c.l.b16 %v3004
    %v4236 = vunpack.c.h.b16 %v3004
    %v4237 = vunpack.c.l.b16 %v3005
    %v4238 = vunpack.c.l.b16 %v3006
    %v4239 = vunpack.c.h.b16 %v3006
    %v4240 = vunpack.c.l.b16 %v3007
    %v4241 = vunpack.c.h.b16 %v3007
    %v4242 = vunpack.c.l.b16 %v3008
    %v4243 = vunpack.c.h.b16 %v3008
    %v4244 = vunpack.c.l.b16 %v3009
    %v4245 = vunpack.c.l.b16 %v3010
    %v4246 = vunpack.c.h.b16 %v3010
    %v4247 = vunpack.c.l.b16 %v3011
    %v4248 = vunpack.c.h.b16 %v3011
    %v4249 = vunpack.c.l.b16 %v3012
    %v4250 = vunpack.c.h.b16 %v3012
    %v4251 = vunpack.c.l.b16 %v3013
    %v4252 = vunpack.c.l.b16 %v3014
    %v4253 = vunpack.c.h.b16 %v3014
    %v4254 = vunpack.c.l.b16 %v3015
    %v4255 = vunpack.c.h.b16 %v3015
    %v4256 = vunpack.c.l.b16 %v3016
    %v4257 = vunpack.c.h.b16 %v3016
    %v4258 = vunpack.c.l.b16 %v3017
    %v4259 = vunpack.c.l.b16 %v3018
    %v4260 = vunpack.c.h.b16 %v3018
    %v4261 = vunpack.c.l.b16 %v3019
    %v4262 = vunpack.c.h.b16 %v3019
    %v4263 = vunpack.c.l.b16 %v3020
    %v4264 = vunpack.c.h.b16 %v3020
    %v4265 = vunpack.c.l.b16 %v3021
    %v4266 = vunpack.c.l.b16 %v3022
    %v4267 = vunpack.c.h.b16 %v3022
    %v4268 = vunpack.c.l.b16 %v3023
    %v4269 = vunpack.c.h.b16 %v3023
    %v4270 = vunpack.c.l.b16 %v3024
    %v4271 = vunpack.c.h.b16 %v3024
    %v4272 = vunpack.c.l.b16 %v3025
    %v4273 = vunpack.c.l.b16 %v3026
    %v4274 = vunpack.c.h.b16 %v3026
    %v4275 = vunpack.c.l.b16 %v3027
    %v4276 = vunpack.c.h.b16 %v3027
    %v4277 = vunpack.c.l.b16 %v3028
    %v4278 = vunpack.c.h.b16 %v3028
    %v4279 = vunpack.c.l.b16 %v3029
    %v4280 = vunpack.c.l.b16 %v3030
    %v4281 = vunpack.c.h.b16 %v3030
    %v4282 = vunpack.c.l.b16 %v3031
    %v4283 = vunpack.c.h.b16 %v3031
    %v4284 = vunpack.c.l.b16 %v3032
    %v4285 = vunpack.c.h.b16 %v3032
    %v4286 = vunpack.c.l.b16 %v3033
    %v4287 = vunpack.c.l.b16 %v3034
    %v4288 = vunpack.c.h.b16 %v3034
    %v4289 = vunpack.c.l.b16 %v3035
    %v4290 = vunpack.c.h.b16 %v3035
    %v4291 = vunpack.c.l.b16 %v3036
    %v4292 = vunpack.c.h.b16 %v3036
    %v4293 = vunpack.c.l.b16 %v3037
    %v4294 = vunpack.c.l.b16 %v3038
    %v4295 = vunpack.c.h.b16 %v3038
    %v4296 = vunpack.c.l.b16 %v3039
    %v4297 = vunpack.c.h.b16 %v3039
    %v4298 = vunpack.c.l.b16 %v3040
    %v4299 = vunpack.c.h.b16 %v3040
    %v4300 = vunpack.c.l.b16 %v3041
    %v4301 = vunpack.c.l.b16 %v3042
    %v4302 = vunpack.c.h.b16 %v3042
    %v4303 = vunpack.c.l.b16 %v3043
    %v4304 = vunpack.c.h.b16 %v3043
    %v4305 = vunpack.c.l.b16 %v3044
    %v4306 = vunpack.c.h.b16 %v3044
    %v4307 = vunpack.c.l.b16 %v3045
    %v4308 = vunpack.c.l.b16 %v3046
    %v4309 = vunpack.c.h.b16 %v3046
    %v4310 = vunpack.c.l.b16 %v3047
    %v4311 = vunpack.c.h.b16 %v3047
    %v4312 = vunpack.c.l.b16 %v3048
    %v4313 = vunpack.c.h.b16 %v3048
    %v4314 = vunpack.c.l.b16 %v3049
    %v4315 = vunpack.c.l.b16 %v3050
    %v4316 = vunpack.c.h.b16 %v3050
    %v4317 = vunpack.c.l.b16 %v3051
    %v4318 = vunpack.c.h.b16 %v3051
    %v4319 = vunpack.c.l.b16 %v3052
    %v4320 = vunpack.c.h.b16 %v3052
    %v4321 = vunpack.c.l.b16 %v3053
    %v4322 = vunpack.c.l.b16 %v3054
    %v4323 = vunpack.c.h.b16 %v3054
    %v4324 = vunpack.c.l.b16 %v3055
    %v4325 = vunpack.c.h.b16 %v3055
    %v4326 = vunpack.c.l.b16 %v3056
    %v4327 = vunpack.c.h.b16 %v3056
    %v4328 = vunpack.c.l.b16 %v3057
    %v4329 = vunpack.c.l.b16 %v3058
    %v4330 = vunpack.c.h.b16 %v3058
    %v4331 = vunpack.c.l.b16 %v3059
    %v4332 = vunpack.c.h.b16 %v3059
    %v4333 = vunpack.c.l.b16 %v3060
    %v4334 = vunpack.c.h.b16 %v3060
    %v4335 = vunpack.c.l.b16 %v3061
    %v4336 = vunpack.c.l.b16 %v3062
    %v4337 = vunpack.c.h.b16 %v3062
    %v4338 = vunpack.c.l.b16 %v3063
    %v4339 = vunpack.c.h.b16 %v3063
    %v4340 = vunpack.c.l.b16 %v3064
    %v4341 = vunpack.c.h.b16 %v3064
    %v4342 = vunpack.c.l.b16 %v3065
    %v4343 = vunpack.c.l.b16 %v3066
    %v4344 = vunpack.c.h.b16 %v3066
    %v4345 = vunpack.c.l.b16 %v3067
    %v4346 = vunpack.c.h.b16 %v3067
    %v4347 = vunpack.c.l.b16 %v3068
    %v4348 = vunpack.c.h.b16 %v3068
    %v4349 = vunpack.c.l.b16 %v3069
    %v4350 = vunpack.c.l.b16 %v3070
    %v4351 = vunpack.c.h.b16 %v3070
    %v4352 = vunpack.c.l.b16 %v3071
    %v4353 = vunpack.c.h.b16 %v3071
    %v4354 = vunpack.c.l.b16 %v3072
    %v4355 = vunpack.c.h.b16 %v3072
    %v4356 = vunpack.c.l.b16 %v3073
    %v4357 = vunpack.c.l.b16 %v3074
    %v4358 = vunpack.c.h.b16 %v3074
    %v4359 = vunpack.c.l.b16 %v3075
    %v4360 = vunpack.c.h.b16 %v3075
    %v4361 = vunpack.c.l.b16 %v3076
    %v4362 = vunpack.c.h.b16 %v3076
    %v4363 = vunpack.c.l.b16 %v3077
    %v4364 = vunpack.c.l.b16 %v3078
    %v4365 = vunpack.c.h.b16 %v3078
    %v4366 = vunpack.c.l.b16 %v3079
    %v4367 = vunpack.c.h.b16 %v3079
    %v4368 = vunpack.c.l.b16 %v3080
    %v4369 = vunpack.c.h.b16 %v3080
    %v4370 = vunpack.c.l.b16 %v3081
    %v4371 = vunpack.c.l.b16 %v3082
    %v4372 = vunpack.c.h.b16 %v3082
    %v4373 = vunpack.c.l.b16 %v3083
    %v4374 = vunpack.c.h.b16 %v3083
    %v4375 = vunpack.c.l.b16 %v3084
    %v4376 = vunpack.c.h.b16 %v3084
    %v4377 = vunpack.c.l.b16 %v3085
    %v4378 = vunpack.c.l.b16 %v3086
    %v4379 = vunpack.c.h.b16 %v3086
    %v4380 = vunpack.c.l.b16 %v3087
    %v4381 = vunpack.c.h.b16 %v3087
    %v4382 = vunpack.c.l.b16 %v3088
    %v4383 = vunpack.c.h.b16 %v3088
    %v4384 = vunpack.c.l.b16 %v3089
    %v4385 = vunpack.c.l.b16 %v3090
    %v4386 = vunpack.c.h.b16 %v3090
    %v4387 = vunpack.c.l.b16 %v3091
    %v4388 = vunpack.c.h.b16 %v3091
    %v4389 = vunpack.c.l.b16 %v3092
    %v4390 = vunpack.c.h.b16 %v3092
    %v4391 = vunpack.c.l.b16 %v3093
    %v4392 = vunpack.c.l.b16 %v3094
    %v4393 = vunpack.c.h.b16 %v3094
    %v4394 = vunpack.c.l.b16 %v3095
    %v4395 = vunpack.c.h.b16 %v3095
    %v4396 = vunpack.c.l.b16 %v3096
    %v4397 = vunpack.c.h.b16 %v3096
    %v4398 = vunpack.c.l.b16 %v3097
    %v4399 = vunpack.c.l.b16 %v3098
    %v4400 = vunpack.c.h.b16 %v3098
    %v4401 = vunpack.c.l.b16 %v3099
    %v4402 = vunpack.c.h.b16 %v3099
    %v4403 = vunpack.c.l.b16 %v3100
    %v4404 = vunpack.c.h.b16 %v3100
    %v4405 = vunpack.c.l.b16 %v3101
    %v4406 = vunpack.c.l.b16 %v3102
    %v4407 = vunpack.c.h.b16 %v3102
    %v4408 = vunpack.c.l.b16 %v3103
    %v4409 = vunpack.c.h.b16 %v3103
    %v4410 = vunpack.c.l.b16 %v3104
    %v4411 = vunpack.c.h.b16 %v3104
    %v4412 = vunpack.c.l.b16 %v3105
    %v4413 = vunpack.c.l.b16 %v3106
    %v4414 = vunpack.c.h.b16 %v3106
    %v4415 = vunpack.c.l.b16 %v3107
    %v4416 = vunpack.c.h.b16 %v3107
    %v4417 = vunpack.c.l.b16 %v3108
    %v4418 = vunpack.c.h.b16 %v3108
    %v4419 = vunpack.c.l.b16 %v3109
    %v4420 = vunpack.c.l.b16 %v3110
    %v4421 = vunpack.c.h.b16 %v3110
    %v4422 = vunpack.c.l.b16 %v3111
    %v4423 = vunpack.c.h.b16 %v3111
    %v4424 = vunpack.c.l.b16 %v3112
    %v4425 = vunpack.c.h.b16 %v3112
    %v4426 = vunpack.c.l.b16 %v3113
    %v4427 = vunpack.c.l.b16 %v3114
    %v4428 = vunpack.c.h.b16 %v3114
    %v4429 = vunpack.c.l.b16 %v3115
    %v4430 = vunpack.c.h.b16 %v3115
    %v4431 = vunpack.c.l.b16 %v3116
    %v4432 = vunpack.c.h.b16 %v3116
    %v4433 = vunpack.c.l.b16 %v3117
    %v4434 = vunpack.c.l.b16 %v3118
    %v4435 = vunpack.c.h.b16 %v3118
    %v4436 = vunpack.c.l.b16 %v3119
    %v4437 = vunpack.c.h.b16 %v3119
    %v4438 = vunpack.c.l.b16 %v3120
    %v4439 = vunpack.c.h.b16 %v3120
    %v4440 = vunpack.c.l.b16 %v3121
    %v4441 = vunpack.c.l.b16 %v3122
    %v4442 = vunpack.c.h.b16 %v3122
    %v4443 = vunpack.c.l.b16 %v3123
    %v4444 = vunpack.c.h.b16 %v3123
    %v4445 = vunpack.c.l.b16 %v3124
    %v4446 = vunpack.c.h.b16 %v3124
    %v4447 = vunpack.c.l.b16 %v3125
    %v4448 = vunpack.c.l.b16 %v3126
    %v4449 = vunpack.c.h.b16 %v3126
    %v4450 = vunpack.c.l.b16 %v3127
    %v4451 = vunpack.c.h.b16 %v3127
    %v4452 = vunpack.c.l.b16 %v3128
    %v4453 = vunpack.c.h.b16 %v3128
    %v4454 = vunpack.c.l.b16 %v3129
    %v4455 = vunpack.c.l.b16 %v3130
    %v4456 = vunpack.c.h.b16 %v3130
    %v4457 = vunpack.c.l.b16 %v3131
    %v4458 = vunpack.c.h.b16 %v3131
    %v4459 = vunpack.c.l.b16 %v3132
    %v4460 = vunpack.c.h.b16 %v3132
    %v4461 = vunpack.c.l.b16 %v3133
    %v4462 = vunpack.c.l.b16 %v3134
    %v4463 = vunpack.c.h.b16 %v3134
    %v4464 = vunpack.c.l.b16 %v3135
    %v4465 = vunpack.c.h.b16 %v3135
    %v4466 = vunpack.c.l.b16 %v3136
    %v4467 = vunpack.c.h.b16 %v3136
    %v4468 = vunpack.c.l.b16 %v3137
    %v4469 = vunpack.c.l.b16 %v3138
    %v4470 = vunpack.c.h.b16 %v3138
    %v4471 = vunpack.c.l.b16 %v3139
    %v4472 = vunpack.c.h.b16 %v3139
    %v4473 = vunpack.c.l.b16 %v3140
    %v4474 = vunpack.c.h.b16 %v3140
    %v4475 = vunpack.c.l.b16 %v3141
    %v4476 = vunpack.c.l.b16 %v3142
    %v4477 = vunpack.c.h.b16 %v3142
    %v4478 = vunpack.c.l.b16 %v3143
    %v4479 = vunpack.c.h.b16 %v3143
    %v4480 = vunpack.c.l.b16 %v3144
    %v4481 = vunpack.c.h.b16 %v3144
    %v4482 = vunpack.c.l.b16 %v3145
    %v4483 = vunpack.c.l.b16 %v3146
    %v4484 = vunpack.c.h.b16 %v3146
    %v4485 = vunpack.c.l.b16 %v3147
    %v4486 = vunpack.c.h.b16 %v3147
    %v4487 = vunpack.c.l.b16 %v3148
    %v4488 = vunpack.c.h.b16 %v3148
    %v4489 = vunpack.c.l.b16 %v3149
    %v4490 = vunpack.c.l.b16 %v3150
    %v4491 = vunpack.c.h.b16 %v3150
    %v4492 = vunpack.c.l.b16 %v3151
    %v4493 = vunpack.c.h.b16 %v3151
    %v4494 = vunpack.c.l.b16 %v3152
    %v4495 = vunpack.c.h.b16 %v3152
    %v4496 = vunpack.c.l.b16 %v3153
    %v4497 = vunpack.c.l.b16 %v3154
    %v4498 = vunpack.c.h.b16 %v3154
    %v4499 = vunpack.c.l.b16 %v3155
    %v4500 = vunpack.c.h.b16 %v3155
    %v4501 = vunpack.c.l.b16 %v3156
    %v4502 = vunpack.c.h.b16 %v3156
    %v4503 = vunpack.c.l.b16 %v3157
    %v4504 = vunpack.c.l.b16 %v3158
    %v4505 = vunpack.c.h.b16 %v3158
    %v4506 = vunpack.c.l.b16 %v3159
    %v4507 = vunpack.c.h.b16 %v3159
    %v4508 = vunpack.c.l.b16 %v3160
    %v4509 = vunpack.c.h.b16 %v3160
    %v4510 = vunpack.c.l.b16 %v3161
    %v4511 = vunpack.c.l.b16 %v3162
    %v4512 = vunpack.c.h.b16 %v3162
    %v4513 = vunpack.c.l.b16 %v3163
    %v4514 = vunpack.c.h.b16 %v3163
    %v4515 = vunpack.c.l.b16 %v3164
    %v4516 = vunpack.c.h.b16 %v3164
    %v4517 = vunpack.c.l.b16 %v3165
    %v4518 = vunpack.c.l.b16 %v3166
    %v4519 = vunpack.c.h.b16 %v3166
    %v4520 = vunpack.c.l.b16 %v3167
    %v4521 = vunpack.c.h.b16 %v3167
    %v4522 = vunpack.c.l.b16 %v3168
    %v4523 = vunpack.c.h.b16 %v3168
    %v4524 = vunpack.c.l.b16 %v3169
    %v4525 = vunpack.c.l.b16 %v3170
    %v4526 = vunpack.c.h.b16 %v3170
    %v4527 = vunpack.c.l.b16 %v3171
    %v4528 = vunpack.c.h.b16 %v3171
    %v4529 = vunpack.c.l.b16 %v3172
    %v4530 = vunpack.c.h.b16 %v3172
    %v4531 = vunpack.c.l.b16 %v3173
    %v4532 = vunpack.c.l.b16 %v3174
    %v4533 = vunpack.c.h.b16 %v3174
    %v4534 = vunpack.c.l.b16 %v3175
    %v4535 = vunpack.c.h.b16 %v3175
    %v4536 = vunpack.c.l.b16 %v3176
    %v4537 = vunpack.c.h.b16 %v3176
    %v4538 = vunpack.c.l.b16 %v3177
    %v4539 = vunpack.c.l.b16 %v3178
    %v4540 = vunpack.c.h.b16 %v3178
    %v4541 = vunpack.c.l.b16 %v3179
    %v4542 = vunpack.c.h.b16 %v3179
    %v4543 = vunpack.c.l.b16 %v3180
    %v4544 = vunpack.c.h.b16 %v3180
    %v4545 = vunpack.c.l.b16 %v3181
    %v4546 = vunpack.c.l.b16 %v3182
    %v4547 = vunpack.c.h.b16 %v3182
    %v4548 = vunpack.c.l.b16 %v3183
    %v4549 = vunpack.c.h.b16 %v3183
    %v4550 = vunpack.c.l.b16 %v3184
    %v4551 = vunpack.c.h.b16 %v3184
    %v4552 = vunpack.c.l.b16 %v3185
    %v4553 = vunpack.c.l.b16 %v3186
    %v4554 = vunpack.c.h.b16 %v3186
    %v4555 = vunpack.c.l.b16 %v3187
    %v4556 = vunpack.c.h.b16 %v3187
    %v4557 = vunpack.c.l.b16 %v3188
    %v4558 = vunpack.c.h.b16 %v3188
    %v4559 = vunpack.c.l.b16 %v3189
    %v4560 = vunpack.c.l.b16 %v3190
    %v4561 = vunpack.c.h.b16 %v3190
    %v4562 = vunpack.c.l.b16 %v3191
    %v4563 = vunpack.c.h.b16 %v3191
    %v4564 = vunpack.c.l.b16 %v3192
    %v4565 = vunpack.c.h.b16 %v3192
    %v4566 = vunpack.c.l.b16 %v3193
    %v4567 = vunpack.c.l.b16 %v3194
    %v4568 = vunpack.c.h.b16 %v3194
    %v4569 = vunpack.c.l.b16 %v3195
    %v4570 = vunpack.c.h.b16 %v3195
    %v4571 = vunpack.c.l.b16 %v3196
    %v4572 = vunpack.c.h.b16 %v3196
    %v4573 = vunpack.c.l.b16 %v3197
    %v4574 = vunpack.c.l.b16 %v3198
    %v4575 = vunpack.c.h.b16 %v3198
    %v4576 = vunpack.c.l.b16 %v3199
    %v4577 = vunpack.c.h.b16 %v3199
    %v4578 = vunpack.c.l.b16 %v3200
    %v4579 = vunpack.c.h.b16 %v3200
    %v4580 = vunpack.c.l.b16 %v3201
    %v4581 = vunpack.c.l.b16 %v3202
    %v4582 = vunpack.c.h.b16 %v3202
    %v4583 = vunpack.c.l.b16 %v3203
    %v4584 = vunpack.c.h.b16 %v3203
    %v4585 = vunpack.c.l.b16 %v3204
    %v4586 = vunpack.c.h.b16 %v3204
    %v4587 = vunpack.c.l.b16 %v3205
    %v4588 = vunpack.c.l.b16 %v3206
    %v4589 = vunpack.c.h.b16 %v3206
    %v4590 = vunpack.c.l.b16 %v3207
    %v4591 = vunpack.c.h.b16 %v3207
    %v4592 = vunpack.c.l.b16 %v3208
    %v4593 = vunpack.c.h.b16 %v3208
    %v4594 = vunpack.c.l.b16 %v3209
    %v4595 = vunpack.c.l.b16 %v3210
    %v4596 = vunpack.c.h.b16 %v3210
    %v4597 = vunpack.c.l.b16 %v3211
    %v4598 = vunpack.c.h.b16 %v3211
    %v4599 = vunpack.c.l.b16 %v3212
    %v4600 = vunpack.c.h.b16 %v3212
    %v4601 = vunpack.c.l.b16 %v3213
    %v4602 = vunpack.c.l.b16 %v3214
    %v4603 = vunpack.c.h.b16 %v3214
    %v4604 = vunpack.c.l.b16 %v3215
    %v4605 = vunpack.c.h.b16 %v3215
    %v4606 = vunpack.c.l.b16 %v3216
    %v4607 = vunpack.c.h.b16 %v3216
    %v4608 = vunpack.c.l.b16 %v3217
    %v4609 = vunpack.c.l.b16 %v3218
    %v4610 = vunpack.c.h.b16 %v3218
    %v4611 = vunpack.c.l.b16 %v3219
    %v4612 = vunpack.c.h.b16 %v3219
    %v4613 = vunpack.c.l.b16 %v3220
    %v4614 = vunpack.c.h.b16 %v3220
    %v4615 = vunpack.c.l.b16 %v3221
    %v4616 = vunpack.c.l.b16 %v3222
    %v4617 = vunpack.c.h.b16 %v3222
    %v4618 = vunpack.c.l.b16 %v3223
    %v4619 = vunpack.c.h.b16 %v3223
    %v4620 = vunpack.c.l.b16 %v3224
    %v4621 = vunpack.c.h.b16 %v3224
    %v4622 = vunpack.c.l.b16 %v3225
    %v4623 = vunpack.c.l.b16 %v3226
    %v4624 = vunpack.c.h.b16 %v3226
    %v4625 = vunpack.c.l.b16 %v3227
    %v4626 = vunpack.c.h.b16 %v3227
    %v4627 = vunpack.c.l.b16 %v3228
    %v4628 = vunpack.c.h.b16 %v3228
    %v4629 = vunpack.c.l.b16 %v3229
    %v4630 = vunpack.c.l.b16 %v3230
    %v4631 = vunpack.c.h.b16 %v3230
    %v4632 = vunpack.c.l.b16 %v3231
    %v4633 = vunpack.c.h.b16 %v3231
    %v4634 = vunpack.c.l.b16 %v3232
    %v4635 = vunpack.c.h.b16 %v3232
    %v4636 = vunpack.c.l.b16 %v3233
    %v4637 = vunpack.c.l.b16 %v3234
    %v4638 = vunpack.c.h.b16 %v3234
    %v4639 = vunpack.c.l.b16 %v3235
    %v4640 = vunpack.c.h.b16 %v3235
    %v4641 = vunpack.c.l.b16 %v3236
    %v4642 = vunpack.c.h.b16 %v3236
    %v4643 = vunpack.c.l.b16 %v3237
    %v4644 = vunpack.c.l.b16 %v3238
    %v4645 = vunpack.c.h.b16 %v3238
    %v4646 = vunpack.c.l.b16 %v3239
    %v4647 = vunpack.c.h.b16 %v3239
    %v4648 = vunpack.c.l.b16 %v3240
    %v4649 = vunpack.c.h.b16 %v3240
    %v4650 = vunpack.c.l.b16 %v3241
    %v4651 = vunpack.c.l.b16 %v3242
    %v4652 = vunpack.c.h.b16 %v3242
    %v4653 = vunpack.c.l.b16 %v3243
    %v4654 = vunpack.c.h.b16 %v3243
    %v4655 = vunpack.c.l.b16 %v3244
    %v4656 = vunpack.c.h.b16 %v3244
    %v4657 = vunpack.c.l.b16 %v3245
    %v4658 = vunpack.c.l.b16 %v3246
    %v4659 = vunpack.c.h.b16 %v3246
    %v4660 = vunpack.c.l.b16 %v3247
    %v4661 = vunpack.c.h.b16 %v3247
    %v4662 = vunpack.c.l.b16 %v3248
    %v4663 = vunpack.c.h.b16 %v3248
    %v4664 = vunpack.c.l.b16 %v3249
    %v4665 = vunpack.c.l.b16 %v3250
    %v4666 = vunpack.c.h.b16 %v3250
    %v4667 = vunpack.c.l.b16 %v3251
    %v4668 = vunpack.c.h.b16 %v3251
    %v4669 = vunpack.c.l.b16 %v3252
    %v4670 = vunpack.c.h.b16 %v3252
    %v4671 = vunpack.c.l.b16 %v3253
    %v4672 = vunpack.c.l.b16 %v3254
    %v4673 = vunpack.c.h.b16 %v3254
    %v4674 = vunpack.c.l.b16 %v3255
    %v4675 = vunpack.c.h.b16 %v3255
    %v4676 = vunpack.c.l.b16 %v3256
    %v4677 = vunpack.c.h.b16 %v3256
    %v4678 = vunpack.c.l.b16 %v3257
    %v4679 = vunpack.c.l.b16 %v3258
    %v4680 = vunpack.c.h.b16 %v3258
    %v4681 = vunpack.c.l.b16 %v3259
    %v4682 = vunpack.c.h.b16 %v3259
    %v4683 = vunpack.c.l.b16 %v3260
    %v4684 = vunpack.c.h.b16 %v3260
    %v4685 = vunpack.c.l.b16 %v3261
    %v4686 = vunpack.c.l.b16 %v3262
    %v4687 = vunpack.c.h.b16 %v3262
    %v4688 = vunpack.c.l.b16 %v3263
    %v4689 = vunpack.c.h.b16 %v3263
    %v4690 = vunpack.c.l.b16 %v3264
    %v4691 = vunpack.c.h.b16 %v3264
    %v4692 = vunpack.c.l.b16 %v3265
    %v4693 = vunpack.c.l.b16 %v3266
    %v4694 = vunpack.c.h.b16 %v3266
    %v4695 = vunpack.c.l.b16 %v3267
    %v4696 = vunpack.c.h.b16 %v3267
    %v4697 = vunpack.c.l.b16 %v3268
    %v4698 = vunpack.c.h.b16 %v3268
    %v4699 = vunpack.c.l.b16 %v3269
    %v4700 = vunpack.c.l.b16 %v3270
    %v4701 = vunpack.c.h.b16 %v3270
    %v4702 = vunpack.c.l.b16 %v3271
    %v4703 = vunpack.c.h.b16 %v3271
    %v4704 = vunpack.c.l.b16 %v3272
    %v4705 = vunpack.c.h.b16 %v3272
    %v4706 = vunpack.c.l.b16 %v3273
    %v4707 = vunpack.c.l.b16 %v3274
    %v4708 = vunpack.c.h.b16 %v3274
    %v4709 = vunpack.c.l.b16 %v3275
    %v4710 = vunpack.c.h.b16 %v3275
    %v4711 = vunpack.c.l.b16 %v3276
    %v4712 = vunpack.c.h.b16 %v3276
    %v4713 = vunpack.c.l.b16 %v3277
    %v4714 = vunpack.c.l.b16 %v3278
    %v4715 = vunpack.c.h.b16 %v3278
    %v4716 = vunpack.c.l.b16 %v3279
    %v4717 = vunpack.c.h.b16 %v3279
    %v4718 = vunpack.c.l.b16 %v3280
    %v4719 = vunpack.c.h.b16 %v3280
    %v4720 = vunpack.c.l.b16 %v3281
    %v4721 = vunpack.c.l.b16 %v3282
    %v4722 = vunpack.c.h.b16 %v3282
    %v4723 = vunpack.c.l.b16 %v3283
    %v4724 = vunpack.c.h.b16 %v3283
    %v4725 = vunpack.c.l.b16 %v3284
    %v4726 = vunpack.c.h.b16 %v3284
    %v4727 = vunpack.c.l.b16 %v3285
    %v4728 = vunpack.c.l.b16 %v3286
    %v4729 = vunpack.c.h.b16 %v3286
    %v4730 = vunpack.c.l.b16 %v3287
    %v4731 = vunpack.c.h.b16 %v3287
    %v4732 = vunpack.c.l.b16 %v3288
    %v4733 = vunpack.c.h.b16 %v3288
    %v4734 = vunpack.c.l.b16 %v3289
    %v4735 = vpack.c.b16 %v3846, %v3839
    %v4736 = vpack.c.b16 %v3847, %v3840
    %v4737 = vpack.c.b16 %v3848, %v3841
    %v4738 = vpack.c.b16 %v3849, %v3842
    %v4739 = vpack.c.b16 %v3850, %v3843
    %v4740 = vpack.c.b16 %v3851, %v3844
    %v4741 = vpack.c.b16 %v3852, %v3845
    %v4742 = vpack.c.b16 %v3860, %v3853
    %v4743 = vpack.c.b16 %v3861, %v3854
    %v4744 = vpack.c.b16 %v3862, %v3855
    %v4745 = vpack.c.b16 %v3863, %v3856
    %v4746 = vpack.c.b16 %v3864, %v3857
    %v4747 = vpack.c.b16 %v3865, %v3858
    %v4748 = vpack.c.b16 %v3866, %v3859
    %v4749 = vpack.c.b16 %v3874, %v3867
    %v4750 = vpack.c.b16 %v3875, %v3868
    %v4751 = vpack.c.b16 %v3876, %v3869
    %v4752 = vpack.c.b16 %v3877, %v3870
    %v4753 = vpack.c.b16 %v3878, %v3871
    %v4754 = vpack.c.b16 %v3879, %v3872
    %v4755 = vpack.c.b16 %v3880, %v3873
    %v4756 = vpack.c.b16 %v3888, %v3881
    %v4757 = vpack.c.b16 %v3889, %v3882
    %v4758 = vpack.c.b16 %v3890, %v3883
    %v4759 = vpack.c.b16 %v3891, %v3884
    %v4760 = vpack.c.b16 %v3892, %v3885
    %v4761 = vpack.c.b16 %v3893, %v3886
    %v4762 = vpack.c.b16 %v3894, %v3887
    %v4763 = vpack.c.b16 %v3902, %v3895
    %v4764 = vpack.c.b16 %v3903, %v3896
    %v4765 = vpack.c.b16 %v3904, %v3897
    %v4766 = vpack.c.b16 %v3905, %v3898
    %v4767 = vpack.c.b16 %v3906, %v3899
    %v4768 = vpack.c.b16 %v3907, %v3900
    %v4769 = vpack.c.b16 %v3908, %v3901
    %v4770 = vpack.c.b16 %v3916, %v3909
    %v4771 = vpack.c.b16 %v3917, %v3910
    %v4772 = vpack.c.b16 %v3918, %v3911
    %v4773 = vpack.c.b16 %v3919, %v3912
    %v4774 = vpack.c.b16 %v3920, %v3913
    %v4775 = vpack.c.b16 %v3921, %v3914
    %v4776 = vpack.c.b16 %v3922, %v3915
    %v4777 = vpack.c.b16 %v3930, %v3923
    %v4778 = vpack.c.b16 %v3931, %v3924
    %v4779 = vpack.c.b16 %v3932, %v3925
    %v4780 = vpack.c.b16 %v3933, %v3926
    %v4781 = vpack.c.b16 %v3934, %v3927
    %v4782 = vpack.c.b16 %v3935, %v3928
    %v4783 = vpack.c.b16 %v3936, %v3929
    %v4784 = vpack.c.b16 %v3944, %v3937
    %v4785 = vpack.c.b16 %v3945, %v3938
    %v4786 = vpack.c.b16 %v3946, %v3939
    %v4787 = vpack.c.b16 %v3947, %v3940
    %v4788 = vpack.c.b16 %v3948, %v3941
    %v4789 = vpack.c.b16 %v3949, %v3942
    %v4790 = vpack.c.b16 %v3950, %v3943
    %v4791 = vpack.c.b16 %v3958, %v3951
    %v4792 = vpack.c.b16 %v3959, %v3952
    %v4793 = vpack.c.b16 %v3960, %v3953
    %v4794 = vpack.c.b16 %v3961, %v3954
    %v4795 = vpack.c.b16 %v3962, %v3955
    %v4796 = vpack.c.b16 %v3963, %v3956
    %v4797 = vpack.c.b16 %v3964, %v3957
    %v4798 = vpack.c.b16 %v3972, %v3965
    %v4799 = vpack.c.b16 %v3973, %v3966
    %v4800 = vpack.c.b16 %v3974, %v3967
    %v4801 = vpack.c.b16 %v3975, %v3968
    %v4802 = vpack.c.b16 %v3976, %v3969
    %v4803 = vpack.c.b16 %v3977, %v3970
    %v4804 = vpack.c.b16 %v3978, %v3971
    %v4805 = vpack.c.b16 %v3986, %v3979
    %v4806 = vpack.c.b16 %v3987, %v3980
    %v4807 = vpack.c.b16 %v3988, %v3981
    %v4808 = vpack.c.b16 %v3989, %v3982
    %v4809 = vpack.c.b16 %v3990, %v3983
    %v4810 = vpack.c.b16 %v3991, %v3984
    %v4811 = vpack.c.b16 %v3992, %v3985
    %v4812 = vpack.c.b16 %v4000, %v3993
    %v4813 = vpack.c.b16 %v4001, %v3994
    %v4814 = vpack.c.b16 %v4002, %v3995
    %v4815 = vpack.c.b16 %v4003, %v3996
    %v4816 = vpack.c.b16 %v4004, %v3997
    %v4817 = vpack.c.b16 %v4005, %v3998
    %v4818 = vpack.c.b16 %v4006, %v3999
    %v4819 = vpack.c.b16 %v4014, %v4007
    %v4820 = vpack.c.b16 %v4015, %v4008
    %v4821 = vpack.c.b16 %v4016, %v4009
    %v4822 = vpack.c.b16 %v4017, %v4010
    %v4823 = vpack.c.b16 %v4018, %v4011
    %v4824 = vpack.c.b16 %v4019, %v4012
    %v4825 = vpack.c.b16 %v4020, %v4013
    %v4826 = vpack.c.b16 %v4028, %v4021
    %v4827 = vpack.c.b16 %v4029, %v4022
    %v4828 = vpack.c.b16 %v4030, %v4023
    %v4829 = vpack.c.b16 %v4031, %v4024
    %v4830 = vpack.c.b16 %v4032, %v4025
    %v4831 = vpack.c.b16 %v4033, %v4026
    %v4832 = vpack.c.b16 %v4034, %v4027
    %v4833 = vpack.c.b16 %v4042, %v4035
    %v4834 = vpack.c.b16 %v4043, %v4036
    %v4835 = vpack.c.b16 %v4044, %v4037
    %v4836 = vpack.c.b16 %v4045, %v4038
    %v4837 = vpack.c.b16 %v4046, %v4039
    %v4838 = vpack.c.b16 %v4047, %v4040
    %v4839 = vpack.c.b16 %v4048, %v4041
    %v4840 = vpack.c.b16 %v4056, %v4049
    %v4841 = vpack.c.b16 %v4057, %v4050
    %v4842 = vpack.c.b16 %v4058, %v4051
    %v4843 = vpack.c.b16 %v4059, %v4052
    %v4844 = vpack.c.b16 %v4060, %v4053
    %v4845 = vpack.c.b16 %v4061, %v4054
    %v4846 = vpack.c.b16 %v4062, %v4055
    %v4847 = vpack.c.b16 %v4070, %v4063
    %v4848 = vpack.c.b16 %v4071, %v4064
    %v4849 = vpack.c.b16 %v4072, %v4065
    %v4850 = vpack.c.b16 %v4073, %v4066
    %v4851 = vpack.c.b16 %v4074, %v4067
    %v4852 = vpack.c.b16 %v4075, %v4068
    %v4853 = vpack.c.b16 %v4076, %v4069
    %v4854 = vpack.c.b16 %v4084, %v4077
    %v4855 = vpack.c.b16 %v4085, %v4078
    %v4856 = vpack.c.b16 %v4086, %v4079
    %v4857 = vpack.c.b16 %v4087, %v4080
    %v4858 = vpack.c.b16 %v4088, %v4081
    %v4859 = vpack.c.b16 %v4089, %v4082
    %v4860 = vpack.c.b16 %v4090, %v4083
    %v4861 = vpack.c.b16 %v4098, %v4091
    %v4862 = vpack.c.b16 %v4099, %v4092
    %v4863 = vpack.c.b16 %v4100, %v4093
    %v4864 = vpack.c.b16 %v4101, %v4094
    %v4865 = vpack.c.b16 %v4102, %v4095
    %v4866 = vpack.c.b16 %v4103, %v4096
    %v4867 = vpack.c.b16 %v4104, %v4097
    %v4868 = vpack.c.b16 %v4112, %v4105
    %v4869 = vpack.c.b16 %v4113, %v4106
    %v4870 = vpack.c.b16 %v4114, %v4107
    %v4871 = vpack.c.b16 %v4115, %v4108
    %v4872 = vpack.c.b16 %v4116, %v4109
    %v4873 = vpack.c.b16 %v4117, %v4110
    %v4874 = vpack.c.b16 %v4118, %v4111
    %v4875 = vpack.c.b16 %v4126, %v4119
    %v4876 = vpack.c.b16 %v4127, %v4120
    %v4877 = vpack.c.b16 %v4128, %v4121
    %v4878 = vpack.c.b16 %v4129, %v4122
    %v4879 = vpack.c.b16 %v4130, %v4123
    %v4880 = vpack.c.b16 %v4131, %v4124
    %v4881 = vpack.c.b16 %v4132, %v4125
    %v4882 = vpack.c.b16 %v4140, %v4133
    %v4883 = vpack.c.b16 %v4141, %v4134
    %v4884 = vpack.c.b16 %v4142, %v4135
    %v4885 = vpack.c.b16 %v4143, %v4136
    %v4886 = vpack.c.b16 %v4144, %v4137
    %v4887 = vpack.c.b16 %v4145, %v4138
    %v4888 = vpack.c.b16 %v4146, %v4139
    %v4889 = vpack.c.b16 %v4154, %v4147
    %v4890 = vpack.c.b16 %v4155, %v4148
    %v4891 = vpack.c.b16 %v4156, %v4149
    %v4892 = vpack.c.b16 %v4157, %v4150
    %v4893 = vpack.c.b16 %v4158, %v4151
    %v4894 = vpack.c.b16 %v4159, %v4152
    %v4895 = vpack.c.b16 %v4160, %v4153
    %v4896 = vpack.c.b16 %v4168, %v4161
    %v4897 = vpack.c.b16 %v4169, %v4162
    %v4898 = vpack.c.b16 %v4170, %v4163
    %v4899 = vpack.c.b16 %v4171, %v4164
    %v4900 = vpack.c.b16 %v4172, %v4165
    %v4901 = vpack.c.b16 %v4173, %v4166
    %v4902 = vpack.c.b16 %v4174, %v4167
    %v4903 = vpack.c.b16 %v4182, %v4175
    %v4904 = vpack.c.b16 %v4183, %v4176
    %v4905 = vpack.c.b16 %v4184, %v4177
    %v4906 = vpack.c.b16 %v4185, %v4178
    %v4907 = vpack.c.b16 %v4186, %v4179
    %v4908 = vpack.c.b16 %v4187, %v4180
    %v4909 = vpack.c.b16 %v4188, %v4181
    %v4910 = vpack.c.b16 %v4196, %v4189
    %v4911 = vpack.c.b16 %v4197, %v4190
    %v4912 = vpack.c.b16 %v4198, %v4191
    %v4913 = vpack.c.b16 %v4199, %v4192
    %v4914 = vpack.c.b16 %v4200, %v4193
    %v4915 = vpack.c.b16 %v4201, %v4194
    %v4916 = vpack.c.b16 %v4202, %v4195
    %v4917 = vpack.c.b16 %v4210, %v4203
    %v4918 = vpack.c.b16 %v4211, %v4204
    %v4919 = vpack.c.b16 %v4212, %v4205
    %v4920 = vpack.c.b16 %v4213, %v4206
    %v4921 = vpack.c.b16 %v4214, %v4207
    %v4922 = vpack.c.b16 %v4215, %v4208
    %v4923 = vpack.c.b16 %v4216, %v4209
    %v4924 = vpack.c.b16 %v4224, %v4217
    %v4925 = vpack.c.b16 %v4225, %v4218
    %v4926 = vpack.c.b16 %v4226, %v4219
    %v4927 = vpack.c.b16 %v4227, %v4220
    %v4928 = vpack.c.b16 %v4228, %v4221
    %v4929 = vpack.c.b16 %v4229, %v4222
    %v4930 = vpack.c.b16 %v4230, %v4223
    %v4931 = vpack.c.b16 %v4238, %v4231
    %v4932 = vpack.c.b16 %v4239, %v4232
    %v4933 = vpack.c.b16 %v4240, %v4233
    %v4934 = vpack.c.b16 %v4241, %v4234
    %v4935 = vpack.c.b16 %v4242, %v4235
    %v4936 = vpack.c.b16 %v4243, %v4236
    %v4937 = vpack.c.b16 %v4244, %v4237
    %v4938 = vpack.c.b16 %v4252, %v4245
    %v4939 = vpack.c.b16 %v4253, %v4246
    %v4940 = vpack.c.b16 %v4254, %v4247
    %v4941 = vpack.c.b16 %v4255, %v4248
    %v4942 = vpack.c.b16 %v4256, %v4249
    %v4943 = vpack.c.b16 %v4257, %v4250
    %v4944 = vpack.c.b16 %v4258, %v4251
    %v4945 = vpack.c.b16 %v4266, %v4259
    %v4946 = vpack.c.b16 %v4267, %v4260
    %v4947 = vpack.c.b16 %v4268, %v4261
    %v4948 = vpack.c.b16 %v4269, %v4262
    %v4949 = vpack.c.b16 %v4270, %v4263
    %v4950 = vpack.c.b16 %v4271, %v4264
    %v4951 = vpack.c.b16 %v4272, %v4265
    %v4952 = vpack.c.b16 %v4280, %v4273
    %v4953 = vpack.c.b16 %v4281, %v4274
    %v4954 = vpack.c.b16 %v4282, %v4275
    %v4955 = vpack.c.b16 %v4283, %v4276
    %v4956 = vpack.c.b16 %v4284, %v4277
    %v4957 = vpack.c.b16 %v4285, %v4278
    %v4958 = vpack.c.b16 %v4286, %v4279
    %v4959 = vpack.c.b16 %v4294, %v4287
    %v4960 = vpack.c.b16 %v4295, %v4288
    %v4961 = vpack.c.b16 %v4296, %v4289
    %v4962 = vpack.c.b16 %v4297, %v4290
    %v4963 = vpack.c.b16 %v4298, %v4291
    %v4964 = vpack.c.b16 %v4299, %v4292
    %v4965 = vpack.c.b16 %v4300, %v4293
    %v4966 = vpack.c.b16 %v4308, %v4301
    %v4967 = vpack.c.b16 %v4309, %v4302
    %v4968 = vpack.c.b16 %v4310, %v4303
    %v4969 = vpack.c.b16 %v4311, %v4304
    %v4970 = vpack.c.b16 %v4312, %v4305
    %v4971 = vpack.c.b16 %v4313, %v4306
    %v4972 = vpack.c.b16 %v4314, %v4307
    %v4973 = vpack.c.b16 %v4322, %v4315
    %v4974 = vpack.c.b16 %v4323, %v4316
    %v4975 = vpack.c.b16 %v4324, %v4317
    %v4976 = vpack.c.b16 %v4325, %v4318
    %v4977 = vpack.c.b16 %v4326, %v4319
    %v4978 = vpack.c.b16 %v4327, %v4320
    %v4979 = vpack.c.b16 %v4328, %v4321
    %v4980 = vpack.c.b16 %v4336, %v4329
    %v4981 = vpack.c.b16 %v4337, %v4330
    %v4982 = vpack.c.b16 %v4338, %v4331
    %v4983 = vpack.c.b16 %v4339, %v4332
    %v4984 = vpack.c.b16 %v4340, %v4333
    %v4985 = vpack.c.b16 %v4341, %v4334
    %v4986 = vpack.c.b16 %v4342, %v4335
    %v4987 = vpack.c.b16 %v4350, %v4343
    %v4988 = vpack.c.b16 %v4351, %v4344
    %v4989 = vpack.c.b16 %v4352, %v4345
    %v4990 = vpack.c.b16 %v4353, %v4346
    %v4991 = vpack.c.b16 %v4354, %v4347
    %v4992 = vpack.c.b16 %v4355, %v4348
    %v4993 = vpack.c.b16 %v4356, %v4349
    %v4994 = vpack.c.b16 %v4364, %v4357
    %v4995 = vpack.c.b16 %v4365, %v4358
    %v4996 = vpack.c.b16 %v4366, %v4359
    %v4997 = vpack.c.b16 %v4367, %v4360
    %v4998 = vpack.c.b16 %v4368, %v4361
    %v4999 = vpack.c.b16 %v4369, %v4362
    %v5000 = vpack.c.b16 %v4370, %v4363
    %v5001 = vpack.c.b16 %v4378, %v4371
    %v5002 = vpack.c.b16 %v4379, %v4372
    %v5003 = vpack.c.b16 %v4380, %v4373
    %v5004 = vpack.c.b16 %v4381, %v4374
    %v5005 = vpack.c.b16 %v4382, %v4375
    %v5006 = vpack.c.b16 %v4383, %v4376
    %v5007 = vpack.c.b16 %v4384, %v4377
    %v5008 = vpack.c.b16 %v4392, %v4385
    %v5009 = vpack.c.b16 %v4393, %v4386
    %v5010 = vpack.c.b16 %v4394, %v4387
    %v5011 = vpack.c.b16 %v4395, %v4388
    %v5012 = vpack.c.b16 %v4396, %v4389
    %v5013 = vpack.c.b16 %v4397, %v4390
    %v5014 = vpack.c.b16 %v4398, %v4391
    %v5015 = vpack.c.b16 %v4406, %v4399
    %v5016 = vpack.c.b16 %v4407, %v4400
    %v5017 = vpack.c.b16 %v4408, %v4401
    %v5018 = vpack.c.b16 %v4409, %v4402
    %v5019 = vpack.c.b16 %v4410, %v4403
    %v5020 = vpack.c.b16 %v4411, %v4404
    %v5021 = vpack.c.b16 %v4412, %v4405
    %v5022 = vpack.c.b16 %v4420, %v4413
    %v5023 = vpack.c.b16 %v4421, %v4414
    %v5024 = vpack.c.b16 %v4422, %v4415
    %v5025 = vpack.c.b16 %v4423, %v4416
    %v5026 = vpack.c.b16 %v4424, %v4417
    %v5027 = vpack.c.b16 %v4425, %v4418
    %v5028 = vpack.c.b16 %v4426, %v4419
    %v5029 = vpack.c.b16 %v4434, %v4427
    %v5030 = vpack.c.b16 %v4435, %v4428
    %v5031 = vpack.c.b16 %v4436, %v4429
    %v5032 = vpack.c.b16 %v4437, %v4430
    %v5033 = vpack.c.b16 %v4438, %v4431
    %v5034 = vpack.c.b16 %v4439, %v4432
    %v5035 = vpack.c.b16 %v4440, %v4433
    %v5036 = vpack.c.b16 %v4448, %v4441
    %v5037 = vpack.c.b16 %v4449, %v4442
    %v5038 = vpack.c.b16 %v4450, %v4443
    %v5039 = vpack.c.b16 %v4451, %v4444
    %v5040 = vpack.c.b16 %v4452, %v4445
    %v5041 = vpack.c.b16 %v4453, %v4446
    %v5042 = vpack.c.b16 %v4454, %v4447
    %v5043 = vpack.c.b16 %v4462, %v4455
    %v5044 = vpack.c.b16 %v4463, %v4456
    %v5045 = vpack.c.b16 %v4464, %v4457
    %v5046 = vpack.c.b16 %v4465, %v4458
    %v5047 = vpack.c.b16 %v4466, %v4459
    %v5048 = vpack.c.b16 %v4467, %v4460
    %v5049 = vpack.c.b16 %v4468, %v4461
    %v5050 = vpack.c.b16 %v4476, %v4469
    %v5051 = vpack.c.b16 %v4477, %v4470
    %v5052 = vpack.c.b16 %v4478, %v4471
    %v5053 = vpack.c.b16 %v4479, %v4472
    %v5054 = vpack.c.b16 %v4480, %v4473
    %v5055 = vpack.c.b16 %v4481, %v4474
    %v5056 = vpack.c.b16 %v4482, %v4475
    %v5057 = vpack.c.b16 %v4490, %v4483
    %v5058 = vpack.c.b16 %v4491, %v4484
    %v5059 = vpack.c.b16 %v4492, %v4485
    %v5060 = vpack.c.b16 %v4493, %v4486
    %v5061 = vpack.c.b16 %v4494, %v4487
    %v5062 = vpack.c.b16 %v4495, %v4488
    %v5063 = vpack.c.b16 %v4496, %v4489
    %v5064 = vpack.c.b16 %v4504, %v4497
    %v5065 = vpack.c.b16 %v4505, %v4498
    %v5066 = vpack.c.b16 %v4506, %v4499
    %v5067 = vpack.c.b16 %v4507, %v4500
    %v5068 = vpack.c.b16 %v4508, %v4501
    %v5069 = vpack.c.b16 %v4509, %v4502
    %v5070 = vpack.c.b16 %v4510, %v4503
    %v5071 = vpack.c.b16 %v4518, %v4511
    %v5072 = vpack.c.b16 %v4519, %v4512
    %v5073 = vpack.c.b16 %v4520, %v4513
    %v5074 = vpack.c.b16 %v4521, %v4514
    %v5075 = vpack.c.b16 %v4522, %v4515
    %v5076 = vpack.c.b16 %v4523, %v4516
    %v5077 = vpack.c.b16 %v4524, %v4517
    %v5078 = vpack.c.b16 %v4532, %v4525
    %v5079 = vpack.c.b16 %v4533, %v4526
    %v5080 = vpack.c.b16 %v4534, %v4527
    %v5081 = vpack.c.b16 %v4535, %v4528
    %v5082 = vpack.c.b16 %v4536, %v4529
    %v5083 = vpack.c.b16 %v4537, %v4530
    %v5084 = vpack.c.b16 %v4538, %v4531
    %v5085 = vpack.c.b16 %v4546, %v4539
    %v5086 = vpack.c.b16 %v4547, %v4540
    %v5087 = vpack.c.b16 %v4548, %v4541
    %v5088 = vpack.c.b16 %v4549, %v4542
    %v5089 = vpack.c.b16 %v4550, %v4543
    %v5090 = vpack.c.b16 %v4551, %v4544
    %v5091 = vpack.c.b16 %v4552, %v4545
    %v5092 = vpack.c.b16 %v4560, %v4553
    %v5093 = vpack.c.b16 %v4561, %v4554
    %v5094 = vpack.c.b16 %v4562, %v4555
    %v5095 = vpack.c.b16 %v4563, %v4556
    %v5096 = vpack.c.b16 %v4564, %v4557
    %v5097 = vpack.c.b16 %v4565, %v4558
    %v5098 = vpack.c.b16 %v4566, %v4559
    %v5099 = vpack.c.b16 %v4574, %v4567
    %v5100 = vpack.c.b16 %v4575, %v4568
    %v5101 = vpack.c.b16 %v4576, %v4569
    %v5102 = vpack.c.b16 %v4577, %v4570
    %v5103 = vpack.c.b16 %v4578, %v4571
    %v5104 = vpack.c.b16 %v4579, %v4572
    %v5105 = vpack.c.b16 %v4580, %v4573
    %v5106 = vpack.c.b16 %v4588, %v4581
    %v5107 = vpack.c.b16 %v4589, %v4582
    %v5108 = vpack.c.b16 %v4590, %v4583
    %v5109 = vpack.c.b16 %v4591, %v4584
    %v5110 = vpack.c.b16 %v4592, %v4585
    %v5111 = vpack.c.b16 %v4593, %v4586
    %v5112 = vpack.c.b16 %v4594, %v4587
    %v5113 = vpack.c.b16 %v4602, %v4595
    %v5114 = vpack.c.b16 %v4603, %v4596
    %v5115 = vpack.c.b16 %v4604, %v4597
    %v5116 = vpack.c.b16 %v4605, %v4598
    %v5117 = vpack.c.b16 %v4606, %v4599
    %v5118 = vpack.c.b16 %v4607, %v4600
    %v5119 = vpack.c.b16 %v4608, %v4601
    %v5120 = vpack.c.b16 %v4616, %v4609
    %v5121 = vpack.c.b16 %v4617, %v4610
    %v5122 = vpack.c.b16 %v4618, %v4611
    %v5123 = vpack.c.b16 %v4619, %v4612
    %v5124 = vpack.c.b16 %v4620, %v4613
    %v5125 = vpack.c.b16 %v4621, %v4614
    %v5126 = vpack.c.b16 %v4622, %v4615
    %v5127 = vpack.c.b16 %v4630, %v4623
    %v5128 = vpack.c.b16 %v4631, %v4624
    %v5129 = vpack.c.b16 %v4632, %v4625
    %v5130 = vpack.c.b16 %v4633, %v4626
    %v5131 = vpack.c.b16 %v4634, %v4627
    %v5132 = vpack.c.b16 %v4635, %v4628
    %v5133 = vpack.c.b16 %v4636, %v4629
    %v5134 = vpack.c.b16 %v4644, %v4637
    %v5135 = vpack.c.b16 %v4645, %v4638
    %v5136 = vpack.c.b16 %v4646, %v4639
    %v5137 = vpack.c.b16 %v4647, %v4640
    %v5138 = vpack.c.b16 %v4648, %v4641
    %v5139 = vpack.c.b16 %v4649, %v4642
    %v5140 = vpack.c.b16 %v4650, %v4643
    %v5141 = vpack.c.b16 %v4658, %v4651
    %v5142 = vpack.c.b16 %v4659, %v4652
    %v5143 = vpack.c.b16 %v4660, %v4653
    %v5144 = vpack.c.b16 %v4661, %v4654
    %v5145 = vpack.c.b16 %v4662, %v4655
    %v5146 = vpack.c.b16 %v4663, %v4656
    %v5147 = vpack.c.b16 %v4664, %v4657
    %v5148 = vpack.c.b16 %v4672, %v4665
    %v5149 = vpack.c.b16 %v4673, %v4666
    %v5150 = vpack.c.b16 %v4674, %v4667
    %v5151 = vpack.c.b16 %v4675, %v4668
    %v5152 = vpack.c.b16 %v4676, %v4669
    %v5153 = vpack.c.b16 %v4677, %v4670
    %v5154 = vpack.c.b16 %v4678, %v4671
    %v5155 = vpack.c.b16 %v4686, %v4679
    %v5156 = vpack.c.b16 %v4687, %v4680
    %v5157 = vpack.c.b16 %v4688, %v4681
    %v5158 = vpack.c.b16 %v4689, %v4682
    %v5159 = vpack.c.b16 %v4690, %v4683
    %v5160 = vpack.c.b16 %v4691, %v4684
    %v5161 = vpack.c.b16 %v4692, %v4685
    %v5162 = vpack.c.b16 %v4700, %v4693
    %v5163 = vpack.c.b16 %v4701, %v4694
    %v5164 = vpack.c.b16 %v4702, %v4695
    %v5165 = vpack.c.b16 %v4703, %v4696
    %v5166 = vpack.c.b16 %v4704, %v4697
    %v5167 = vpack.c.b16 %v4705, %v4698
    %v5168 = vpack.c.b16 %v4706, %v4699
    %v5169 = vpack.c.b16 %v4714, %v4707
    %v5170 = vpack.c.b16 %v4715, %v4708
    %v5171 = vpack.c.b16 %v4716, %v4709
    %v5172 = vpack.c.b16 %v4717, %v4710
    %v5173 = vpack.c.b16 %v4718, %v4711
    %v5174 = vpack.c.b16 %v4719, %v4712
    %v5175 = vpack.c.b16 %v4720, %v4713
    %v5176 = vpack.c.b16 %v4728, %v4721
    %v5177 = vpack.c.b16 %v4729, %v4722
    %v5178 = vpack.c.b16 %v4730, %v4723
    %v5179 = vpack.c.b16 %v4731, %v4724
    %v5180 = vpack.c.b16 %v4732, %v4725
    %v5181 = vpack.c.b16 %v4733, %v4726
    %v5182 = vpack.c.b16 %v4734, %v4727
    %5631 = vmatprep.subr.bf16.mxu0 %v4736
    %5632 = vmatpush1.bf16.msra.mxu0 %v4735
    %5633 = vmatprep.subr.bf16.mxu0 %v4743
    %5634 = vmatpush1.bf16.msra.mxu0 %v4742
    %5635 = vmatprep.subr.bf16.mxu0 %v4750
    %5636 = vmatpush1.bf16.msra.mxu0 %v4749
    %5637 = vmatprep.subr.bf16.mxu0 %v4757
    %5638 = vmatpush1.bf16.msra.mxu0 %v4756
    %5639 = vmatprep.subr.bf16.mxu0 %v4764
    %5640 = vmatpush1.bf16.msra.mxu0 %v4763
    %5641 = vmatprep.subr.bf16.mxu0 %v4771
    %5642 = vmatpush1.bf16.msra.mxu0 %v4770
    %5643 = vmatprep.subr.bf16.mxu0 %v4778
    %5644 = vmatpush1.bf16.msra.mxu0 %v4777
    %5645 = vmatprep.subr.bf16.mxu0 %v4785
    %5646 = vmatpush1.bf16.msra.mxu0 %v4784
    %5647 = vmatprep.subr.bf16.mxu0 %v4792
    %5648 = vmatpush1.bf16.msra.mxu0 %v4791
    %5649 = vmatprep.subr.bf16.mxu0 %v4799
    %5650 = vmatpush1.bf16.msra.mxu0 %v4798
    %5651 = vmatprep.subr.bf16.mxu0 %v4806
    %5652 = vmatpush1.bf16.msra.mxu0 %v4805
    %5653 = vmatprep.subr.bf16.mxu0 %v4813
    %5654 = vmatpush1.bf16.msra.mxu0 %v4812
    %5655 = vmatprep.subr.bf16.mxu0 %v4820
    %5656 = vmatpush1.bf16.msra.mxu0 %v4819
    %5657 = vmatprep.subr.bf16.mxu0 %v4827
    %5658 = vmatpush1.bf16.msra.mxu0 %v4826
    %5659 = vmatprep.subr.bf16.mxu0 %v4834
    %5660 = vmatpush1.bf16.msra.mxu0 %v4833
    %5661 = vmatprep.subr.bf16.mxu0 %v4841
    %5662 = vmatpush1.bf16.msra.mxu0 %v4840
    %5663 = vmatprep.mubr.bf16.mxu0 %v2771
    %5664 = vmatmul.mubr.bf16.gmra.mrb[0].mxu0 %v2770
    %v5665 = vpop.f32.mrb[0].mxu0
    %v5666 = vadd.f32 %v3295, %v5665
    %v5667 = vpop.f32.mrb[0].mxu0
    %v5668 = vadd.f32 %v3299, %v5667
    %v5669 = vpop.f32.mrb[0].mxu0
    %v5670 = vadd.f32 %v3295, %v5669
    %v5671 = vpop.f32.mrb[0].mxu0
    %v5672 = vadd.f32 %v3299, %v5671
    %5673 = vdwg.mxu0
    %5674 = vmatprep.subr.bf16.mxu0 %v4848
    %5675 = vmatpush1.bf16.msra.mxu0 %v4847
    %5676 = vmatprep.subr.bf16.mxu0 %v4855
    %5677 = vmatpush1.bf16.msra.mxu0 %v4854
    %5678 = vmatprep.subr.bf16.mxu0 %v4862
    %5679 = vmatpush1.bf16.msra.mxu0 %v4861
    %5680 = vmatprep.subr.bf16.mxu0 %v4869
    %5681 = vmatpush1.bf16.msra.mxu0 %v4868
    %5682 = vmatprep.subr.bf16.mxu0 %v4876
    %5683 = vmatpush1.bf16.msra.mxu0 %v4875
    %5684 = vmatprep.subr.bf16.mxu0 %v4883
    %5685 = vmatpush1.bf16.msra.mxu0 %v4882
    %5686 = vmatprep.subr.bf16.mxu0 %v4890
    %5687 = vmatpush1.bf16.msra.mxu0 %v4889
    %5688 = vmatprep.subr.bf16.mxu0 %v4897
    %5689 = vmatpush1.bf16.msra.mxu0 %v4896
    %5690 = vmatprep.subr.bf16.mxu0 %v4904
    %5691 = vmatpush1.bf16.msra.mxu0 %v4903
    %5692 = vmatprep.subr.bf16.mxu0 %v4911
    %5693 = vmatpush1.bf16.msra.mxu0 %v4910
    %5694 = vmatprep.subr.bf16.mxu0 %v4918
    %5695 = vmatpush1.bf16.msra.mxu0 %v4917
    %5696 = vmatprep.subr.bf16.mxu0 %v4925
    %5697 = vmatpush1.bf16.msra.mxu0 %v4924
    %5698 = vmatprep.subr.bf16.mxu0 %v4932
    %5699 = vmatpush1.bf16.msra.mxu0 %v4931
    %5700 = vmatprep.subr.bf16.mxu0 %v4939
    %5701 = vmatpush1.bf16.msra.mxu0 %v4938
    %5702 = vmatprep.subr.bf16.mxu0 %v4946
    %5703 = vmatpush1.bf16.msra.mxu0 %v4945
    %5704 = vmatprep.subr.bf16.mxu0 %v4953
    %5705 = vmatpush1.bf16.msra.mxu0 %v4952
    %5706 = vmatprep.mubr.bf16.mxu0 %v2773
    %5707 = vmatmul.mubr.bf16.gmra.mrb[0].mxu0 %v2772
    %v5708 = vpop.f32.mrb[0].mxu0
    %v5709 = vadd.f32 %v5666, %v5708
    %v5710 = vpop.f32.mrb[0].mxu0
    %v5711 = vadd.f32 %v5668, %v5710
    %v5712 = vpop.f32.mrb[0].mxu0
    %v5713 = vadd.f32 %v5670, %v5712
    %v5714 = vpop.f32.mrb[0].mxu0
    %v5715 = vadd.f32 %v5672, %v5714
    %5716 = vdwg.mxu0
    %5717 = vmatprep.subr.bf16.mxu0 %v4960
    %5718 = vmatpush1.bf16.msra.mxu0 %v4959
    %5719 = vmatprep.subr.bf16.mxu0 %v4967
    %5720 = vmatpush1.bf16.msra.mxu0 %v4966
    %5721 = vmatprep.subr.bf16.mxu0 %v4974
    %5722 = vmatpush1.bf16.msra.mxu0 %v4973
    %5723 = vmatprep.subr.bf16.mxu0 %v4981
    %5724 = vmatpush1.bf16.msra.mxu0 %v4980
    %5725 = vmatprep.subr.bf16.mxu0 %v4988
    %5726 = vmatpush1.bf16.msra.mxu0 %v4987
    %5727 = vmatprep.subr.bf16.mxu0 %v4995
    %5728 = vmatpush1.bf16.msra.mxu0 %v4994
    %5729 = vmatprep.subr.bf16.mxu0 %v5002
    %5730 = vmatpush1.bf16.msra.mxu0 %v5001
    %5731 = vmatprep.subr.bf16.mxu0 %v5009
    %5732 = vmatpush1.bf16.msra.mxu0 %v5008
    %5733 = vmatprep.subr.bf16.mxu0 %v5016
    %5734 = vmatpush1.bf16.msra.mxu0 %v5015
    %5735 = vmatprep.subr.bf16.mxu0 %v5023
    %5736 = vmatpush1.bf16.msra.mxu0 %v5022
    %5737 = vmatprep.subr.bf16.mxu0 %v5030
    %5738 = vmatpush1.bf16.msra.mxu0 %v5029
    %5739 = vmatprep.subr.bf16.mxu0 %v5037
    %5740 = vmatpush1.bf16.msra.mxu0 %v5036
    %5741 = vmatprep.subr.bf16.mxu0 %v5044
    %5742 = vmatpush1.bf16.msra.mxu0 %v5043
    %5743 = vmatprep.subr.bf16.mxu0 %v5051
    %5744 = vmatpush1.bf16.msra.mxu0 %v5050
    %5745 = vmatprep.subr.bf16.mxu0 %v5058
    %5746 = vmatpush1.bf16.msra.mxu0 %v5057
    %5747 = vmatprep.subr.bf16.mxu0 %v5065
    %5748 = vmatpush1.bf16.msra.mxu0 %v5064
    %5749 = vmatprep.mubr.bf16.mxu0 %v2775
    %5750 = vmatmul.mubr.bf16.gmra.mrb[0].mxu0 %v2774
    %v5751 = vpop.f32.mrb[0].mxu0
    %v5752 = vadd.f32 %v5709, %v5751
    %v5753 = vpop.f32.mrb[0].mxu0
    %v5754 = vadd.f32 %v5711, %v5753
    %v5755 = vpop.f32.mrb[0].mxu0
    %v5756 = vadd.f32 %v5713, %v5755
    %v5757 = vpop.f32.mrb[0].mxu0
    %v5758 = vadd.f32 %v5715, %v5757
    %5759 = vdwg.mxu0
    %5760 = vmatprep.subr.bf16.mxu0 %v5072
    %5761 = vmatpush1.bf16.msra.mxu0 %v5071
    %5762 = vmatprep.subr.bf16.mxu0 %v5079
    %5763 = vmatpush1.bf16.msra.mxu0 %v5078
    %5764 = vmatprep.subr.bf16.mxu0 %v5086
    %5765 = vmatpush1.bf16.msra.mxu0 %v5085
    %5766 = vmatprep.subr.bf16.mxu0 %v5093
    %5767 = vmatpush1.bf16.msra.mxu0 %v5092
    %5768 = vmatprep.subr.bf16.mxu0 %v5100
    %5769 = vmatpush1.bf16.msra.mxu0 %v5099
    %5770 = vmatprep.subr.bf16.mxu0 %v5107
    %5771 = vmatpush1.bf16.msra.mxu0 %v5106
    %5772 = vmatprep.subr.bf16.mxu0 %v5114
    %5773 = vmatpush1.bf16.msra.mxu0 %v5113
    %5774 = vmatprep.subr.bf16.mxu0 %v5121
    %5775 = vmatpush1.bf16.msra.mxu0 %v5120
    %5776 = vmatprep.subr.bf16.mxu0 %v5128
    %5777 = vmatpush1.bf16.msra.mxu0 %v5127
    %5778 = vmatprep.subr.bf16.mxu0 %v5135
    %5779 = vmatpush1.bf16.msra.mxu0 %v5134
    %5780 = vmatprep.subr.bf16.mxu0 %v5142
    %5781 = vmatpush1.bf16.msra.mxu0 %v5141
    %5782 = vmatprep.subr.bf16.mxu0 %v5149
    %5783 = vmatpush1.bf16.msra.mxu0 %v5148
    %5784 = vmatprep.subr.bf16.mxu0 %v5156
    %5785 = vmatpush1.bf16.msra.mxu0 %v5155
    %5786 = vmatprep.subr.bf16.mxu0 %v5163
    %5787 = vmatpush1.bf16.msra.mxu0 %v5162
    %5788 = vmatprep.subr.bf16.mxu0 %v5170
    %5789 = vmatpush1.bf16.msra.mxu0 %v5169
    %5790 = vmatprep.subr.bf16.mxu0 %v5177
    %5791 = vmatpush1.bf16.msra.mxu0 %v5176
    %5792 = vmatprep.mubr.bf16.mxu0 %v2777
    %5793 = vmatmul.mubr.bf16.gmra.mrb[0].mxu0 %v2776
    %v5794 = vpop.f32.mrb[0].mxu0
    %v5795 = vadd.f32 %v5752, %v5794
    %v5796 = vpop.f32.mrb[0].mxu0
    %v5797 = vadd.f32 %v5754, %v5796
    %v5798 = vpop.f32.mrb[0].mxu0
    %v5799 = vadd.f32 %v5756, %v5798
    %v5800 = vpop.f32.mrb[0].mxu0
    %v5801 = vadd.f32 %v5758, %v5800
    %5802 = vdwg.mxu0
    %5803 = vmatprep.subr.bf16.mxu0 %v4738
    %5804 = vmatpush1.bf16.msra.mxu0 %v4737
    %5805 = vmatprep.subr.bf16.mxu0 %v4745
    %5806 = vmatpush1.bf16.msra.mxu0 %v4744
    %5807 = vmatprep.subr.bf16.mxu0 %v4752
    %5808 = vmatpush1.bf16.msra.mxu0 %v4751
    %5809 = vmatprep.subr.bf16.mxu0 %v4759
    %5810 = vmatpush1.bf16.msra.mxu0 %v4758
    %5811 = vmatprep.subr.bf16.mxu0 %v4766
    %5812 = vmatpush1.bf16.msra.mxu0 %v4765
    %5813 = vmatprep.subr.bf16.mxu0 %v4773
    %5814 = vmatpush1.bf16.msra.mxu0 %v4772
    %5815 = vmatprep.subr.bf16.mxu0 %v4780
    %5816 = vmatpush1.bf16.msra.mxu0 %v4779
    %5817 = vmatprep.subr.bf16.mxu0 %v4787
    %5818 = vmatpush1.bf16.msra.mxu0 %v4786
    %5819 = vmatprep.subr.bf16.mxu0 %v4794
    %5820 = vmatpush1.bf16.msra.mxu0 %v4793
    %5821 = vmatprep.subr.bf16.mxu0 %v4801
    %5822 = vmatpush1.bf16.msra.mxu0 %v4800
    %5823 = vmatprep.subr.bf16.mxu0 %v4808
    %5824 = vmatpush1.bf16.msra.mxu0 %v4807
    %5825 = vmatprep.subr.bf16.mxu0 %v4815
    %5826 = vmatpush1.bf16.msra.mxu0 %v4814
    %5827 = vmatprep.subr.bf16.mxu0 %v4822
    %5828 = vmatpush1.bf16.msra.mxu0 %v4821
    %5829 = vmatprep.subr.bf16.mxu0 %v4829
    %5830 = vmatpush1.bf16.msra.mxu0 %v4828
    %5831 = vmatprep.subr.bf16.mxu0 %v4836
    %5832 = vmatpush1.bf16.msra.mxu0 %v4835
    %5833 = vmatprep.subr.bf16.mxu0 %v4843
    %5834 = vmatpush1.bf16.msra.mxu0 %v4842
    %5835 = vmatprep.mubr.bf16.mxu0 %v2771
    %5836 = vmatmul.mubr.bf16.gmra.mrb[0].mxu0 %v2770
    %v5837 = vpop.f32.mrb[0].mxu0
    %v5838 = vadd.f32 %v3303, %v5837
    %v5839 = vpop.f32.mrb[0].mxu0
    %v5840 = vadd.f32 %v3307, %v5839
    %v5841 = vpop.f32.mrb[0].mxu0
    %v5842 = vadd.f32 %v3303, %v5841
    %v5843 = vpop.f32.mrb[0].mxu0
    %v5844 = vadd.f32 %v3307, %v5843
    %5845 = vdwg.mxu0
    %5846 = vmatprep.subr.bf16.mxu0 %v4850
    %5847 = vmatpush1.bf16.msra.mxu0 %v4849
    %5848 = vmatprep.subr.bf16.mxu0 %v4857
    %5849 = vmatpush1.bf16.msra.mxu0 %v4856
    %5850 = vmatprep.subr.bf16.mxu0 %v4864
    %5851 = vmatpush1.bf16.msra.mxu0 %v4863
    %5852 = vmatprep.subr.bf16.mxu0 %v4871
    %5853 = vmatpush1.bf16.msra.mxu0 %v4870
    %5854 = vmatprep.subr.bf16.mxu0 %v4878
    %5855 = vmatpush1.bf16.msra.mxu0 %v4877
    %5856 = vmatprep.subr.bf16.mxu0 %v4885
    %5857 = vmatpush1.bf16.msra.mxu0 %v4884
    %5858 = vmatprep.subr.bf16.mxu0 %v4892
    %5859 = vmatpush1.bf16.msra.mxu0 %v4891
    %5860 = vmatprep.subr.bf16.mxu0 %v4899
    %5861 = vmatpush1.bf16.msra.mxu0 %v4898
    %5862 = vmatprep.subr.bf16.mxu0 %v4906
    %5863 = vmatpush1.bf16.msra.mxu0 %v4905
    %5864 = vmatprep.subr.bf16.mxu0 %v4913
    %5865 = vmatpush1.bf16.msra.mxu0 %v4912
    %5866 = vmatprep.subr.bf16.mxu0 %v4920
    %5867 = vmatpush1.bf16.msra.mxu0 %v4919
    %5868 = vmatprep.subr.bf16.mxu0 %v4927
    %5869 = vmatpush1.bf16.msra.mxu0 %v4926
    %5870 = vmatprep.subr.bf16.mxu0 %v4934
    %5871 = vmatpush1.bf16.msra.mxu0 %v4933
    %5872 = vmatprep.subr.bf16.mxu0 %v4941
    %5873 = vmatpush1.bf16.msra.mxu0 %v4940
    %5874 = vmatprep.subr.bf16.mxu0 %v4948
    %5875 = vmatpush1.bf16.msra.mxu0 %v4947
    %5876 = vmatprep.subr.bf16.mxu0 %v4955
    %5877 = vmatpush1.bf16.msra.mxu0 %v4954
    %5878 = vmatprep.mubr.bf16.mxu0 %v2773
    %5879 = vmatmul.mubr.bf16.gmra.mrb[0].mxu0 %v2772
    %v5880 = vpop.f32.mrb[0].mxu0
    %v5881 = vadd.f32 %v5838, %v5880
    %v5882 = vpop.f32.mrb[0].mxu0
    %v5883 = vadd.f32 %v5840, %v5882
    %v5884 = vpop.f32.mrb[0].mxu0
    %v5885 = vadd.f32 %v5842, %v5884
    %v5886 = vpop.f32.mrb[0].mxu0
    %v5887 = vadd.f32 %v5844, %v5886
    %5888 = vdwg.mxu0
    %5889 = vmatprep.subr.bf16.mxu0 %v4962
    %5890 = vmatpush1.bf16.msra.mxu0 %v4961
    %5891 = vmatprep.subr.bf16.mxu0 %v4969
    %5892 = vmatpush1.bf16.msra.mxu0 %v4968
    %5893 = vmatprep.subr.bf16.mxu0 %v4976
    %5894 = vmatpush1.bf16.msra.mxu0 %v4975
    %5895 = vmatprep.subr.bf16.mxu0 %v4983
    %5896 = vmatpush1.bf16.msra.mxu0 %v4982
    %5897 = vmatprep.subr.bf16.mxu0 %v4990
    %5898 = vmatpush1.bf16.msra.mxu0 %v4989
    %5899 = vmatprep.subr.bf16.mxu0 %v4997
    %5900 = vmatpush1.bf16.msra.mxu0 %v4996
    %5901 = vmatprep.subr.bf16.mxu0 %v5004
    %5902 = vmatpush1.bf16.msra.mxu0 %v5003
    %5903 = vmatprep.subr.bf16.mxu0 %v5011
    %5904 = vmatpush1.bf16.msra.mxu0 %v5010
    %5905 = vmatprep.subr.bf16.mxu0 %v5018
    %5906 = vmatpush1.bf16.msra.mxu0 %v5017
    %5907 = vmatprep.subr.bf16.mxu0 %v5025
    %5908 = vmatpush1.bf16.msra.mxu0 %v5024
    %5909 = vmatprep.subr.bf16.mxu0 %v5032
    %5910 = vmatpush1.bf16.msra.mxu0 %v5031
    %5911 = vmatprep.subr.bf16.mxu0 %v5039
    %5912 = vmatpush1.bf16.msra.mxu0 %v5038
    %5913 = vmatprep.subr.bf16.mxu0 %v5046
    %5914 = vmatpush1.bf16.msra.mxu0 %v5045
    %5915 = vmatprep.subr.bf16.mxu0 %v5053
    %5916 = vmatpush1.bf16.msra.mxu0 %v5052
    %5917 = vmatprep.subr.bf16.mxu0 %v5060
    %5918 = vmatpush1.bf16.msra.mxu0 %v5059
    %5919 = vmatprep.subr.bf16.mxu0 %v5067
    %5920 = vmatpush1.bf16.msra.mxu0 %v5066
    %5921 = vmatprep.mubr.bf16.mxu0 %v2775
    %5922 = vmatmul.mubr.bf16.gmra.mrb[0].mxu0 %v2774
    %v5923 = vpop.f32.mrb[0].mxu0
    %v5924 = vadd.f32 %v5881, %v5923
    %v5925 = vpop.f32.mrb[0].mxu0
    %v5926 = vadd.f32 %v5883, %v5925
    %v5927 = vpop.f32.mrb[0].mxu0
    %v5928 = vadd.f32 %v5885, %v5927
    %v5929 = vpop.f32.mrb[0].mxu0
    %v5930 = vadd.f32 %v5887, %v5929
    %5931 = vdwg.mxu0
    %5932 = vmatprep.subr.bf16.mxu0 %v5074
    %5933 = vmatpush1.bf16.msra.mxu0 %v5073
    %5934 = vmatprep.subr.bf16.mxu0 %v5081
    %5935 = vmatpush1.bf16.msra.mxu0 %v5080
    %5936 = vmatprep.subr.bf16.mxu0 %v5088
    %5937 = vmatpush1.bf16.msra.mxu0 %v5087
    %5938 = vmatprep.subr.bf16.mxu0 %v5095
    %5939 = vmatpush1.bf16.msra.mxu0 %v5094
    %5940 = vmatprep.subr.bf16.mxu0 %v5102
    %5941 = vmatpush1.bf16.msra.mxu0 %v5101
    %5942 = vmatprep.subr.bf16.mxu0 %v5109
    %5943 = vmatpush1.bf16.msra.mxu0 %v5108
    %5944 = vmatprep.subr.bf16.mxu0 %v5116
    %5945 = vmatpush1.bf16.msra.mxu0 %v5115
    %5946 = vmatprep.subr.bf16.mxu0 %v5123
    %5947 = vmatpush1.bf16.msra.mxu0 %v5122
    %5948 = vmatprep.subr.bf16.mxu0 %v5130
    %5949 = vmatpush1.bf16.msra.mxu0 %v5129
    %5950 = vmatprep.subr.bf16.mxu0 %v5137
    %5951 = vmatpush1.bf16.msra.mxu0 %v5136
    %5952 = vmatprep.subr.bf16.mxu0 %v5144
    %5953 = vmatpush1.bf16.msra.mxu0 %v5143
    %5954 = vmatprep.subr.bf16.mxu0 %v5151
    %5955 = vmatpush1.bf16.msra.mxu0 %v5150
    %5956 = vmatprep.subr.bf16.mxu0 %v5158
    %5957 = vmatpush1.bf16.msra.mxu0 %v5157
    %5958 = vmatprep.subr.bf16.mxu0 %v5165
    %5959 = vmatpush1.bf16.msra.mxu0 %v5164
    %5960 = vmatprep.subr.bf16.mxu0 %v5172
    %5961 = vmatpush1.bf16.msra.mxu0 %v5171
    %5962 = vmatprep.subr.bf16.mxu0 %v5179
    %5963 = vmatpush1.bf16.msra.mxu0 %v5178
    %5964 = vmatprep.mubr.bf16.mxu0 %v2777
    %5965 = vmatmul.mubr.bf16.gmra.mrb[0].mxu0 %v2776
    %v5966 = vpop.f32.mrb[0].mxu0
    %v5967 = vadd.f32 %v5924, %v5966
    %v5968 = vpop.f32.mrb[0].mxu0
    %v5969 = vadd.f32 %v5926, %v5968
    %v5970 = vpop.f32.mrb[0].mxu0
    %v5971 = vadd.f32 %v5928, %v5970
    %v5972 = vpop.f32.mrb[0].mxu0
    %v5973 = vadd.f32 %v5930, %v5972
    %5974 = vdwg.mxu0
    %5975 = vmatprep.subr.bf16.mxu0 %v4740
    %5976 = vmatpush1.bf16.msra.mxu0 %v4739
    %5977 = vmatprep.subr.bf16.mxu0 %v4747
    %5978 = vmatpush1.bf16.msra.mxu0 %v4746
    %5979 = vmatprep.subr.bf16.mxu0 %v4754
    %5980 = vmatpush1.bf16.msra.mxu0 %v4753
    %5981 = vmatprep.subr.bf16.mxu0 %v4761
    %5982 = vmatpush1.bf16.msra.mxu0 %v4760
    %5983 = vmatprep.subr.bf16.mxu0 %v4768
    %5984 = vmatpush1.bf16.msra.mxu0 %v4767
    %5985 = vmatprep.subr.bf16.mxu0 %v4775
    %5986 = vmatpush1.bf16.msra.mxu0 %v4774
    %5987 = vmatprep.subr.bf16.mxu0 %v4782
    %5988 = vmatpush1.bf16.msra.mxu0 %v4781
    %5989 = vmatprep.subr.bf16.mxu0 %v4789
    %5990 = vmatpush1.bf16.msra.mxu0 %v4788
    %5991 = vmatprep.subr.bf16.mxu0 %v4796
    %5992 = vmatpush1.bf16.msra.mxu0 %v4795
    %5993 = vmatprep.subr.bf16.mxu0 %v4803
    %5994 = vmatpush1.bf16.msra.mxu0 %v4802
    %5995 = vmatprep.subr.bf16.mxu0 %v4810
    %5996 = vmatpush1.bf16.msra.mxu0 %v4809
    %5997 = vmatprep.subr.bf16.mxu0 %v4817
    %5998 = vmatpush1.bf16.msra.mxu0 %v4816
    %5999 = vmatprep.subr.bf16.mxu0 %v4824
    %6000 = vmatpush1.bf16.msra.mxu0 %v4823
    %6001 = vmatprep.subr.bf16.mxu0 %v4831
    %6002 = vmatpush1.bf16.msra.mxu0 %v4830
    %6003 = vmatprep.subr.bf16.mxu0 %v4838
    %6004 = vmatpush1.bf16.msra.mxu0 %v4837
    %6005 = vmatprep.subr.bf16.mxu0 %v4845
    %6006 = vmatpush1.bf16.msra.mxu0 %v4844
    %6007 = vmatprep.mubr.bf16.mxu0 %v2771
    %6008 = vmatmul.mubr.bf16.gmra.mrb[0].mxu0 %v2770
    %v6009 = vpop.f32.mrb[0].mxu0
    %v6010 = vadd.f32 %v3311, %v6009
    %v6011 = vpop.f32.mrb[0].mxu0
    %v6012 = vadd.f32 %v3315, %v6011
    %v6013 = vpop.f32.mrb[0].mxu0
    %v6014 = vadd.f32 %v3311, %v6013
    %v6015 = vpop.f32.mrb[0].mxu0
    %v6016 = vadd.f32 %v3315, %v6015
    %6017 = vdwg.mxu0
    %6018 = vmatprep.subr.bf16.mxu0 %v4852
    %6019 = vmatpush1.bf16.msra.mxu0 %v4851
    %6020 = vmatprep.subr.bf16.mxu0 %v4859
    %6021 = vmatpush1.bf16.msra.mxu0 %v4858
    %6022 = vmatprep.subr.bf16.mxu0 %v4866
    %6023 = vmatpush1.bf16.msra.mxu0 %v4865
    %6024 = vmatprep.subr.bf16.mxu0 %v4873
    %6025 = vmatpush1.bf16.msra.mxu0 %v4872
    %6026 = vmatprep.subr.bf16.mxu0 %v4880
    %6027 = vmatpush1.bf16.msra.mxu0 %v4879
    %6028 = vmatprep.subr.bf16.mxu0 %v4887
    %6029 = vmatpush1.bf16.msra.mxu0 %v4886
    %6030 = vmatprep.subr.bf16.mxu0 %v4894
    %6031 = vmatpush1.bf16.msra.mxu0 %v4893
    %6032 = vmatprep.subr.bf16.mxu0 %v4901
    %6033 = vmatpush1.bf16.msra.mxu0 %v4900
    %6034 = vmatprep.subr.bf16.mxu0 %v4908
    %6035 = vmatpush1.bf16.msra.mxu0 %v4907
    %6036 = vmatprep.subr.bf16.mxu0 %v4915
    %6037 = vmatpush1.bf16.msra.mxu0 %v4914
    %6038 = vmatprep.subr.bf16.mxu0 %v4922
    %6039 = vmatpush1.bf16.msra.mxu0 %v4921
    %6040 = vmatprep.subr.bf16.mxu0 %v4929
    %6041 = vmatpush1.bf16.msra.mxu0 %v4928
    %6042 = vmatprep.subr.bf16.mxu0 %v4936
    %6043 = vmatpush1.bf16.msra.mxu0 %v4935
    %6044 = vmatprep.subr.bf16.mxu0 %v4943
    %6045 = vmatpush1.bf16.msra.mxu0 %v4942
    %6046 = vmatprep.subr.bf16.mxu0 %v4950
    %6047 = vmatpush1.bf16.msra.mxu0 %v4949
    %6048 = vmatprep.subr.bf16.mxu0 %v4957
    %6049 = vmatpush1.bf16.msra.mxu0 %v4956
    %6050 = vmatprep.mubr.bf16.mxu0 %v2773
    %6051 = vmatmul.mubr.bf16.gmra.mrb[0].mxu0 %v2772
    %v6052 = vpop.f32.mrb[0].mxu0
    %v6053 = vadd.f32 %v6010, %v6052
    %v6054 = vpop.f32.mrb[0].mxu0
    %v6055 = vadd.f32 %v6012, %v6054
    %v6056 = vpop.f32.mrb[0].mxu0
    %v6057 = vadd.f32 %v6014, %v6056
    %v6058 = vpop.f32.mrb[0].mxu0
    %v6059 = vadd.f32 %v6016, %v6058
    %6060 = vdwg.mxu0
    %6061 = vmatprep.subr.bf16.mxu0 %v4964
    %6062 = vmatpush1.bf16.msra.mxu0 %v4963
    %6063 = vmatprep.subr.bf16.mxu0 %v4971
    %6064 = vmatpush1.bf16.msra.mxu0 %v4970
    %6065 = vmatprep.subr.bf16.mxu0 %v4978
    %6066 = vmatpush1.bf16.msra.mxu0 %v4977
    %6067 = vmatprep.subr.bf16.mxu0 %v4985
    %6068 = vmatpush1.bf16.msra.mxu0 %v4984
    %6069 = vmatprep.subr.bf16.mxu0 %v4992
    %6070 = vmatpush1.bf16.msra.mxu0 %v4991
    %6071 = vmatprep.subr.bf16.mxu0 %v4999
    %6072 = vmatpush1.bf16.msra.mxu0 %v4998
    %6073 = vmatprep.subr.bf16.mxu0 %v5006
    %6074 = vmatpush1.bf16.msra.mxu0 %v5005
    %6075 = vmatprep.subr.bf16.mxu0 %v5013
    %6076 = vmatpush1.bf16.msra.mxu0 %v5012
    %6077 = vmatprep.subr.bf16.mxu0 %v5020
    %6078 = vmatpush1.bf16.msra.mxu0 %v5019
    %6079 = vmatprep.subr.bf16.mxu0 %v5027
    %6080 = vmatpush1.bf16.msra.mxu0 %v5026
    %6081 = vmatprep.subr.bf16.mxu0 %v5034
    %6082 = vmatpush1.bf16.msra.mxu0 %v5033
    %6083 = vmatprep.subr.bf16.mxu0 %v5041
    %6084 = vmatpush1.bf16.msra.mxu0 %v5040
    %6085 = vmatprep.subr.bf16.mxu0 %v5048
    %6086 = vmatpush1.bf16.msra.mxu0 %v5047
    %6087 = vmatprep.subr.bf16.mxu0 %v5055
    %6088 = vmatpush1.bf16.msra.mxu0 %v5054
    %6089 = vmatprep.subr.bf16.mxu0 %v5062
    %6090 = vmatpush1.bf16.msra.mxu0 %v5061
    %6091 = vmatprep.subr.bf16.mxu0 %v5069
    %6092 = vmatpush1.bf16.msra.mxu0 %v5068
    %6093 = vmatprep.mubr.bf16.mxu0 %v2775
    %6094 = vmatmul.mubr.bf16.gmra.mrb[0].mxu0 %v2774
    %v6095 = vpop.f32.mrb[0].mxu0
    %v6096 = vadd.f32 %v6053, %v6095
    %v6097 = vpop.f32.mrb[0].mxu0
    %v6098 = vadd.f32 %v6055, %v6097
    %v6099 = vpop.f32.mrb[0].mxu0
    %v6100 = vadd.f32 %v6057, %v6099
    %v6101 = vpop.f32.mrb[0].mxu0
    %v6102 = vadd.f32 %v6059, %v6101
    %6103 = vdwg.mxu0
    %6104 = vmatprep.subr.bf16.mxu0 %v5076
    %6105 = vmatpush1.bf16.msra.mxu0 %v5075
    %6106 = vmatprep.subr.bf16.mxu0 %v5083
    %6107 = vmatpush1.bf16.msra.mxu0 %v5082
    %6108 = vmatprep.subr.bf16.mxu0 %v5090
    %6109 = vmatpush1.bf16.msra.mxu0 %v5089
    %6110 = vmatprep.subr.bf16.mxu0 %v5097
    %6111 = vmatpush1.bf16.msra.mxu0 %v5096
    %6112 = vmatprep.subr.bf16.mxu0 %v5104
    %6113 = vmatpush1.bf16.msra.mxu0 %v5103
    %6114 = vmatprep.subr.bf16.mxu0 %v5111
    %6115 = vmatpush1.bf16.msra.mxu0 %v5110
    %6116 = vmatprep.subr.bf16.mxu0 %v5118
    %6117 = vmatpush1.bf16.msra.mxu0 %v5117
    %6118 = vmatprep.subr.bf16.mxu0 %v5125
    %6119 = vmatpush1.bf16.msra.mxu0 %v5124
    %6120 = vmatprep.subr.bf16.mxu0 %v5132
    %6121 = vmatpush1.bf16.msra.mxu0 %v5131
    %6122 = vmatprep.subr.bf16.mxu0 %v5139
    %6123 = vmatpush1.bf16.msra.mxu0 %v5138
    %6124 = vmatprep.subr.bf16.mxu0 %v5146
    %6125 = vmatpush1.bf16.msra.mxu0 %v5145
    %6126 = vmatprep.subr.bf16.mxu0 %v5153
    %6127 = vmatpush1.bf16.msra.mxu0 %v5152
    %6128 = vmatprep.subr.bf16.mxu0 %v5160
    %6129 = vmatpush1.bf16.msra.mxu0 %v5159
    %6130 = vmatprep.subr.bf16.mxu0 %v5167
    %6131 = vmatpush1.bf16.msra.mxu0 %v5166
    %6132 = vmatprep.subr.bf16.mxu0 %v5174
    %6133 = vmatpush1.bf16.msra.mxu0 %v5173
    %6134 = vmatprep.subr.bf16.mxu0 %v5181
    %6135 = vmatpush1.bf16.msra.mxu0 %v5180
    %6136 = vmatprep.mubr.bf16.mxu0 %v2777
    %6137 = vmatmul.mubr.bf16.gmra.mrb[0].mxu0 %v2776
    %v6138 = vpop.f32.mrb[0].mxu0
    %v6139 = vadd.f32 %v6096, %v6138
    %v6140 = vpop.f32.mrb[0].mxu0
    %v6141 = vadd.f32 %v6098, %v6140
    %v6142 = vpop.f32.mrb[0].mxu0
    %v6143 = vadd.f32 %v6100, %v6142
    %v6144 = vpop.f32.mrb[0].mxu0
    %v6145 = vadd.f32 %v6102, %v6144
    %6146 = vdwg.mxu0
    %6147 = vmatprep.subr.bf16.mxu0 0
    %6148 = vmatpush1.bf16.msra.mxu0 %v4741
    %6149 = vmatprep.subr.bf16.mxu0 0
    %6150 = vmatpush1.bf16.msra.mxu0 %v4748
    %6151 = vmatprep.subr.bf16.mxu0 0
    %6152 = vmatpush1.bf16.msra.mxu0 %v4755
    %6153 = vmatprep.subr.bf16.mxu0 0
    %6154 = vmatpush1.bf16.msra.mxu0 %v4762
    %6155 = vmatprep.subr.bf16.mxu0 0
    %6156 = vmatpush1.bf16.msra.mxu0 %v4769
    %6157 = vmatprep.subr.bf16.mxu0 0
    %6158 = vmatpush1.bf16.msra.mxu0 %v4776
    %6159 = vmatprep.subr.bf16.mxu0 0
    %6160 = vmatpush1.bf16.msra.mxu0 %v4783
    %6161 = vmatprep.subr.bf16.mxu0 0
    %6162 = vmatpush1.bf16.msra.mxu0 %v4790
    %6163 = vmatprep.subr.bf16.mxu0 0
    %6164 = vmatpush1.bf16.msra.mxu0 %v4797
    %6165 = vmatprep.subr.bf16.mxu0 0
    %6166 = vmatpush1.bf16.msra.mxu0 %v4804
    %6167 = vmatprep.subr.bf16.mxu0 0
    %6168 = vmatpush1.bf16.msra.mxu0 %v4811
    %6169 = vmatprep.subr.bf16.mxu0 0
    %6170 = vmatpush1.bf16.msra.mxu0 %v4818
    %6171 = vmatprep.subr.bf16.mxu0 0
    %6172 = vmatpush1.bf16.msra.mxu0 %v4825
    %6173 = vmatprep.subr.bf16.mxu0 0
    %6174 = vmatpush1.bf16.msra.mxu0 %v4832
    %6175 = vmatprep.subr.bf16.mxu0 0
    %6176 = vmatpush1.bf16.msra.mxu0 %v4839
    %6177 = vmatprep.subr.bf16.mxu0 0
    %6178 = vmatpush1.bf16.msra.mxu0 %v4846
    %6179 = vmatprep.mubr.bf16.mxu0 %v2771
    %6180 = vmatmul.mubr.bf16.gmra.mrb[0].mxu0 %v2770
    %v6181 = vpop.f32.mrb[0].mxu0
    %v6182 = vadd.f32 %v3319, %v6181
    %v6183 = vpop.f32.mrb[0].mxu0
    %v6184 = vpop.f32.mrb[0].mxu0
    %v6185 = vadd.f32 %v3319, %v6184
    %v6186 = vpop.f32.mrb[0].mxu0
    %6187 = vdwg.mxu0
    %6188 = vmatprep.subr.bf16.mxu0 0
    %6189 = vmatpush1.bf16.msra.mxu0 %v4853
    %6190 = vmatprep.subr.bf16.mxu0 0
    %6191 = vmatpush1.bf16.msra.mxu0 %v4860
    %6192 = vmatprep.subr.bf16.mxu0 0
    %6193 = vmatpush1.bf16.msra.mxu0 %v4867
    %6194 = vmatprep.subr.bf16.mxu0 0
    %6195 = vmatpush1.bf16.msra.mxu0 %v4874
    %6196 = vmatprep.subr.bf16.mxu0 0
    %6197 = vmatpush1.bf16.msra.mxu0 %v4881
    %6198 = vmatprep.subr.bf16.mxu0 0
    %6199 = vmatpush1.bf16.msra.mxu0 %v4888
    %6200 = vmatprep.subr.bf16.mxu0 0
    %6201 = vmatpush1.bf16.msra.mxu0 %v4895
    %6202 = vmatprep.subr.bf16.mxu0 0
    %6203 = vmatpush1.bf16.msra.mxu0 %v4902
    %6204 = vmatprep.subr.bf16.mxu0 0
    %6205 = vmatpush1.bf16.msra.mxu0 %v4909
    %6206 = vmatprep.subr.bf16.mxu0 0
    %6207 = vmatpush1.bf16.msra.mxu0 %v4916
    %6208 = vmatprep.subr.bf16.mxu0 0
    %6209 = vmatpush1.bf16.msra.mxu0 %v4923
    %6210 = vmatprep.subr.bf16.mxu0 0
    %6211 = vmatpush1.bf16.msra.mxu0 %v4930
    %6212 = vmatprep.subr.bf16.mxu0 0
    %6213 = vmatpush1.bf16.msra.mxu0 %v4937
    %6214 = vmatprep.subr.bf16.mxu0 0
    %6215 = vmatpush1.bf16.msra.mxu0 %v4944
    %6216 = vmatprep.subr.bf16.mxu0 0
    %6217 = vmatpush1.bf16.msra.mxu0 %v4951
    %6218 = vmatprep.subr.bf16.mxu0 0
    %6219 = vmatpush1.bf16.msra.mxu0 %v4958
    %6220 = vmatprep.mubr.bf16.mxu0 %v2773
    %6221 = vmatmul.mubr.bf16.gmra.mrb[0].mxu0 %v2772
    %v6222 = vpop.f32.mrb[0].mxu0
    %v6223 = vadd.f32 %v6182, %v6222
    %v6224 = vpop.f32.mrb[0].mxu0
    %v6225 = vpop.f32.mrb[0].mxu0
    %v6226 = vadd.f32 %v6185, %v6225
    %v6227 = vpop.f32.mrb[0].mxu0
    %6228 = vdwg.mxu0
    %6229 = vmatprep.subr.bf16.mxu0 0
    %6230 = vmatpush1.bf16.msra.mxu0 %v4965
    %6231 = vmatprep.subr.bf16.mxu0 0
    %6232 = vmatpush1.bf16.msra.mxu0 %v4972
    %6233 = vmatprep.subr.bf16.mxu0 0
    %6234 = vmatpush1.bf16.msra.mxu0 %v4979
    %6235 = vmatprep.subr.bf16.mxu0 0
    %6236 = vmatpush1.bf16.msra.mxu0 %v4986
    %6237 = vmatprep.subr.bf16.mxu0 0
    %6238 = vmatpush1.bf16.msra.mxu0 %v4993
    %6239 = vmatprep.subr.bf16.mxu0 0
    %6240 = vmatpush1.bf16.msra.mxu0 %v5000
    %6241 = vmatprep.subr.bf16.mxu0 0
    %6242 = vmatpush1.bf16.msra.mxu0 %v5007
    %6243 = vmatprep.subr.bf16.mxu0 0
    %6244 = vmatpush1.bf16.msra.mxu0 %v5014
    %6245 = vmatprep.subr.bf16.mxu0 0
    %6246 = vmatpush1.bf16.msra.mxu0 %v5021
    %6247 = vmatprep.subr.bf16.mxu0 0
    %6248 = vmatpush1.bf16.msra.mxu0 %v5028
    %6249 = vmatprep.subr.bf16.mxu0 0
    %6250 = vmatpush1.bf16.msra.mxu0 %v5035
    %6251 = vmatprep.subr.bf16.mxu0 0
    %6252 = vmatpush1.bf16.msra.mxu0 %v5042
    %6253 = vmatprep.subr.bf16.mxu0 0
    %6254 = vmatpush1.bf16.msra.mxu0 %v5049
    %6255 = vmatprep.subr.bf16.mxu0 0
    %6256 = vmatpush1.bf16.msra.mxu0 %v5056
    %6257 = vmatprep.subr.bf16.mxu0 0
    %6258 = vmatpush1.bf16.msra.mxu0 %v5063
    %6259 = vmatprep.subr.bf16.mxu0 0
    %6260 = vmatpush1.bf16.msra.mxu0 %v5070
    %6261 = vmatprep.mubr.bf16.mxu0 %v2775
    %6262 = vmatmul.mubr.bf16.gmra.mrb[0].mxu0 %v2774
    %v6263 = vpop.f32.mrb[0].mxu0
    %v6264 = vadd.f32 %v6223, %v6263
    %v6265 = vpop.f32.mrb[0].mxu0
    %v6266 = vpop.f32.mrb[0].mxu0
    %v6267 = vadd.f32 %v6226, %v6266
    %v6268 = vpop.f32.mrb[0].mxu0
    %6269 = vdwg.mxu0
    %6270 = vmatprep.subr.bf16.mxu0 0
    %6271 = vmatpush1.bf16.msra.mxu0 %v5077
    %6272 = vmatprep.subr.bf16.mxu0 0
    %6273 = vmatpush1.bf16.msra.mxu0 %v5084
    %6274 = vmatprep.subr.bf16.mxu0 0
    %6275 = vmatpush1.bf16.msra.mxu0 %v5091
    %6276 = vmatprep.subr.bf16.mxu0 0
    %6277 = vmatpush1.bf16.msra.mxu0 %v5098
    %6278 = vmatprep.subr.bf16.mxu0 0
    %6279 = vmatpush1.bf16.msra.mxu0 %v5105
    %6280 = vmatprep.subr.bf16.mxu0 0
    %6281 = vmatpush1.bf16.msra.mxu0 %v5112
    %6282 = vmatprep.subr.bf16.mxu0 0
    %6283 = vmatpush1.bf16.msra.mxu0 %v5119
    %6284 = vmatprep.subr.bf16.mxu0 0
    %6285 = vmatpush1.bf16.msra.mxu0 %v5126
    %6286 = vmatprep.subr.bf16.mxu0 0
    %6287 = vmatpush1.bf16.msra.mxu0 %v5133
    %6288 = vmatprep.subr.bf16.mxu0 0
    %6289 = vmatpush1.bf16.msra.mxu0 %v5140
    %6290 = vmatprep.subr.bf16.mxu0 0
    %6291 = vmatpush1.bf16.msra.mxu0 %v5147
    %6292 = vmatprep.subr.bf16.mxu0 0
    %6293 = vmatpush1.bf16.msra.mxu0 %v5154
    %6294 = vmatprep.subr.bf16.mxu0 0
    %6295 = vmatpush1.bf16.msra.mxu0 %v5161
    %6296 = vmatprep.subr.bf16.mxu0 0
    %6297 = vmatpush1.bf16.msra.mxu0 %v5168
    %6298 = vmatprep.subr.bf16.mxu0 0
    %6299 = vmatpush1.bf16.msra.mxu0 %v5175
    %6300 = vmatprep.subr.bf16.mxu0 0
    %6301 = vmatpush1.bf16.msra.mxu0 %v5182
    %6302 = vmatprep.mubr.bf16.mxu0 %v2777
    %6303 = vmatmul.mubr.bf16.gmra.mrb[0].mxu0 %v2776
    %v6304 = vpop.f32.mrb[0].mxu0
    %v6305 = vadd.f32 %v6264, %v6304
    %v6306 = vpop.f32.mrb[0].mxu0
    %v6307 = vpop.f32.mrb[0].mxu0
    %v6308 = vadd.f32 %v6267, %v6307
    %v6309 = vpop.f32.mrb[0].mxu0
    %6310 = vdwg.mxu0
    %v6311 = vtanh.pop %v5795
    %v6312 = vtanh.pop %v5797
    %v6313 = vtanh.pop %v5967
    %v6314 = vtanh.pop %v5969
    %v6315 = vtanh.pop %v6139
    %v6316 = vtanh.pop %v6141
    %v6317 = vtanh.pop %v6305
    %v6318 = vtanh.pop %v5799
    %v6319 = vtanh.pop %v5801
    %v6320 = vtanh.pop %v5971
    %v6321 = vtanh.pop %v5973
    %v6322 = vtanh.pop %v6143
    %v6323 = vtanh.pop %v6145
    %v6324 = vtanh.pop %v6308
    %6325 = vst [vmem:[#allocation17] sm:$0xff] %v6311
    %6326 = vst [vmem:[#allocation17 + $0x8] sm:$0xff] %v6312
    %6327 = vst [vmem:[#allocation17 + $0x10] sm:$0xff] %v6313
    %6328 = vst [vmem:[#allocation17 + $0x18] sm:$0xff] %v6314
    %6329 = vst [vmem:[#allocation17 + $0x20] sm:$0xff] %v6315
    %6330 = vst [vmem:[#allocation17 + $0x28] sm:$0xff] %v6316
    %6331 = vst [vmem:[#allocation17 + $0x30] sm:$0xff] %v6317
    %6332 = vst [vmem:[#allocation17 + $0x38] sm:$0xff] %v6318
    %6333 = vst [vmem:[#allocation17 + $0x40] sm:$0xff] %v6319
    %6334 = vst [vmem:[#allocation17 + $0x48] sm:$0xff] %v6320
    %6335 = vst [vmem:[#allocation17 + $0x50] sm:$0xff] %v6321
    %6336 = vst [vmem:[#allocation17 + $0x58] sm:$0xff] %v6322
    %6337 = vst [vmem:[#allocation17 + $0x60] sm:$0xff] %v6323
    %6338 = vst [vmem:[#allocation17 + $0x68] sm:$0xff] %v6324
    // Predicated region
    $region74: #{tpu_custom_call.1} parent=1 // pred_check
      _
    $region75: #{tpu_custom_call.1} parent=1 // pred_check_branch
      %6340 = sbr.rel (0) target = $region77
    $region76: #{tpu_custom_call.1} parent=1 // pred_region
      %s6342 = ssub.s32 1792, 1792
      %6343 = vsyncadd [#allocation4], %s6342
      %s6344 = sshll.u32 [#allocation17], 4
      %s6345 = int_to_ptr.vmem [resolvable:$true] %s6344
      %6350 = dma.vmem_to_hbm [thread:$0]  %s6345, 1792, %s9, [#allocation4], 896, 896, 56
    $region77: #{tpu_custom_call.1} parent=1 // pred_fallthru
      _
    // Predicated region
    $region78: #{tpu_custom_call.1} parent=1 // pred_check
      _
    $region79: #{tpu_custom_call.1} parent=1 // pred_check_branch
      %6352 = sbr.rel (0) target = $region81
    $region80: #{tpu_custom_call.1} parent=1 // pred_region
      %6353 = dma.done [#allocation4], 1792
    $region81: #{tpu_custom_call.1} parent=1 // pred_fallthru
      _
    %6354 = vsyncpa [#allocation3], 1
    %6355 = vsyncpa [#allocation6], 1
    %6356 = vsyncpa [#allocation9], 1
    %6357 = vsyncpa [#allocation12], 1
    %6358 = vsyncpa [#allocation15], 1
    %6359 = vsyncpa [#allocation4], 1

</llo_original>
